<compile_context>
chip_gen: v5e
topology: v5e:2x2
jax: 0.10.0
libtpu: 0.0.40
codegen_flags: <defaults>
</compile_context>

<pallas_src>
import functools

import jax
import jax.numpy as jnp
from jax.experimental import pallas as pl
from jax.experimental.pallas import tpu as pltpu


def _round_up(x, m):
    return (x + m - 1) // m * m


def _pad_cols(x, n_to):
    return jnp.pad(x, ((0, 0), (0, n_to - x.shape[1])))


def _pad_rows(x, m_to):
    return jnp.pad(x, ((0, m_to - x.shape[0]), (0, 0)))


def _vmem():
    return pl.BlockSpec(memory_space=pltpu.MemorySpace.VMEM)


# ---------------------------------------------------------------------------
# Whole-array matmul + bias + ReLU kernel (used by all three convs via im2col).
# Inputs are bf16, accumulation is f32 on the MXU, output is bf16.
# ---------------------------------------------------------------------------
def _matmul_bias_relu_kernel(x_ref, w_ref, b_ref, o_ref):
    y = jnp.dot(x_ref[...], w_ref[...], preferred_element_type=jnp.float32)
    o_ref[...] = jnp.maximum(y + b_ref[...], 0.0).astype(o_ref.dtype)


def matmul_bias_relu(x, w, b, out_dtype=jnp.bfloat16):
    """relu(x @ w + b) as one grid-free Pallas call.

    x: (M, Kp) bf16, w: (Kp, Np) bf16, b: (1, Np) f32; Kp/Np already padded to
    multiples of 128.  Everything fits VMEM at these sizes, so there is no
    grid (a single kernel invocation, zero pipeline-step overhead).
    """
    M, K = x.shape
    K2, N = w.shape
    assert K == K2 and b.shape == (1, N), (x.shape, w.shape, b.shape)
    Mp = _round_up(M, 8)
    xp = _pad_rows(x, Mp) if Mp != M else x
    out = pl.pallas_call(
        _matmul_bias_relu_kernel,
        out_shape=jax.ShapeDtypeStruct((Mp, N), out_dtype),
        in_specs=[_vmem(), _vmem(), _vmem()],
        out_specs=_vmem(),
    )(xp, w, b)
    return out[:M] if Mp != M else out


# ---------------------------------------------------------------------------
# Fully fused dueling head: one Pallas call does
#   h          = relu(feat @ [adv1|val1] + [b_adv1|b_val1])      (fused N)
#   adv        = h[:, :512] @ W_adv2 + b_adv2
#   val        = h[:, 512:] @ W_val2 + b_val2
#   out        = val + adv - mean(adv, axis=-1, keepdims=True)
# Padded action columns carry zero weight/bias, so summing over the padded row
# equals the true sum; divide by the true action_dim (static).
# ---------------------------------------------------------------------------
def _dueling_head_kernel(feat_ref, w1_ref, b1_ref, w2a_ref, b2a_ref,
                         w2v_ref, b2v_ref, o_ref, *, action_dim, hidden):
    h = jnp.dot(feat_ref[...], w1_ref[...], preferred_element_type=jnp.float32)
    h = jnp.maximum(h + b1_ref[...], 0.0).astype(jnp.bfloat16)
    h_adv = h[:, :hidden]
    h_val = h[:, hidden:]
    adv = jnp.dot(h_adv, w2a_ref[...],
                  preferred_element_type=jnp.float32) + b2a_ref[...]
    val = jnp.dot(h_val, w2v_ref[...],
                  preferred_element_type=jnp.float32) + b2v_ref[...]
    adv_mean = jnp.sum(adv, axis=-1, keepdims=True) * (1.0 / action_dim)
    o_ref[...] = (val[:, 0:1] + adv - adv_mean).astype(o_ref.dtype)


def dueling_head(feat, w1, b1, w2a, b2a, w2v, b2v, *, action_dim):
    B = feat.shape[0]
    hidden = w2a.shape[0]           # 512
    a_pad = w2a.shape[1]            # action_dim padded to 128
    Bp = _round_up(B, 8)
    featp = _pad_rows(feat, Bp) if Bp != B else feat
    out = pl.pallas_call(
        functools.partial(_dueling_head_kernel, action_dim=action_dim,
                          hidden=hidden),
        out_shape=jax.ShapeDtypeStruct((Bp, a_pad), jnp.float32),
        in_specs=[_vmem() for _ in range(7)],
        out_specs=_vmem(),
    )(featp, w1, b1, w2a, b2a, w2v, b2v)
    return out[:B, :action_dim]


# ---------------------------------------------------------------------------
# Glue: NHWC im2col patch extraction (pure slicing/stacking) + conv wrapper.
# Patch flatten order is (kh, kw, C), matching the weight layout built at init.
# ---------------------------------------------------------------------------
def im2col_nhwc(x, kh, kw, stride):
    B, H, W, C = x.shape
    OH = (H - kh) // stride + 1
    OW = (W - kw) // stride + 1
    cols = []
    for di in range(kh):
        for dj in range(kw):
            cols.append(x[:, di:di + stride * OH:stride,
                          dj:dj + stride * OW:stride, :])
    p = jnp.stack(cols, axis=3)                      # (B, OH, OW, kh*kw, C)
    return p.reshape(B * OH * OW, kh * kw * C), (B, OH, OW)


def conv2d_relu(x_nhwc, wmat, b, *, kh, kw, stride, oc):
    """x: NHWC bf16, wmat: (Kp, Np) bf16 kernel-layout weight, b: (1, Np) f32."""
    patches, (B, OH, OW) = im2col_nhwc(x_nhwc, kh, kw, stride)
    kp = wmat.shape[0]
    if patches.shape[1] != kp:
        patches = _pad_cols(patches, kp)
    y = matmul_bias_relu(patches, wmat, b)           # (B*OH*OW, Np) bf16
    return y[:, :oc].reshape(B, OH, OW, oc)          # stay NHWC


# ---------------------------------------------------------------------------
# Parameters: generated in PyTorch layout, converted once (outside jit) to the
# bf16 kernel layout (transposed, zero-padded, adv1/val1 fused along N).
# ---------------------------------------------------------------------------
def init_params(key, in_channels, action_dim):
    ks = jax.random.split(key, 14)

    def w(k, shape, fan_in):
        return jax.random.normal(k, shape, jnp.float32) * (2.0 / fan_in) ** 0.5

    def bvec(k, n, fan_in):
        return jax.random.normal(k, (n,), jnp.float32) * (1.0 / fan_in) ** 0.5

    conv1_w = w(ks[0], (32, in_channels, 8, 8), in_channels * 64)
    conv1_b = bvec(ks[1], 32, in_channels * 64)
    conv2_w = w(ks[2], (64, 32, 4, 4), 32 * 16)
    conv2_b = bvec(ks[3], 64, 32 * 16)
    conv3_w = w(ks[4], (64, 64, 3, 3), 64 * 9)
    conv3_b = bvec(ks[5], 64, 64 * 9)
    adv1_w = w(ks[6], (64 * 7 * 7, 512), 64 * 7 * 7)
    adv1_b = bvec(ks[7], 512, 64 * 7 * 7)
    adv2_w = w(ks[8], (512, action_dim), 512)
    adv2_b = bvec(ks[9], action_dim, 512)
    val1_w = w(ks[10], (64 * 7 * 7, 512), 64 * 7 * 7)
    val1_b = bvec(ks[11], 512, 64 * 7 * 7)
    val2_w = w(ks[12], (512, 1), 512)
    val2_b = bvec(ks[13], 1, 512)

    def conv_pack(wc, bc):
        oc, ic, kh, kw = wc.shape
        kdim = kh * kw * ic
        kp, np_ = _round_up(kdim, 128), _round_up(oc, 128)
        wm = jnp.transpose(wc, (2, 3, 1, 0)).reshape(kdim, oc)   # (kh*kw*ic, oc)
        wm = jnp.pad(wm, ((0, kp - kdim), (0, np_ - oc))).astype(jnp.bfloat16)
        bm = jnp.pad(bc, (0, np_ - oc)).reshape(1, np_).astype(jnp.float32)
        return wm, bm

    c1w, c1b = conv_pack(conv1_w, conv1_b)
    c2w, c2b = conv_pack(conv2_w, conv2_b)
    c3w, c3b = conv_pack(conv3_w, conv3_b)

    feat_dim = 64 * 7 * 7
    feat_pad = _round_up(feat_dim, 128)
    # fused first-stage head weight: [adv1 | val1] along N, K zero-padded.
    h1w = jnp.concatenate([adv1_w, val1_w], axis=1)              # (3136, 1024)
    h1w = jnp.pad(h1w, ((0, feat_pad - feat_dim), (0, 0))).astype(jnp.bfloat16)
    h1b = jnp.concatenate([adv1_b, val1_b]).reshape(1, 1024).astype(jnp.float32)

    a_pad = _round_up(action_dim, 128)
    w2a = jnp.pad(adv2_w, ((0, 0), (0, a_pad - action_dim))).astype(jnp.bfloat16)
    b2a = jnp.pad(adv2_b, (0, a_pad - action_dim)).reshape(1, a_pad).astype(jnp.float32)
    w2v = jnp.pad(val2_w, ((0, 0), (0, 128 - 1))).astype(jnp.bfloat16)
    b2v = jnp.pad(val2_b, (0, 128 - 1)).reshape(1, 128).astype(jnp.float32)

    return {
        "conv1_w": c1w, "conv1_b": c1b,
        "conv2_w": c2w, "conv2_b": c2b,
        "conv3_w": c3w, "conv3_b": c3b,
        "head1_w": h1w, "head1_b": h1b,
        "adv2_w": w2a, "adv2_b": b2a,
        "val2_w": w2v, "val2_b": b2v,
    }


def vacnn_forward(params, x, *, action_dim):
    # NCHW -> NHWC once; compute in bf16 (f32 accumulation inside the kernels).
    x = jnp.transpose(x, (0, 2, 3, 1)).astype(jnp.bfloat16)
    x = conv2d_relu(x, params["conv1_w"], params["conv1_b"],
                    kh=8, kw=8, stride=4, oc=32)                 # (B,20,20,32)
    x = conv2d_relu(x, params["conv2_w"], params["conv2_b"],
                    kh=4, kw=4, stride=2, oc=64)                 # (B, 9, 9,64)
    x = conv2d_relu(x, params["conv3_w"], params["conv3_b"],
                    kh=3, kw=3, stride=1, oc=64)                 # (B, 7, 7,64)
    B = x.shape[0]
    # match the module's Rearrange('b c h w -> b (c h w)') flatten order.
    feat = jnp.transpose(x, (0, 3, 1, 2)).reshape(B, -1)         # (B, 3136)
    feat = _pad_cols(feat, params["head1_w"].shape[0])           # (B, 3200)
    return dueling_head(feat, params["head1_w"], params["head1_b"],
                        params["adv2_w"], params["adv2_b"],
                        params["val2_w"], params["val2_b"],
                        action_dim=action_dim)


if __name__ == "__main__":
    key = jax.random.PRNGKey(0)
    kp, kx = jax.random.split(key)

    in_channels, action_dim = 4, 6
    batch = 2
    params = init_params(kp, in_channels, action_dim)
    # Spatial size 84 is forced by the 64*7*7 Linear in the module.
    x = jax.random.normal(kx, (batch, in_channels, 84, 84), jnp.float32)

    fwd = jax.jit(functools.partial(vacnn_forward, action_dim=action_dim))
    out = jax.block_until_ready(fwd(params, x))

    assert out.shape == (batch, action_dim), out.shape
    assert jnp.all(jnp.isfinite(out))
    print("KERNEL_OK")
</pallas_src>

<mosaic_0001>
module attributes {stable_mosaic.version = 11 : i64} {
  func.func @_matmul_bias_relu_kernel(%arg0: memref<800x256xbf16, #tpu.memory_space<vmem>>, %arg1: memref<256x128xbf16, #tpu.memory_space<vmem>>, %arg2: memref<1x128xf32, #tpu.memory_space<vmem>>, %arg3: memref<800x128xbf16, #tpu.memory_space<vmem>>) attributes {dimension_semantics = [], scalar_prefetch = 0 : i64, scratch_operands = 0 : i64, tpu.core_type = #tpu.core_type<tc>} {
    %c0 = arith.constant 0 : index
    %c0_0 = arith.constant 0 : index
    %0 = vector.load %arg0[%c0, %c0_0] : memref<800x256xbf16, #tpu.memory_space<vmem>>, vector<800x256xbf16>
    %c0_1 = arith.constant 0 : index
    %c0_2 = arith.constant 0 : index
    %1 = vector.load %arg1[%c0_1, %c0_2] : memref<256x128xbf16, #tpu.memory_space<vmem>>, vector<256x128xbf16>
    %cst = arith.constant dense<0.000000e+00> : vector<800x128xf32>
    %2 = tpu.matmul %0, %1, %cst {dimension_numbers = #tpu.dot_dimension_numbers<[1], [0], [0], [1], [0, 0, 1, 1], [], []>} : vector<800x256xbf16>, vector<256x128xbf16>, vector<800x128xf32> -> vector<800x128xf32>
    %c0_3 = arith.constant 0 : index
    %c0_4 = arith.constant 0 : index
    %3 = vector.load %arg2[%c0_3, %c0_4] : memref<1x128xf32, #tpu.memory_space<vmem>>, vector<1x128xf32>
    %4 = vector.broadcast %3 : vector<1x128xf32> to vector<800x128xf32>
    %5 = arith.addf %2, %4 : vector<800x128xf32>
    %cst_5 = arith.constant 0.000000e+00 : f32
    %6 = vector.broadcast %cst_5 : f32 to vector<800x128xf32>
    %7 = arith.maximumf %5, %6 : vector<800x128xf32>
    %8 = arith.truncf %7 : vector<800x128xf32> to vector<800x128xbf16>
    %c0_6 = arith.constant 0 : index
    %c0_7 = arith.constant 0 : index
    %9 = vector.load %arg3[%c0_6, %c0_7] : memref<800x128xbf16, #tpu.memory_space<vmem>>, vector<800x128xbf16>
    tpu.vector_store %arg3[%c0_6, %c0_7], %8 {strides = array<i32>} : memref<800x128xbf16, #tpu.memory_space<vmem>>, vector<800x128xbf16>,
    return
  }
}

module attributes {stable_mosaic.version = 11 : i64} {
  func.func @_matmul_bias_relu_kernel(%arg0: memref<168x512xbf16, #tpu.memory_space<vmem>>, %arg1: memref<512x128xbf16, #tpu.memory_space<vmem>>, %arg2: memref<1x128xf32, #tpu.memory_space<vmem>>, %arg3: memref<168x128xbf16, #tpu.memory_space<vmem>>) attributes {dimension_semantics = [], scalar_prefetch = 0 : i64, scratch_operands = 0 : i64, tpu.core_type = #tpu.core_type<tc>} {
    %c0 = arith.constant 0 : index
    %c0_0 = arith.constant 0 : index
    %0 = vector.load %arg0[%c0, %c0_0] : memref<168x512xbf16, #tpu.memory_space<vmem>>, vector<168x512xbf16>
    %c0_1 = arith.constant 0 : index
    %c0_2 = arith.constant 0 : index
    %1 = vector.load %arg1[%c0_1, %c0_2] : memref<512x128xbf16, #tpu.memory_space<vmem>>, vector<512x128xbf16>
    %cst = arith.constant dense<0.000000e+00> : vector<168x128xf32>
    %2 = tpu.matmul %0, %1, %cst {dimension_numbers = #tpu.dot_dimension_numbers<[1], [0], [0], [1], [0, 0, 1, 1], [], []>} : vector<168x512xbf16>, vector<512x128xbf16>, vector<168x128xf32> -> vector<168x128xf32>
    %c0_3 = arith.constant 0 : index
    %c0_4 = arith.constant 0 : index
    %3 = vector.load %arg2[%c0_3, %c0_4] : memref<1x128xf32, #tpu.memory_space<vmem>>, vector<1x128xf32>
    %4 = vector.broadcast %3 : vector<1x128xf32> to vector<168x128xf32>
    %5 = arith.addf %2, %4 : vector<168x128xf32>
    %cst_5 = arith.constant 0.000000e+00 : f32
    %6 = vector.broadcast %cst_5 : f32 to vector<168x128xf32>
    %7 = arith.maximumf %5, %6 : vector<168x128xf32>
    %8 = arith.truncf %7 : vector<168x128xf32> to vector<168x128xbf16>
    %c0_6 = arith.constant 0 : index
    %c0_7 = arith.constant 0 : index
    %9 = vector.load %arg3[%c0_6, %c0_7] : memref<168x128xbf16, #tpu.memory_space<vmem>>, vector<168x128xbf16>
    tpu.vector_store %arg3[%c0_6, %c0_7], %8 {strides = array<i32>} : memref<168x128xbf16, #tpu.memory_space<vmem>>, vector<168x128xbf16>,
    return
  }
}

module attributes {stable_mosaic.version = 11 : i64} {
  func.func @_matmul_bias_relu_kernel(%arg0: memref<104x640xbf16, #tpu.memory_space<vmem>>, %arg1: memref<640x128xbf16, #tpu.memory_space<vmem>>, %arg2: memref<1x128xf32, #tpu.memory_space<vmem>>, %arg3: memref<104x128xbf16, #tpu.memory_space<vmem>>) attributes {dimension_semantics = [], scalar_prefetch = 0 : i64, scratch_operands = 0 : i64, tpu.core_type = #tpu.core_type<tc>} {
    %c0 = arith.constant 0 : index
    %c0_0 = arith.constant 0 : index
    %0 = vector.load %arg0[%c0, %c0_0] : memref<104x640xbf16, #tpu.memory_space<vmem>>, vector<104x640xbf16>
    %c0_1 = arith.constant 0 : index
    %c0_2 = arith.constant 0 : index
    %1 = vector.load %arg1[%c0_1, %c0_2] : memref<640x128xbf16, #tpu.memory_space<vmem>>, vector<640x128xbf16>
    %cst = arith.constant dense<0.000000e+00> : vector<104x128xf32>
    %2 = tpu.matmul %0, %1, %cst {dimension_numbers = #tpu.dot_dimension_numbers<[1], [0], [0], [1], [0, 0, 1, 1], [], []>} : vector<104x640xbf16>, vector<640x128xbf16>, vector<104x128xf32> -> vector<104x128xf32>
    %c0_3 = arith.constant 0 : index
    %c0_4 = arith.constant 0 : index
    %3 = vector.load %arg2[%c0_3, %c0_4] : memref<1x128xf32, #tpu.memory_space<vmem>>, vector<1x128xf32>
    %4 = vector.broadcast %3 : vector<1x128xf32> to vector<104x128xf32>
    %5 = arith.addf %2, %4 : vector<104x128xf32>
    %cst_5 = arith.constant 0.000000e+00 : f32
    %6 = vector.broadcast %cst_5 : f32 to vector<104x128xf32>
    %7 = arith.maximumf %5, %6 : vector<104x128xf32>
    %8 = arith.truncf %7 : vector<104x128xf32> to vector<104x128xbf16>
    %c0_6 = arith.constant 0 : index
    %c0_7 = arith.constant 0 : index
    %9 = vector.load %arg3[%c0_6, %c0_7] : memref<104x128xbf16, #tpu.memory_space<vmem>>, vector<104x128xbf16>
    tpu.vector_store %arg3[%c0_6, %c0_7], %8 {strides = array<i32>} : memref<104x128xbf16, #tpu.memory_space<vmem>>, vector<104x128xbf16>,
    return
  }
}

module attributes {stable_mosaic.version = 11 : i64} {
  func.func @_dueling_head_kernel(%arg0: memref<8x3200xbf16, #tpu.memory_space<vmem>>, %arg1: memref<3200x1024xbf16, #tpu.memory_space<vmem>>, %arg2: memref<1x1024xf32, #tpu.memory_space<vmem>>, %arg3: memref<512x128xbf16, #tpu.memory_space<vmem>>, %arg4: memref<1x128xf32, #tpu.memory_space<vmem>>, %arg5: memref<512x128xbf16, #tpu.memory_space<vmem>>, %arg6: memref<1x128xf32, #tpu.memory_space<vmem>>, %arg7: memref<8x128xf32, #tpu.memory_space<vmem>>) attributes {dimension_semantics = [], scalar_prefetch = 0 : i64, scratch_operands = 0 : i64, tpu.core_type = #tpu.core_type<tc>} {
    %c0 = arith.constant 0 : index
    %c0_0 = arith.constant 0 : index
    %0 = vector.load %arg0[%c0, %c0_0] : memref<8x3200xbf16, #tpu.memory_space<vmem>>, vector<8x3200xbf16>
    %c0_1 = arith.constant 0 : index
    %c0_2 = arith.constant 0 : index
    %1 = vector.load %arg1[%c0_1, %c0_2] : memref<3200x1024xbf16, #tpu.memory_space<vmem>>, vector<3200x1024xbf16>
    %cst = arith.constant dense<0.000000e+00> : vector<8x1024xf32>
    %2 = tpu.matmul %0, %1, %cst {dimension_numbers = #tpu.dot_dimension_numbers<[1], [0], [0], [1], [0, 0, 1, 1], [], []>} : vector<8x3200xbf16>, vector<3200x1024xbf16>, vector<8x1024xf32> -> vector<8x1024xf32>
    %c0_3 = arith.constant 0 : index
    %c0_4 = arith.constant 0 : index
    %3 = vector.load %arg2[%c0_3, %c0_4] : memref<1x1024xf32, #tpu.memory_space<vmem>>, vector<1x1024xf32>
    %4 = vector.broadcast %3 : vector<1x1024xf32> to vector<8x1024xf32>
    %5 = arith.addf %2, %4 : vector<8x1024xf32>
    %cst_5 = arith.constant 0.000000e+00 : f32
    %6 = vector.broadcast %cst_5 : f32 to vector<8x1024xf32>
    %7 = arith.maximumf %5, %6 : vector<8x1024xf32>
    %8 = arith.truncf %7 : vector<8x1024xf32> to vector<8x1024xbf16>
    %9 = vector.extract_strided_slice %8 {offsets = [0, 0], sizes = [8, 512], strides = [1, 1]} : vector<8x1024xbf16> to vector<8x512xbf16>
    %10 = vector.extract_strided_slice %8 {offsets = [0, 512], sizes = [8, 512], strides = [1, 1]} : vector<8x1024xbf16> to vector<8x512xbf16>
    %c0_6 = arith.constant 0 : index
    %c0_7 = arith.constant 0 : index
    %11 = vector.load %arg3[%c0_6, %c0_7] : memref<512x128xbf16, #tpu.memory_space<vmem>>, vector<512x128xbf16>
    %cst_8 = arith.constant dense<0.000000e+00> : vector<8x128xf32>
    %12 = tpu.matmul %9, %11, %cst_8 {dimension_numbers = #tpu.dot_dimension_numbers<[1], [0], [0], [1], [0, 0, 1, 1], [], []>} : vector<8x512xbf16>, vector<512x128xbf16>, vector<8x128xf32> -> vector<8x128xf32>
    %c0_9 = arith.constant 0 : index
    %c0_10 = arith.constant 0 : index
    %13 = vector.load %arg4[%c0_9, %c0_10] : memref<1x128xf32, #tpu.memory_space<vmem>>, vector<1x128xf32>
    %14 = vector.broadcast %13 : vector<1x128xf32> to vector<8x128xf32>
    %15 = arith.addf %12, %14 : vector<8x128xf32>
    %c0_11 = arith.constant 0 : index
    %c0_12 = arith.constant 0 : index
    %16 = vector.load %arg5[%c0_11, %c0_12] : memref<512x128xbf16, #tpu.memory_space<vmem>>, vector<512x128xbf16>
    %cst_13 = arith.constant dense<0.000000e+00> : vector<8x128xf32>
    %17 = tpu.matmul %10, %16, %cst_13 {dimension_numbers = #tpu.dot_dimension_numbers<[1], [0], [0], [1], [0, 0, 1, 1], [], []>} : vector<8x512xbf16>, vector<512x128xbf16>, vector<8x128xf32> -> vector<8x128xf32>
    %c0_14 = arith.constant 0 : index
    %c0_15 = arith.constant 0 : index
    %18 = vector.load %arg6[%c0_14, %c0_15] : memref<1x128xf32, #tpu.memory_space<vmem>>, vector<1x128xf32>
    %19 = vector.broadcast %18 : vector<1x128xf32> to vector<8x128xf32>
    %20 = arith.addf %17, %19 : vector<8x128xf32>
    %cst_16 = arith.constant dense<0.000000e+00> : vector<8xf32>
    %21 = vector.multi_reduction <add>, %15, %cst_16 [1] : vector<8x128xf32> to vector<8xf32>
    %22 = vector.shape_cast %21 : vector<8xf32> to vector<8x1xf32>
    %cst_17 = arith.constant 0.166666672 : f32
    %23 = vector.broadcast %cst_17 : f32 to vector<8x1xf32>
    %24 = arith.mulf %22, %23 : vector<8x1xf32>
    %25 = vector.extract_strided_slice %20 {offsets = [0, 0], sizes = [8, 1], strides = [1, 1]} : vector<8x128xf32> to vector<8x1xf32>
    %26 = vector.broadcast %25 : vector<8x1xf32> to vector<8x128xf32>
    %27 = arith.addf %26, %15 : vector<8x128xf32>
    %28 = vector.broadcast %24 : vector<8x1xf32> to vector<8x128xf32>
    %29 = arith.subf %27, %28 : vector<8x128xf32>
    %c0_18 = arith.constant 0 : index
    %c0_19 = arith.constant 0 : index
    %30 = vector.load %arg7[%c0_18, %c0_19] : memref<8x128xf32, #tpu.memory_space<vmem>>, vector<8x128xf32>
    tpu.vector_store %arg7[%c0_18, %c0_19], %29 {strides = array<i32>} : memref<8x128xf32, #tpu.memory_space<vmem>>, vector<8x128xf32>,
    return
  }
}

</mosaic_0001>

<llo_original>
// kernel: vacnn_forward.4
$region0: #{vacnn_forward.4}
  #allocation0 [shape = 'u32[]', space=smem, size = 0x4, offset = 0x4, fixed_abs, tag = 'smem constant byte address 0x4 - core index']
  #allocation1 [shape = 'u32[72,128]{1,0:T(1,128)}', space=vmem, size = 0x9000, scoped, tag = 'internal scratch']
  %s0 = inlined_call_operand.vmem [shape: bf16[800,256], index: 0, kind: input, shape index: {}]
  %s1 = inlined_call_operand.vmem [shape: bf16[256,128], index: 1, kind: input, shape index: {}]
  %s2 = inlined_call_operand.vmem [shape: f32[1,128], index: 2, kind: input, shape index: {}]
  %s3 = inlined_call_operand.vmem [shape: bf16[800,128], index: 3, kind: output, shape index: {}]
  %s4 = sld [smem:[#allocation0]]
  $region22: #{vacnn_forward.4} parent=0
    _
  %s6 = ssub.s32 1, %s4
  %s7 = scalar_select 0, %s6, %s4
  // Predicated region
  $region2: #{vacnn_forward.4} parent=0 // pred_check
    _
  $region3: #{vacnn_forward.4} parent=0 // pred_check_branch
    %9 = sbr.rel (0) target = $region5
  $region4: #{vacnn_forward.4} parent=0 // pred_region
    _
  $region5: #{vacnn_forward.4} parent=0 // pred_fallthru
    _
  // Predicated region
  $region6: #{vacnn_forward.4} parent=0 // pred_check
    _
  $region7: #{vacnn_forward.4} parent=0 // pred_check_branch
    %11 = sbr.rel (0) target = $region9
  $region8: #{vacnn_forward.4} parent=0 // pred_region
    _
  $region9: #{vacnn_forward.4} parent=0 // pred_fallthru
    _
  // Predicated region
  $region10: #{vacnn_forward.4} parent=0 // pred_check
    _
  $region11: #{vacnn_forward.4} parent=0 // pred_check_branch
    %13 = sbr.rel (0) target = $region13
  $region12: #{vacnn_forward.4} parent=0 // pred_region
    _
  $region13: #{vacnn_forward.4} parent=0 // pred_fallthru
    _
  %v14 = vld [vmem:[%s0] sm:$0xff]
  %v15 = vld [vmem:[%s0 + $0x8] sm:$0xff]
  %v16 = vld [vmem:[%s0 + $0x10] sm:$0xff]
  %v17 = vld [vmem:[%s0 + $0x18] sm:$0xff]
  %v18 = vld [vmem:[%s0 + $0x20] sm:$0xff]
  %v19 = vld [vmem:[%s0 + $0x28] sm:$0xff]
  %v20 = vld [vmem:[%s0 + $0x30] sm:$0xff]
  %v21 = vld [vmem:[%s0 + $0x38] sm:$0xff]
  %v22 = vld [vmem:[%s0 + $0x40] sm:$0xff]
  %v23 = vld [vmem:[%s0 + $0x48] sm:$0xff]
  %v24 = vld [vmem:[%s0 + $0x50] sm:$0xff]
  %v25 = vld [vmem:[%s0 + $0x58] sm:$0xff]
  %v26 = vld [vmem:[%s0 + $0x60] sm:$0xff]
  %v27 = vld [vmem:[%s0 + $0x68] sm:$0xff]
  %v28 = vld [vmem:[%s0 + $0x70] sm:$0xff]
  %v29 = vld [vmem:[%s0 + $0x78] sm:$0xff]
  %v30 = vld [vmem:[%s0 + $0x80] sm:$0xff]
  %v31 = vld [vmem:[%s0 + $0x88] sm:$0xff]
  %v32 = vld [vmem:[%s0 + $0x90] sm:$0xff]
  %v33 = vld [vmem:[%s0 + $0x98] sm:$0xff]
  %v34 = vld [vmem:[%s0 + $0xa0] sm:$0xff]
  %v35 = vld [vmem:[%s0 + $0xa8] sm:$0xff]
  %v36 = vld [vmem:[%s0 + $0xb0] sm:$0xff]
  %v37 = vld [vmem:[%s0 + $0xb8] sm:$0xff]
  %v38 = vld [vmem:[%s0 + $0xc0] sm:$0xff]
  %v39 = vld [vmem:[%s0 + $0xc8] sm:$0xff]
  %v40 = vld [vmem:[%s0 + $0xd0] sm:$0xff]
  %v41 = vld [vmem:[%s0 + $0xd8] sm:$0xff]
  %v42 = vld [vmem:[%s0 + $0xe0] sm:$0xff]
  %v43 = vld [vmem:[%s0 + $0xe8] sm:$0xff]
  %v44 = vld [vmem:[%s0 + $0xf0] sm:$0xff]
  %v45 = vld [vmem:[%s0 + $0xf8] sm:$0xff]
  %v46 = vld [vmem:[%s0 + $0x100] sm:$0xff]
  %v47 = vld [vmem:[%s0 + $0x108] sm:$0xff]
  %v48 = vld [vmem:[%s0 + $0x110] sm:$0xff]
  %v49 = vld [vmem:[%s0 + $0x118] sm:$0xff]
  %v50 = vld [vmem:[%s0 + $0x120] sm:$0xff]
  %v51 = vld [vmem:[%s0 + $0x128] sm:$0xff]
  %v52 = vld [vmem:[%s0 + $0x130] sm:$0xff]
  %v53 = vld [vmem:[%s0 + $0x138] sm:$0xff]
  %v54 = vld [vmem:[%s0 + $0x140] sm:$0xff]
  %v55 = vld [vmem:[%s0 + $0x148] sm:$0xff]
  %v56 = vld [vmem:[%s0 + $0x150] sm:$0xff]
  %v57 = vld [vmem:[%s0 + $0x158] sm:$0xff]
  %v58 = vld [vmem:[%s0 + $0x160] sm:$0xff]
  %v59 = vld [vmem:[%s0 + $0x168] sm:$0xff]
  %v60 = vld [vmem:[%s0 + $0x170] sm:$0xff]
  %v61 = vld [vmem:[%s0 + $0x178] sm:$0xff]
  %v62 = vld [vmem:[%s0 + $0x180] sm:$0xff]
  %v63 = vld [vmem:[%s0 + $0x188] sm:$0xff]
  %v64 = vld [vmem:[%s0 + $0x190] sm:$0xff]
  %v65 = vld [vmem:[%s0 + $0x198] sm:$0xff]
  %v66 = vld [vmem:[%s0 + $0x1a0] sm:$0xff]
  %v67 = vld [vmem:[%s0 + $0x1a8] sm:$0xff]
  %v68 = vld [vmem:[%s0 + $0x1b0] sm:$0xff]
  %v69 = vld [vmem:[%s0 + $0x1b8] sm:$0xff]
  %v70 = vld [vmem:[%s0 + $0x1c0] sm:$0xff]
  %v71 = vld [vmem:[%s0 + $0x1c8] sm:$0xff]
  %v72 = vld [vmem:[%s0 + $0x1d0] sm:$0xff]
  %v73 = vld [vmem:[%s0 + $0x1d8] sm:$0xff]
  %v74 = vld [vmem:[%s0 + $0x1e0] sm:$0xff]
  %v75 = vld [vmem:[%s0 + $0x1e8] sm:$0xff]
  %v76 = vld [vmem:[%s0 + $0x1f0] sm:$0xff]
  %v77 = vld [vmem:[%s0 + $0x1f8] sm:$0xff]
  %v78 = vld [vmem:[%s0 + $0x200] sm:$0xff]
  %v79 = vld [vmem:[%s0 + $0x208] sm:$0xff]
  %v80 = vld [vmem:[%s0 + $0x210] sm:$0xff]
  %v81 = vld [vmem:[%s0 + $0x218] sm:$0xff]
  %v82 = vld [vmem:[%s0 + $0x220] sm:$0xff]
  %v83 = vld [vmem:[%s0 + $0x228] sm:$0xff]
  %v84 = vld [vmem:[%s0 + $0x230] sm:$0xff]
  %v85 = vld [vmem:[%s0 + $0x238] sm:$0xff]
  %v86 = vld [vmem:[%s0 + $0x240] sm:$0xff]
  %v87 = vld [vmem:[%s0 + $0x248] sm:$0xff]
  %v88 = vld [vmem:[%s0 + $0x250] sm:$0xff]
  %v89 = vld [vmem:[%s0 + $0x258] sm:$0xff]
  %v90 = vld [vmem:[%s0 + $0x260] sm:$0xff]
  %v91 = vld [vmem:[%s0 + $0x268] sm:$0xff]
  %v92 = vld [vmem:[%s0 + $0x270] sm:$0xff]
  %v93 = vld [vmem:[%s0 + $0x278] sm:$0xff]
  %v94 = vld [vmem:[%s0 + $0x280] sm:$0xff]
  %v95 = vld [vmem:[%s0 + $0x288] sm:$0xff]
  %v96 = vld [vmem:[%s0 + $0x290] sm:$0xff]
  %v97 = vld [vmem:[%s0 + $0x298] sm:$0xff]
  %v98 = vld [vmem:[%s0 + $0x2a0] sm:$0xff]
  %v99 = vld [vmem:[%s0 + $0x2a8] sm:$0xff]
  %v100 = vld [vmem:[%s0 + $0x2b0] sm:$0xff]
  %v101 = vld [vmem:[%s0 + $0x2b8] sm:$0xff]
  %v102 = vld [vmem:[%s0 + $0x2c0] sm:$0xff]
  %v103 = vld [vmem:[%s0 + $0x2c8] sm:$0xff]
  %v104 = vld [vmem:[%s0 + $0x2d0] sm:$0xff]
  %v105 = vld [vmem:[%s0 + $0x2d8] sm:$0xff]
  %v106 = vld [vmem:[%s0 + $0x2e0] sm:$0xff]
  %v107 = vld [vmem:[%s0 + $0x2e8] sm:$0xff]
  %v108 = vld [vmem:[%s0 + $0x2f0] sm:$0xff]
  %v109 = vld [vmem:[%s0 + $0x2f8] sm:$0xff]
  %v110 = vld [vmem:[%s0 + $0x300] sm:$0xff]
  %v111 = vld [vmem:[%s0 + $0x308] sm:$0xff]
  %v112 = vld [vmem:[%s0 + $0x310] sm:$0xff]
  %v113 = vld [vmem:[%s0 + $0x318] sm:$0xff]
  %v114 = vld [vmem:[%s1] sm:$0xf]
  %v115 = vld [vmem:[%s1 + $0x4] sm:$0xf]
  %v116 = vld [vmem:[%s1 + $0x8] sm:$0xf]
  %v117 = vld [vmem:[%s1 + $0xc] sm:$0xf]
  %v118 = vld [vmem:[%s1 + $0x10] sm:$0xf]
  %v119 = vld [vmem:[%s1 + $0x14] sm:$0xf]
  %v120 = vld [vmem:[%s1 + $0x18] sm:$0xf]
  %v121 = vld [vmem:[%s1 + $0x1c] sm:$0xf]
  %v122 = vld [vmem:[%s1 + $0x20] sm:$0xf]
  %v123 = vld [vmem:[%s1 + $0x24] sm:$0xf]
  %v124 = vld [vmem:[%s1 + $0x28] sm:$0xf]
  %v125 = vld [vmem:[%s1 + $0x2c] sm:$0xf]
  %v126 = vld [vmem:[%s1 + $0x30] sm:$0xf]
  %v127 = vld [vmem:[%s1 + $0x34] sm:$0xf]
  %v128 = vld [vmem:[%s1 + $0x38] sm:$0xf]
  %v129 = vld [vmem:[%s1 + $0x3c] sm:$0xf]
  %v130 = vld [vmem:[%s1 + $0x40] sm:$0xf]
  %v131 = vld [vmem:[%s1 + $0x44] sm:$0xf]
  %v132 = vld [vmem:[%s1 + $0x48] sm:$0xf]
  %v133 = vld [vmem:[%s1 + $0x4c] sm:$0xf]
  %v134 = vld [vmem:[%s1 + $0x50] sm:$0xf]
  %v135 = vld [vmem:[%s1 + $0x54] sm:$0xf]
  %v136 = vld [vmem:[%s1 + $0x58] sm:$0xf]
  %v137 = vld [vmem:[%s1 + $0x5c] sm:$0xf]
  %v138 = vld [vmem:[%s1 + $0x60] sm:$0xf]
  %v139 = vld [vmem:[%s1 + $0x64] sm:$0xf]
  %v140 = vld [vmem:[%s1 + $0x68] sm:$0xf]
  %v141 = vld [vmem:[%s1 + $0x6c] sm:$0xf]
  %v142 = vld [vmem:[%s1 + $0x70] sm:$0xf]
  %v143 = vld [vmem:[%s1 + $0x74] sm:$0xf]
  %v144 = vld [vmem:[%s1 + $0x78] sm:$0xf]
  %v145 = vld [vmem:[%s1 + $0x7c] sm:$0xf]
  %v146 = vld [vmem:[%s2] sm:$0x1]
  %v148 = vperm.slane %v146, 0
  %v250 = vunpack.c.l.b16 %v14
  %v251 = vunpack.c.h.b16 %v14
  %v252 = vunpack.c.l.b16 %v15
  %v253 = vunpack.c.h.b16 %v15
  %v254 = vunpack.c.l.b16 %v16
  %v255 = vunpack.c.h.b16 %v16
  %v256 = vunpack.c.l.b16 %v17
  %v257 = vunpack.c.h.b16 %v17
  %v258 = vunpack.c.l.b16 %v18
  %v259 = vunpack.c.h.b16 %v18
  %v260 = vunpack.c.l.b16 %v19
  %v261 = vunpack.c.h.b16 %v19
  %v262 = vunpack.c.l.b16 %v20
  %v263 = vunpack.c.h.b16 %v20
  %v264 = vunpack.c.l.b16 %v21
  %v265 = vunpack.c.h.b16 %v21
  %v266 = vunpack.c.l.b16 %v22
  %v267 = vunpack.c.h.b16 %v22
  %v268 = vunpack.c.l.b16 %v23
  %v269 = vunpack.c.h.b16 %v23
  %v270 = vunpack.c.l.b16 %v24
  %v271 = vunpack.c.h.b16 %v24
  %v272 = vunpack.c.l.b16 %v25
  %v273 = vunpack.c.h.b16 %v25
  %v274 = vunpack.c.l.b16 %v26
  %v275 = vunpack.c.h.b16 %v26
  %v276 = vunpack.c.l.b16 %v27
  %v277 = vunpack.c.h.b16 %v27
  %v278 = vunpack.c.l.b16 %v28
  %v279 = vunpack.c.h.b16 %v28
  %v280 = vunpack.c.l.b16 %v29
  %v281 = vunpack.c.h.b16 %v29
  %v282 = vunpack.c.l.b16 %v30
  %v283 = vunpack.c.h.b16 %v30
  %v284 = vunpack.c.l.b16 %v31
  %v285 = vunpack.c.h.b16 %v31
  %v286 = vunpack.c.l.b16 %v32
  %v287 = vunpack.c.h.b16 %v32
  %v288 = vunpack.c.l.b16 %v33
  %v289 = vunpack.c.h.b16 %v33
  %v290 = vunpack.c.l.b16 %v34
  %v291 = vunpack.c.h.b16 %v34
  %v292 = vunpack.c.l.b16 %v35
  %v293 = vunpack.c.h.b16 %v35
  %v294 = vunpack.c.l.b16 %v36
  %v295 = vunpack.c.h.b16 %v36
  %v296 = vunpack.c.l.b16 %v37
  %v297 = vunpack.c.h.b16 %v37
  %v298 = vunpack.c.l.b16 %v38
  %v299 = vunpack.c.h.b16 %v38
  %v300 = vunpack.c.l.b16 %v39
  %v301 = vunpack.c.h.b16 %v39
  %v302 = vunpack.c.l.b16 %v40
  %v303 = vunpack.c.h.b16 %v40
  %v304 = vunpack.c.l.b16 %v41
  %v305 = vunpack.c.h.b16 %v41
  %v306 = vunpack.c.l.b16 %v42
  %v307 = vunpack.c.h.b16 %v42
  %v308 = vunpack.c.l.b16 %v43
  %v309 = vunpack.c.h.b16 %v43
  %v310 = vunpack.c.l.b16 %v44
  %v311 = vunpack.c.h.b16 %v44
  %v312 = vunpack.c.l.b16 %v45
  %v313 = vunpack.c.h.b16 %v45
  %v314 = vunpack.c.l.b16 %v46
  %v315 = vunpack.c.h.b16 %v46
  %v316 = vunpack.c.l.b16 %v47
  %v317 = vunpack.c.h.b16 %v47
  %v318 = vunpack.c.l.b16 %v48
  %v319 = vunpack.c.h.b16 %v48
  %v320 = vunpack.c.l.b16 %v49
  %v321 = vunpack.c.h.b16 %v49
  %v322 = vunpack.c.l.b16 %v50
  %v323 = vunpack.c.h.b16 %v50
  %v324 = vunpack.c.l.b16 %v51
  %v325 = vunpack.c.h.b16 %v51
  %v326 = vunpack.c.l.b16 %v52
  %v327 = vunpack.c.h.b16 %v52
  %v328 = vunpack.c.l.b16 %v53
  %v329 = vunpack.c.h.b16 %v53
  %v330 = vunpack.c.l.b16 %v54
  %v331 = vunpack.c.h.b16 %v54
  %v332 = vunpack.c.l.b16 %v55
  %v333 = vunpack.c.h.b16 %v55
  %v334 = vunpack.c.l.b16 %v56
  %v335 = vunpack.c.h.b16 %v56
  %v336 = vunpack.c.l.b16 %v57
  %v337 = vunpack.c.h.b16 %v57
  %v338 = vunpack.c.l.b16 %v58
  %v339 = vunpack.c.h.b16 %v58
  %v340 = vunpack.c.l.b16 %v59
  %v341 = vunpack.c.h.b16 %v59
  %v342 = vunpack.c.l.b16 %v60
  %v343 = vunpack.c.h.b16 %v60
  %v344 = vunpack.c.l.b16 %v61
  %v345 = vunpack.c.h.b16 %v61
  %v346 = vunpack.c.l.b16 %v62
  %v347 = vunpack.c.h.b16 %v62
  %v348 = vunpack.c.l.b16 %v63
  %v349 = vunpack.c.h.b16 %v63
  %v350 = vunpack.c.l.b16 %v64
  %v351 = vunpack.c.h.b16 %v64
  %v352 = vunpack.c.l.b16 %v65
  %v353 = vunpack.c.h.b16 %v65
  %v354 = vunpack.c.l.b16 %v66
  %v355 = vunpack.c.h.b16 %v66
  %v356 = vunpack.c.l.b16 %v67
  %v357 = vunpack.c.h.b16 %v67
  %v358 = vunpack.c.l.b16 %v68
  %v359 = vunpack.c.h.b16 %v68
  %v360 = vunpack.c.l.b16 %v69
  %v361 = vunpack.c.h.b16 %v69
  %v362 = vunpack.c.l.b16 %v70
  %v363 = vunpack.c.h.b16 %v70
  %v364 = vunpack.c.l.b16 %v71
  %v365 = vunpack.c.h.b16 %v71
  %v366 = vunpack.c.l.b16 %v72
  %v367 = vunpack.c.h.b16 %v72
  %v368 = vunpack.c.l.b16 %v73
  %v369 = vunpack.c.h.b16 %v73
  %v370 = vunpack.c.l.b16 %v74
  %v371 = vunpack.c.h.b16 %v74
  %v372 = vunpack.c.l.b16 %v75
  %v373 = vunpack.c.h.b16 %v75
  %v374 = vunpack.c.l.b16 %v76
  %v375 = vunpack.c.h.b16 %v76
  %v376 = vunpack.c.l.b16 %v77
  %v377 = vunpack.c.h.b16 %v77
  %v378 = vunpack.c.l.b16 %v78
  %v379 = vunpack.c.h.b16 %v78
  %v380 = vunpack.c.l.b16 %v79
  %v381 = vunpack.c.h.b16 %v79
  %v382 = vunpack.c.l.b16 %v80
  %v383 = vunpack.c.h.b16 %v80
  %v384 = vunpack.c.l.b16 %v81
  %v385 = vunpack.c.h.b16 %v81
  %v386 = vunpack.c.l.b16 %v82
  %v387 = vunpack.c.h.b16 %v82
  %v388 = vunpack.c.l.b16 %v83
  %v389 = vunpack.c.h.b16 %v83
  %v390 = vunpack.c.l.b16 %v84
  %v391 = vunpack.c.h.b16 %v84
  %v392 = vunpack.c.l.b16 %v85
  %v393 = vunpack.c.h.b16 %v85
  %v394 = vunpack.c.l.b16 %v86
  %v395 = vunpack.c.h.b16 %v86
  %v396 = vunpack.c.l.b16 %v87
  %v397 = vunpack.c.h.b16 %v87
  %v398 = vunpack.c.l.b16 %v88
  %v399 = vunpack.c.h.b16 %v88
  %v400 = vunpack.c.l.b16 %v89
  %v401 = vunpack.c.h.b16 %v89
  %v402 = vunpack.c.l.b16 %v90
  %v403 = vunpack.c.h.b16 %v90
  %v404 = vunpack.c.l.b16 %v91
  %v405 = vunpack.c.h.b16 %v91
  %v406 = vunpack.c.l.b16 %v92
  %v407 = vunpack.c.h.b16 %v92
  %v408 = vunpack.c.l.b16 %v93
  %v409 = vunpack.c.h.b16 %v93
  %v410 = vunpack.c.l.b16 %v94
  %v411 = vunpack.c.h.b16 %v94
  %v412 = vunpack.c.l.b16 %v95
  %v413 = vunpack.c.h.b16 %v95
  %v414 = vunpack.c.l.b16 %v96
  %v415 = vunpack.c.h.b16 %v96
  %v416 = vunpack.c.l.b16 %v97
  %v417 = vunpack.c.h.b16 %v97
  %v418 = vunpack.c.l.b16 %v98
  %v419 = vunpack.c.h.b16 %v98
  %v420 = vunpack.c.l.b16 %v99
  %v421 = vunpack.c.h.b16 %v99
  %v422 = vunpack.c.l.b16 %v100
  %v423 = vunpack.c.h.b16 %v100
  %v424 = vunpack.c.l.b16 %v101
  %v425 = vunpack.c.h.b16 %v101
  %v426 = vunpack.c.l.b16 %v102
  %v427 = vunpack.c.h.b16 %v102
  %v428 = vunpack.c.l.b16 %v103
  %v429 = vunpack.c.h.b16 %v103
  %v430 = vunpack.c.l.b16 %v104
  %v431 = vunpack.c.h.b16 %v104
  %v432 = vunpack.c.l.b16 %v105
  %v433 = vunpack.c.h.b16 %v105
  %v434 = vunpack.c.l.b16 %v106
  %v435 = vunpack.c.h.b16 %v106
  %v436 = vunpack.c.l.b16 %v107
  %v437 = vunpack.c.h.b16 %v107
  %v438 = vunpack.c.l.b16 %v108
  %v439 = vunpack.c.h.b16 %v108
  %v440 = vunpack.c.l.b16 %v109
  %v441 = vunpack.c.h.b16 %v109
  %v442 = vunpack.c.l.b16 %v110
  %v443 = vunpack.c.h.b16 %v110
  %v444 = vunpack.c.l.b16 %v111
  %v445 = vunpack.c.h.b16 %v111
  %v446 = vunpack.c.l.b16 %v112
  %v447 = vunpack.c.h.b16 %v112
  %v448 = vunpack.c.l.b16 %v113
  %v449 = vunpack.c.h.b16 %v113
  %v450 = vpack.c.b16 %v252, %v250
  %v451 = vpack.c.b16 %v253, %v251
  %v452 = vpack.c.b16 %v256, %v254
  %v453 = vpack.c.b16 %v257, %v255
  %v454 = vpack.c.b16 %v260, %v258
  %v455 = vpack.c.b16 %v261, %v259
  %v456 = vpack.c.b16 %v264, %v262
  %v457 = vpack.c.b16 %v265, %v263
  %v458 = vpack.c.b16 %v268, %v266
  %v459 = vpack.c.b16 %v269, %v267
  %v460 = vpack.c.b16 %v272, %v270
  %v461 = vpack.c.b16 %v273, %v271
  %v462 = vpack.c.b16 %v276, %v274
  %v463 = vpack.c.b16 %v277, %v275
  %v464 = vpack.c.b16 %v280, %v278
  %v465 = vpack.c.b16 %v281, %v279
  %v466 = vpack.c.b16 %v284, %v282
  %v467 = vpack.c.b16 %v285, %v283
  %v468 = vpack.c.b16 %v288, %v286
  %v469 = vpack.c.b16 %v289, %v287
  %v470 = vpack.c.b16 %v292, %v290
  %v471 = vpack.c.b16 %v293, %v291
  %v472 = vpack.c.b16 %v296, %v294
  %v473 = vpack.c.b16 %v297, %v295
  %v474 = vpack.c.b16 %v300, %v298
  %v475 = vpack.c.b16 %v301, %v299
  %v476 = vpack.c.b16 %v304, %v302
  %v477 = vpack.c.b16 %v305, %v303
  %v478 = vpack.c.b16 %v308, %v306
  %v479 = vpack.c.b16 %v309, %v307
  %v480 = vpack.c.b16 %v312, %v310
  %v481 = vpack.c.b16 %v313, %v311
  %v482 = vpack.c.b16 %v316, %v314
  %v483 = vpack.c.b16 %v317, %v315
  %v484 = vpack.c.b16 %v320, %v318
  %v485 = vpack.c.b16 %v321, %v319
  %v486 = vpack.c.b16 %v324, %v322
  %v487 = vpack.c.b16 %v325, %v323
  %v488 = vpack.c.b16 %v328, %v326
  %v489 = vpack.c.b16 %v329, %v327
  %v490 = vpack.c.b16 %v332, %v330
  %v491 = vpack.c.b16 %v333, %v331
  %v492 = vpack.c.b16 %v336, %v334
  %v493 = vpack.c.b16 %v337, %v335
  %v494 = vpack.c.b16 %v340, %v338
  %v495 = vpack.c.b16 %v341, %v339
  %v496 = vpack.c.b16 %v344, %v342
  %v497 = vpack.c.b16 %v345, %v343
  %v498 = vpack.c.b16 %v348, %v346
  %v499 = vpack.c.b16 %v349, %v347
  %v500 = vpack.c.b16 %v352, %v350
  %v501 = vpack.c.b16 %v353, %v351
  %v502 = vpack.c.b16 %v356, %v354
  %v503 = vpack.c.b16 %v357, %v355
  %v504 = vpack.c.b16 %v360, %v358
  %v505 = vpack.c.b16 %v361, %v359
  %v506 = vpack.c.b16 %v364, %v362
  %v507 = vpack.c.b16 %v365, %v363
  %v508 = vpack.c.b16 %v368, %v366
  %v509 = vpack.c.b16 %v369, %v367
  %v510 = vpack.c.b16 %v372, %v370
  %v511 = vpack.c.b16 %v373, %v371
  %v512 = vpack.c.b16 %v376, %v374
  %v513 = vpack.c.b16 %v377, %v375
  %v514 = vpack.c.b16 %v380, %v378
  %v515 = vpack.c.b16 %v381, %v379
  %v516 = vpack.c.b16 %v384, %v382
  %v517 = vpack.c.b16 %v385, %v383
  %v518 = vpack.c.b16 %v388, %v386
  %v519 = vpack.c.b16 %v389, %v387
  %v520 = vpack.c.b16 %v392, %v390
  %v521 = vpack.c.b16 %v393, %v391
  %v522 = vpack.c.b16 %v396, %v394
  %v523 = vpack.c.b16 %v397, %v395
  %v524 = vpack.c.b16 %v400, %v398
  %v525 = vpack.c.b16 %v401, %v399
  %v526 = vpack.c.b16 %v404, %v402
  %v527 = vpack.c.b16 %v405, %v403
  %v528 = vpack.c.b16 %v408, %v406
  %v529 = vpack.c.b16 %v409, %v407
  %v530 = vpack.c.b16 %v412, %v410
  %v531 = vpack.c.b16 %v413, %v411
  %v532 = vpack.c.b16 %v416, %v414
  %v533 = vpack.c.b16 %v417, %v415
  %v534 = vpack.c.b16 %v420, %v418
  %v535 = vpack.c.b16 %v421, %v419
  %v536 = vpack.c.b16 %v424, %v422
  %v537 = vpack.c.b16 %v425, %v423
  %v538 = vpack.c.b16 %v428, %v426
  %v539 = vpack.c.b16 %v429, %v427
  %v540 = vpack.c.b16 %v432, %v430
  %v541 = vpack.c.b16 %v433, %v431
  %v542 = vpack.c.b16 %v436, %v434
  %v543 = vpack.c.b16 %v437, %v435
  %v544 = vpack.c.b16 %v440, %v438
  %v545 = vpack.c.b16 %v441, %v439
  %v546 = vpack.c.b16 %v444, %v442
  %v547 = vpack.c.b16 %v445, %v443
  %v548 = vpack.c.b16 %v448, %v446
  %v549 = vpack.c.b16 %v449, %v447
  %v682 = vunpack.c.l.b16 %v114
  %v683 = vunpack.c.l.b16 %v115
  %v684 = vunpack.c.l.b16 %v116
  %v685 = vunpack.c.l.b16 %v117
  %v686 = vunpack.c.l.b16 %v118
  %v687 = vunpack.c.l.b16 %v119
  %v688 = vunpack.c.l.b16 %v120
  %v689 = vunpack.c.l.b16 %v121
  %v690 = vunpack.c.l.b16 %v122
  %v691 = vunpack.c.l.b16 %v123
  %v692 = vunpack.c.l.b16 %v124
  %v693 = vunpack.c.l.b16 %v125
  %v694 = vunpack.c.l.b16 %v126
  %v695 = vunpack.c.l.b16 %v127
  %v696 = vunpack.c.l.b16 %v128
  %v697 = vunpack.c.l.b16 %v129
  %v698 = vunpack.c.l.b16 %v130
  %v699 = vunpack.c.l.b16 %v131
  %v700 = vunpack.c.l.b16 %v132
  %v701 = vunpack.c.l.b16 %v133
  %v702 = vunpack.c.l.b16 %v134
  %v703 = vunpack.c.l.b16 %v135
  %v704 = vunpack.c.l.b16 %v136
  %v705 = vunpack.c.l.b16 %v137
  %v706 = vunpack.c.l.b16 %v138
  %v707 = vunpack.c.l.b16 %v139
  %v708 = vunpack.c.l.b16 %v140
  %v709 = vunpack.c.l.b16 %v141
  %v710 = vunpack.c.l.b16 %v142
  %v711 = vunpack.c.l.b16 %v143
  %v712 = vunpack.c.l.b16 %v144
  %v713 = vunpack.c.l.b16 %v145
  %v714 = vpack.c.b16 %v683, %v682
  %v715 = vpack.c.b16 %v685, %v684
  %v716 = vpack.c.b16 %v687, %v686
  %v717 = vpack.c.b16 %v689, %v688
  %v718 = vpack.c.b16 %v691, %v690
  %v719 = vpack.c.b16 %v693, %v692
  %v720 = vpack.c.b16 %v695, %v694
  %v721 = vpack.c.b16 %v697, %v696
  %v722 = vpack.c.b16 %v699, %v698
  %v723 = vpack.c.b16 %v701, %v700
  %v724 = vpack.c.b16 %v703, %v702
  %v725 = vpack.c.b16 %v705, %v704
  %v726 = vpack.c.b16 %v707, %v706
  %v727 = vpack.c.b16 %v709, %v708
  %v728 = vpack.c.b16 %v711, %v710
  %v729 = vpack.c.b16 %v713, %v712
  %746 = vmatpush.bf16.msra.mxu0 %v721
  %747 = vmatpush.bf16.msra.mxu0 %v720
  %748 = vmatpush.bf16.msra.mxu0 %v719
  %749 = vmatpush.bf16.msra.mxu0 %v718
  %750 = vmatpush.bf16.msra.mxu0 %v717
  %751 = vmatpush.bf16.msra.mxu0 %v716
  %752 = vmatpush.bf16.msra.mxu0 %v715
  %753 = vmatpush.bf16.msra.mxu0 %v714
  %754 = vmatmul.bf16.gmra.mxu0 %v450
  %v755 = vpop.f32.mrf.mxu0
  %v756 = vadd.f32 %v148, %v755
  %v757 = vpop.f32.mrf.mxu0
  %v758 = vadd.f32 %v148, %v757
  %759 = vmatmul.bf16.gmra.mxu0 %v452
  %v760 = vpop.f32.mrf.mxu0
  %v761 = vadd.f32 %v148, %v760
  %v762 = vpop.f32.mrf.mxu0
  %v763 = vadd.f32 %v148, %v762
  %764 = vmatmul.bf16.gmra.mxu0 %v454
  %v765 = vpop.f32.mrf.mxu0
  %v766 = vadd.f32 %v148, %v765
  %v767 = vpop.f32.mrf.mxu0
  %v768 = vadd.f32 %v148, %v767
  %769 = vmatmul.bf16.gmra.mxu0 %v456
  %v770 = vpop.f32.mrf.mxu0
  %v771 = vadd.f32 %v148, %v770
  %v772 = vpop.f32.mrf.mxu0
  %v773 = vadd.f32 %v148, %v772
  %774 = vmatmul.bf16.gmra.mxu0 %v458
  %v775 = vpop.f32.mrf.mxu0
  %v776 = vadd.f32 %v148, %v775
  %v777 = vpop.f32.mrf.mxu0
  %v778 = vadd.f32 %v148, %v777
  %779 = vmatmul.bf16.gmra.mxu0 %v460
  %v780 = vpop.f32.mrf.mxu0
  %v781 = vadd.f32 %v148, %v780
  %v782 = vpop.f32.mrf.mxu0
  %v783 = vadd.f32 %v148, %v782
  %784 = vmatmul.bf16.gmra.mxu0 %v462
  %v785 = vpop.f32.mrf.mxu0
  %v786 = vadd.f32 %v148, %v785
  %v787 = vpop.f32.mrf.mxu0
  %v788 = vadd.f32 %v148, %v787
  %789 = vmatmul.bf16.gmra.mxu0 %v464
  %v790 = vpop.f32.mrf.mxu0
  %v791 = vadd.f32 %v148, %v790
  %v792 = vpop.f32.mrf.mxu0
  %v793 = vadd.f32 %v148, %v792
  %794 = vmatmul.bf16.gmra.mxu0 %v466
  %v795 = vpop.f32.mrf.mxu0
  %v796 = vadd.f32 %v148, %v795
  %v797 = vpop.f32.mrf.mxu0
  %v798 = vadd.f32 %v148, %v797
  %799 = vmatmul.bf16.gmra.mxu0 %v468
  %v800 = vpop.f32.mrf.mxu0
  %v801 = vadd.f32 %v148, %v800
  %v802 = vpop.f32.mrf.mxu0
  %v803 = vadd.f32 %v148, %v802
  %804 = vmatmul.bf16.gmra.mxu0 %v470
  %v805 = vpop.f32.mrf.mxu0
  %v806 = vadd.f32 %v148, %v805
  %v807 = vpop.f32.mrf.mxu0
  %v808 = vadd.f32 %v148, %v807
  %809 = vmatmul.bf16.gmra.mxu0 %v472
  %v810 = vpop.f32.mrf.mxu0
  %v811 = vadd.f32 %v148, %v810
  %v812 = vpop.f32.mrf.mxu0
  %v813 = vadd.f32 %v148, %v812
  %814 = vmatmul.bf16.gmra.mxu0 %v474
  %v815 = vpop.f32.mrf.mxu0
  %v816 = vadd.f32 %v148, %v815
  %v817 = vpop.f32.mrf.mxu0
  %v818 = vadd.f32 %v148, %v817
  %819 = vmatmul.bf16.gmra.mxu0 %v476
  %v820 = vpop.f32.mrf.mxu0
  %v821 = vadd.f32 %v148, %v820
  %v822 = vpop.f32.mrf.mxu0
  %v823 = vadd.f32 %v148, %v822
  %824 = vmatmul.bf16.gmra.mxu0 %v478
  %v825 = vpop.f32.mrf.mxu0
  %v826 = vadd.f32 %v148, %v825
  %v827 = vpop.f32.mrf.mxu0
  %v828 = vadd.f32 %v148, %v827
  %829 = vmatmul.bf16.gmra.mxu0 %v480
  %v830 = vpop.f32.mrf.mxu0
  %v831 = vadd.f32 %v148, %v830
  %v832 = vpop.f32.mrf.mxu0
  %v833 = vadd.f32 %v148, %v832
  %834 = vmatmul.bf16.gmra.mxu0 %v482
  %v835 = vpop.f32.mrf.mxu0
  %v836 = vadd.f32 %v148, %v835
  %v837 = vpop.f32.mrf.mxu0
  %v838 = vadd.f32 %v148, %v837
  %839 = vmatmul.bf16.gmra.mxu0 %v484
  %v840 = vpop.f32.mrf.mxu0
  %v841 = vadd.f32 %v148, %v840
  %v842 = vpop.f32.mrf.mxu0
  %v843 = vadd.f32 %v148, %v842
  %844 = vmatmul.bf16.gmra.mxu0 %v486
  %v845 = vpop.f32.mrf.mxu0
  %v846 = vadd.f32 %v148, %v845
  %v847 = vpop.f32.mrf.mxu0
  %v848 = vadd.f32 %v148, %v847
  %849 = vmatmul.bf16.gmra.mxu0 %v488
  %v850 = vpop.f32.mrf.mxu0
  %v851 = vadd.f32 %v148, %v850
  %v852 = vpop.f32.mrf.mxu0
  %v853 = vadd.f32 %v148, %v852
  %854 = vmatmul.bf16.gmra.mxu0 %v490
  %v855 = vpop.f32.mrf.mxu0
  %v856 = vadd.f32 %v148, %v855
  %v857 = vpop.f32.mrf.mxu0
  %v858 = vadd.f32 %v148, %v857
  %859 = vmatmul.bf16.gmra.mxu0 %v492
  %v860 = vpop.f32.mrf.mxu0
  %v861 = vadd.f32 %v148, %v860
  %v862 = vpop.f32.mrf.mxu0
  %v863 = vadd.f32 %v148, %v862
  %864 = vmatmul.bf16.gmra.mxu0 %v494
  %v865 = vpop.f32.mrf.mxu0
  %v866 = vadd.f32 %v148, %v865
  %v867 = vpop.f32.mrf.mxu0
  %v868 = vadd.f32 %v148, %v867
  %869 = vmatmul.bf16.gmra.mxu0 %v496
  %v870 = vpop.f32.mrf.mxu0
  %v871 = vadd.f32 %v148, %v870
  %v872 = vpop.f32.mrf.mxu0
  %v873 = vadd.f32 %v148, %v872
  %874 = vmatmul.bf16.gmra.mxu0 %v498
  %v875 = vpop.f32.mrf.mxu0
  %v876 = vadd.f32 %v148, %v875
  %v877 = vpop.f32.mrf.mxu0
  %v878 = vadd.f32 %v148, %v877
  %879 = vmatmul.bf16.gmra.mxu0 %v500
  %v880 = vpop.f32.mrf.mxu0
  %v881 = vadd.f32 %v148, %v880
  %v882 = vpop.f32.mrf.mxu0
  %v883 = vadd.f32 %v148, %v882
  %884 = vmatmul.bf16.gmra.mxu0 %v502
  %v885 = vpop.f32.mrf.mxu0
  %v886 = vadd.f32 %v148, %v885
  %v887 = vpop.f32.mrf.mxu0
  %v888 = vadd.f32 %v148, %v887
  %889 = vmatmul.bf16.gmra.mxu0 %v504
  %v890 = vpop.f32.mrf.mxu0
  %v891 = vadd.f32 %v148, %v890
  %v892 = vpop.f32.mrf.mxu0
  %v893 = vadd.f32 %v148, %v892
  %894 = vmatmul.bf16.gmra.mxu0 %v506
  %v895 = vpop.f32.mrf.mxu0
  %v896 = vadd.f32 %v148, %v895
  %v897 = vpop.f32.mrf.mxu0
  %v898 = vadd.f32 %v148, %v897
  %899 = vmatmul.bf16.gmra.mxu0 %v508
  %v900 = vpop.f32.mrf.mxu0
  %v901 = vadd.f32 %v148, %v900
  %v902 = vpop.f32.mrf.mxu0
  %v903 = vadd.f32 %v148, %v902
  %904 = vmatmul.bf16.gmra.mxu0 %v510
  %v905 = vpop.f32.mrf.mxu0
  %v906 = vadd.f32 %v148, %v905
  %v907 = vpop.f32.mrf.mxu0
  %v908 = vadd.f32 %v148, %v907
  %909 = vmatmul.bf16.gmra.mxu0 %v512
  %v910 = vpop.f32.mrf.mxu0
  %v911 = vadd.f32 %v148, %v910
  %v912 = vpop.f32.mrf.mxu0
  %v913 = vadd.f32 %v148, %v912
  %914 = vmatmul.bf16.gmra.mxu0 %v514
  %v915 = vpop.f32.mrf.mxu0
  %v916 = vadd.f32 %v148, %v915
  %v917 = vpop.f32.mrf.mxu0
  %v918 = vadd.f32 %v148, %v917
  %919 = vmatmul.bf16.gmra.mxu0 %v516
  %v920 = vpop.f32.mrf.mxu0
  %v921 = vadd.f32 %v148, %v920
  %v922 = vpop.f32.mrf.mxu0
  %v923 = vadd.f32 %v148, %v922
  %924 = vmatmul.bf16.gmra.mxu0 %v518
  %v925 = vpop.f32.mrf.mxu0
  %v926 = vadd.f32 %v148, %v925
  %v927 = vpop.f32.mrf.mxu0
  %v928 = vadd.f32 %v148, %v927
  %929 = vmatmul.bf16.gmra.mxu0 %v520
  %v930 = vpop.f32.mrf.mxu0
  %v931 = vadd.f32 %v148, %v930
  %v932 = vpop.f32.mrf.mxu0
  %v933 = vadd.f32 %v148, %v932
  %934 = vmatmul.bf16.gmra.mxu0 %v522
  %v935 = vpop.f32.mrf.mxu0
  %v936 = vadd.f32 %v148, %v935
  %v937 = vpop.f32.mrf.mxu0
  %v938 = vadd.f32 %v148, %v937
  %939 = vmatmul.bf16.gmra.mxu0 %v524
  %v940 = vpop.f32.mrf.mxu0
  %v941 = vadd.f32 %v148, %v940
  %v942 = vpop.f32.mrf.mxu0
  %v943 = vadd.f32 %v148, %v942
  %944 = vmatmul.bf16.gmra.mxu0 %v526
  %v945 = vpop.f32.mrf.mxu0
  %v946 = vadd.f32 %v148, %v945
  %v947 = vpop.f32.mrf.mxu0
  %v948 = vadd.f32 %v148, %v947
  %949 = vmatmul.bf16.gmra.mxu0 %v528
  %v950 = vpop.f32.mrf.mxu0
  %v951 = vadd.f32 %v148, %v950
  %v952 = vpop.f32.mrf.mxu0
  %v953 = vadd.f32 %v148, %v952
  %954 = vmatmul.bf16.gmra.mxu0 %v530
  %v955 = vpop.f32.mrf.mxu0
  %v956 = vadd.f32 %v148, %v955
  %v957 = vpop.f32.mrf.mxu0
  %v958 = vadd.f32 %v148, %v957
  %959 = vmatmul.bf16.gmra.mxu0 %v532
  %v960 = vpop.f32.mrf.mxu0
  %v961 = vadd.f32 %v148, %v960
  %v962 = vpop.f32.mrf.mxu0
  %v963 = vadd.f32 %v148, %v962
  %964 = vmatmul.bf16.gmra.mxu0 %v534
  %v965 = vpop.f32.mrf.mxu0
  %v966 = vadd.f32 %v148, %v965
  %v967 = vpop.f32.mrf.mxu0
  %v968 = vadd.f32 %v148, %v967
  %969 = vmatmul.bf16.gmra.mxu0 %v536
  %v970 = vpop.f32.mrf.mxu0
  %v971 = vadd.f32 %v148, %v970
  %v972 = vpop.f32.mrf.mxu0
  %v973 = vadd.f32 %v148, %v972
  %974 = vmatmul.bf16.gmra.mxu0 %v538
  %v975 = vpop.f32.mrf.mxu0
  %v976 = vadd.f32 %v148, %v975
  %v977 = vpop.f32.mrf.mxu0
  %v978 = vadd.f32 %v148, %v977
  %979 = vmatmul.bf16.gmra.mxu0 %v540
  %v980 = vpop.f32.mrf.mxu0
  %v981 = vadd.f32 %v148, %v980
  %v982 = vpop.f32.mrf.mxu0
  %v983 = vadd.f32 %v148, %v982
  %984 = vmatmul.bf16.gmra.mxu0 %v542
  %v985 = vpop.f32.mrf.mxu0
  %v986 = vadd.f32 %v148, %v985
  %v987 = vpop.f32.mrf.mxu0
  %v988 = vadd.f32 %v148, %v987
  %989 = vmatmul.bf16.gmra.mxu0 %v544
  %v990 = vpop.f32.mrf.mxu0
  %v991 = vadd.f32 %v148, %v990
  %v992 = vpop.f32.mrf.mxu0
  %v993 = vadd.f32 %v148, %v992
  %994 = vmatmul.bf16.gmra.mxu0 %v546
  %v995 = vpop.f32.mrf.mxu0
  %v996 = vadd.f32 %v148, %v995
  %v997 = vpop.f32.mrf.mxu0
  %v998 = vadd.f32 %v148, %v997
  %999 = vmatmul.bf16.gmra.mxu0 %v548
  %v1000 = vpop.f32.mrf.mxu0
  %v1001 = vadd.f32 %v148, %v1000
  %v1002 = vpop.f32.mrf.mxu0
  %v1003 = vadd.f32 %v148, %v1002
  %1004 = vdwg.mxu0
  %1005 = vmatpush.bf16.msra.mxu0 %v729
  %1006 = vmatpush.bf16.msra.mxu0 %v728
  %1007 = vmatpush.bf16.msra.mxu0 %v727
  %1008 = vmatpush.bf16.msra.mxu0 %v726
  %1009 = vmatpush.bf16.msra.mxu0 %v725
  %1010 = vmatpush.bf16.msra.mxu0 %v724
  %1011 = vmatpush.bf16.msra.mxu0 %v723
  %1012 = vmatpush.bf16.msra.mxu0 %v722
  %1013 = vmatmul.bf16.gmra.mxu0 %v451
  %v1014 = vpop.f32.mrf.mxu0
  %v1015 = vadd.f32 %v756, %v1014
  %v1016 = vpop.f32.mrf.mxu0
  %v1017 = vadd.f32 %v758, %v1016
  %1018 = vmatmul.bf16.gmra.mxu0 %v453
  %v1019 = vpop.f32.mrf.mxu0
  %v1020 = vadd.f32 %v761, %v1019
  %v1021 = vpop.f32.mrf.mxu0
  %v1022 = vadd.f32 %v763, %v1021
  %1023 = vmatmul.bf16.gmra.mxu0 %v455
  %v1024 = vpop.f32.mrf.mxu0
  %v1025 = vadd.f32 %v766, %v1024
  %v1026 = vpop.f32.mrf.mxu0
  %v1027 = vadd.f32 %v768, %v1026
  %1028 = vmatmul.bf16.gmra.mxu0 %v457
  %v1029 = vpop.f32.mrf.mxu0
  %v1030 = vadd.f32 %v771, %v1029
  %v1031 = vpop.f32.mrf.mxu0
  %v1032 = vadd.f32 %v773, %v1031
  %1033 = vmatmul.bf16.gmra.mxu0 %v459
  %v1034 = vpop.f32.mrf.mxu0
  %v1035 = vadd.f32 %v776, %v1034
  %v1036 = vpop.f32.mrf.mxu0
  %v1037 = vadd.f32 %v778, %v1036
  %1038 = vmatmul.bf16.gmra.mxu0 %v461
  %v1039 = vpop.f32.mrf.mxu0
  %v1040 = vadd.f32 %v781, %v1039
  %v1041 = vpop.f32.mrf.mxu0
  %v1042 = vadd.f32 %v783, %v1041
  %1043 = vmatmul.bf16.gmra.mxu0 %v463
  %v1044 = vpop.f32.mrf.mxu0
  %v1045 = vadd.f32 %v786, %v1044
  %v1046 = vpop.f32.mrf.mxu0
  %v1047 = vadd.f32 %v788, %v1046
  %1048 = vmatmul.bf16.gmra.mxu0 %v465
  %v1049 = vpop.f32.mrf.mxu0
  %v1050 = vadd.f32 %v791, %v1049
  %v1051 = vpop.f32.mrf.mxu0
  %v1052 = vadd.f32 %v793, %v1051
  %1053 = vmatmul.bf16.gmra.mxu0 %v467
  %v1054 = vpop.f32.mrf.mxu0
  %v1055 = vadd.f32 %v796, %v1054
  %v1056 = vpop.f32.mrf.mxu0
  %v1057 = vadd.f32 %v798, %v1056
  %1058 = vmatmul.bf16.gmra.mxu0 %v469
  %v1059 = vpop.f32.mrf.mxu0
  %v1060 = vadd.f32 %v801, %v1059
  %v1061 = vpop.f32.mrf.mxu0
  %v1062 = vadd.f32 %v803, %v1061
  %1063 = vmatmul.bf16.gmra.mxu0 %v471
  %v1064 = vpop.f32.mrf.mxu0
  %v1065 = vadd.f32 %v806, %v1064
  %v1066 = vpop.f32.mrf.mxu0
  %v1067 = vadd.f32 %v808, %v1066
  %1068 = vmatmul.bf16.gmra.mxu0 %v473
  %v1069 = vpop.f32.mrf.mxu0
  %v1070 = vadd.f32 %v811, %v1069
  %v1071 = vpop.f32.mrf.mxu0
  %v1072 = vadd.f32 %v813, %v1071
  %1073 = vmatmul.bf16.gmra.mxu0 %v475
  %v1074 = vpop.f32.mrf.mxu0
  %v1075 = vadd.f32 %v816, %v1074
  %v1076 = vpop.f32.mrf.mxu0
  %v1077 = vadd.f32 %v818, %v1076
  %1078 = vmatmul.bf16.gmra.mxu0 %v477
  %v1079 = vpop.f32.mrf.mxu0
  %v1080 = vadd.f32 %v821, %v1079
  %v1081 = vpop.f32.mrf.mxu0
  %v1082 = vadd.f32 %v823, %v1081
  %1083 = vmatmul.bf16.gmra.mxu0 %v479
  %v1084 = vpop.f32.mrf.mxu0
  %v1085 = vadd.f32 %v826, %v1084
  %v1086 = vpop.f32.mrf.mxu0
  %v1087 = vadd.f32 %v828, %v1086
  %1088 = vmatmul.bf16.gmra.mxu0 %v481
  %v1089 = vpop.f32.mrf.mxu0
  %v1090 = vadd.f32 %v831, %v1089
  %v1091 = vpop.f32.mrf.mxu0
  %v1092 = vadd.f32 %v833, %v1091
  %1093 = vmatmul.bf16.gmra.mxu0 %v483
  %v1094 = vpop.f32.mrf.mxu0
  %v1095 = vadd.f32 %v836, %v1094
  %v1096 = vpop.f32.mrf.mxu0
  %v1097 = vadd.f32 %v838, %v1096
  %1098 = vmatmul.bf16.gmra.mxu0 %v485
  %v1099 = vpop.f32.mrf.mxu0
  %v1100 = vadd.f32 %v841, %v1099
  %v1101 = vpop.f32.mrf.mxu0
  %v1102 = vadd.f32 %v843, %v1101
  %1103 = vmatmul.bf16.gmra.mxu0 %v487
  %v1104 = vpop.f32.mrf.mxu0
  %v1105 = vadd.f32 %v846, %v1104
  %v1106 = vpop.f32.mrf.mxu0
  %v1107 = vadd.f32 %v848, %v1106
  %1108 = vmatmul.bf16.gmra.mxu0 %v489
  %v1109 = vpop.f32.mrf.mxu0
  %v1110 = vadd.f32 %v851, %v1109
  %v1111 = vpop.f32.mrf.mxu0
  %v1112 = vadd.f32 %v853, %v1111
  %1113 = vmatmul.bf16.gmra.mxu0 %v491
  %v1114 = vpop.f32.mrf.mxu0
  %v1115 = vadd.f32 %v856, %v1114
  %v1116 = vpop.f32.mrf.mxu0
  %v1117 = vadd.f32 %v858, %v1116
  %1118 = vmatmul.bf16.gmra.mxu0 %v493
  %v1119 = vpop.f32.mrf.mxu0
  %v1120 = vadd.f32 %v861, %v1119
  %v1121 = vpop.f32.mrf.mxu0
  %v1122 = vadd.f32 %v863, %v1121
  %1123 = vmatmul.bf16.gmra.mxu0 %v495
  %v1124 = vpop.f32.mrf.mxu0
  %v1125 = vadd.f32 %v866, %v1124
  %v1126 = vpop.f32.mrf.mxu0
  %v1127 = vadd.f32 %v868, %v1126
  %1128 = vmatmul.bf16.gmra.mxu0 %v497
  %v1129 = vpop.f32.mrf.mxu0
  %v1130 = vadd.f32 %v871, %v1129
  %v1131 = vpop.f32.mrf.mxu0
  %v1132 = vadd.f32 %v873, %v1131
  %1133 = vmatmul.bf16.gmra.mxu0 %v499
  %v1134 = vpop.f32.mrf.mxu0
  %v1135 = vadd.f32 %v876, %v1134
  %v1136 = vpop.f32.mrf.mxu0
  %v1137 = vadd.f32 %v878, %v1136
  %1138 = vmatmul.bf16.gmra.mxu0 %v501
  %v1139 = vpop.f32.mrf.mxu0
  %v1140 = vadd.f32 %v881, %v1139
  %v1141 = vpop.f32.mrf.mxu0
  %v1142 = vadd.f32 %v883, %v1141
  %1143 = vmatmul.bf16.gmra.mxu0 %v503
  %v1144 = vpop.f32.mrf.mxu0
  %v1145 = vadd.f32 %v886, %v1144
  %v1146 = vpop.f32.mrf.mxu0
  %v1147 = vadd.f32 %v888, %v1146
  %1148 = vmatmul.bf16.gmra.mxu0 %v505
  %v1149 = vpop.f32.mrf.mxu0
  %v1150 = vadd.f32 %v891, %v1149
  %v1151 = vpop.f32.mrf.mxu0
  %v1152 = vadd.f32 %v893, %v1151
  %1153 = vmatmul.bf16.gmra.mxu0 %v507
  %v1154 = vpop.f32.mrf.mxu0
  %v1155 = vadd.f32 %v896, %v1154
  %v1156 = vpop.f32.mrf.mxu0
  %v1157 = vadd.f32 %v898, %v1156
  %1158 = vmatmul.bf16.gmra.mxu0 %v509
  %v1159 = vpop.f32.mrf.mxu0
  %v1160 = vadd.f32 %v901, %v1159
  %v1161 = vpop.f32.mrf.mxu0
  %v1162 = vadd.f32 %v903, %v1161
  %1163 = vmatmul.bf16.gmra.mxu0 %v511
  %v1164 = vpop.f32.mrf.mxu0
  %v1165 = vadd.f32 %v906, %v1164
  %v1166 = vpop.f32.mrf.mxu0
  %v1167 = vadd.f32 %v908, %v1166
  %1168 = vmatmul.bf16.gmra.mxu0 %v513
  %v1169 = vpop.f32.mrf.mxu0
  %v1170 = vadd.f32 %v911, %v1169
  %v1171 = vpop.f32.mrf.mxu0
  %v1172 = vadd.f32 %v913, %v1171
  %1173 = vmatmul.bf16.gmra.mxu0 %v515
  %v1174 = vpop.f32.mrf.mxu0
  %v1175 = vadd.f32 %v916, %v1174
  %v1176 = vpop.f32.mrf.mxu0
  %v1177 = vadd.f32 %v918, %v1176
  %1178 = vmatmul.bf16.gmra.mxu0 %v517
  %v1179 = vpop.f32.mrf.mxu0
  %v1180 = vadd.f32 %v921, %v1179
  %v1181 = vpop.f32.mrf.mxu0
  %v1182 = vadd.f32 %v923, %v1181
  %1183 = vmatmul.bf16.gmra.mxu0 %v519
  %v1184 = vpop.f32.mrf.mxu0
  %v1185 = vadd.f32 %v926, %v1184
  %v1186 = vpop.f32.mrf.mxu0
  %v1187 = vadd.f32 %v928, %v1186
  %1188 = vmatmul.bf16.gmra.mxu0 %v521
  %v1189 = vpop.f32.mrf.mxu0
  %v1190 = vadd.f32 %v931, %v1189
  %v1191 = vpop.f32.mrf.mxu0
  %v1192 = vadd.f32 %v933, %v1191
  %1193 = vmatmul.bf16.gmra.mxu0 %v523
  %v1194 = vpop.f32.mrf.mxu0
  %v1195 = vadd.f32 %v936, %v1194
  %v1196 = vpop.f32.mrf.mxu0
  %v1197 = vadd.f32 %v938, %v1196
  %1198 = vmatmul.bf16.gmra.mxu0 %v525
  %v1199 = vpop.f32.mrf.mxu0
  %v1200 = vadd.f32 %v941, %v1199
  %v1201 = vpop.f32.mrf.mxu0
  %v1202 = vadd.f32 %v943, %v1201
  %1203 = vmatmul.bf16.gmra.mxu0 %v527
  %v1204 = vpop.f32.mrf.mxu0
  %v1205 = vadd.f32 %v946, %v1204
  %v1206 = vpop.f32.mrf.mxu0
  %v1207 = vadd.f32 %v948, %v1206
  %1208 = vmatmul.bf16.gmra.mxu0 %v529
  %v1209 = vpop.f32.mrf.mxu0
  %v1210 = vadd.f32 %v951, %v1209
  %v1211 = vpop.f32.mrf.mxu0
  %v1212 = vadd.f32 %v953, %v1211
  %1213 = vmatmul.bf16.gmra.mxu0 %v531
  %v1214 = vpop.f32.mrf.mxu0
  %v1215 = vadd.f32 %v956, %v1214
  %v1216 = vpop.f32.mrf.mxu0
  %v1217 = vadd.f32 %v958, %v1216
  %1218 = vmatmul.bf16.gmra.mxu0 %v533
  %v1219 = vpop.f32.mrf.mxu0
  %v1220 = vadd.f32 %v961, %v1219
  %v1221 = vpop.f32.mrf.mxu0
  %v1222 = vadd.f32 %v963, %v1221
  %1223 = vmatmul.bf16.gmra.mxu0 %v535
  %v1224 = vpop.f32.mrf.mxu0
  %v1225 = vadd.f32 %v966, %v1224
  %v1226 = vpop.f32.mrf.mxu0
  %v1227 = vadd.f32 %v968, %v1226
  %1228 = vmatmul.bf16.gmra.mxu0 %v537
  %v1229 = vpop.f32.mrf.mxu0
  %v1230 = vadd.f32 %v971, %v1229
  %v1231 = vpop.f32.mrf.mxu0
  %v1232 = vadd.f32 %v973, %v1231
  %1233 = vmatmul.bf16.gmra.mxu0 %v539
  %v1234 = vpop.f32.mrf.mxu0
  %v1235 = vadd.f32 %v976, %v1234
  %v1236 = vpop.f32.mrf.mxu0
  %v1237 = vadd.f32 %v978, %v1236
  %1238 = vmatmul.bf16.gmra.mxu0 %v541
  %v1239 = vpop.f32.mrf.mxu0
  %v1240 = vadd.f32 %v981, %v1239
  %v1241 = vpop.f32.mrf.mxu0
  %v1242 = vadd.f32 %v983, %v1241
  %1243 = vmatmul.bf16.gmra.mxu0 %v543
  %v1244 = vpop.f32.mrf.mxu0
  %v1245 = vadd.f32 %v986, %v1244
  %v1246 = vpop.f32.mrf.mxu0
  %v1247 = vadd.f32 %v988, %v1246
  %1248 = vmatmul.bf16.gmra.mxu0 %v545
  %v1249 = vpop.f32.mrf.mxu0
  %v1250 = vadd.f32 %v991, %v1249
  %v1251 = vpop.f32.mrf.mxu0
  %v1252 = vadd.f32 %v993, %v1251
  %1253 = vmatmul.bf16.gmra.mxu0 %v547
  %v1254 = vpop.f32.mrf.mxu0
  %v1255 = vadd.f32 %v996, %v1254
  %v1256 = vpop.f32.mrf.mxu0
  %v1257 = vadd.f32 %v998, %v1256
  %1258 = vmatmul.bf16.gmra.mxu0 %v549
  %v1259 = vpop.f32.mrf.mxu0
  %v1260 = vadd.f32 %v1001, %v1259
  %v1261 = vpop.f32.mrf.mxu0
  %v1262 = vadd.f32 %v1003, %v1261
  %1263 = vdwg.mxu0
  %v1264 = vmax.f32 %v1015, 0.0
  %v1265 = vmax.f32 %v1017, 0.0
  %v1266 = vmax.f32 %v1020, 0.0
  %v1267 = vmax.f32 %v1022, 0.0
  %v1268 = vmax.f32 %v1025, 0.0
  %v1269 = vmax.f32 %v1027, 0.0
  %v1270 = vmax.f32 %v1030, 0.0
  %v1271 = vmax.f32 %v1032, 0.0
  %v1272 = vmax.f32 %v1035, 0.0
  %v1273 = vmax.f32 %v1037, 0.0
  %v1274 = vmax.f32 %v1040, 0.0
  %v1275 = vmax.f32 %v1042, 0.0
  %v1276 = vmax.f32 %v1045, 0.0
  %v1277 = vmax.f32 %v1047, 0.0
  %v1278 = vmax.f32 %v1050, 0.0
  %v1279 = vmax.f32 %v1052, 0.0
  %v1280 = vmax.f32 %v1055, 0.0
  %v1281 = vmax.f32 %v1057, 0.0
  %v1282 = vmax.f32 %v1060, 0.0
  %v1283 = vmax.f32 %v1062, 0.0
  %v1284 = vmax.f32 %v1065, 0.0
  %v1285 = vmax.f32 %v1067, 0.0
  %v1286 = vmax.f32 %v1070, 0.0
  %v1287 = vmax.f32 %v1072, 0.0
  %v1288 = vmax.f32 %v1075, 0.0
  %v1289 = vmax.f32 %v1077, 0.0
  %v1290 = vmax.f32 %v1080, 0.0
  %v1291 = vmax.f32 %v1082, 0.0
  %v1292 = vmax.f32 %v1085, 0.0
  %v1293 = vmax.f32 %v1087, 0.0
  %v1294 = vmax.f32 %v1090, 0.0
  %v1295 = vmax.f32 %v1092, 0.0
  %v1296 = vmax.f32 %v1095, 0.0
  %v1297 = vmax.f32 %v1097, 0.0
  %v1298 = vmax.f32 %v1100, 0.0
  %v1299 = vmax.f32 %v1102, 0.0
  %v1300 = vmax.f32 %v1105, 0.0
  %v1301 = vmax.f32 %v1107, 0.0
  %v1302 = vmax.f32 %v1110, 0.0
  %v1303 = vmax.f32 %v1112, 0.0
  %v1304 = vmax.f32 %v1115, 0.0
  %v1305 = vmax.f32 %v1117, 0.0
  %v1306 = vmax.f32 %v1120, 0.0
  %v1307 = vmax.f32 %v1122, 0.0
  %v1308 = vmax.f32 %v1125, 0.0
  %v1309 = vmax.f32 %v1127, 0.0
  %v1310 = vmax.f32 %v1130, 0.0
  %v1311 = vmax.f32 %v1132, 0.0
  %v1312 = vmax.f32 %v1135, 0.0
  %v1313 = vmax.f32 %v1137, 0.0
  %v1314 = vmax.f32 %v1140, 0.0
  %v1315 = vmax.f32 %v1142, 0.0
  %v1316 = vmax.f32 %v1145, 0.0
  %v1317 = vmax.f32 %v1147, 0.0
  %v1318 = vmax.f32 %v1150, 0.0
  %v1319 = vmax.f32 %v1152, 0.0
  %v1320 = vmax.f32 %v1155, 0.0
  %v1321 = vmax.f32 %v1157, 0.0
  %v1322 = vmax.f32 %v1160, 0.0
  %v1323 = vmax.f32 %v1162, 0.0
  %v1324 = vmax.f32 %v1165, 0.0
  %v1325 = vmax.f32 %v1167, 0.0
  %v1326 = vmax.f32 %v1170, 0.0
  %v1327 = vmax.f32 %v1172, 0.0
  %v1328 = vmax.f32 %v1175, 0.0
  %v1329 = vmax.f32 %v1177, 0.0
  %v1330 = vmax.f32 %v1180, 0.0
  %v1331 = vmax.f32 %v1182, 0.0
  %v1332 = vmax.f32 %v1185, 0.0
  %v1333 = vmax.f32 %v1187, 0.0
  %v1334 = vmax.f32 %v1190, 0.0
  %v1335 = vmax.f32 %v1192, 0.0
  %v1336 = vmax.f32 %v1195, 0.0
  %v1337 = vmax.f32 %v1197, 0.0
  %v1338 = vmax.f32 %v1200, 0.0
  %v1339 = vmax.f32 %v1202, 0.0
  %v1340 = vmax.f32 %v1205, 0.0
  %v1341 = vmax.f32 %v1207, 0.0
  %v1342 = vmax.f32 %v1210, 0.0
  %v1343 = vmax.f32 %v1212, 0.0
  %v1344 = vmax.f32 %v1215, 0.0
  %v1345 = vmax.f32 %v1217, 0.0
  %v1346 = vmax.f32 %v1220, 0.0
  %v1347 = vmax.f32 %v1222, 0.0
  %v1348 = vmax.f32 %v1225, 0.0
  %v1349 = vmax.f32 %v1227, 0.0
  %v1350 = vmax.f32 %v1230, 0.0
  %v1351 = vmax.f32 %v1232, 0.0
  %v1352 = vmax.f32 %v1235, 0.0
  %v1353 = vmax.f32 %v1237, 0.0
  %v1354 = vmax.f32 %v1240, 0.0
  %v1355 = vmax.f32 %v1242, 0.0
  %v1356 = vmax.f32 %v1245, 0.0
  %v1357 = vmax.f32 %v1247, 0.0
  %v1358 = vmax.f32 %v1250, 0.0
  %v1359 = vmax.f32 %v1252, 0.0
  %v1360 = vmax.f32 %v1255, 0.0
  %v1361 = vmax.f32 %v1257, 0.0
  %v1362 = vmax.f32 %v1260, 0.0
  %v1363 = vmax.f32 %v1262, 0.0
  %v1364 = vpack.c.bf16 %v1264, %v1264
  %v1365 = vpack.c.bf16 %v1265, %v1265
  %v1366 = vpack.c.bf16 %v1266, %v1266
  %v1367 = vpack.c.bf16 %v1267, %v1267
  %v1368 = vpack.c.bf16 %v1268, %v1268
  %v1369 = vpack.c.bf16 %v1269, %v1269
  %v1370 = vpack.c.bf16 %v1270, %v1270
  %v1371 = vpack.c.bf16 %v1271, %v1271
  %v1372 = vpack.c.bf16 %v1272, %v1272
  %v1373 = vpack.c.bf16 %v1273, %v1273
  %v1374 = vpack.c.bf16 %v1274, %v1274
  %v1375 = vpack.c.bf16 %v1275, %v1275
  %v1376 = vpack.c.bf16 %v1276, %v1276
  %v1377 = vpack.c.bf16 %v1277, %v1277
  %v1378 = vpack.c.bf16 %v1278, %v1278
  %v1379 = vpack.c.bf16 %v1279, %v1279
  %v1380 = vpack.c.bf16 %v1280, %v1280
  %v1381 = vpack.c.bf16 %v1281, %v1281
  %v1382 = vpack.c.bf16 %v1282, %v1282
  %v1383 = vpack.c.bf16 %v1283, %v1283
  %v1384 = vpack.c.bf16 %v1284, %v1284
  %v1385 = vpack.c.bf16 %v1285, %v1285
  %v1386 = vpack.c.bf16 %v1286, %v1286
  %v1387 = vpack.c.bf16 %v1287, %v1287
  %v1388 = vpack.c.bf16 %v1288, %v1288
  %v1389 = vpack.c.bf16 %v1289, %v1289
  %v1390 = vpack.c.bf16 %v1290, %v1290
  %v1391 = vpack.c.bf16 %v1291, %v1291
  %v1392 = vpack.c.bf16 %v1292, %v1292
  %v1393 = vpack.c.bf16 %v1293, %v1293
  %v1394 = vpack.c.bf16 %v1294, %v1294
  %v1395 = vpack.c.bf16 %v1295, %v1295
  %v1396 = vpack.c.bf16 %v1296, %v1296
  %v1397 = vpack.c.bf16 %v1297, %v1297
  %v1398 = vpack.c.bf16 %v1298, %v1298
  %v1399 = vpack.c.bf16 %v1299, %v1299
  %v1400 = vpack.c.bf16 %v1300, %v1300
  %v1401 = vpack.c.bf16 %v1301, %v1301
  %v1402 = vpack.c.bf16 %v1302, %v1302
  %v1403 = vpack.c.bf16 %v1303, %v1303
  %v1404 = vpack.c.bf16 %v1304, %v1304
  %v1405 = vpack.c.bf16 %v1305, %v1305
  %v1406 = vpack.c.bf16 %v1306, %v1306
  %v1407 = vpack.c.bf16 %v1307, %v1307
  %v1408 = vpack.c.bf16 %v1308, %v1308
  %v1409 = vpack.c.bf16 %v1309, %v1309
  %v1410 = vpack.c.bf16 %v1310, %v1310
  %v1411 = vpack.c.bf16 %v1311, %v1311
  %v1412 = vpack.c.bf16 %v1312, %v1312
  %v1413 = vpack.c.bf16 %v1313, %v1313
  %v1414 = vpack.c.bf16 %v1314, %v1314
  %v1415 = vpack.c.bf16 %v1315, %v1315
  %v1416 = vpack.c.bf16 %v1316, %v1316
  %v1417 = vpack.c.bf16 %v1317, %v1317
  %v1418 = vpack.c.bf16 %v1318, %v1318
  %v1419 = vpack.c.bf16 %v1319, %v1319
  %v1420 = vpack.c.bf16 %v1320, %v1320
  %v1421 = vpack.c.bf16 %v1321, %v1321
  %v1422 = vpack.c.bf16 %v1322, %v1322
  %v1423 = vpack.c.bf16 %v1323, %v1323
  %v1424 = vpack.c.bf16 %v1324, %v1324
  %v1425 = vpack.c.bf16 %v1325, %v1325
  %v1426 = vpack.c.bf16 %v1326, %v1326
  %v1427 = vpack.c.bf16 %v1327, %v1327
  %v1428 = vpack.c.bf16 %v1328, %v1328
  %v1429 = vpack.c.bf16 %v1329, %v1329
  %v1430 = vpack.c.bf16 %v1330, %v1330
  %v1431 = vpack.c.bf16 %v1331, %v1331
  %v1432 = vpack.c.bf16 %v1332, %v1332
  %v1433 = vpack.c.bf16 %v1333, %v1333
  %v1434 = vpack.c.bf16 %v1334, %v1334
  %v1435 = vpack.c.bf16 %v1335, %v1335
  %v1436 = vpack.c.bf16 %v1336, %v1336
  %v1437 = vpack.c.bf16 %v1337, %v1337
  %v1438 = vpack.c.bf16 %v1338, %v1338
  %v1439 = vpack.c.bf16 %v1339, %v1339
  %v1440 = vpack.c.bf16 %v1340, %v1340
  %v1441 = vpack.c.bf16 %v1341, %v1341
  %v1442 = vpack.c.bf16 %v1342, %v1342
  %v1443 = vpack.c.bf16 %v1343, %v1343
  %v1444 = vpack.c.bf16 %v1344, %v1344
  %v1445 = vpack.c.bf16 %v1345, %v1345
  %v1446 = vpack.c.bf16 %v1346, %v1346
  %v1447 = vpack.c.bf16 %v1347, %v1347
  %v1448 = vpack.c.bf16 %v1348, %v1348
  %v1449 = vpack.c.bf16 %v1349, %v1349
  %v1450 = vpack.c.bf16 %v1350, %v1350
  %v1451 = vpack.c.bf16 %v1351, %v1351
  %v1452 = vpack.c.bf16 %v1352, %v1352
  %v1453 = vpack.c.bf16 %v1353, %v1353
  %v1454 = vpack.c.bf16 %v1354, %v1354
  %v1455 = vpack.c.bf16 %v1355, %v1355
  %v1456 = vpack.c.bf16 %v1356, %v1356
  %v1457 = vpack.c.bf16 %v1357, %v1357
  %v1458 = vpack.c.bf16 %v1358, %v1358
  %v1459 = vpack.c.bf16 %v1359, %v1359
  %v1460 = vpack.c.bf16 %v1360, %v1360
  %v1461 = vpack.c.bf16 %v1361, %v1361
  %v1462 = vpack.c.bf16 %v1362, %v1362
  %v1463 = vpack.c.bf16 %v1363, %v1363
  %1464 = vst [vmem:[%s3] sm:$0xf] %v1364
  %1465 = vst [vmem:[%s3 + $0x4] sm:$0xf] %v1365
  %1466 = vst [vmem:[%s3 + $0x8] sm:$0xf] %v1366
  %1467 = vst [vmem:[%s3 + $0xc] sm:$0xf] %v1367
  %1468 = vst [vmem:[%s3 + $0x10] sm:$0xf] %v1368
  %1469 = vst [vmem:[%s3 + $0x14] sm:$0xf] %v1369
  %1470 = vst [vmem:[%s3 + $0x18] sm:$0xf] %v1370
  %1471 = vst [vmem:[%s3 + $0x1c] sm:$0xf] %v1371
  %1472 = vst [vmem:[%s3 + $0x20] sm:$0xf] %v1372
  %1473 = vst [vmem:[%s3 + $0x24] sm:$0xf] %v1373
  %1474 = vst [vmem:[%s3 + $0x28] sm:$0xf] %v1374
  %1475 = vst [vmem:[%s3 + $0x2c] sm:$0xf] %v1375
  %1476 = vst [vmem:[%s3 + $0x30] sm:$0xf] %v1376
  %1477 = vst [vmem:[%s3 + $0x34] sm:$0xf] %v1377
  %1478 = vst [vmem:[%s3 + $0x38] sm:$0xf] %v1378
  %1479 = vst [vmem:[%s3 + $0x3c] sm:$0xf] %v1379
  %1480 = vst [vmem:[%s3 + $0x40] sm:$0xf] %v1380
  %1481 = vst [vmem:[%s3 + $0x44] sm:$0xf] %v1381
  %1482 = vst [vmem:[%s3 + $0x48] sm:$0xf] %v1382
  %1483 = vst [vmem:[%s3 + $0x4c] sm:$0xf] %v1383
  %1484 = vst [vmem:[%s3 + $0x50] sm:$0xf] %v1384
  %1485 = vst [vmem:[%s3 + $0x54] sm:$0xf] %v1385
  %1486 = vst [vmem:[%s3 + $0x58] sm:$0xf] %v1386
  %1487 = vst [vmem:[%s3 + $0x5c] sm:$0xf] %v1387
  %1488 = vst [vmem:[%s3 + $0x60] sm:$0xf] %v1388
  %1489 = vst [vmem:[%s3 + $0x64] sm:$0xf] %v1389
  %1490 = vst [vmem:[%s3 + $0x68] sm:$0xf] %v1390
  %1491 = vst [vmem:[%s3 + $0x6c] sm:$0xf] %v1391
  %1492 = vst [vmem:[%s3 + $0x70] sm:$0xf] %v1392
  %1493 = vst [vmem:[%s3 + $0x74] sm:$0xf] %v1393
  %1494 = vst [vmem:[%s3 + $0x78] sm:$0xf] %v1394
  %1495 = vst [vmem:[%s3 + $0x7c] sm:$0xf] %v1395
  %1496 = vst [vmem:[%s3 + $0x80] sm:$0xf] %v1396
  %1497 = vst [vmem:[%s3 + $0x84] sm:$0xf] %v1397
  %1498 = vst [vmem:[%s3 + $0x88] sm:$0xf] %v1398
  %1499 = vst [vmem:[%s3 + $0x8c] sm:$0xf] %v1399
  %1500 = vst [vmem:[%s3 + $0x90] sm:$0xf] %v1400
  %1501 = vst [vmem:[%s3 + $0x94] sm:$0xf] %v1401
  %1502 = vst [vmem:[%s3 + $0x98] sm:$0xf] %v1402
  %1503 = vst [vmem:[%s3 + $0x9c] sm:$0xf] %v1403
  %1504 = vst [vmem:[%s3 + $0xa0] sm:$0xf] %v1404
  %1505 = vst [vmem:[%s3 + $0xa4] sm:$0xf] %v1405
  %1506 = vst [vmem:[%s3 + $0xa8] sm:$0xf] %v1406
  %1507 = vst [vmem:[%s3 + $0xac] sm:$0xf] %v1407
  %1508 = vst [vmem:[%s3 + $0xb0] sm:$0xf] %v1408
  %1509 = vst [vmem:[%s3 + $0xb4] sm:$0xf] %v1409
  %1510 = vst [vmem:[%s3 + $0xb8] sm:$0xf] %v1410
  %1511 = vst [vmem:[%s3 + $0xbc] sm:$0xf] %v1411
  %1512 = vst [vmem:[%s3 + $0xc0] sm:$0xf] %v1412
  %1513 = vst [vmem:[%s3 + $0xc4] sm:$0xf] %v1413
  %1514 = vst [vmem:[%s3 + $0xc8] sm:$0xf] %v1414
  %1515 = vst [vmem:[%s3 + $0xcc] sm:$0xf] %v1415
  %1516 = vst [vmem:[%s3 + $0xd0] sm:$0xf] %v1416
  %1517 = vst [vmem:[%s3 + $0xd4] sm:$0xf] %v1417
  %1518 = vst [vmem:[%s3 + $0xd8] sm:$0xf] %v1418
  %1519 = vst [vmem:[%s3 + $0xdc] sm:$0xf] %v1419
  %1520 = vst [vmem:[%s3 + $0xe0] sm:$0xf] %v1420
  %1521 = vst [vmem:[%s3 + $0xe4] sm:$0xf] %v1421
  %1522 = vst [vmem:[%s3 + $0xe8] sm:$0xf] %v1422
  %1523 = vst [vmem:[%s3 + $0xec] sm:$0xf] %v1423
  %1524 = vst [vmem:[%s3 + $0xf0] sm:$0xf] %v1424
  %1525 = vst [vmem:[%s3 + $0xf4] sm:$0xf] %v1425
  %1526 = vst [vmem:[%s3 + $0xf8] sm:$0xf] %v1426
  %1527 = vst [vmem:[%s3 + $0xfc] sm:$0xf] %v1427
  %1528 = vst [vmem:[%s3 + $0x100] sm:$0xf] %v1428
  %1529 = vst [vmem:[%s3 + $0x104] sm:$0xf] %v1429
  %1530 = vst [vmem:[%s3 + $0x108] sm:$0xf] %v1430
  %1531 = vst [vmem:[%s3 + $0x10c] sm:$0xf] %v1431
  %1532 = vst [vmem:[%s3 + $0x110] sm:$0xf] %v1432
  %1533 = vst [vmem:[%s3 + $0x114] sm:$0xf] %v1433
  %1534 = vst [vmem:[%s3 + $0x118] sm:$0xf] %v1434
  %1535 = vst [vmem:[%s3 + $0x11c] sm:$0xf] %v1435
  %1536 = vst [vmem:[%s3 + $0x120] sm:$0xf] %v1436
  %1537 = vst [vmem:[%s3 + $0x124] sm:$0xf] %v1437
  %1538 = vst [vmem:[%s3 + $0x128] sm:$0xf] %v1438
  %1539 = vst [vmem:[%s3 + $0x12c] sm:$0xf] %v1439
  %1540 = vst [vmem:[%s3 + $0x130] sm:$0xf] %v1440
  %1541 = vst [vmem:[%s3 + $0x134] sm:$0xf] %v1441
  %1542 = vst [vmem:[%s3 + $0x138] sm:$0xf] %v1442
  %1543 = vst [vmem:[%s3 + $0x13c] sm:$0xf] %v1443
  %1544 = vst [vmem:[%s3 + $0x140] sm:$0xf] %v1444
  %1545 = vst [vmem:[%s3 + $0x144] sm:$0xf] %v1445
  %1546 = vst [vmem:[%s3 + $0x148] sm:$0xf] %v1446
  %1547 = vst [vmem:[%s3 + $0x14c] sm:$0xf] %v1447
  %1548 = vst [vmem:[%s3 + $0x150] sm:$0xf] %v1448
  %1549 = vst [vmem:[%s3 + $0x154] sm:$0xf] %v1449
  %1550 = vst [vmem:[%s3 + $0x158] sm:$0xf] %v1450
  %1551 = vst [vmem:[%s3 + $0x15c] sm:$0xf] %v1451
  %1552 = vst [vmem:[%s3 + $0x160] sm:$0xf] %v1452
  %1553 = vst [vmem:[%s3 + $0x164] sm:$0xf] %v1453
  %1554 = vst [vmem:[%s3 + $0x168] sm:$0xf] %v1454
  %1555 = vst [vmem:[%s3 + $0x16c] sm:$0xf] %v1455
  %1556 = vst [vmem:[%s3 + $0x170] sm:$0xf] %v1456
  %1557 = vst [vmem:[%s3 + $0x174] sm:$0xf] %v1457
  %1558 = vst [vmem:[%s3 + $0x178] sm:$0xf] %v1458
  %1559 = vst [vmem:[%s3 + $0x17c] sm:$0xf] %v1459
  %1560 = vst [vmem:[%s3 + $0x180] sm:$0xf] %v1460
  %1561 = vst [vmem:[%s3 + $0x184] sm:$0xf] %v1461
  %1562 = vst [vmem:[%s3 + $0x188] sm:$0xf] %v1462
  %1563 = vst [vmem:[%s3 + $0x18c] sm:$0xf] %v1463
  // Predicated region
  $region14: #{vacnn_forward.4} parent=0 // pred_check
    _
  $region15: #{vacnn_forward.4} parent=0 // pred_check_branch
    %1565 = sbr.rel (0) target = $region17
  $region16: #{vacnn_forward.4} parent=0 // pred_region
    _
  $region17: #{vacnn_forward.4} parent=0 // pred_fallthru
    _
  // Predicated region
  $region18: #{vacnn_forward.4} parent=0 // pred_check
    _
  $region19: #{vacnn_forward.4} parent=0 // pred_check_branch
    %1567 = sbr.rel (0) target = $region21
  $region20: #{vacnn_forward.4} parent=0 // pred_region
    _
  $region21: #{vacnn_forward.4} parent=0 // pred_fallthru
    _

// kernel: vacnn_forward.5
$region0: #{vacnn_forward.5}
  #allocation0 [shape = 'u32[]', space=smem, size = 0x4, offset = 0x4, fixed_abs, tag = 'smem constant byte address 0x4 - core index']
  #allocation1 [shape = 'u32[72,128]{1,0:T(1,128)}', space=vmem, size = 0x9000, scoped, tag = 'internal scratch']
  %s0 = inlined_call_operand.vmem [shape: bf16[168,512], index: 0, kind: input, shape index: {}]
  %s1 = inlined_call_operand.vmem [shape: bf16[512,128], index: 1, kind: input, shape index: {}]
  %s2 = inlined_call_operand.vmem [shape: f32[1,128], index: 2, kind: input, shape index: {}]
  %s3 = inlined_call_operand.vmem [shape: bf16[168,128], index: 3, kind: output, shape index: {}]
  %s4 = sld [smem:[#allocation0]]
  $region22: #{vacnn_forward.5} parent=0
    _
  %s6 = ssub.s32 1, %s4
  %s7 = scalar_select 0, %s6, %s4
  // Predicated region
  $region2: #{vacnn_forward.5} parent=0 // pred_check
    _
  $region3: #{vacnn_forward.5} parent=0 // pred_check_branch
    %9 = sbr.rel (0) target = $region5
  $region4: #{vacnn_forward.5} parent=0 // pred_region
    _
  $region5: #{vacnn_forward.5} parent=0 // pred_fallthru
    _
  // Predicated region
  $region6: #{vacnn_forward.5} parent=0 // pred_check
    _
  $region7: #{vacnn_forward.5} parent=0 // pred_check_branch
    %11 = sbr.rel (0) target = $region9
  $region8: #{vacnn_forward.5} parent=0 // pred_region
    _
  $region9: #{vacnn_forward.5} parent=0 // pred_fallthru
    _
  // Predicated region
  $region10: #{vacnn_forward.5} parent=0 // pred_check
    _
  $region11: #{vacnn_forward.5} parent=0 // pred_check_branch
    %13 = sbr.rel (0) target = $region13
  $region12: #{vacnn_forward.5} parent=0 // pred_region
    _
  $region13: #{vacnn_forward.5} parent=0 // pred_fallthru
    _
  %v14 = vld [vmem:[%s0] sm:$0xff]
  %v15 = vld [vmem:[%s0 + $0x8] sm:$0xff]
  %v16 = vld [vmem:[%s0 + $0x10] sm:$0xff]
  %v17 = vld [vmem:[%s0 + $0x18] sm:$0xff]
  %v18 = vld [vmem:[%s0 + $0x20] sm:$0xff]
  %v19 = vld [vmem:[%s0 + $0x28] sm:$0xff]
  %v20 = vld [vmem:[%s0 + $0x30] sm:$0xff]
  %v21 = vld [vmem:[%s0 + $0x38] sm:$0xff]
  %v22 = vld [vmem:[%s0 + $0x40] sm:$0xff]
  %v23 = vld [vmem:[%s0 + $0x48] sm:$0xff]
  %v24 = vld [vmem:[%s0 + $0x50] sm:$0xff]
  %v25 = vld [vmem:[%s0 + $0x58] sm:$0xff]
  %v26 = vld [vmem:[%s0 + $0x60] sm:$0xff]
  %v27 = vld [vmem:[%s0 + $0x68] sm:$0xff]
  %v28 = vld [vmem:[%s0 + $0x70] sm:$0xff]
  %v29 = vld [vmem:[%s0 + $0x78] sm:$0xff]
  %v30 = vld [vmem:[%s0 + $0x80] sm:$0xff]
  %v31 = vld [vmem:[%s0 + $0x88] sm:$0xff]
  %v32 = vld [vmem:[%s0 + $0x90] sm:$0xff]
  %v33 = vld [vmem:[%s0 + $0x98] sm:$0xff]
  %v34 = vld [vmem:[%s0 + $0xa0] sm:$0xff]
  %v35 = vld [vmem:[%s0 + $0xa8] sm:$0xff]
  %v36 = vld [vmem:[%s0 + $0xb0] sm:$0xff]
  %v37 = vld [vmem:[%s0 + $0xb8] sm:$0xff]
  %v38 = vld [vmem:[%s0 + $0xc0] sm:$0xff]
  %v39 = vld [vmem:[%s0 + $0xc8] sm:$0xff]
  %v40 = vld [vmem:[%s0 + $0xd0] sm:$0xff]
  %v41 = vld [vmem:[%s0 + $0xd8] sm:$0xff]
  %v42 = vld [vmem:[%s0 + $0xe0] sm:$0xff]
  %v43 = vld [vmem:[%s0 + $0xe8] sm:$0xff]
  %v44 = vld [vmem:[%s0 + $0xf0] sm:$0xff]
  %v45 = vld [vmem:[%s0 + $0xf8] sm:$0xff]
  %v46 = vld [vmem:[%s0 + $0x100] sm:$0xff]
  %v47 = vld [vmem:[%s0 + $0x108] sm:$0xff]
  %v48 = vld [vmem:[%s0 + $0x110] sm:$0xff]
  %v49 = vld [vmem:[%s0 + $0x118] sm:$0xff]
  %v50 = vld [vmem:[%s0 + $0x120] sm:$0xff]
  %v51 = vld [vmem:[%s0 + $0x128] sm:$0xff]
  %v52 = vld [vmem:[%s0 + $0x130] sm:$0xff]
  %v53 = vld [vmem:[%s0 + $0x138] sm:$0xff]
  %v54 = vld [vmem:[%s0 + $0x140] sm:$0xff]
  %v55 = vld [vmem:[%s0 + $0x148] sm:$0xff]
  %v56 = vld [vmem:[%s1] sm:$0xf]
  %v57 = vld [vmem:[%s1 + $0x4] sm:$0xf]
  %v58 = vld [vmem:[%s1 + $0x8] sm:$0xf]
  %v59 = vld [vmem:[%s1 + $0xc] sm:$0xf]
  %v60 = vld [vmem:[%s1 + $0x10] sm:$0xf]
  %v61 = vld [vmem:[%s1 + $0x14] sm:$0xf]
  %v62 = vld [vmem:[%s1 + $0x18] sm:$0xf]
  %v63 = vld [vmem:[%s1 + $0x1c] sm:$0xf]
  %v64 = vld [vmem:[%s1 + $0x20] sm:$0xf]
  %v65 = vld [vmem:[%s1 + $0x24] sm:$0xf]
  %v66 = vld [vmem:[%s1 + $0x28] sm:$0xf]
  %v67 = vld [vmem:[%s1 + $0x2c] sm:$0xf]
  %v68 = vld [vmem:[%s1 + $0x30] sm:$0xf]
  %v69 = vld [vmem:[%s1 + $0x34] sm:$0xf]
  %v70 = vld [vmem:[%s1 + $0x38] sm:$0xf]
  %v71 = vld [vmem:[%s1 + $0x3c] sm:$0xf]
  %v72 = vld [vmem:[%s1 + $0x40] sm:$0xf]
  %v73 = vld [vmem:[%s1 + $0x44] sm:$0xf]
  %v74 = vld [vmem:[%s1 + $0x48] sm:$0xf]
  %v75 = vld [vmem:[%s1 + $0x4c] sm:$0xf]
  %v76 = vld [vmem:[%s1 + $0x50] sm:$0xf]
  %v77 = vld [vmem:[%s1 + $0x54] sm:$0xf]
  %v78 = vld [vmem:[%s1 + $0x58] sm:$0xf]
  %v79 = vld [vmem:[%s1 + $0x5c] sm:$0xf]
  %v80 = vld [vmem:[%s1 + $0x60] sm:$0xf]
  %v81 = vld [vmem:[%s1 + $0x64] sm:$0xf]
  %v82 = vld [vmem:[%s1 + $0x68] sm:$0xf]
  %v83 = vld [vmem:[%s1 + $0x6c] sm:$0xf]
  %v84 = vld [vmem:[%s1 + $0x70] sm:$0xf]
  %v85 = vld [vmem:[%s1 + $0x74] sm:$0xf]
  %v86 = vld [vmem:[%s1 + $0x78] sm:$0xf]
  %v87 = vld [vmem:[%s1 + $0x7c] sm:$0xf]
  %v88 = vld [vmem:[%s1 + $0x80] sm:$0xf]
  %v89 = vld [vmem:[%s1 + $0x84] sm:$0xf]
  %v90 = vld [vmem:[%s1 + $0x88] sm:$0xf]
  %v91 = vld [vmem:[%s1 + $0x8c] sm:$0xf]
  %v92 = vld [vmem:[%s1 + $0x90] sm:$0xf]
  %v93 = vld [vmem:[%s1 + $0x94] sm:$0xf]
  %v94 = vld [vmem:[%s1 + $0x98] sm:$0xf]
  %v95 = vld [vmem:[%s1 + $0x9c] sm:$0xf]
  %v96 = vld [vmem:[%s1 + $0xa0] sm:$0xf]
  %v97 = vld [vmem:[%s1 + $0xa4] sm:$0xf]
  %v98 = vld [vmem:[%s1 + $0xa8] sm:$0xf]
  %v99 = vld [vmem:[%s1 + $0xac] sm:$0xf]
  %v100 = vld [vmem:[%s1 + $0xb0] sm:$0xf]
  %v101 = vld [vmem:[%s1 + $0xb4] sm:$0xf]
  %v102 = vld [vmem:[%s1 + $0xb8] sm:$0xf]
  %v103 = vld [vmem:[%s1 + $0xbc] sm:$0xf]
  %v104 = vld [vmem:[%s1 + $0xc0] sm:$0xf]
  %v105 = vld [vmem:[%s1 + $0xc4] sm:$0xf]
  %v106 = vld [vmem:[%s1 + $0xc8] sm:$0xf]
  %v107 = vld [vmem:[%s1 + $0xcc] sm:$0xf]
  %v108 = vld [vmem:[%s1 + $0xd0] sm:$0xf]
  %v109 = vld [vmem:[%s1 + $0xd4] sm:$0xf]
  %v110 = vld [vmem:[%s1 + $0xd8] sm:$0xf]
  %v111 = vld [vmem:[%s1 + $0xdc] sm:$0xf]
  %v112 = vld [vmem:[%s1 + $0xe0] sm:$0xf]
  %v113 = vld [vmem:[%s1 + $0xe4] sm:$0xf]
  %v114 = vld [vmem:[%s1 + $0xe8] sm:$0xf]
  %v115 = vld [vmem:[%s1 + $0xec] sm:$0xf]
  %v116 = vld [vmem:[%s1 + $0xf0] sm:$0xf]
  %v117 = vld [vmem:[%s1 + $0xf4] sm:$0xf]
  %v118 = vld [vmem:[%s1 + $0xf8] sm:$0xf]
  %v119 = vld [vmem:[%s1 + $0xfc] sm:$0xf]
  %v120 = vld [vmem:[%s2] sm:$0x1]
  %v122 = vperm.slane %v120, 0
  %v166 = vunpack.c.l.b16 %v14
  %v167 = vunpack.c.h.b16 %v14
  %v168 = vunpack.c.l.b16 %v15
  %v169 = vunpack.c.h.b16 %v15
  %v170 = vunpack.c.l.b16 %v16
  %v171 = vunpack.c.h.b16 %v16
  %v172 = vunpack.c.l.b16 %v17
  %v173 = vunpack.c.h.b16 %v17
  %v174 = vunpack.c.l.b16 %v18
  %v175 = vunpack.c.h.b16 %v18
  %v176 = vunpack.c.l.b16 %v19
  %v177 = vunpack.c.h.b16 %v19
  %v178 = vunpack.c.l.b16 %v20
  %v179 = vunpack.c.h.b16 %v20
  %v180 = vunpack.c.l.b16 %v21
  %v181 = vunpack.c.h.b16 %v21
  %v182 = vunpack.c.l.b16 %v22
  %v183 = vunpack.c.h.b16 %v22
  %v184 = vunpack.c.l.b16 %v23
  %v185 = vunpack.c.h.b16 %v23
  %v186 = vunpack.c.l.b16 %v24
  %v187 = vunpack.c.h.b16 %v24
  %v188 = vunpack.c.l.b16 %v25
  %v189 = vunpack.c.h.b16 %v25
  %v190 = vunpack.c.l.b16 %v26
  %v191 = vunpack.c.h.b16 %v26
  %v192 = vunpack.c.l.b16 %v27
  %v193 = vunpack.c.h.b16 %v27
  %v194 = vunpack.c.l.b16 %v28
  %v195 = vunpack.c.h.b16 %v28
  %v196 = vunpack.c.l.b16 %v29
  %v197 = vunpack.c.h.b16 %v29
  %v198 = vunpack.c.l.b16 %v30
  %v199 = vunpack.c.h.b16 %v30
  %v200 = vunpack.c.l.b16 %v31
  %v201 = vunpack.c.h.b16 %v31
  %v202 = vunpack.c.l.b16 %v32
  %v203 = vunpack.c.h.b16 %v32
  %v204 = vunpack.c.l.b16 %v33
  %v205 = vunpack.c.h.b16 %v33
  %v206 = vunpack.c.l.b16 %v34
  %v207 = vunpack.c.h.b16 %v34
  %v208 = vunpack.c.l.b16 %v35
  %v209 = vunpack.c.h.b16 %v35
  %v210 = vunpack.c.l.b16 %v36
  %v211 = vunpack.c.h.b16 %v36
  %v212 = vunpack.c.l.b16 %v37
  %v213 = vunpack.c.h.b16 %v37
  %v214 = vunpack.c.l.b16 %v38
  %v215 = vunpack.c.h.b16 %v38
  %v216 = vunpack.c.l.b16 %v39
  %v217 = vunpack.c.h.b16 %v39
  %v218 = vunpack.c.l.b16 %v40
  %v219 = vunpack.c.h.b16 %v40
  %v220 = vunpack.c.l.b16 %v41
  %v221 = vunpack.c.h.b16 %v41
  %v222 = vunpack.c.l.b16 %v42
  %v223 = vunpack.c.h.b16 %v42
  %v224 = vunpack.c.l.b16 %v43
  %v225 = vunpack.c.h.b16 %v43
  %v226 = vunpack.c.l.b16 %v44
  %v227 = vunpack.c.h.b16 %v44
  %v228 = vunpack.c.l.b16 %v45
  %v229 = vunpack.c.h.b16 %v45
  %v230 = vunpack.c.l.b16 %v46
  %v231 = vunpack.c.h.b16 %v46
  %v232 = vunpack.c.l.b16 %v47
  %v233 = vunpack.c.h.b16 %v47
  %v234 = vunpack.c.l.b16 %v48
  %v235 = vunpack.c.h.b16 %v48
  %v236 = vunpack.c.l.b16 %v49
  %v237 = vunpack.c.h.b16 %v49
  %v238 = vunpack.c.l.b16 %v50
  %v239 = vunpack.c.h.b16 %v50
  %v240 = vunpack.c.l.b16 %v51
  %v241 = vunpack.c.h.b16 %v51
  %v242 = vunpack.c.l.b16 %v52
  %v243 = vunpack.c.h.b16 %v52
  %v244 = vunpack.c.l.b16 %v53
  %v245 = vunpack.c.h.b16 %v53
  %v246 = vunpack.c.l.b16 %v54
  %v247 = vunpack.c.h.b16 %v54
  %v248 = vunpack.c.l.b16 %v55
  %v249 = vunpack.c.h.b16 %v55
  %v250 = vpack.c.b16 %v170, %v166
  %v251 = vpack.c.b16 %v171, %v167
  %v252 = vpack.c.b16 %v172, %v168
  %v253 = vpack.c.b16 %v173, %v169
  %v254 = vpack.c.b16 %v178, %v174
  %v255 = vpack.c.b16 %v179, %v175
  %v256 = vpack.c.b16 %v180, %v176
  %v257 = vpack.c.b16 %v181, %v177
  %v258 = vpack.c.b16 %v186, %v182
  %v259 = vpack.c.b16 %v187, %v183
  %v260 = vpack.c.b16 %v188, %v184
  %v261 = vpack.c.b16 %v189, %v185
  %v262 = vpack.c.b16 %v194, %v190
  %v263 = vpack.c.b16 %v195, %v191
  %v264 = vpack.c.b16 %v196, %v192
  %v265 = vpack.c.b16 %v197, %v193
  %v266 = vpack.c.b16 %v202, %v198
  %v267 = vpack.c.b16 %v203, %v199
  %v268 = vpack.c.b16 %v204, %v200
  %v269 = vpack.c.b16 %v205, %v201
  %v270 = vpack.c.b16 %v210, %v206
  %v271 = vpack.c.b16 %v211, %v207
  %v272 = vpack.c.b16 %v212, %v208
  %v273 = vpack.c.b16 %v213, %v209
  %v274 = vpack.c.b16 %v218, %v214
  %v275 = vpack.c.b16 %v219, %v215
  %v276 = vpack.c.b16 %v220, %v216
  %v277 = vpack.c.b16 %v221, %v217
  %v278 = vpack.c.b16 %v226, %v222
  %v279 = vpack.c.b16 %v227, %v223
  %v280 = vpack.c.b16 %v228, %v224
  %v281 = vpack.c.b16 %v229, %v225
  %v282 = vpack.c.b16 %v234, %v230
  %v283 = vpack.c.b16 %v235, %v231
  %v284 = vpack.c.b16 %v236, %v232
  %v285 = vpack.c.b16 %v237, %v233
  %v286 = vpack.c.b16 %v242, %v238
  %v287 = vpack.c.b16 %v243, %v239
  %v288 = vpack.c.b16 %v244, %v240
  %v289 = vpack.c.b16 %v245, %v241
  %v290 = vpack.c.b16 %v246, %v246
  %v291 = vpack.c.b16 %v247, %v247
  %v292 = vpack.c.b16 %v248, %v248
  %v293 = vpack.c.b16 %v249, %v249
  %v402 = vunpack.c.l.b16 %v56
  %v403 = vunpack.c.l.b16 %v57
  %v404 = vunpack.c.l.b16 %v58
  %v405 = vunpack.c.l.b16 %v59
  %v406 = vunpack.c.l.b16 %v60
  %v407 = vunpack.c.l.b16 %v61
  %v408 = vunpack.c.l.b16 %v62
  %v409 = vunpack.c.l.b16 %v63
  %v410 = vunpack.c.l.b16 %v64
  %v411 = vunpack.c.l.b16 %v65
  %v412 = vunpack.c.l.b16 %v66
  %v413 = vunpack.c.l.b16 %v67
  %v414 = vunpack.c.l.b16 %v68
  %v415 = vunpack.c.l.b16 %v69
  %v416 = vunpack.c.l.b16 %v70
  %v417 = vunpack.c.l.b16 %v71
  %v418 = vunpack.c.l.b16 %v72
  %v419 = vunpack.c.l.b16 %v73
  %v420 = vunpack.c.l.b16 %v74
  %v421 = vunpack.c.l.b16 %v75
  %v422 = vunpack.c.l.b16 %v76
  %v423 = vunpack.c.l.b16 %v77
  %v424 = vunpack.c.l.b16 %v78
  %v425 = vunpack.c.l.b16 %v79
  %v426 = vunpack.c.l.b16 %v80
  %v427 = vunpack.c.l.b16 %v81
  %v428 = vunpack.c.l.b16 %v82
  %v429 = vunpack.c.l.b16 %v83
  %v430 = vunpack.c.l.b16 %v84
  %v431 = vunpack.c.l.b16 %v85
  %v432 = vunpack.c.l.b16 %v86
  %v433 = vunpack.c.l.b16 %v87
  %v434 = vunpack.c.l.b16 %v88
  %v435 = vunpack.c.l.b16 %v89
  %v436 = vunpack.c.l.b16 %v90
  %v437 = vunpack.c.l.b16 %v91
  %v438 = vunpack.c.l.b16 %v92
  %v439 = vunpack.c.l.b16 %v93
  %v440 = vunpack.c.l.b16 %v94
  %v441 = vunpack.c.l.b16 %v95
  %v442 = vunpack.c.l.b16 %v96
  %v443 = vunpack.c.l.b16 %v97
  %v444 = vunpack.c.l.b16 %v98
  %v445 = vunpack.c.l.b16 %v99
  %v446 = vunpack.c.l.b16 %v100
  %v447 = vunpack.c.l.b16 %v101
  %v448 = vunpack.c.l.b16 %v102
  %v449 = vunpack.c.l.b16 %v103
  %v450 = vunpack.c.l.b16 %v104
  %v451 = vunpack.c.l.b16 %v105
  %v452 = vunpack.c.l.b16 %v106
  %v453 = vunpack.c.l.b16 %v107
  %v454 = vunpack.c.l.b16 %v108
  %v455 = vunpack.c.l.b16 %v109
  %v456 = vunpack.c.l.b16 %v110
  %v457 = vunpack.c.l.b16 %v111
  %v458 = vunpack.c.l.b16 %v112
  %v459 = vunpack.c.l.b16 %v113
  %v460 = vunpack.c.l.b16 %v114
  %v461 = vunpack.c.l.b16 %v115
  %v462 = vunpack.c.l.b16 %v116
  %v463 = vunpack.c.l.b16 %v117
  %v464 = vunpack.c.l.b16 %v118
  %v465 = vunpack.c.l.b16 %v119
  %v466 = vpack.c.b16 %v403, %v402
  %v467 = vpack.c.b16 %v405, %v404
  %v468 = vpack.c.b16 %v407, %v406
  %v469 = vpack.c.b16 %v409, %v408
  %v470 = vpack.c.b16 %v411, %v410
  %v471 = vpack.c.b16 %v413, %v412
  %v472 = vpack.c.b16 %v415, %v414
  %v473 = vpack.c.b16 %v417, %v416
  %v474 = vpack.c.b16 %v419, %v418
  %v475 = vpack.c.b16 %v421, %v420
  %v476 = vpack.c.b16 %v423, %v422
  %v477 = vpack.c.b16 %v425, %v424
  %v478 = vpack.c.b16 %v427, %v426
  %v479 = vpack.c.b16 %v429, %v428
  %v480 = vpack.c.b16 %v431, %v430
  %v481 = vpack.c.b16 %v433, %v432
  %v482 = vpack.c.b16 %v435, %v434
  %v483 = vpack.c.b16 %v437, %v436
  %v484 = vpack.c.b16 %v439, %v438
  %v485 = vpack.c.b16 %v441, %v440
  %v486 = vpack.c.b16 %v443, %v442
  %v487 = vpack.c.b16 %v445, %v444
  %v488 = vpack.c.b16 %v447, %v446
  %v489 = vpack.c.b16 %v449, %v448
  %v490 = vpack.c.b16 %v451, %v450
  %v491 = vpack.c.b16 %v453, %v452
  %v492 = vpack.c.b16 %v455, %v454
  %v493 = vpack.c.b16 %v457, %v456
  %v494 = vpack.c.b16 %v459, %v458
  %v495 = vpack.c.b16 %v461, %v460
  %v496 = vpack.c.b16 %v463, %v462
  %v497 = vpack.c.b16 %v465, %v464
  %530 = vmatpush.bf16.msra.mxu0 %v473
  %531 = vmatpush.bf16.msra.mxu0 %v472
  %532 = vmatpush.bf16.msra.mxu0 %v471
  %533 = vmatpush.bf16.msra.mxu0 %v470
  %534 = vmatpush.bf16.msra.mxu0 %v469
  %535 = vmatpush.bf16.msra.mxu0 %v468
  %536 = vmatpush.bf16.msra.mxu0 %v467
  %537 = vmatpush.bf16.msra.mxu0 %v466
  %538 = vmatmul.bf16.gmra.mxu0 %v250
  %v539 = vpop.f32.mrf.mxu0
  %v540 = vadd.f32 %v122, %v539
  %v541 = vpop.f32.mrf.mxu0
  %v542 = vadd.f32 %v122, %v541
  %543 = vmatmul.bf16.gmra.mxu0 %v254
  %v544 = vpop.f32.mrf.mxu0
  %v545 = vadd.f32 %v122, %v544
  %v546 = vpop.f32.mrf.mxu0
  %v547 = vadd.f32 %v122, %v546
  %548 = vmatmul.bf16.gmra.mxu0 %v258
  %v549 = vpop.f32.mrf.mxu0
  %v550 = vadd.f32 %v122, %v549
  %v551 = vpop.f32.mrf.mxu0
  %v552 = vadd.f32 %v122, %v551
  %553 = vmatmul.bf16.gmra.mxu0 %v262
  %v554 = vpop.f32.mrf.mxu0
  %v555 = vadd.f32 %v122, %v554
  %v556 = vpop.f32.mrf.mxu0
  %v557 = vadd.f32 %v122, %v556
  %558 = vmatmul.bf16.gmra.mxu0 %v266
  %v559 = vpop.f32.mrf.mxu0
  %v560 = vadd.f32 %v122, %v559
  %v561 = vpop.f32.mrf.mxu0
  %v562 = vadd.f32 %v122, %v561
  %563 = vmatmul.bf16.gmra.mxu0 %v270
  %v564 = vpop.f32.mrf.mxu0
  %v565 = vadd.f32 %v122, %v564
  %v566 = vpop.f32.mrf.mxu0
  %v567 = vadd.f32 %v122, %v566
  %568 = vmatmul.bf16.gmra.mxu0 %v274
  %v569 = vpop.f32.mrf.mxu0
  %v570 = vadd.f32 %v122, %v569
  %v571 = vpop.f32.mrf.mxu0
  %v572 = vadd.f32 %v122, %v571
  %573 = vmatmul.bf16.gmra.mxu0 %v278
  %v574 = vpop.f32.mrf.mxu0
  %v575 = vadd.f32 %v122, %v574
  %v576 = vpop.f32.mrf.mxu0
  %v577 = vadd.f32 %v122, %v576
  %578 = vmatmul.bf16.gmra.mxu0 %v282
  %v579 = vpop.f32.mrf.mxu0
  %v580 = vadd.f32 %v122, %v579
  %v581 = vpop.f32.mrf.mxu0
  %v582 = vadd.f32 %v122, %v581
  %583 = vmatmul.bf16.gmra.mxu0 %v286
  %v584 = vpop.f32.mrf.mxu0
  %v585 = vadd.f32 %v122, %v584
  %v586 = vpop.f32.mrf.mxu0
  %v587 = vadd.f32 %v122, %v586
  %588 = vmatmul.bf16.gmra.mxu0 %v290
  %v589 = vpop.f32.mrf.mxu0
  %v590 = vadd.f32 %v122, %v589
  %v591 = vpop.f32.mrf.mxu0
  %592 = vdwg.mxu0
  %593 = vmatpush.bf16.msra.mxu0 %v481
  %594 = vmatpush.bf16.msra.mxu0 %v480
  %595 = vmatpush.bf16.msra.mxu0 %v479
  %596 = vmatpush.bf16.msra.mxu0 %v478
  %597 = vmatpush.bf16.msra.mxu0 %v477
  %598 = vmatpush.bf16.msra.mxu0 %v476
  %599 = vmatpush.bf16.msra.mxu0 %v475
  %600 = vmatpush.bf16.msra.mxu0 %v474
  %601 = vmatmul.bf16.gmra.mxu0 %v251
  %v602 = vpop.f32.mrf.mxu0
  %v603 = vadd.f32 %v540, %v602
  %v604 = vpop.f32.mrf.mxu0
  %v605 = vadd.f32 %v542, %v604
  %606 = vmatmul.bf16.gmra.mxu0 %v255
  %v607 = vpop.f32.mrf.mxu0
  %v608 = vadd.f32 %v545, %v607
  %v609 = vpop.f32.mrf.mxu0
  %v610 = vadd.f32 %v547, %v609
  %611 = vmatmul.bf16.gmra.mxu0 %v259
  %v612 = vpop.f32.mrf.mxu0
  %v613 = vadd.f32 %v550, %v612
  %v614 = vpop.f32.mrf.mxu0
  %v615 = vadd.f32 %v552, %v614
  %616 = vmatmul.bf16.gmra.mxu0 %v263
  %v617 = vpop.f32.mrf.mxu0
  %v618 = vadd.f32 %v555, %v617
  %v619 = vpop.f32.mrf.mxu0
  %v620 = vadd.f32 %v557, %v619
  %621 = vmatmul.bf16.gmra.mxu0 %v267
  %v622 = vpop.f32.mrf.mxu0
  %v623 = vadd.f32 %v560, %v622
  %v624 = vpop.f32.mrf.mxu0
  %v625 = vadd.f32 %v562, %v624
  %626 = vmatmul.bf16.gmra.mxu0 %v271
  %v627 = vpop.f32.mrf.mxu0
  %v628 = vadd.f32 %v565, %v627
  %v629 = vpop.f32.mrf.mxu0
  %v630 = vadd.f32 %v567, %v629
  %631 = vmatmul.bf16.gmra.mxu0 %v275
  %v632 = vpop.f32.mrf.mxu0
  %v633 = vadd.f32 %v570, %v632
  %v634 = vpop.f32.mrf.mxu0
  %v635 = vadd.f32 %v572, %v634
  %636 = vmatmul.bf16.gmra.mxu0 %v279
  %v637 = vpop.f32.mrf.mxu0
  %v638 = vadd.f32 %v575, %v637
  %v639 = vpop.f32.mrf.mxu0
  %v640 = vadd.f32 %v577, %v639
  %641 = vmatmul.bf16.gmra.mxu0 %v283
  %v642 = vpop.f32.mrf.mxu0
  %v643 = vadd.f32 %v580, %v642
  %v644 = vpop.f32.mrf.mxu0
  %v645 = vadd.f32 %v582, %v644
  %646 = vmatmul.bf16.gmra.mxu0 %v287
  %v647 = vpop.f32.mrf.mxu0
  %v648 = vadd.f32 %v585, %v647
  %v649 = vpop.f32.mrf.mxu0
  %v650 = vadd.f32 %v587, %v649
  %651 = vmatmul.bf16.gmra.mxu0 %v291
  %v652 = vpop.f32.mrf.mxu0
  %v653 = vadd.f32 %v590, %v652
  %v654 = vpop.f32.mrf.mxu0
  %655 = vdwg.mxu0
  %656 = vmatpush.bf16.msra.mxu0 %v489
  %657 = vmatpush.bf16.msra.mxu0 %v488
  %658 = vmatpush.bf16.msra.mxu0 %v487
  %659 = vmatpush.bf16.msra.mxu0 %v486
  %660 = vmatpush.bf16.msra.mxu0 %v485
  %661 = vmatpush.bf16.msra.mxu0 %v484
  %662 = vmatpush.bf16.msra.mxu0 %v483
  %663 = vmatpush.bf16.msra.mxu0 %v482
  %664 = vmatmul.bf16.gmra.mxu0 %v252
  %v665 = vpop.f32.mrf.mxu0
  %v666 = vadd.f32 %v603, %v665
  %v667 = vpop.f32.mrf.mxu0
  %v668 = vadd.f32 %v605, %v667
  %669 = vmatmul.bf16.gmra.mxu0 %v256
  %v670 = vpop.f32.mrf.mxu0
  %v671 = vadd.f32 %v608, %v670
  %v672 = vpop.f32.mrf.mxu0
  %v673 = vadd.f32 %v610, %v672
  %674 = vmatmul.bf16.gmra.mxu0 %v260
  %v675 = vpop.f32.mrf.mxu0
  %v676 = vadd.f32 %v613, %v675
  %v677 = vpop.f32.mrf.mxu0
  %v678 = vadd.f32 %v615, %v677
  %679 = vmatmul.bf16.gmra.mxu0 %v264
  %v680 = vpop.f32.mrf.mxu0
  %v681 = vadd.f32 %v618, %v680
  %v682 = vpop.f32.mrf.mxu0
  %v683 = vadd.f32 %v620, %v682
  %684 = vmatmul.bf16.gmra.mxu0 %v268
  %v685 = vpop.f32.mrf.mxu0
  %v686 = vadd.f32 %v623, %v685
  %v687 = vpop.f32.mrf.mxu0
  %v688 = vadd.f32 %v625, %v687
  %689 = vmatmul.bf16.gmra.mxu0 %v272
  %v690 = vpop.f32.mrf.mxu0
  %v691 = vadd.f32 %v628, %v690
  %v692 = vpop.f32.mrf.mxu0
  %v693 = vadd.f32 %v630, %v692
  %694 = vmatmul.bf16.gmra.mxu0 %v276
  %v695 = vpop.f32.mrf.mxu0
  %v696 = vadd.f32 %v633, %v695
  %v697 = vpop.f32.mrf.mxu0
  %v698 = vadd.f32 %v635, %v697
  %699 = vmatmul.bf16.gmra.mxu0 %v280
  %v700 = vpop.f32.mrf.mxu0
  %v701 = vadd.f32 %v638, %v700
  %v702 = vpop.f32.mrf.mxu0
  %v703 = vadd.f32 %v640, %v702
  %704 = vmatmul.bf16.gmra.mxu0 %v284
  %v705 = vpop.f32.mrf.mxu0
  %v706 = vadd.f32 %v643, %v705
  %v707 = vpop.f32.mrf.mxu0
  %v708 = vadd.f32 %v645, %v707
  %709 = vmatmul.bf16.gmra.mxu0 %v288
  %v710 = vpop.f32.mrf.mxu0
  %v711 = vadd.f32 %v648, %v710
  %v712 = vpop.f32.mrf.mxu0
  %v713 = vadd.f32 %v650, %v712
  %714 = vmatmul.bf16.gmra.mxu0 %v292
  %v715 = vpop.f32.mrf.mxu0
  %v716 = vadd.f32 %v653, %v715
  %v717 = vpop.f32.mrf.mxu0
  %718 = vdwg.mxu0
  %719 = vmatpush.bf16.msra.mxu0 %v497
  %720 = vmatpush.bf16.msra.mxu0 %v496
  %721 = vmatpush.bf16.msra.mxu0 %v495
  %722 = vmatpush.bf16.msra.mxu0 %v494
  %723 = vmatpush.bf16.msra.mxu0 %v493
  %724 = vmatpush.bf16.msra.mxu0 %v492
  %725 = vmatpush.bf16.msra.mxu0 %v491
  %726 = vmatpush.bf16.msra.mxu0 %v490
  %727 = vmatmul.bf16.gmra.mxu0 %v253
  %v728 = vpop.f32.mrf.mxu0
  %v729 = vadd.f32 %v666, %v728
  %v730 = vpop.f32.mrf.mxu0
  %v731 = vadd.f32 %v668, %v730
  %732 = vmatmul.bf16.gmra.mxu0 %v257
  %v733 = vpop.f32.mrf.mxu0
  %v734 = vadd.f32 %v671, %v733
  %v735 = vpop.f32.mrf.mxu0
  %v736 = vadd.f32 %v673, %v735
  %737 = vmatmul.bf16.gmra.mxu0 %v261
  %v738 = vpop.f32.mrf.mxu0
  %v739 = vadd.f32 %v676, %v738
  %v740 = vpop.f32.mrf.mxu0
  %v741 = vadd.f32 %v678, %v740
  %742 = vmatmul.bf16.gmra.mxu0 %v265
  %v743 = vpop.f32.mrf.mxu0
  %v744 = vadd.f32 %v681, %v743
  %v745 = vpop.f32.mrf.mxu0
  %v746 = vadd.f32 %v683, %v745
  %747 = vmatmul.bf16.gmra.mxu0 %v269
  %v748 = vpop.f32.mrf.mxu0
  %v749 = vadd.f32 %v686, %v748
  %v750 = vpop.f32.mrf.mxu0
  %v751 = vadd.f32 %v688, %v750
  %752 = vmatmul.bf16.gmra.mxu0 %v273
  %v753 = vpop.f32.mrf.mxu0
  %v754 = vadd.f32 %v691, %v753
  %v755 = vpop.f32.mrf.mxu0
  %v756 = vadd.f32 %v693, %v755
  %757 = vmatmul.bf16.gmra.mxu0 %v277
  %v758 = vpop.f32.mrf.mxu0
  %v759 = vadd.f32 %v696, %v758
  %v760 = vpop.f32.mrf.mxu0
  %v761 = vadd.f32 %v698, %v760
  %762 = vmatmul.bf16.gmra.mxu0 %v281
  %v763 = vpop.f32.mrf.mxu0
  %v764 = vadd.f32 %v701, %v763
  %v765 = vpop.f32.mrf.mxu0
  %v766 = vadd.f32 %v703, %v765
  %767 = vmatmul.bf16.gmra.mxu0 %v285
  %v768 = vpop.f32.mrf.mxu0
  %v769 = vadd.f32 %v706, %v768
  %v770 = vpop.f32.mrf.mxu0
  %v771 = vadd.f32 %v708, %v770
  %772 = vmatmul.bf16.gmra.mxu0 %v289
  %v773 = vpop.f32.mrf.mxu0
  %v774 = vadd.f32 %v711, %v773
  %v775 = vpop.f32.mrf.mxu0
  %v776 = vadd.f32 %v713, %v775
  %777 = vmatmul.bf16.gmra.mxu0 %v293
  %v778 = vpop.f32.mrf.mxu0
  %v779 = vadd.f32 %v716, %v778
  %v780 = vpop.f32.mrf.mxu0
  %781 = vdwg.mxu0
  %v782 = vmax.f32 %v729, 0.0
  %v783 = vmax.f32 %v731, 0.0
  %v784 = vmax.f32 %v734, 0.0
  %v785 = vmax.f32 %v736, 0.0
  %v786 = vmax.f32 %v739, 0.0
  %v787 = vmax.f32 %v741, 0.0
  %v788 = vmax.f32 %v744, 0.0
  %v789 = vmax.f32 %v746, 0.0
  %v790 = vmax.f32 %v749, 0.0
  %v791 = vmax.f32 %v751, 0.0
  %v792 = vmax.f32 %v754, 0.0
  %v793 = vmax.f32 %v756, 0.0
  %v794 = vmax.f32 %v759, 0.0
  %v795 = vmax.f32 %v761, 0.0
  %v796 = vmax.f32 %v764, 0.0
  %v797 = vmax.f32 %v766, 0.0
  %v798 = vmax.f32 %v769, 0.0
  %v799 = vmax.f32 %v771, 0.0
  %v800 = vmax.f32 %v774, 0.0
  %v801 = vmax.f32 %v776, 0.0
  %v802 = vmax.f32 %v779, 0.0
  %v803 = vpack.c.bf16 %v782, %v782
  %v804 = vpack.c.bf16 %v783, %v783
  %v805 = vpack.c.bf16 %v784, %v784
  %v806 = vpack.c.bf16 %v785, %v785
  %v807 = vpack.c.bf16 %v786, %v786
  %v808 = vpack.c.bf16 %v787, %v787
  %v809 = vpack.c.bf16 %v788, %v788
  %v810 = vpack.c.bf16 %v789, %v789
  %v811 = vpack.c.bf16 %v790, %v790
  %v812 = vpack.c.bf16 %v791, %v791
  %v813 = vpack.c.bf16 %v792, %v792
  %v814 = vpack.c.bf16 %v793, %v793
  %v815 = vpack.c.bf16 %v794, %v794
  %v816 = vpack.c.bf16 %v795, %v795
  %v817 = vpack.c.bf16 %v796, %v796
  %v818 = vpack.c.bf16 %v797, %v797
  %v819 = vpack.c.bf16 %v798, %v798
  %v820 = vpack.c.bf16 %v799, %v799
  %v821 = vpack.c.bf16 %v800, %v800
  %v822 = vpack.c.bf16 %v801, %v801
  %v823 = vpack.c.bf16 %v802, %v802
  %824 = vst [vmem:[%s3] sm:$0xf] %v803
  %825 = vst [vmem:[%s3 + $0x4] sm:$0xf] %v804
  %826 = vst [vmem:[%s3 + $0x8] sm:$0xf] %v805
  %827 = vst [vmem:[%s3 + $0xc] sm:$0xf] %v806
  %828 = vst [vmem:[%s3 + $0x10] sm:$0xf] %v807
  %829 = vst [vmem:[%s3 + $0x14] sm:$0xf] %v808
  %830 = vst [vmem:[%s3 + $0x18] sm:$0xf] %v809
  %831 = vst [vmem:[%s3 + $0x1c] sm:$0xf] %v810
  %832 = vst [vmem:[%s3 + $0x20] sm:$0xf] %v811
  %833 = vst [vmem:[%s3 + $0x24] sm:$0xf] %v812
  %834 = vst [vmem:[%s3 + $0x28] sm:$0xf] %v813
  %835 = vst [vmem:[%s3 + $0x2c] sm:$0xf] %v814
  %836 = vst [vmem:[%s3 + $0x30] sm:$0xf] %v815
  %837 = vst [vmem:[%s3 + $0x34] sm:$0xf] %v816
  %838 = vst [vmem:[%s3 + $0x38] sm:$0xf] %v817
  %839 = vst [vmem:[%s3 + $0x3c] sm:$0xf] %v818
  %840 = vst [vmem:[%s3 + $0x40] sm:$0xf] %v819
  %841 = vst [vmem:[%s3 + $0x44] sm:$0xf] %v820
  %842 = vst [vmem:[%s3 + $0x48] sm:$0xf] %v821
  %843 = vst [vmem:[%s3 + $0x4c] sm:$0xf] %v822
  %844 = vst [vmem:[%s3 + $0x50] sm:$0xf] %v823
  // Predicated region
  $region14: #{vacnn_forward.5} parent=0 // pred_check
    _
  $region15: #{vacnn_forward.5} parent=0 // pred_check_branch
    %846 = sbr.rel (0) target = $region17
  $region16: #{vacnn_forward.5} parent=0 // pred_region
    _
  $region17: #{vacnn_forward.5} parent=0 // pred_fallthru
    _
  // Predicated region
  $region18: #{vacnn_forward.5} parent=0 // pred_check
    _
  $region19: #{vacnn_forward.5} parent=0 // pred_check_branch
    %848 = sbr.rel (0) target = $region21
  $region20: #{vacnn_forward.5} parent=0 // pred_region
    _
  $region21: #{vacnn_forward.5} parent=0 // pred_fallthru
    _

// kernel: vacnn_forward.6
$region0: #{vacnn_forward.6}
  #allocation0 [shape = 'u32[]', space=smem, size = 0x4, offset = 0x4, fixed_abs, tag = 'smem constant byte address 0x4 - core index']
  #allocation1 [shape = 'u32[72,128]{1,0:T(1,128)}', space=vmem, size = 0x9000, scoped, tag = 'internal scratch']
  %s0 = inlined_call_operand.vmem [shape: bf16[104,640], index: 0, kind: input, shape index: {}]
  %s1 = inlined_call_operand.vmem [shape: bf16[640,128], index: 1, kind: input, shape index: {}]
  %s2 = inlined_call_operand.vmem [shape: f32[1,128], index: 2, kind: input, shape index: {}]
  %s3 = inlined_call_operand.vmem [shape: bf16[104,128], index: 3, kind: output, shape index: {}]
  %s4 = sld [smem:[#allocation0]]
  $region22: #{vacnn_forward.6} parent=0
    _
  %s6 = ssub.s32 1, %s4
  %s7 = scalar_select 0, %s6, %s4
  // Predicated region
  $region2: #{vacnn_forward.6} parent=0 // pred_check
    _
  $region3: #{vacnn_forward.6} parent=0 // pred_check_branch
    %9 = sbr.rel (0) target = $region5
  $region4: #{vacnn_forward.6} parent=0 // pred_region
    _
  $region5: #{vacnn_forward.6} parent=0 // pred_fallthru
    _
  // Predicated region
  $region6: #{vacnn_forward.6} parent=0 // pred_check
    _
  $region7: #{vacnn_forward.6} parent=0 // pred_check_branch
    %11 = sbr.rel (0) target = $region9
  $region8: #{vacnn_forward.6} parent=0 // pred_region
    _
  $region9: #{vacnn_forward.6} parent=0 // pred_fallthru
    _
  // Predicated region
  $region10: #{vacnn_forward.6} parent=0 // pred_check
    _
  $region11: #{vacnn_forward.6} parent=0 // pred_check_branch
    %13 = sbr.rel (0) target = $region13
  $region12: #{vacnn_forward.6} parent=0 // pred_region
    _
  $region13: #{vacnn_forward.6} parent=0 // pred_fallthru
    _
  %v14 = vld [vmem:[%s0] sm:$0xff]
  %v15 = vld [vmem:[%s0 + $0x8] sm:$0xff]
  %v16 = vld [vmem:[%s0 + $0x10] sm:$0xf]
  %v17 = vld [vmem:[%s0 + $0x14] sm:$0xff]
  %v18 = vld [vmem:[%s0 + $0x1c] sm:$0xff]
  %v19 = vld [vmem:[%s0 + $0x24] sm:$0xf]
  %v20 = vld [vmem:[%s0 + $0x28] sm:$0xff]
  %v21 = vld [vmem:[%s0 + $0x30] sm:$0xff]
  %v22 = vld [vmem:[%s0 + $0x38] sm:$0xf]
  %v23 = vld [vmem:[%s0 + $0x3c] sm:$0xff]
  %v24 = vld [vmem:[%s0 + $0x44] sm:$0xff]
  %v25 = vld [vmem:[%s0 + $0x4c] sm:$0xf]
  %v26 = vld [vmem:[%s0 + $0x50] sm:$0xff]
  %v27 = vld [vmem:[%s0 + $0x58] sm:$0xff]
  %v28 = vld [vmem:[%s0 + $0x60] sm:$0xf]
  %v29 = vld [vmem:[%s0 + $0x64] sm:$0xff]
  %v30 = vld [vmem:[%s0 + $0x6c] sm:$0xff]
  %v31 = vld [vmem:[%s0 + $0x74] sm:$0xf]
  %v32 = vld [vmem:[%s0 + $0x78] sm:$0xff]
  %v33 = vld [vmem:[%s0 + $0x80] sm:$0xff]
  %v34 = vld [vmem:[%s0 + $0x88] sm:$0xf]
  %v35 = vld [vmem:[%s0 + $0x8c] sm:$0xff]
  %v36 = vld [vmem:[%s0 + $0x94] sm:$0xff]
  %v37 = vld [vmem:[%s0 + $0x9c] sm:$0xf]
  %v38 = vld [vmem:[%s0 + $0xa0] sm:$0xff]
  %v39 = vld [vmem:[%s0 + $0xa8] sm:$0xff]
  %v40 = vld [vmem:[%s0 + $0xb0] sm:$0xf]
  %v41 = vld [vmem:[%s0 + $0xb4] sm:$0xff]
  %v42 = vld [vmem:[%s0 + $0xbc] sm:$0xff]
  %v43 = vld [vmem:[%s0 + $0xc4] sm:$0xf]
  %v44 = vld [vmem:[%s0 + $0xc8] sm:$0xff]
  %v45 = vld [vmem:[%s0 + $0xd0] sm:$0xff]
  %v46 = vld [vmem:[%s0 + $0xd8] sm:$0xf]
  %v47 = vld [vmem:[%s0 + $0xdc] sm:$0xff]
  %v48 = vld [vmem:[%s0 + $0xe4] sm:$0xff]
  %v49 = vld [vmem:[%s0 + $0xec] sm:$0xf]
  %v50 = vld [vmem:[%s0 + $0xf0] sm:$0xff]
  %v51 = vld [vmem:[%s0 + $0xf8] sm:$0xff]
  %v52 = vld [vmem:[%s0 + $0x100] sm:$0xf]
  %v53 = vld [vmem:[%s1] sm:$0xf]
  %v54 = vld [vmem:[%s1 + $0x4] sm:$0xf]
  %v55 = vld [vmem:[%s1 + $0x8] sm:$0xf]
  %v56 = vld [vmem:[%s1 + $0xc] sm:$0xf]
  %v57 = vld [vmem:[%s1 + $0x10] sm:$0xf]
  %v58 = vld [vmem:[%s1 + $0x14] sm:$0xf]
  %v59 = vld [vmem:[%s1 + $0x18] sm:$0xf]
  %v60 = vld [vmem:[%s1 + $0x1c] sm:$0xf]
  %v61 = vld [vmem:[%s1 + $0x20] sm:$0xf]
  %v62 = vld [vmem:[%s1 + $0x24] sm:$0xf]
  %v63 = vld [vmem:[%s1 + $0x28] sm:$0xf]
  %v64 = vld [vmem:[%s1 + $0x2c] sm:$0xf]
  %v65 = vld [vmem:[%s1 + $0x30] sm:$0xf]
  %v66 = vld [vmem:[%s1 + $0x34] sm:$0xf]
  %v67 = vld [vmem:[%s1 + $0x38] sm:$0xf]
  %v68 = vld [vmem:[%s1 + $0x3c] sm:$0xf]
  %v69 = vld [vmem:[%s1 + $0x40] sm:$0xf]
  %v70 = vld [vmem:[%s1 + $0x44] sm:$0xf]
  %v71 = vld [vmem:[%s1 + $0x48] sm:$0xf]
  %v72 = vld [vmem:[%s1 + $0x4c] sm:$0xf]
  %v73 = vld [vmem:[%s1 + $0x50] sm:$0xf]
  %v74 = vld [vmem:[%s1 + $0x54] sm:$0xf]
  %v75 = vld [vmem:[%s1 + $0x58] sm:$0xf]
  %v76 = vld [vmem:[%s1 + $0x5c] sm:$0xf]
  %v77 = vld [vmem:[%s1 + $0x60] sm:$0xf]
  %v78 = vld [vmem:[%s1 + $0x64] sm:$0xf]
  %v79 = vld [vmem:[%s1 + $0x68] sm:$0xf]
  %v80 = vld [vmem:[%s1 + $0x6c] sm:$0xf]
  %v81 = vld [vmem:[%s1 + $0x70] sm:$0xf]
  %v82 = vld [vmem:[%s1 + $0x74] sm:$0xf]
  %v83 = vld [vmem:[%s1 + $0x78] sm:$0xf]
  %v84 = vld [vmem:[%s1 + $0x7c] sm:$0xf]
  %v85 = vld [vmem:[%s1 + $0x80] sm:$0xf]
  %v86 = vld [vmem:[%s1 + $0x84] sm:$0xf]
  %v87 = vld [vmem:[%s1 + $0x88] sm:$0xf]
  %v88 = vld [vmem:[%s1 + $0x8c] sm:$0xf]
  %v89 = vld [vmem:[%s1 + $0x90] sm:$0xf]
  %v90 = vld [vmem:[%s1 + $0x94] sm:$0xf]
  %v91 = vld [vmem:[%s1 + $0x98] sm:$0xf]
  %v92 = vld [vmem:[%s1 + $0x9c] sm:$0xf]
  %v93 = vld [vmem:[%s1 + $0xa0] sm:$0xf]
  %v94 = vld [vmem:[%s1 + $0xa4] sm:$0xf]
  %v95 = vld [vmem:[%s1 + $0xa8] sm:$0xf]
  %v96 = vld [vmem:[%s1 + $0xac] sm:$0xf]
  %v97 = vld [vmem:[%s1 + $0xb0] sm:$0xf]
  %v98 = vld [vmem:[%s1 + $0xb4] sm:$0xf]
  %v99 = vld [vmem:[%s1 + $0xb8] sm:$0xf]
  %v100 = vld [vmem:[%s1 + $0xbc] sm:$0xf]
  %v101 = vld [vmem:[%s1 + $0xc0] sm:$0xf]
  %v102 = vld [vmem:[%s1 + $0xc4] sm:$0xf]
  %v103 = vld [vmem:[%s1 + $0xc8] sm:$0xf]
  %v104 = vld [vmem:[%s1 + $0xcc] sm:$0xf]
  %v105 = vld [vmem:[%s1 + $0xd0] sm:$0xf]
  %v106 = vld [vmem:[%s1 + $0xd4] sm:$0xf]
  %v107 = vld [vmem:[%s1 + $0xd8] sm:$0xf]
  %v108 = vld [vmem:[%s1 + $0xdc] sm:$0xf]
  %v109 = vld [vmem:[%s1 + $0xe0] sm:$0xf]
  %v110 = vld [vmem:[%s1 + $0xe4] sm:$0xf]
  %v111 = vld [vmem:[%s1 + $0xe8] sm:$0xf]
  %v112 = vld [vmem:[%s1 + $0xec] sm:$0xf]
  %v113 = vld [vmem:[%s1 + $0xf0] sm:$0xf]
  %v114 = vld [vmem:[%s1 + $0xf4] sm:$0xf]
  %v115 = vld [vmem:[%s1 + $0xf8] sm:$0xf]
  %v116 = vld [vmem:[%s1 + $0xfc] sm:$0xf]
  %v117 = vld [vmem:[%s1 + $0x100] sm:$0xf]
  %v118 = vld [vmem:[%s1 + $0x104] sm:$0xf]
  %v119 = vld [vmem:[%s1 + $0x108] sm:$0xf]
  %v120 = vld [vmem:[%s1 + $0x10c] sm:$0xf]
  %v121 = vld [vmem:[%s1 + $0x110] sm:$0xf]
  %v122 = vld [vmem:[%s1 + $0x114] sm:$0xf]
  %v123 = vld [vmem:[%s1 + $0x118] sm:$0xf]
  %v124 = vld [vmem:[%s1 + $0x11c] sm:$0xf]
  %v125 = vld [vmem:[%s1 + $0x120] sm:$0xf]
  %v126 = vld [vmem:[%s1 + $0x124] sm:$0xf]
  %v127 = vld [vmem:[%s1 + $0x128] sm:$0xf]
  %v128 = vld [vmem:[%s1 + $0x12c] sm:$0xf]
  %v129 = vld [vmem:[%s1 + $0x130] sm:$0xf]
  %v130 = vld [vmem:[%s1 + $0x134] sm:$0xf]
  %v131 = vld [vmem:[%s1 + $0x138] sm:$0xf]
  %v132 = vld [vmem:[%s1 + $0x13c] sm:$0xf]
  %v133 = vld [vmem:[%s2] sm:$0x1]
  %v135 = vperm.slane %v133, 0
  %v176 = vunpack.c.l.b16 %v14
  %v177 = vunpack.c.h.b16 %v14
  %v178 = vunpack.c.l.b16 %v15
  %v179 = vunpack.c.h.b16 %v15
  %v180 = vunpack.c.l.b16 %v16
  %v181 = vunpack.c.l.b16 %v17
  %v182 = vunpack.c.h.b16 %v17
  %v183 = vunpack.c.l.b16 %v18
  %v184 = vunpack.c.h.b16 %v18
  %v185 = vunpack.c.l.b16 %v19
  %v186 = vunpack.c.l.b16 %v20
  %v187 = vunpack.c.h.b16 %v20
  %v188 = vunpack.c.l.b16 %v21
  %v189 = vunpack.c.h.b16 %v21
  %v190 = vunpack.c.l.b16 %v22
  %v191 = vunpack.c.l.b16 %v23
  %v192 = vunpack.c.h.b16 %v23
  %v193 = vunpack.c.l.b16 %v24
  %v194 = vunpack.c.h.b16 %v24
  %v195 = vunpack.c.l.b16 %v25
  %v196 = vunpack.c.l.b16 %v26
  %v197 = vunpack.c.h.b16 %v26
  %v198 = vunpack.c.l.b16 %v27
  %v199 = vunpack.c.h.b16 %v27
  %v200 = vunpack.c.l.b16 %v28
  %v201 = vunpack.c.l.b16 %v29
  %v202 = vunpack.c.h.b16 %v29
  %v203 = vunpack.c.l.b16 %v30
  %v204 = vunpack.c.h.b16 %v30
  %v205 = vunpack.c.l.b16 %v31
  %v206 = vunpack.c.l.b16 %v32
  %v207 = vunpack.c.h.b16 %v32
  %v208 = vunpack.c.l.b16 %v33
  %v209 = vunpack.c.h.b16 %v33
  %v210 = vunpack.c.l.b16 %v34
  %v211 = vunpack.c.l.b16 %v35
  %v212 = vunpack.c.h.b16 %v35
  %v213 = vunpack.c.l.b16 %v36
  %v214 = vunpack.c.h.b16 %v36
  %v215 = vunpack.c.l.b16 %v37
  %v216 = vunpack.c.l.b16 %v38
  %v217 = vunpack.c.h.b16 %v38
  %v218 = vunpack.c.l.b16 %v39
  %v219 = vunpack.c.h.b16 %v39
  %v220 = vunpack.c.l.b16 %v40
  %v221 = vunpack.c.l.b16 %v41
  %v222 = vunpack.c.h.b16 %v41
  %v223 = vunpack.c.l.b16 %v42
  %v224 = vunpack.c.h.b16 %v42
  %v225 = vunpack.c.l.b16 %v43
  %v226 = vunpack.c.l.b16 %v44
  %v227 = vunpack.c.h.b16 %v44
  %v228 = vunpack.c.l.b16 %v45
  %v229 = vunpack.c.h.b16 %v45
  %v230 = vunpack.c.l.b16 %v46
  %v231 = vunpack.c.l.b16 %v47
  %v232 = vunpack.c.h.b16 %v47
  %v233 = vunpack.c.l.b16 %v48
  %v234 = vunpack.c.h.b16 %v48
  %v235 = vunpack.c.l.b16 %v49
  %v236 = vunpack.c.l.b16 %v50
  %v237 = vunpack.c.h.b16 %v50
  %v238 = vunpack.c.l.b16 %v51
  %v239 = vunpack.c.h.b16 %v51
  %v240 = vunpack.c.l.b16 %v52
  %v241 = vpack.c.b16 %v181, %v176
  %v242 = vpack.c.b16 %v182, %v177
  %v243 = vpack.c.b16 %v183, %v178
  %v244 = vpack.c.b16 %v184, %v179
  %v245 = vpack.c.b16 %v185, %v180
  %v246 = vpack.c.b16 %v191, %v186
  %v247 = vpack.c.b16 %v192, %v187
  %v248 = vpack.c.b16 %v193, %v188
  %v249 = vpack.c.b16 %v194, %v189
  %v250 = vpack.c.b16 %v195, %v190
  %v251 = vpack.c.b16 %v201, %v196
  %v252 = vpack.c.b16 %v202, %v197
  %v253 = vpack.c.b16 %v203, %v198
  %v254 = vpack.c.b16 %v204, %v199
  %v255 = vpack.c.b16 %v205, %v200
  %v256 = vpack.c.b16 %v211, %v206
  %v257 = vpack.c.b16 %v212, %v207
  %v258 = vpack.c.b16 %v213, %v208
  %v259 = vpack.c.b16 %v214, %v209
  %v260 = vpack.c.b16 %v215, %v210
  %v261 = vpack.c.b16 %v221, %v216
  %v262 = vpack.c.b16 %v222, %v217
  %v263 = vpack.c.b16 %v223, %v218
  %v264 = vpack.c.b16 %v224, %v219
  %v265 = vpack.c.b16 %v225, %v220
  %v266 = vpack.c.b16 %v231, %v226
  %v267 = vpack.c.b16 %v232, %v227
  %v268 = vpack.c.b16 %v233, %v228
  %v269 = vpack.c.b16 %v234, %v229
  %v270 = vpack.c.b16 %v235, %v230
  %v271 = vpack.c.b16 %v236, %v236
  %v272 = vpack.c.b16 %v237, %v237
  %v273 = vpack.c.b16 %v238, %v238
  %v274 = vpack.c.b16 %v239, %v239
  %v275 = vpack.c.b16 %v240, %v240
  %v391 = vunpack.c.l.b16 %v53
  %v392 = vunpack.c.l.b16 %v54
  %v393 = vunpack.c.l.b16 %v55
  %v394 = vunpack.c.l.b16 %v56
  %v395 = vunpack.c.l.b16 %v57
  %v396 = vunpack.c.l.b16 %v58
  %v397 = vunpack.c.l.b16 %v59
  %v398 = vunpack.c.l.b16 %v60
  %v399 = vunpack.c.l.b16 %v61
  %v400 = vunpack.c.l.b16 %v62
  %v401 = vunpack.c.l.b16 %v63
  %v402 = vunpack.c.l.b16 %v64
  %v403 = vunpack.c.l.b16 %v65
  %v404 = vunpack.c.l.b16 %v66
  %v405 = vunpack.c.l.b16 %v67
  %v406 = vunpack.c.l.b16 %v68
  %v407 = vunpack.c.l.b16 %v69
  %v408 = vunpack.c.l.b16 %v70
  %v409 = vunpack.c.l.b16 %v71
  %v410 = vunpack.c.l.b16 %v72
  %v411 = vunpack.c.l.b16 %v73
  %v412 = vunpack.c.l.b16 %v74
  %v413 = vunpack.c.l.b16 %v75
  %v414 = vunpack.c.l.b16 %v76
  %v415 = vunpack.c.l.b16 %v77
  %v416 = vunpack.c.l.b16 %v78
  %v417 = vunpack.c.l.b16 %v79
  %v418 = vunpack.c.l.b16 %v80
  %v419 = vunpack.c.l.b16 %v81
  %v420 = vunpack.c.l.b16 %v82
  %v421 = vunpack.c.l.b16 %v83
  %v422 = vunpack.c.l.b16 %v84
  %v423 = vunpack.c.l.b16 %v85
  %v424 = vunpack.c.l.b16 %v86
  %v425 = vunpack.c.l.b16 %v87
  %v426 = vunpack.c.l.b16 %v88
  %v427 = vunpack.c.l.b16 %v89
  %v428 = vunpack.c.l.b16 %v90
  %v429 = vunpack.c.l.b16 %v91
  %v430 = vunpack.c.l.b16 %v92
  %v431 = vunpack.c.l.b16 %v93
  %v432 = vunpack.c.l.b16 %v94
  %v433 = vunpack.c.l.b16 %v95
  %v434 = vunpack.c.l.b16 %v96
  %v435 = vunpack.c.l.b16 %v97
  %v436 = vunpack.c.l.b16 %v98
  %v437 = vunpack.c.l.b16 %v99
  %v438 = vunpack.c.l.b16 %v100
  %v439 = vunpack.c.l.b16 %v101
  %v440 = vunpack.c.l.b16 %v102
  %v441 = vunpack.c.l.b16 %v103
  %v442 = vunpack.c.l.b16 %v104
  %v443 = vunpack.c.l.b16 %v105
  %v444 = vunpack.c.l.b16 %v106
  %v445 = vunpack.c.l.b16 %v107
  %v446 = vunpack.c.l.b16 %v108
  %v447 = vunpack.c.l.b16 %v109
  %v448 = vunpack.c.l.b16 %v110
  %v449 = vunpack.c.l.b16 %v111
  %v450 = vunpack.c.l.b16 %v112
  %v451 = vunpack.c.l.b16 %v113
  %v452 = vunpack.c.l.b16 %v114
  %v453 = vunpack.c.l.b16 %v115
  %v454 = vunpack.c.l.b16 %v116
  %v455 = vunpack.c.l.b16 %v117
  %v456 = vunpack.c.l.b16 %v118
  %v457 = vunpack.c.l.b16 %v119
  %v458 = vunpack.c.l.b16 %v120
  %v459 = vunpack.c.l.b16 %v121
  %v460 = vunpack.c.l.b16 %v122
  %v461 = vunpack.c.l.b16 %v123
  %v462 = vunpack.c.l.b16 %v124
  %v463 = vunpack.c.l.b16 %v125
  %v464 = vunpack.c.l.b16 %v126
  %v465 = vunpack.c.l.b16 %v127
  %v466 = vunpack.c.l.b16 %v128
  %v467 = vunpack.c.l.b16 %v129
  %v468 = vunpack.c.l.b16 %v130
  %v469 = vunpack.c.l.b16 %v131
  %v470 = vunpack.c.l.b16 %v132
  %v471 = vpack.c.b16 %v392, %v391
  %v472 = vpack.c.b16 %v394, %v393
  %v473 = vpack.c.b16 %v396, %v395
  %v474 = vpack.c.b16 %v398, %v397
  %v475 = vpack.c.b16 %v400, %v399
  %v476 = vpack.c.b16 %v402, %v401
  %v477 = vpack.c.b16 %v404, %v403
  %v478 = vpack.c.b16 %v406, %v405
  %v479 = vpack.c.b16 %v408, %v407
  %v480 = vpack.c.b16 %v410, %v409
  %v481 = vpack.c.b16 %v412, %v411
  %v482 = vpack.c.b16 %v414, %v413
  %v483 = vpack.c.b16 %v416, %v415
  %v484 = vpack.c.b16 %v418, %v417
  %v485 = vpack.c.b16 %v420, %v419
  %v486 = vpack.c.b16 %v422, %v421
  %v487 = vpack.c.b16 %v424, %v423
  %v488 = vpack.c.b16 %v426, %v425
  %v489 = vpack.c.b16 %v428, %v427
  %v490 = vpack.c.b16 %v430, %v429
  %v491 = vpack.c.b16 %v432, %v431
  %v492 = vpack.c.b16 %v434, %v433
  %v493 = vpack.c.b16 %v436, %v435
  %v494 = vpack.c.b16 %v438, %v437
  %v495 = vpack.c.b16 %v440, %v439
  %v496 = vpack.c.b16 %v442, %v441
  %v497 = vpack.c.b16 %v444, %v443
  %v498 = vpack.c.b16 %v446, %v445
  %v499 = vpack.c.b16 %v448, %v447
  %v500 = vpack.c.b16 %v450, %v449
  %v501 = vpack.c.b16 %v452, %v451
  %v502 = vpack.c.b16 %v454, %v453
  %v503 = vpack.c.b16 %v456, %v455
  %v504 = vpack.c.b16 %v458, %v457
  %v505 = vpack.c.b16 %v460, %v459
  %v506 = vpack.c.b16 %v462, %v461
  %v507 = vpack.c.b16 %v464, %v463
  %v508 = vpack.c.b16 %v466, %v465
  %v509 = vpack.c.b16 %v468, %v467
  %v510 = vpack.c.b16 %v470, %v469
  %551 = vmatpush.bf16.msra.mxu0 %v478
  %552 = vmatpush.bf16.msra.mxu0 %v477
  %553 = vmatpush.bf16.msra.mxu0 %v476
  %554 = vmatpush.bf16.msra.mxu0 %v475
  %555 = vmatpush.bf16.msra.mxu0 %v474
  %556 = vmatpush.bf16.msra.mxu0 %v473
  %557 = vmatpush.bf16.msra.mxu0 %v472
  %558 = vmatpush.bf16.msra.mxu0 %v471
  %559 = vmatmul.bf16.gmra.mxu0 %v241
  %v560 = vpop.f32.mrf.mxu0
  %v561 = vadd.f32 %v135, %v560
  %v562 = vpop.f32.mrf.mxu0
  %v563 = vadd.f32 %v135, %v562
  %564 = vmatmul.bf16.gmra.mxu0 %v246
  %v565 = vpop.f32.mrf.mxu0
  %v566 = vadd.f32 %v135, %v565
  %v567 = vpop.f32.mrf.mxu0
  %v568 = vadd.f32 %v135, %v567
  %569 = vmatmul.bf16.gmra.mxu0 %v251
  %v570 = vpop.f32.mrf.mxu0
  %v571 = vadd.f32 %v135, %v570
  %v572 = vpop.f32.mrf.mxu0
  %v573 = vadd.f32 %v135, %v572
  %574 = vmatmul.bf16.gmra.mxu0 %v256
  %v575 = vpop.f32.mrf.mxu0
  %v576 = vadd.f32 %v135, %v575
  %v577 = vpop.f32.mrf.mxu0
  %v578 = vadd.f32 %v135, %v577
  %579 = vmatmul.bf16.gmra.mxu0 %v261
  %v580 = vpop.f32.mrf.mxu0
  %v581 = vadd.f32 %v135, %v580
  %v582 = vpop.f32.mrf.mxu0
  %v583 = vadd.f32 %v135, %v582
  %584 = vmatmul.bf16.gmra.mxu0 %v266
  %v585 = vpop.f32.mrf.mxu0
  %v586 = vadd.f32 %v135, %v585
  %v587 = vpop.f32.mrf.mxu0
  %v588 = vadd.f32 %v135, %v587
  %589 = vmatmul.bf16.gmra.mxu0 %v271
  %v590 = vpop.f32.mrf.mxu0
  %v591 = vadd.f32 %v135, %v590
  %v592 = vpop.f32.mrf.mxu0
  %593 = vdwg.mxu0
  %594 = vmatpush.bf16.msra.mxu0 %v486
  %595 = vmatpush.bf16.msra.mxu0 %v485
  %596 = vmatpush.bf16.msra.mxu0 %v484
  %597 = vmatpush.bf16.msra.mxu0 %v483
  %598 = vmatpush.bf16.msra.mxu0 %v482
  %599 = vmatpush.bf16.msra.mxu0 %v481
  %600 = vmatpush.bf16.msra.mxu0 %v480
  %601 = vmatpush.bf16.msra.mxu0 %v479
  %602 = vmatmul.bf16.gmra.mxu0 %v242
  %v603 = vpop.f32.mrf.mxu0
  %v604 = vadd.f32 %v561, %v603
  %v605 = vpop.f32.mrf.mxu0
  %v606 = vadd.f32 %v563, %v605
  %607 = vmatmul.bf16.gmra.mxu0 %v247
  %v608 = vpop.f32.mrf.mxu0
  %v609 = vadd.f32 %v566, %v608
  %v610 = vpop.f32.mrf.mxu0
  %v611 = vadd.f32 %v568, %v610
  %612 = vmatmul.bf16.gmra.mxu0 %v252
  %v613 = vpop.f32.mrf.mxu0
  %v614 = vadd.f32 %v571, %v613
  %v615 = vpop.f32.mrf.mxu0
  %v616 = vadd.f32 %v573, %v615
  %617 = vmatmul.bf16.gmra.mxu0 %v257
  %v618 = vpop.f32.mrf.mxu0
  %v619 = vadd.f32 %v576, %v618
  %v620 = vpop.f32.mrf.mxu0
  %v621 = vadd.f32 %v578, %v620
  %622 = vmatmul.bf16.gmra.mxu0 %v262
  %v623 = vpop.f32.mrf.mxu0
  %v624 = vadd.f32 %v581, %v623
  %v625 = vpop.f32.mrf.mxu0
  %v626 = vadd.f32 %v583, %v625
  %627 = vmatmul.bf16.gmra.mxu0 %v267
  %v628 = vpop.f32.mrf.mxu0
  %v629 = vadd.f32 %v586, %v628
  %v630 = vpop.f32.mrf.mxu0
  %v631 = vadd.f32 %v588, %v630
  %632 = vmatmul.bf16.gmra.mxu0 %v272
  %v633 = vpop.f32.mrf.mxu0
  %v634 = vadd.f32 %v591, %v633
  %v635 = vpop.f32.mrf.mxu0
  %636 = vdwg.mxu0
  %637 = vmatpush.bf16.msra.mxu0 %v494
  %638 = vmatpush.bf16.msra.mxu0 %v493
  %639 = vmatpush.bf16.msra.mxu0 %v492
  %640 = vmatpush.bf16.msra.mxu0 %v491
  %641 = vmatpush.bf16.msra.mxu0 %v490
  %642 = vmatpush.bf16.msra.mxu0 %v489
  %643 = vmatpush.bf16.msra.mxu0 %v488
  %644 = vmatpush.bf16.msra.mxu0 %v487
  %645 = vmatmul.bf16.gmra.mxu0 %v243
  %v646 = vpop.f32.mrf.mxu0
  %v647 = vadd.f32 %v604, %v646
  %v648 = vpop.f32.mrf.mxu0
  %v649 = vadd.f32 %v606, %v648
  %650 = vmatmul.bf16.gmra.mxu0 %v248
  %v651 = vpop.f32.mrf.mxu0
  %v652 = vadd.f32 %v609, %v651
  %v653 = vpop.f32.mrf.mxu0
  %v654 = vadd.f32 %v611, %v653
  %655 = vmatmul.bf16.gmra.mxu0 %v253
  %v656 = vpop.f32.mrf.mxu0
  %v657 = vadd.f32 %v614, %v656
  %v658 = vpop.f32.mrf.mxu0
  %v659 = vadd.f32 %v616, %v658
  %660 = vmatmul.bf16.gmra.mxu0 %v258
  %v661 = vpop.f32.mrf.mxu0
  %v662 = vadd.f32 %v619, %v661
  %v663 = vpop.f32.mrf.mxu0
  %v664 = vadd.f32 %v621, %v663
  %665 = vmatmul.bf16.gmra.mxu0 %v263
  %v666 = vpop.f32.mrf.mxu0
  %v667 = vadd.f32 %v624, %v666
  %v668 = vpop.f32.mrf.mxu0
  %v669 = vadd.f32 %v626, %v668
  %670 = vmatmul.bf16.gmra.mxu0 %v268
  %v671 = vpop.f32.mrf.mxu0
  %v672 = vadd.f32 %v629, %v671
  %v673 = vpop.f32.mrf.mxu0
  %v674 = vadd.f32 %v631, %v673
  %675 = vmatmul.bf16.gmra.mxu0 %v273
  %v676 = vpop.f32.mrf.mxu0
  %v677 = vadd.f32 %v634, %v676
  %v678 = vpop.f32.mrf.mxu0
  %679 = vdwg.mxu0
  %680 = vmatpush.bf16.msra.mxu0 %v502
  %681 = vmatpush.bf16.msra.mxu0 %v501
  %682 = vmatpush.bf16.msra.mxu0 %v500
  %683 = vmatpush.bf16.msra.mxu0 %v499
  %684 = vmatpush.bf16.msra.mxu0 %v498
  %685 = vmatpush.bf16.msra.mxu0 %v497
  %686 = vmatpush.bf16.msra.mxu0 %v496
  %687 = vmatpush.bf16.msra.mxu0 %v495
  %688 = vmatmul.bf16.gmra.mxu0 %v244
  %v689 = vpop.f32.mrf.mxu0
  %v690 = vadd.f32 %v647, %v689
  %v691 = vpop.f32.mrf.mxu0
  %v692 = vadd.f32 %v649, %v691
  %693 = vmatmul.bf16.gmra.mxu0 %v249
  %v694 = vpop.f32.mrf.mxu0
  %v695 = vadd.f32 %v652, %v694
  %v696 = vpop.f32.mrf.mxu0
  %v697 = vadd.f32 %v654, %v696
  %698 = vmatmul.bf16.gmra.mxu0 %v254
  %v699 = vpop.f32.mrf.mxu0
  %v700 = vadd.f32 %v657, %v699
  %v701 = vpop.f32.mrf.mxu0
  %v702 = vadd.f32 %v659, %v701
  %703 = vmatmul.bf16.gmra.mxu0 %v259
  %v704 = vpop.f32.mrf.mxu0
  %v705 = vadd.f32 %v662, %v704
  %v706 = vpop.f32.mrf.mxu0
  %v707 = vadd.f32 %v664, %v706
  %708 = vmatmul.bf16.gmra.mxu0 %v264
  %v709 = vpop.f32.mrf.mxu0
  %v710 = vadd.f32 %v667, %v709
  %v711 = vpop.f32.mrf.mxu0
  %v712 = vadd.f32 %v669, %v711
  %713 = vmatmul.bf16.gmra.mxu0 %v269
  %v714 = vpop.f32.mrf.mxu0
  %v715 = vadd.f32 %v672, %v714
  %v716 = vpop.f32.mrf.mxu0
  %v717 = vadd.f32 %v674, %v716
  %718 = vmatmul.bf16.gmra.mxu0 %v274
  %v719 = vpop.f32.mrf.mxu0
  %v720 = vadd.f32 %v677, %v719
  %v721 = vpop.f32.mrf.mxu0
  %722 = vdwg.mxu0
  %723 = vmatpush.bf16.msra.mxu0 %v510
  %724 = vmatpush.bf16.msra.mxu0 %v509
  %725 = vmatpush.bf16.msra.mxu0 %v508
  %726 = vmatpush.bf16.msra.mxu0 %v507
  %727 = vmatpush.bf16.msra.mxu0 %v506
  %728 = vmatpush.bf16.msra.mxu0 %v505
  %729 = vmatpush.bf16.msra.mxu0 %v504
  %730 = vmatpush.bf16.msra.mxu0 %v503
  %731 = vmatmul.bf16.gmra.mxu0 %v245
  %v732 = vpop.f32.mrf.mxu0
  %v733 = vadd.f32 %v690, %v732
  %v734 = vpop.f32.mrf.mxu0
  %v735 = vadd.f32 %v692, %v734
  %736 = vmatmul.bf16.gmra.mxu0 %v250
  %v737 = vpop.f32.mrf.mxu0
  %v738 = vadd.f32 %v695, %v737
  %v739 = vpop.f32.mrf.mxu0
  %v740 = vadd.f32 %v697, %v739
  %741 = vmatmul.bf16.gmra.mxu0 %v255
  %v742 = vpop.f32.mrf.mxu0
  %v743 = vadd.f32 %v700, %v742
  %v744 = vpop.f32.mrf.mxu0
  %v745 = vadd.f32 %v702, %v744
  %746 = vmatmul.bf16.gmra.mxu0 %v260
  %v747 = vpop.f32.mrf.mxu0
  %v748 = vadd.f32 %v705, %v747
  %v749 = vpop.f32.mrf.mxu0
  %v750 = vadd.f32 %v707, %v749
  %751 = vmatmul.bf16.gmra.mxu0 %v265
  %v752 = vpop.f32.mrf.mxu0
  %v753 = vadd.f32 %v710, %v752
  %v754 = vpop.f32.mrf.mxu0
  %v755 = vadd.f32 %v712, %v754
  %756 = vmatmul.bf16.gmra.mxu0 %v270
  %v757 = vpop.f32.mrf.mxu0
  %v758 = vadd.f32 %v715, %v757
  %v759 = vpop.f32.mrf.mxu0
  %v760 = vadd.f32 %v717, %v759
  %761 = vmatmul.bf16.gmra.mxu0 %v275
  %v762 = vpop.f32.mrf.mxu0
  %v763 = vadd.f32 %v720, %v762
  %v764 = vpop.f32.mrf.mxu0
  %765 = vdwg.mxu0
  %v766 = vmax.f32 %v733, 0.0
  %v767 = vmax.f32 %v735, 0.0
  %v768 = vmax.f32 %v738, 0.0
  %v769 = vmax.f32 %v740, 0.0
  %v770 = vmax.f32 %v743, 0.0
  %v771 = vmax.f32 %v745, 0.0
  %v772 = vmax.f32 %v748, 0.0
  %v773 = vmax.f32 %v750, 0.0
  %v774 = vmax.f32 %v753, 0.0
  %v775 = vmax.f32 %v755, 0.0
  %v776 = vmax.f32 %v758, 0.0
  %v777 = vmax.f32 %v760, 0.0
  %v778 = vmax.f32 %v763, 0.0
  %v779 = vpack.c.bf16 %v766, %v766
  %v780 = vpack.c.bf16 %v767, %v767
  %v781 = vpack.c.bf16 %v768, %v768
  %v782 = vpack.c.bf16 %v769, %v769
  %v783 = vpack.c.bf16 %v770, %v770
  %v784 = vpack.c.bf16 %v771, %v771
  %v785 = vpack.c.bf16 %v772, %v772
  %v786 = vpack.c.bf16 %v773, %v773
  %v787 = vpack.c.bf16 %v774, %v774
  %v788 = vpack.c.bf16 %v775, %v775
  %v789 = vpack.c.bf16 %v776, %v776
  %v790 = vpack.c.bf16 %v777, %v777
  %v791 = vpack.c.bf16 %v778, %v778
  %792 = vst [vmem:[%s3] sm:$0xf] %v779
  %793 = vst [vmem:[%s3 + $0x4] sm:$0xf] %v780
  %794 = vst [vmem:[%s3 + $0x8] sm:$0xf] %v781
  %795 = vst [vmem:[%s3 + $0xc] sm:$0xf] %v782
  %796 = vst [vmem:[%s3 + $0x10] sm:$0xf] %v783
  %797 = vst [vmem:[%s3 + $0x14] sm:$0xf] %v784
  %798 = vst [vmem:[%s3 + $0x18] sm:$0xf] %v785
  %799 = vst [vmem:[%s3 + $0x1c] sm:$0xf] %v786
  %800 = vst [vmem:[%s3 + $0x20] sm:$0xf] %v787
  %801 = vst [vmem:[%s3 + $0x24] sm:$0xf] %v788
  %802 = vst [vmem:[%s3 + $0x28] sm:$0xf] %v789
  %803 = vst [vmem:[%s3 + $0x2c] sm:$0xf] %v790
  %804 = vst [vmem:[%s3 + $0x30] sm:$0xf] %v791
  // Predicated region
  $region14: #{vacnn_forward.6} parent=0 // pred_check
    _
  $region15: #{vacnn_forward.6} parent=0 // pred_check_branch
    %806 = sbr.rel (0) target = $region17
  $region16: #{vacnn_forward.6} parent=0 // pred_region
    _
  $region17: #{vacnn_forward.6} parent=0 // pred_fallthru
    _
  // Predicated region
  $region18: #{vacnn_forward.6} parent=0 // pred_check
    _
  $region19: #{vacnn_forward.6} parent=0 // pred_check_branch
    %808 = sbr.rel (0) target = $region21
  $region20: #{vacnn_forward.6} parent=0 // pred_region
    _
  $region21: #{vacnn_forward.6} parent=0 // pred_fallthru
    _

// kernel: vacnn_forward.7
$region0: #{vacnn_forward.7}
  #allocation0 [shape = 'u32[]', space=smem, size = 0x4, offset = 0x4, fixed_abs, tag = 'smem constant byte address 0x4 - core index']
  #allocation1 [shape = 'u32[72,128]{1,0:T(1,128)}', space=vmem, size = 0x9000, scoped, tag = 'internal scratch']
  %s0 = inlined_call_operand.vmem [shape: bf16[8,3200], index: 0, kind: input, shape index: {}]
  %s1 = inlined_call_operand.vmem [shape: bf16[3200,1024], index: 1, kind: input, shape index: {}]
  %s2 = inlined_call_operand.vmem [shape: f32[1,1024], index: 2, kind: input, shape index: {}]
  %s3 = inlined_call_operand.vmem [shape: bf16[512,128], index: 3, kind: input, shape index: {}]
  %s4 = inlined_call_operand.vmem [shape: f32[1,128], index: 4, kind: input, shape index: {}]
  %s5 = inlined_call_operand.vmem [shape: bf16[512,128], index: 5, kind: input, shape index: {}]
  %s6 = inlined_call_operand.vmem [shape: f32[1,128], index: 6, kind: input, shape index: {}]
  %s7 = inlined_call_operand.vmem [shape: f32[8,128], index: 7, kind: output, shape index: {}]
  %s8 = sld [smem:[#allocation0]]
  $region38: #{vacnn_forward.7} parent=0
    _
  %s10 = ssub.s32 1, %s8
  %s11 = scalar_select 0, %s10, %s8
  // Predicated region
  $region2: #{vacnn_forward.7} parent=0 // pred_check
    _
  $region3: #{vacnn_forward.7} parent=0 // pred_check_branch
    %13 = sbr.rel (0) target = $region5
  $region4: #{vacnn_forward.7} parent=0 // pred_region
    _
  $region5: #{vacnn_forward.7} parent=0 // pred_fallthru
    _
  // Predicated region
  $region6: #{vacnn_forward.7} parent=0 // pred_check
    _
  $region7: #{vacnn_forward.7} parent=0 // pred_check_branch
    %15 = sbr.rel (0) target = $region9
  $region8: #{vacnn_forward.7} parent=0 // pred_region
    _
  $region9: #{vacnn_forward.7} parent=0 // pred_fallthru
    _
  // Predicated region
  $region10: #{vacnn_forward.7} parent=0 // pred_check
    _
  $region11: #{vacnn_forward.7} parent=0 // pred_check_branch
    %17 = sbr.rel (0) target = $region13
  $region12: #{vacnn_forward.7} parent=0 // pred_region
    _
  $region13: #{vacnn_forward.7} parent=0 // pred_fallthru
    _
  // Predicated region
  $region14: #{vacnn_forward.7} parent=0 // pred_check
    _
  $region15: #{vacnn_forward.7} parent=0 // pred_check_branch
    %19 = sbr.rel (0) target = $region17
  $region16: #{vacnn_forward.7} parent=0 // pred_region
    _
  $region17: #{vacnn_forward.7} parent=0 // pred_fallthru
    _
  // Predicated region
  $region18: #{vacnn_forward.7} parent=0 // pred_check
    _
  $region19: #{vacnn_forward.7} parent=0 // pred_check_branch
    %21 = sbr.rel (0) target = $region21
  $region20: #{vacnn_forward.7} parent=0 // pred_region
    _
  $region21: #{vacnn_forward.7} parent=0 // pred_fallthru
    _
  // Predicated region
  $region22: #{vacnn_forward.7} parent=0 // pred_check
    _
  $region23: #{vacnn_forward.7} parent=0 // pred_check_branch
    %23 = sbr.rel (0) target = $region25
  $region24: #{vacnn_forward.7} parent=0 // pred_region
    _
  $region25: #{vacnn_forward.7} parent=0 // pred_fallthru
    _
  // Predicated region
  $region26: #{vacnn_forward.7} parent=0 // pred_check
    _
  $region27: #{vacnn_forward.7} parent=0 // pred_check_branch
    %25 = sbr.rel (0) target = $region29
  $region28: #{vacnn_forward.7} parent=0 // pred_region
    _
  $region29: #{vacnn_forward.7} parent=0 // pred_fallthru
    _
  %v26 = vld [vmem:[%s0] sm:$0xff]
  %v27 = vld [vmem:[%s0 + $0x8] sm:$0xff]
  %v28 = vld [vmem:[%s0 + $0x10] sm:$0xff]
  %v29 = vld [vmem:[%s0 + $0x18] sm:$0xff]
  %v30 = vld [vmem:[%s0 + $0x20] sm:$0xff]
  %v31 = vld [vmem:[%s0 + $0x28] sm:$0xff]
  %v32 = vld [vmem:[%s0 + $0x30] sm:$0xff]
  %v33 = vld [vmem:[%s0 + $0x38] sm:$0xff]
  %v34 = vld [vmem:[%s0 + $0x40] sm:$0xff]
  %v35 = vld [vmem:[%s0 + $0x48] sm:$0xff]
  %v36 = vld [vmem:[%s0 + $0x50] sm:$0xff]
  %v37 = vld [vmem:[%s0 + $0x58] sm:$0xff]
  %v38 = vld [vmem:[%s0 + $0x60] sm:$0xf]
  %v39 = vld [vmem:[%s1] sm:$0xff]
  %v40 = vld [vmem:[%s1 + $0x8] sm:$0xff]
  %v41 = vld [vmem:[%s1 + $0x10] sm:$0xff]
  %v42 = vld [vmem:[%s1 + $0x18] sm:$0xff]
  %v43 = vld [vmem:[%s1 + $0x20] sm:$0xff]
  %v44 = vld [vmem:[%s1 + $0x28] sm:$0xff]
  %v45 = vld [vmem:[%s1 + $0x30] sm:$0xff]
  %v46 = vld [vmem:[%s1 + $0x38] sm:$0xff]
  %v47 = vld [vmem:[%s1 + $0x40] sm:$0xff]
  %v48 = vld [vmem:[%s1 + $0x48] sm:$0xff]
  %v49 = vld [vmem:[%s1 + $0x50] sm:$0xff]
  %v50 = vld [vmem:[%s1 + $0x58] sm:$0xff]
  %v51 = vld [vmem:[%s1 + $0x60] sm:$0xff]
  %v52 = vld [vmem:[%s1 + $0x68] sm:$0xff]
  %v53 = vld [vmem:[%s1 + $0x70] sm:$0xff]
  %v54 = vld [vmem:[%s1 + $0x78] sm:$0xff]
  %v55 = vld [vmem:[%s1 + $0x80] sm:$0xff]
  %v56 = vld [vmem:[%s1 + $0x88] sm:$0xff]
  %v57 = vld [vmem:[%s1 + $0x90] sm:$0xff]
  %v58 = vld [vmem:[%s1 + $0x98] sm:$0xff]
  %v59 = vld [vmem:[%s1 + $0xa0] sm:$0xff]
  %v60 = vld [vmem:[%s1 + $0xa8] sm:$0xff]
  %v61 = vld [vmem:[%s1 + $0xb0] sm:$0xff]
  %v62 = vld [vmem:[%s1 + $0xb8] sm:$0xff]
  %v63 = vld [vmem:[%s1 + $0xc0] sm:$0xff]
  %v64 = vld [vmem:[%s1 + $0xc8] sm:$0xff]
  %v65 = vld [vmem:[%s1 + $0xd0] sm:$0xff]
  %v66 = vld [vmem:[%s1 + $0xd8] sm:$0xff]
  %v67 = vld [vmem:[%s1 + $0xe0] sm:$0xff]
  %v68 = vld [vmem:[%s1 + $0xe8] sm:$0xff]
  %v69 = vld [vmem:[%s1 + $0xf0] sm:$0xff]
  %v70 = vld [vmem:[%s1 + $0xf8] sm:$0xff]
  %v71 = vld [vmem:[%s1 + $0x100] sm:$0xff]
  %v72 = vld [vmem:[%s1 + $0x108] sm:$0xff]
  %v73 = vld [vmem:[%s1 + $0x110] sm:$0xff]
  %v74 = vld [vmem:[%s1 + $0x118] sm:$0xff]
  %v75 = vld [vmem:[%s1 + $0x120] sm:$0xff]
  %v76 = vld [vmem:[%s1 + $0x128] sm:$0xff]
  %v77 = vld [vmem:[%s1 + $0x130] sm:$0xff]
  %v78 = vld [vmem:[%s1 + $0x138] sm:$0xff]
  %v79 = vld [vmem:[%s1 + $0x140] sm:$0xff]
  %v80 = vld [vmem:[%s1 + $0x148] sm:$0xff]
  %v81 = vld [vmem:[%s1 + $0x150] sm:$0xff]
  %v82 = vld [vmem:[%s1 + $0x158] sm:$0xff]
  %v83 = vld [vmem:[%s1 + $0x160] sm:$0xff]
  %v84 = vld [vmem:[%s1 + $0x168] sm:$0xff]
  %v85 = vld [vmem:[%s1 + $0x170] sm:$0xff]
  %v86 = vld [vmem:[%s1 + $0x178] sm:$0xff]
  %v87 = vld [vmem:[%s1 + $0x180] sm:$0xff]
  %v88 = vld [vmem:[%s1 + $0x188] sm:$0xff]
  %v89 = vld [vmem:[%s1 + $0x190] sm:$0xff]
  %v90 = vld [vmem:[%s1 + $0x198] sm:$0xff]
  %v91 = vld [vmem:[%s1 + $0x1a0] sm:$0xff]
  %v92 = vld [vmem:[%s1 + $0x1a8] sm:$0xff]
  %v93 = vld [vmem:[%s1 + $0x1b0] sm:$0xff]
  %v94 = vld [vmem:[%s1 + $0x1b8] sm:$0xff]
  %v95 = vld [vmem:[%s1 + $0x1c0] sm:$0xff]
  %v96 = vld [vmem:[%s1 + $0x1c8] sm:$0xff]
  %v97 = vld [vmem:[%s1 + $0x1d0] sm:$0xff]
  %v98 = vld [vmem:[%s1 + $0x1d8] sm:$0xff]
  %v99 = vld [vmem:[%s1 + $0x1e0] sm:$0xff]
  %v100 = vld [vmem:[%s1 + $0x1e8] sm:$0xff]
  %v101 = vld [vmem:[%s1 + $0x1f0] sm:$0xff]
  %v102 = vld [vmem:[%s1 + $0x1f8] sm:$0xff]
  %v103 = vld [vmem:[%s1 + $0x200] sm:$0xff]
  %v104 = vld [vmem:[%s1 + $0x208] sm:$0xff]
  %v105 = vld [vmem:[%s1 + $0x210] sm:$0xff]
  %v106 = vld [vmem:[%s1 + $0x218] sm:$0xff]
  %v107 = vld [vmem:[%s1 + $0x220] sm:$0xff]
  %v108 = vld [vmem:[%s1 + $0x228] sm:$0xff]
  %v109 = vld [vmem:[%s1 + $0x230] sm:$0xff]
  %v110 = vld [vmem:[%s1 + $0x238] sm:$0xff]
  %v111 = vld [vmem:[%s1 + $0x240] sm:$0xff]
  %v112 = vld [vmem:[%s1 + $0x248] sm:$0xff]
  %v113 = vld [vmem:[%s1 + $0x250] sm:$0xff]
  %v114 = vld [vmem:[%s1 + $0x258] sm:$0xff]
  %v115 = vld [vmem:[%s1 + $0x260] sm:$0xff]
  %v116 = vld [vmem:[%s1 + $0x268] sm:$0xff]
  %v117 = vld [vmem:[%s1 + $0x270] sm:$0xff]
  %v118 = vld [vmem:[%s1 + $0x278] sm:$0xff]
  %v119 = vld [vmem:[%s1 + $0x280] sm:$0xff]
  %v120 = vld [vmem:[%s1 + $0x288] sm:$0xff]
  %v121 = vld [vmem:[%s1 + $0x290] sm:$0xff]
  %v122 = vld [vmem:[%s1 + $0x298] sm:$0xff]
  %v123 = vld [vmem:[%s1 + $0x2a0] sm:$0xff]
  %v124 = vld [vmem:[%s1 + $0x2a8] sm:$0xff]
  %v125 = vld [vmem:[%s1 + $0x2b0] sm:$0xff]
  %v126 = vld [vmem:[%s1 + $0x2b8] sm:$0xff]
  %v127 = vld [vmem:[%s1 + $0x2c0] sm:$0xff]
  %v128 = vld [vmem:[%s1 + $0x2c8] sm:$0xff]
  %v129 = vld [vmem:[%s1 + $0x2d0] sm:$0xff]
  %v130 = vld [vmem:[%s1 + $0x2d8] sm:$0xff]
  %v131 = vld [vmem:[%s1 + $0x2e0] sm:$0xff]
  %v132 = vld [vmem:[%s1 + $0x2e8] sm:$0xff]
  %v133 = vld [vmem:[%s1 + $0x2f0] sm:$0xff]
  %v134 = vld [vmem:[%s1 + $0x2f8] sm:$0xff]
  %v135 = vld [vmem:[%s1 + $0x300] sm:$0xff]
  %v136 = vld [vmem:[%s1 + $0x308] sm:$0xff]
  %v137 = vld [vmem:[%s1 + $0x310] sm:$0xff]
  %v138 = vld [vmem:[%s1 + $0x318] sm:$0xff]
  %v139 = vld [vmem:[%s1 + $0x320] sm:$0xff]
  %v140 = vld [vmem:[%s1 + $0x328] sm:$0xff]
  %v141 = vld [vmem:[%s1 + $0x330] sm:$0xff]
  %v142 = vld [vmem:[%s1 + $0x338] sm:$0xff]
  %v143 = vld [vmem:[%s1 + $0x340] sm:$0xff]
  %v144 = vld [vmem:[%s1 + $0x348] sm:$0xff]
  %v145 = vld [vmem:[%s1 + $0x350] sm:$0xff]
  %v146 = vld [vmem:[%s1 + $0x358] sm:$0xff]
  %v147 = vld [vmem:[%s1 + $0x360] sm:$0xff]
  %v148 = vld [vmem:[%s1 + $0x368] sm:$0xff]
  %v149 = vld [vmem:[%s1 + $0x370] sm:$0xff]
  %v150 = vld [vmem:[%s1 + $0x378] sm:$0xff]
  %v151 = vld [vmem:[%s1 + $0x380] sm:$0xff]
  %v152 = vld [vmem:[%s1 + $0x388] sm:$0xff]
  %v153 = vld [vmem:[%s1 + $0x390] sm:$0xff]
  %v154 = vld [vmem:[%s1 + $0x398] sm:$0xff]
  %v155 = vld [vmem:[%s1 + $0x3a0] sm:$0xff]
  %v156 = vld [vmem:[%s1 + $0x3a8] sm:$0xff]
  %v157 = vld [vmem:[%s1 + $0x3b0] sm:$0xff]
  %v158 = vld [vmem:[%s1 + $0x3b8] sm:$0xff]
  %v159 = vld [vmem:[%s1 + $0x3c0] sm:$0xff]
  %v160 = vld [vmem:[%s1 + $0x3c8] sm:$0xff]
  %v161 = vld [vmem:[%s1 + $0x3d0] sm:$0xff]
  %v162 = vld [vmem:[%s1 + $0x3d8] sm:$0xff]
  %v163 = vld [vmem:[%s1 + $0x3e0] sm:$0xff]
  %v164 = vld [vmem:[%s1 + $0x3e8] sm:$0xff]
  %v165 = vld [vmem:[%s1 + $0x3f0] sm:$0xff]
  %v166 = vld [vmem:[%s1 + $0x3f8] sm:$0xff]
  %v167 = vld [vmem:[%s1 + $0x400] sm:$0xff]
  %v168 = vld [vmem:[%s1 + $0x408] sm:$0xff]
  %v169 = vld [vmem:[%s1 + $0x410] sm:$0xff]
  %v170 = vld [vmem:[%s1 + $0x418] sm:$0xff]
  %v171 = vld [vmem:[%s1 + $0x420] sm:$0xff]
  %v172 = vld [vmem:[%s1 + $0x428] sm:$0xff]
  %v173 = vld [vmem:[%s1 + $0x430] sm:$0xff]
  %v174 = vld [vmem:[%s1 + $0x438] sm:$0xff]
  %v175 = vld [vmem:[%s1 + $0x440] sm:$0xff]
  %v176 = vld [vmem:[%s1 + $0x448] sm:$0xff]
  %v177 = vld [vmem:[%s1 + $0x450] sm:$0xff]
  %v178 = vld [vmem:[%s1 + $0x458] sm:$0xff]
  %v179 = vld [vmem:[%s1 + $0x460] sm:$0xff]
  %v180 = vld [vmem:[%s1 + $0x468] sm:$0xff]
  %v181 = vld [vmem:[%s1 + $0x470] sm:$0xff]
  %v182 = vld [vmem:[%s1 + $0x478] sm:$0xff]
  %v183 = vld [vmem:[%s1 + $0x480] sm:$0xff]
  %v184 = vld [vmem:[%s1 + $0x488] sm:$0xff]
  %v185 = vld [vmem:[%s1 + $0x490] sm:$0xff]
  %v186 = vld [vmem:[%s1 + $0x498] sm:$0xff]
  %v187 = vld [vmem:[%s1 + $0x4a0] sm:$0xff]
  %v188 = vld [vmem:[%s1 + $0x4a8] sm:$0xff]
  %v189 = vld [vmem:[%s1 + $0x4b0] sm:$0xff]
  %v190 = vld [vmem:[%s1 + $0x4b8] sm:$0xff]
  %v191 = vld [vmem:[%s1 + $0x4c0] sm:$0xff]
  %v192 = vld [vmem:[%s1 + $0x4c8] sm:$0xff]
  %v193 = vld [vmem:[%s1 + $0x4d0] sm:$0xff]
  %v194 = vld [vmem:[%s1 + $0x4d8] sm:$0xff]
  %v195 = vld [vmem:[%s1 + $0x4e0] sm:$0xff]
  %v196 = vld [vmem:[%s1 + $0x4e8] sm:$0xff]
  %v197 = vld [vmem:[%s1 + $0x4f0] sm:$0xff]
  %v198 = vld [vmem:[%s1 + $0x4f8] sm:$0xff]
  %v199 = vld [vmem:[%s1 + $0x500] sm:$0xff]
  %v200 = vld [vmem:[%s1 + $0x508] sm:$0xff]
  %v201 = vld [vmem:[%s1 + $0x510] sm:$0xff]
  %v202 = vld [vmem:[%s1 + $0x518] sm:$0xff]
  %v203 = vld [vmem:[%s1 + $0x520] sm:$0xff]
  %v204 = vld [vmem:[%s1 + $0x528] sm:$0xff]
  %v205 = vld [vmem:[%s1 + $0x530] sm:$0xff]
  %v206 = vld [vmem:[%s1 + $0x538] sm:$0xff]
  %v207 = vld [vmem:[%s1 + $0x540] sm:$0xff]
  %v208 = vld [vmem:[%s1 + $0x548] sm:$0xff]
  %v209 = vld [vmem:[%s1 + $0x550] sm:$0xff]
  %v210 = vld [vmem:[%s1 + $0x558] sm:$0xff]
  %v211 = vld [vmem:[%s1 + $0x560] sm:$0xff]
  %v212 = vld [vmem:[%s1 + $0x568] sm:$0xff]
  %v213 = vld [vmem:[%s1 + $0x570] sm:$0xff]
  %v214 = vld [vmem:[%s1 + $0x578] sm:$0xff]
  %v215 = vld [vmem:[%s1 + $0x580] sm:$0xff]
  %v216 = vld [vmem:[%s1 + $0x588] sm:$0xff]
  %v217 = vld [vmem:[%s1 + $0x590] sm:$0xff]
  %v218 = vld [vmem:[%s1 + $0x598] sm:$0xff]
  %v219 = vld [vmem:[%s1 + $0x5a0] sm:$0xff]
  %v220 = vld [vmem:[%s1 + $0x5a8] sm:$0xff]
  %v221 = vld [vmem:[%s1 + $0x5b0] sm:$0xff]
  %v222 = vld [vmem:[%s1 + $0x5b8] sm:$0xff]
  %v223 = vld [vmem:[%s1 + $0x5c0] sm:$0xff]
  %v224 = vld [vmem:[%s1 + $0x5c8] sm:$0xff]
  %v225 = vld [vmem:[%s1 + $0x5d0] sm:$0xff]
  %v226 = vld [vmem:[%s1 + $0x5d8] sm:$0xff]
  %v227 = vld [vmem:[%s1 + $0x5e0] sm:$0xff]
  %v228 = vld [vmem:[%s1 + $0x5e8] sm:$0xff]
  %v229 = vld [vmem:[%s1 + $0x5f0] sm:$0xff]
  %v230 = vld [vmem:[%s1 + $0x5f8] sm:$0xff]
  %v231 = vld [vmem:[%s1 + $0x600] sm:$0xff]
  %v232 = vld [vmem:[%s1 + $0x608] sm:$0xff]
  %v233 = vld [vmem:[%s1 + $0x610] sm:$0xff]
  %v234 = vld [vmem:[%s1 + $0x618] sm:$0xff]
  %v235 = vld [vmem:[%s1 + $0x620] sm:$0xff]
  %v236 = vld [vmem:[%s1 + $0x628] sm:$0xff]
  %v237 = vld [vmem:[%s1 + $0x630] sm:$0xff]
  %v238 = vld [vmem:[%s1 + $0x638] sm:$0xff]
  %v239 = vld [vmem:[%s1 + $0x640] sm:$0xff]
  %v240 = vld [vmem:[%s1 + $0x648] sm:$0xff]
  %v241 = vld [vmem:[%s1 + $0x650] sm:$0xff]
  %v242 = vld [vmem:[%s1 + $0x658] sm:$0xff]
  %v243 = vld [vmem:[%s1 + $0x660] sm:$0xff]
  %v244 = vld [vmem:[%s1 + $0x668] sm:$0xff]
  %v245 = vld [vmem:[%s1 + $0x670] sm:$0xff]
  %v246 = vld [vmem:[%s1 + $0x678] sm:$0xff]
  %v247 = vld [vmem:[%s1 + $0x680] sm:$0xff]
  %v248 = vld [vmem:[%s1 + $0x688] sm:$0xff]
  %v249 = vld [vmem:[%s1 + $0x690] sm:$0xff]
  %v250 = vld [vmem:[%s1 + $0x698] sm:$0xff]
  %v251 = vld [vmem:[%s1 + $0x6a0] sm:$0xff]
  %v252 = vld [vmem:[%s1 + $0x6a8] sm:$0xff]
  %v253 = vld [vmem:[%s1 + $0x6b0] sm:$0xff]
  %v254 = vld [vmem:[%s1 + $0x6b8] sm:$0xff]
  %v255 = vld [vmem:[%s1 + $0x6c0] sm:$0xff]
  %v256 = vld [vmem:[%s1 + $0x6c8] sm:$0xff]
  %v257 = vld [vmem:[%s1 + $0x6d0] sm:$0xff]
  %v258 = vld [vmem:[%s1 + $0x6d8] sm:$0xff]
  %v259 = vld [vmem:[%s1 + $0x6e0] sm:$0xff]
  %v260 = vld [vmem:[%s1 + $0x6e8] sm:$0xff]
  %v261 = vld [vmem:[%s1 + $0x6f0] sm:$0xff]
  %v262 = vld [vmem:[%s1 + $0x6f8] sm:$0xff]
  %v263 = vld [vmem:[%s1 + $0x700] sm:$0xff]
  %v264 = vld [vmem:[%s1 + $0x708] sm:$0xff]
  %v265 = vld [vmem:[%s1 + $0x710] sm:$0xff]
  %v266 = vld [vmem:[%s1 + $0x718] sm:$0xff]
  %v267 = vld [vmem:[%s1 + $0x720] sm:$0xff]
  %v268 = vld [vmem:[%s1 + $0x728] sm:$0xff]
  %v269 = vld [vmem:[%s1 + $0x730] sm:$0xff]
  %v270 = vld [vmem:[%s1 + $0x738] sm:$0xff]
  %v271 = vld [vmem:[%s1 + $0x740] sm:$0xff]
  %v272 = vld [vmem:[%s1 + $0x748] sm:$0xff]
  %v273 = vld [vmem:[%s1 + $0x750] sm:$0xff]
  %v274 = vld [vmem:[%s1 + $0x758] sm:$0xff]
  %v275 = vld [vmem:[%s1 + $0x760] sm:$0xff]
  %v276 = vld [vmem:[%s1 + $0x768] sm:$0xff]
  %v277 = vld [vmem:[%s1 + $0x770] sm:$0xff]
  %v278 = vld [vmem:[%s1 + $0x778] sm:$0xff]
  %v279 = vld [vmem:[%s1 + $0x780] sm:$0xff]
  %v280 = vld [vmem:[%s1 + $0x788] sm:$0xff]
  %v281 = vld [vmem:[%s1 + $0x790] sm:$0xff]
  %v282 = vld [vmem:[%s1 + $0x798] sm:$0xff]
  %v283 = vld [vmem:[%s1 + $0x7a0] sm:$0xff]
  %v284 = vld [vmem:[%s1 + $0x7a8] sm:$0xff]
  %v285 = vld [vmem:[%s1 + $0x7b0] sm:$0xff]
  %v286 = vld [vmem:[%s1 + $0x7b8] sm:$0xff]
  %v287 = vld [vmem:[%s1 + $0x7c0] sm:$0xff]
  %v288 = vld [vmem:[%s1 + $0x7c8] sm:$0xff]
  %v289 = vld [vmem:[%s1 + $0x7d0] sm:$0xff]
  %v290 = vld [vmem:[%s1 + $0x7d8] sm:$0xff]
  %v291 = vld [vmem:[%s1 + $0x7e0] sm:$0xff]
  %v292 = vld [vmem:[%s1 + $0x7e8] sm:$0xff]
  %v293 = vld [vmem:[%s1 + $0x7f0] sm:$0xff]
  %v294 = vld [vmem:[%s1 + $0x7f8] sm:$0xff]
  %v295 = vld [vmem:[%s1 + $0x800] sm:$0xff]
  %v296 = vld [vmem:[%s1 + $0x808] sm:$0xff]
  %v297 = vld [vmem:[%s1 + $0x810] sm:$0xff]
  %v298 = vld [vmem:[%s1 + $0x818] sm:$0xff]
  %v299 = vld [vmem:[%s1 + $0x820] sm:$0xff]
  %v300 = vld [vmem:[%s1 + $0x828] sm:$0xff]
  %v301 = vld [vmem:[%s1 + $0x830] sm:$0xff]
  %v302 = vld [vmem:[%s1 + $0x838] sm:$0xff]
  %v303 = vld [vmem:[%s1 + $0x840] sm:$0xff]
  %v304 = vld [vmem:[%s1 + $0x848] sm:$0xff]
  %v305 = vld [vmem:[%s1 + $0x850] sm:$0xff]
  %v306 = vld [vmem:[%s1 + $0x858] sm:$0xff]
  %v307 = vld [vmem:[%s1 + $0x860] sm:$0xff]
  %v308 = vld [vmem:[%s1 + $0x868] sm:$0xff]
  %v309 = vld [vmem:[%s1 + $0x870] sm:$0xff]
  %v310 = vld [vmem:[%s1 + $0x878] sm:$0xff]
  %v311 = vld [vmem:[%s1 + $0x880] sm:$0xff]
  %v312 = vld [vmem:[%s1 + $0x888] sm:$0xff]
  %v313 = vld [vmem:[%s1 + $0x890] sm:$0xff]
  %v314 = vld [vmem:[%s1 + $0x898] sm:$0xff]
  %v315 = vld [vmem:[%s1 + $0x8a0] sm:$0xff]
  %v316 = vld [vmem:[%s1 + $0x8a8] sm:$0xff]
  %v317 = vld [vmem:[%s1 + $0x8b0] sm:$0xff]
  %v318 = vld [vmem:[%s1 + $0x8b8] sm:$0xff]
  %v319 = vld [vmem:[%s1 + $0x8c0] sm:$0xff]
  %v320 = vld [vmem:[%s1 + $0x8c8] sm:$0xff]
  %v321 = vld [vmem:[%s1 + $0x8d0] sm:$0xff]
  %v322 = vld [vmem:[%s1 + $0x8d8] sm:$0xff]
  %v323 = vld [vmem:[%s1 + $0x8e0] sm:$0xff]
  %v324 = vld [vmem:[%s1 + $0x8e8] sm:$0xff]
  %v325 = vld [vmem:[%s1 + $0x8f0] sm:$0xff]
  %v326 = vld [vmem:[%s1 + $0x8f8] sm:$0xff]
  %v327 = vld [vmem:[%s1 + $0x900] sm:$0xff]
  %v328 = vld [vmem:[%s1 + $0x908] sm:$0xff]
  %v329 = vld [vmem:[%s1 + $0x910] sm:$0xff]
  %v330 = vld [vmem:[%s1 + $0x918] sm:$0xff]
  %v331 = vld [vmem:[%s1 + $0x920] sm:$0xff]
  %v332 = vld [vmem:[%s1 + $0x928] sm:$0xff]
  %v333 = vld [vmem:[%s1 + $0x930] sm:$0xff]
  %v334 = vld [vmem:[%s1 + $0x938] sm:$0xff]
  %v335 = vld [vmem:[%s1 + $0x940] sm:$0xff]
  %v336 = vld [vmem:[%s1 + $0x948] sm:$0xff]
  %v337 = vld [vmem:[%s1 + $0x950] sm:$0xff]
  %v338 = vld [vmem:[%s1 + $0x958] sm:$0xff]
  %v339 = vld [vmem:[%s1 + $0x960] sm:$0xff]
  %v340 = vld [vmem:[%s1 + $0x968] sm:$0xff]
  %v341 = vld [vmem:[%s1 + $0x970] sm:$0xff]
  %v342 = vld [vmem:[%s1 + $0x978] sm:$0xff]
  %v343 = vld [vmem:[%s1 + $0x980] sm:$0xff]
  %v344 = vld [vmem:[%s1 + $0x988] sm:$0xff]
  %v345 = vld [vmem:[%s1 + $0x990] sm:$0xff]
  %v346 = vld [vmem:[%s1 + $0x998] sm:$0xff]
  %v347 = vld [vmem:[%s1 + $0x9a0] sm:$0xff]
  %v348 = vld [vmem:[%s1 + $0x9a8] sm:$0xff]
  %v349 = vld [vmem:[%s1 + $0x9b0] sm:$0xff]
  %v350 = vld [vmem:[%s1 + $0x9b8] sm:$0xff]
  %v351 = vld [vmem:[%s1 + $0x9c0] sm:$0xff]
  %v352 = vld [vmem:[%s1 + $0x9c8] sm:$0xff]
  %v353 = vld [vmem:[%s1 + $0x9d0] sm:$0xff]
  %v354 = vld [vmem:[%s1 + $0x9d8] sm:$0xff]
  %v355 = vld [vmem:[%s1 + $0x9e0] sm:$0xff]
  %v356 = vld [vmem:[%s1 + $0x9e8] sm:$0xff]
  %v357 = vld [vmem:[%s1 + $0x9f0] sm:$0xff]
  %v358 = vld [vmem:[%s1 + $0x9f8] sm:$0xff]
  %v359 = vld [vmem:[%s1 + $0xa00] sm:$0xff]
  %v360 = vld [vmem:[%s1 + $0xa08] sm:$0xff]
  %v361 = vld [vmem:[%s1 + $0xa10] sm:$0xff]
  %v362 = vld [vmem:[%s1 + $0xa18] sm:$0xff]
  %v363 = vld [vmem:[%s1 + $0xa20] sm:$0xff]
  %v364 = vld [vmem:[%s1 + $0xa28] sm:$0xff]
  %v365 = vld [vmem:[%s1 + $0xa30] sm:$0xff]
  %v366 = vld [vmem:[%s1 + $0xa38] sm:$0xff]
  %v367 = vld [vmem:[%s1 + $0xa40] sm:$0xff]
  %v368 = vld [vmem:[%s1 + $0xa48] sm:$0xff]
  %v369 = vld [vmem:[%s1 + $0xa50] sm:$0xff]
  %v370 = vld [vmem:[%s1 + $0xa58] sm:$0xff]
  %v371 = vld [vmem:[%s1 + $0xa60] sm:$0xff]
  %v372 = vld [vmem:[%s1 + $0xa68] sm:$0xff]
  %v373 = vld [vmem:[%s1 + $0xa70] sm:$0xff]
  %v374 = vld [vmem:[%s1 + $0xa78] sm:$0xff]
  %v375 = vld [vmem:[%s1 + $0xa80] sm:$0xff]
  %v376 = vld [vmem:[%s1 + $0xa88] sm:$0xff]
  %v377 = vld [vmem:[%s1 + $0xa90] sm:$0xff]
  %v378 = vld [vmem:[%s1 + $0xa98] sm:$0xff]
  %v379 = vld [vmem:[%s1 + $0xaa0] sm:$0xff]
  %v380 = vld [vmem:[%s1 + $0xaa8] sm:$0xff]
  %v381 = vld [vmem:[%s1 + $0xab0] sm:$0xff]
  %v382 = vld [vmem:[%s1 + $0xab8] sm:$0xff]
  %v383 = vld [vmem:[%s1 + $0xac0] sm:$0xff]
  %v384 = vld [vmem:[%s1 + $0xac8] sm:$0xff]
  %v385 = vld [vmem:[%s1 + $0xad0] sm:$0xff]
  %v386 = vld [vmem:[%s1 + $0xad8] sm:$0xff]
  %v387 = vld [vmem:[%s1 + $0xae0] sm:$0xff]
  %v388 = vld [vmem:[%s1 + $0xae8] sm:$0xff]
  %v389 = vld [vmem:[%s1 + $0xaf0] sm:$0xff]
  %v390 = vld [vmem:[%s1 + $0xaf8] sm:$0xff]
  %v391 = vld [vmem:[%s1 + $0xb00] sm:$0xff]
  %v392 = vld [vmem:[%s1 + $0xb08] sm:$0xff]
  %v393 = vld [vmem:[%s1 + $0xb10] sm:$0xff]
  %v394 = vld [vmem:[%s1 + $0xb18] sm:$0xff]
  %v395 = vld [vmem:[%s1 + $0xb20] sm:$0xff]
  %v396 = vld [vmem:[%s1 + $0xb28] sm:$0xff]
  %v397 = vld [vmem:[%s1 + $0xb30] sm:$0xff]
  %v398 = vld [vmem:[%s1 + $0xb38] sm:$0xff]
  %v399 = vld [vmem:[%s1 + $0xb40] sm:$0xff]
  %v400 = vld [vmem:[%s1 + $0xb48] sm:$0xff]
  %v401 = vld [vmem:[%s1 + $0xb50] sm:$0xff]
  %v402 = vld [vmem:[%s1 + $0xb58] sm:$0xff]
  %v403 = vld [vmem:[%s1 + $0xb60] sm:$0xff]
  %v404 = vld [vmem:[%s1 + $0xb68] sm:$0xff]
  %v405 = vld [vmem:[%s1 + $0xb70] sm:$0xff]
  %v406 = vld [vmem:[%s1 + $0xb78] sm:$0xff]
  %v407 = vld [vmem:[%s1 + $0xb80] sm:$0xff]
  %v408 = vld [vmem:[%s1 + $0xb88] sm:$0xff]
  %v409 = vld [vmem:[%s1 + $0xb90] sm:$0xff]
  %v410 = vld [vmem:[%s1 + $0xb98] sm:$0xff]
  %v411 = vld [vmem:[%s1 + $0xba0] sm:$0xff]
  %v412 = vld [vmem:[%s1 + $0xba8] sm:$0xff]
  %v413 = vld [vmem:[%s1 + $0xbb0] sm:$0xff]
  %v414 = vld [vmem:[%s1 + $0xbb8] sm:$0xff]
  %v415 = vld [vmem:[%s1 + $0xbc0] sm:$0xff]
  %v416 = vld [vmem:[%s1 + $0xbc8] sm:$0xff]
  %v417 = vld [vmem:[%s1 + $0xbd0] sm:$0xff]
  %v418 = vld [vmem:[%s1 + $0xbd8] sm:$0xff]
  %v419 = vld [vmem:[%s1 + $0xbe0] sm:$0xff]
  %v420 = vld [vmem:[%s1 + $0xbe8] sm:$0xff]
  %v421 = vld [vmem:[%s1 + $0xbf0] sm:$0xff]
  %v422 = vld [vmem:[%s1 + $0xbf8] sm:$0xff]
  %v423 = vld [vmem:[%s1 + $0xc00] sm:$0xff]
  %v424 = vld [vmem:[%s1 + $0xc08] sm:$0xff]
  %v425 = vld [vmem:[%s1 + $0xc10] sm:$0xff]
  %v426 = vld [vmem:[%s1 + $0xc18] sm:$0xff]
  %v427 = vld [vmem:[%s1 + $0xc20] sm:$0xff]
  %v428 = vld [vmem:[%s1 + $0xc28] sm:$0xff]
  %v429 = vld [vmem:[%s1 + $0xc30] sm:$0xff]
  %v430 = vld [vmem:[%s1 + $0xc38] sm:$0xff]
  %v431 = vld [vmem:[%s1 + $0xc40] sm:$0xff]
  %v432 = vld [vmem:[%s1 + $0xc48] sm:$0xff]
  %v433 = vld [vmem:[%s1 + $0xc50] sm:$0xff]
  %v434 = vld [vmem:[%s1 + $0xc58] sm:$0xff]
  %v435 = vld [vmem:[%s1 + $0xc60] sm:$0xff]
  %v436 = vld [vmem:[%s1 + $0xc68] sm:$0xff]
  %v437 = vld [vmem:[%s1 + $0xc70] sm:$0xff]
  %v438 = vld [vmem:[%s1 + $0xc78] sm:$0xff]
  %v439 = vld [vmem:[%s1 + $0xc80] sm:$0xff]
  %v440 = vld [vmem:[%s1 + $0xc88] sm:$0xff]
  %v441 = vld [vmem:[%s1 + $0xc90] sm:$0xff]
  %v442 = vld [vmem:[%s1 + $0xc98] sm:$0xff]
  %v443 = vld [vmem:[%s1 + $0xca0] sm:$0xff]
  %v444 = vld [vmem:[%s1 + $0xca8] sm:$0xff]
  %v445 = vld [vmem:[%s1 + $0xcb0] sm:$0xff]
  %v446 = vld [vmem:[%s1 + $0xcb8] sm:$0xff]
  %v447 = vld [vmem:[%s1 + $0xcc0] sm:$0xff]
  %v448 = vld [vmem:[%s1 + $0xcc8] sm:$0xff]
  %v449 = vld [vmem:[%s1 + $0xcd0] sm:$0xff]
  %v450 = vld [vmem:[%s1 + $0xcd8] sm:$0xff]
  %v451 = vld [vmem:[%s1 + $0xce0] sm:$0xff]
  %v452 = vld [vmem:[%s1 + $0xce8] sm:$0xff]
  %v453 = vld [vmem:[%s1 + $0xcf0] sm:$0xff]
  %v454 = vld [vmem:[%s1 + $0xcf8] sm:$0xff]
  %v455 = vld [vmem:[%s1 + $0xd00] sm:$0xff]
  %v456 = vld [vmem:[%s1 + $0xd08] sm:$0xff]
  %v457 = vld [vmem:[%s1 + $0xd10] sm:$0xff]
  %v458 = vld [vmem:[%s1 + $0xd18] sm:$0xff]
  %v459 = vld [vmem:[%s1 + $0xd20] sm:$0xff]
  %v460 = vld [vmem:[%s1 + $0xd28] sm:$0xff]
  %v461 = vld [vmem:[%s1 + $0xd30] sm:$0xff]
  %v462 = vld [vmem:[%s1 + $0xd38] sm:$0xff]
  %v463 = vld [vmem:[%s1 + $0xd40] sm:$0xff]
  %v464 = vld [vmem:[%s1 + $0xd48] sm:$0xff]
  %v465 = vld [vmem:[%s1 + $0xd50] sm:$0xff]
  %v466 = vld [vmem:[%s1 + $0xd58] sm:$0xff]
  %v467 = vld [vmem:[%s1 + $0xd60] sm:$0xff]
  %v468 = vld [vmem:[%s1 + $0xd68] sm:$0xff]
  %v469 = vld [vmem:[%s1 + $0xd70] sm:$0xff]
  %v470 = vld [vmem:[%s1 + $0xd78] sm:$0xff]
  %v471 = vld [vmem:[%s1 + $0xd80] sm:$0xff]
  %v472 = vld [vmem:[%s1 + $0xd88] sm:$0xff]
  %v473 = vld [vmem:[%s1 + $0xd90] sm:$0xff]
  %v474 = vld [vmem:[%s1 + $0xd98] sm:$0xff]
  %v475 = vld [vmem:[%s1 + $0xda0] sm:$0xff]
  %v476 = vld [vmem:[%s1 + $0xda8] sm:$0xff]
  %v477 = vld [vmem:[%s1 + $0xdb0] sm:$0xff]
  %v478 = vld [vmem:[%s1 + $0xdb8] sm:$0xff]
  %v479 = vld [vmem:[%s1 + $0xdc0] sm:$0xff]
  %v480 = vld [vmem:[%s1 + $0xdc8] sm:$0xff]
  %v481 = vld [vmem:[%s1 + $0xdd0] sm:$0xff]
  %v482 = vld [vmem:[%s1 + $0xdd8] sm:$0xff]
  %v483 = vld [vmem:[%s1 + $0xde0] sm:$0xff]
  %v484 = vld [vmem:[%s1 + $0xde8] sm:$0xff]
  %v485 = vld [vmem:[%s1 + $0xdf0] sm:$0xff]
  %v486 = vld [vmem:[%s1 + $0xdf8] sm:$0xff]
  %v487 = vld [vmem:[%s1 + $0xe00] sm:$0xff]
  %v488 = vld [vmem:[%s1 + $0xe08] sm:$0xff]
  %v489 = vld [vmem:[%s1 + $0xe10] sm:$0xff]
  %v490 = vld [vmem:[%s1 + $0xe18] sm:$0xff]
  %v491 = vld [vmem:[%s1 + $0xe20] sm:$0xff]
  %v492 = vld [vmem:[%s1 + $0xe28] sm:$0xff]
  %v493 = vld [vmem:[%s1 + $0xe30] sm:$0xff]
  %v494 = vld [vmem:[%s1 + $0xe38] sm:$0xff]
  %v495 = vld [vmem:[%s1 + $0xe40] sm:$0xff]
  %v496 = vld [vmem:[%s1 + $0xe48] sm:$0xff]
  %v497 = vld [vmem:[%s1 + $0xe50] sm:$0xff]
  %v498 = vld [vmem:[%s1 + $0xe58] sm:$0xff]
  %v499 = vld [vmem:[%s1 + $0xe60] sm:$0xff]
  %v500 = vld [vmem:[%s1 + $0xe68] sm:$0xff]
  %v501 = vld [vmem:[%s1 + $0xe70] sm:$0xff]
  %v502 = vld [vmem:[%s1 + $0xe78] sm:$0xff]
  %v503 = vld [vmem:[%s1 + $0xe80] sm:$0xff]
  %v504 = vld [vmem:[%s1 + $0xe88] sm:$0xff]
  %v505 = vld [vmem:[%s1 + $0xe90] sm:$0xff]
  %v506 = vld [vmem:[%s1 + $0xe98] sm:$0xff]
  %v507 = vld [vmem:[%s1 + $0xea0] sm:$0xff]
  %v508 = vld [vmem:[%s1 + $0xea8] sm:$0xff]
  %v509 = vld [vmem:[%s1 + $0xeb0] sm:$0xff]
  %v510 = vld [vmem:[%s1 + $0xeb8] sm:$0xff]
  %v511 = vld [vmem:[%s1 + $0xec0] sm:$0xff]
  %v512 = vld [vmem:[%s1 + $0xec8] sm:$0xff]
  %v513 = vld [vmem:[%s1 + $0xed0] sm:$0xff]
  %v514 = vld [vmem:[%s1 + $0xed8] sm:$0xff]
  %v515 = vld [vmem:[%s1 + $0xee0] sm:$0xff]
  %v516 = vld [vmem:[%s1 + $0xee8] sm:$0xff]
  %v517 = vld [vmem:[%s1 + $0xef0] sm:$0xff]
  %v518 = vld [vmem:[%s1 + $0xef8] sm:$0xff]
  %v519 = vld [vmem:[%s1 + $0xf00] sm:$0xff]
  %v520 = vld [vmem:[%s1 + $0xf08] sm:$0xff]
  %v521 = vld [vmem:[%s1 + $0xf10] sm:$0xff]
  %v522 = vld [vmem:[%s1 + $0xf18] sm:$0xff]
  %v523 = vld [vmem:[%s1 + $0xf20] sm:$0xff]
  %v524 = vld [vmem:[%s1 + $0xf28] sm:$0xff]
  %v525 = vld [vmem:[%s1 + $0xf30] sm:$0xff]
  %v526 = vld [vmem:[%s1 + $0xf38] sm:$0xff]
  %v527 = vld [vmem:[%s1 + $0xf40] sm:$0xff]
  %v528 = vld [vmem:[%s1 + $0xf48] sm:$0xff]
  %v529 = vld [vmem:[%s1 + $0xf50] sm:$0xff]
  %v530 = vld [vmem:[%s1 + $0xf58] sm:$0xff]
  %v531 = vld [vmem:[%s1 + $0xf60] sm:$0xff]
  %v532 = vld [vmem:[%s1 + $0xf68] sm:$0xff]
  %v533 = vld [vmem:[%s1 + $0xf70] sm:$0xff]
  %v534 = vld [vmem:[%s1 + $0xf78] sm:$0xff]
  %v535 = vld [vmem:[%s1 + $0xf80] sm:$0xff]
  %v536 = vld [vmem:[%s1 + $0xf88] sm:$0xff]
  %v537 = vld [vmem:[%s1 + $0xf90] sm:$0xff]
  %v538 = vld [vmem:[%s1 + $0xf98] sm:$0xff]
  %v539 = vld [vmem:[%s1 + $0xfa0] sm:$0xff]
  %v540 = vld [vmem:[%s1 + $0xfa8] sm:$0xff]
  %v541 = vld [vmem:[%s1 + $0xfb0] sm:$0xff]
  %v542 = vld [vmem:[%s1 + $0xfb8] sm:$0xff]
  %v543 = vld [vmem:[%s1 + $0xfc0] sm:$0xff]
  %v544 = vld [vmem:[%s1 + $0xfc8] sm:$0xff]
  %v545 = vld [vmem:[%s1 + $0xfd0] sm:$0xff]
  %v546 = vld [vmem:[%s1 + $0xfd8] sm:$0xff]
  %v547 = vld [vmem:[%s1 + $0xfe0] sm:$0xff]
  %v548 = vld [vmem:[%s1 + $0xfe8] sm:$0xff]
  %v549 = vld [vmem:[%s1 + $0xff0] sm:$0xff]
  %v550 = vld [vmem:[%s1 + $0xff8] sm:$0xff]
  %v551 = vld [vmem:[%s1 + $0x1000] sm:$0xff]
  %v552 = vld [vmem:[%s1 + $0x1008] sm:$0xff]
  %v553 = vld [vmem:[%s1 + $0x1010] sm:$0xff]
  %v554 = vld [vmem:[%s1 + $0x1018] sm:$0xff]
  %v555 = vld [vmem:[%s1 + $0x1020] sm:$0xff]
  %v556 = vld [vmem:[%s1 + $0x1028] sm:$0xff]
  %v557 = vld [vmem:[%s1 + $0x1030] sm:$0xff]
  %v558 = vld [vmem:[%s1 + $0x1038] sm:$0xff]
  %v559 = vld [vmem:[%s1 + $0x1040] sm:$0xff]
  %v560 = vld [vmem:[%s1 + $0x1048] sm:$0xff]
  %v561 = vld [vmem:[%s1 + $0x1050] sm:$0xff]
  %v562 = vld [vmem:[%s1 + $0x1058] sm:$0xff]
  %v563 = vld [vmem:[%s1 + $0x1060] sm:$0xff]
  %v564 = vld [vmem:[%s1 + $0x1068] sm:$0xff]
  %v565 = vld [vmem:[%s1 + $0x1070] sm:$0xff]
  %v566 = vld [vmem:[%s1 + $0x1078] sm:$0xff]
  %v567 = vld [vmem:[%s1 + $0x1080] sm:$0xff]
  %v568 = vld [vmem:[%s1 + $0x1088] sm:$0xff]
  %v569 = vld [vmem:[%s1 + $0x1090] sm:$0xff]
  %v570 = vld [vmem:[%s1 + $0x1098] sm:$0xff]
  %v571 = vld [vmem:[%s1 + $0x10a0] sm:$0xff]
  %v572 = vld [vmem:[%s1 + $0x10a8] sm:$0xff]
  %v573 = vld [vmem:[%s1 + $0x10b0] sm:$0xff]
  %v574 = vld [vmem:[%s1 + $0x10b8] sm:$0xff]
  %v575 = vld [vmem:[%s1 + $0x10c0] sm:$0xff]
  %v576 = vld [vmem:[%s1 + $0x10c8] sm:$0xff]
  %v577 = vld [vmem:[%s1 + $0x10d0] sm:$0xff]
  %v578 = vld [vmem:[%s1 + $0x10d8] sm:$0xff]
  %v579 = vld [vmem:[%s1 + $0x10e0] sm:$0xff]
  %v580 = vld [vmem:[%s1 + $0x10e8] sm:$0xff]
  %v581 = vld [vmem:[%s1 + $0x10f0] sm:$0xff]
  %v582 = vld [vmem:[%s1 + $0x10f8] sm:$0xff]
  %v583 = vld [vmem:[%s1 + $0x1100] sm:$0xff]
  %v584 = vld [vmem:[%s1 + $0x1108] sm:$0xff]
  %v585 = vld [vmem:[%s1 + $0x1110] sm:$0xff]
  %v586 = vld [vmem:[%s1 + $0x1118] sm:$0xff]
  %v587 = vld [vmem:[%s1 + $0x1120] sm:$0xff]
  %v588 = vld [vmem:[%s1 + $0x1128] sm:$0xff]
  %v589 = vld [vmem:[%s1 + $0x1130] sm:$0xff]
  %v590 = vld [vmem:[%s1 + $0x1138] sm:$0xff]
  %v591 = vld [vmem:[%s1 + $0x1140] sm:$0xff]
  %v592 = vld [vmem:[%s1 + $0x1148] sm:$0xff]
  %v593 = vld [vmem:[%s1 + $0x1150] sm:$0xff]
  %v594 = vld [vmem:[%s1 + $0x1158] sm:$0xff]
  %v595 = vld [vmem:[%s1 + $0x1160] sm:$0xff]
  %v596 = vld [vmem:[%s1 + $0x1168] sm:$0xff]
  %v597 = vld [vmem:[%s1 + $0x1170] sm:$0xff]
  %v598 = vld [vmem:[%s1 + $0x1178] sm:$0xff]
  %v599 = vld [vmem:[%s1 + $0x1180] sm:$0xff]
  %v600 = vld [vmem:[%s1 + $0x1188] sm:$0xff]
  %v601 = vld [vmem:[%s1 + $0x1190] sm:$0xff]
  %v602 = vld [vmem:[%s1 + $0x1198] sm:$0xff]
  %v603 = vld [vmem:[%s1 + $0x11a0] sm:$0xff]
  %v604 = vld [vmem:[%s1 + $0x11a8] sm:$0xff]
  %v605 = vld [vmem:[%s1 + $0x11b0] sm:$0xff]
  %v606 = vld [vmem:[%s1 + $0x11b8] sm:$0xff]
  %v607 = vld [vmem:[%s1 + $0x11c0] sm:$0xff]
  %v608 = vld [vmem:[%s1 + $0x11c8] sm:$0xff]
  %v609 = vld [vmem:[%s1 + $0x11d0] sm:$0xff]
  %v610 = vld [vmem:[%s1 + $0x11d8] sm:$0xff]
  %v611 = vld [vmem:[%s1 + $0x11e0] sm:$0xff]
  %v612 = vld [vmem:[%s1 + $0x11e8] sm:$0xff]
  %v613 = vld [vmem:[%s1 + $0x11f0] sm:$0xff]
  %v614 = vld [vmem:[%s1 + $0x11f8] sm:$0xff]
  %v615 = vld [vmem:[%s1 + $0x1200] sm:$0xff]
  %v616 = vld [vmem:[%s1 + $0x1208] sm:$0xff]
  %v617 = vld [vmem:[%s1 + $0x1210] sm:$0xff]
  %v618 = vld [vmem:[%s1 + $0x1218] sm:$0xff]
  %v619 = vld [vmem:[%s1 + $0x1220] sm:$0xff]
  %v620 = vld [vmem:[%s1 + $0x1228] sm:$0xff]
  %v621 = vld [vmem:[%s1 + $0x1230] sm:$0xff]
  %v622 = vld [vmem:[%s1 + $0x1238] sm:$0xff]
  %v623 = vld [vmem:[%s1 + $0x1240] sm:$0xff]
  %v624 = vld [vmem:[%s1 + $0x1248] sm:$0xff]
  %v625 = vld [vmem:[%s1 + $0x1250] sm:$0xff]
  %v626 = vld [vmem:[%s1 + $0x1258] sm:$0xff]
  %v627 = vld [vmem:[%s1 + $0x1260] sm:$0xff]
  %v628 = vld [vmem:[%s1 + $0x1268] sm:$0xff]
  %v629 = vld [vmem:[%s1 + $0x1270] sm:$0xff]
  %v630 = vld [vmem:[%s1 + $0x1278] sm:$0xff]
  %v631 = vld [vmem:[%s1 + $0x1280] sm:$0xff]
  %v632 = vld [vmem:[%s1 + $0x1288] sm:$0xff]
  %v633 = vld [vmem:[%s1 + $0x1290] sm:$0xff]
  %v634 = vld [vmem:[%s1 + $0x1298] sm:$0xff]
  %v635 = vld [vmem:[%s1 + $0x12a0] sm:$0xff]
  %v636 = vld [vmem:[%s1 + $0x12a8] sm:$0xff]
  %v637 = vld [vmem:[%s1 + $0x12b0] sm:$0xff]
  %v638 = vld [vmem:[%s1 + $0x12b8] sm:$0xff]
  %v639 = vld [vmem:[%s1 + $0x12c0] sm:$0xff]
  %v640 = vld [vmem:[%s1 + $0x12c8] sm:$0xff]
  %v641 = vld [vmem:[%s1 + $0x12d0] sm:$0xff]
  %v642 = vld [vmem:[%s1 + $0x12d8] sm:$0xff]
  %v643 = vld [vmem:[%s1 + $0x12e0] sm:$0xff]
  %v644 = vld [vmem:[%s1 + $0x12e8] sm:$0xff]
  %v645 = vld [vmem:[%s1 + $0x12f0] sm:$0xff]
  %v646 = vld [vmem:[%s1 + $0x12f8] sm:$0xff]
  %v647 = vld [vmem:[%s1 + $0x1300] sm:$0xff]
  %v648 = vld [vmem:[%s1 + $0x1308] sm:$0xff]
  %v649 = vld [vmem:[%s1 + $0x1310] sm:$0xff]
  %v650 = vld [vmem:[%s1 + $0x1318] sm:$0xff]
  %v651 = vld [vmem:[%s1 + $0x1320] sm:$0xff]
  %v652 = vld [vmem:[%s1 + $0x1328] sm:$0xff]
  %v653 = vld [vmem:[%s1 + $0x1330] sm:$0xff]
  %v654 = vld [vmem:[%s1 + $0x1338] sm:$0xff]
  %v655 = vld [vmem:[%s1 + $0x1340] sm:$0xff]
  %v656 = vld [vmem:[%s1 + $0x1348] sm:$0xff]
  %v657 = vld [vmem:[%s1 + $0x1350] sm:$0xff]
  %v658 = vld [vmem:[%s1 + $0x1358] sm:$0xff]
  %v659 = vld [vmem:[%s1 + $0x1360] sm:$0xff]
  %v660 = vld [vmem:[%s1 + $0x1368] sm:$0xff]
  %v661 = vld [vmem:[%s1 + $0x1370] sm:$0xff]
  %v662 = vld [vmem:[%s1 + $0x1378] sm:$0xff]
  %v663 = vld [vmem:[%s1 + $0x1380] sm:$0xff]
  %v664 = vld [vmem:[%s1 + $0x1388] sm:$0xff]
  %v665 = vld [vmem:[%s1 + $0x1390] sm:$0xff]
  %v666 = vld [vmem:[%s1 + $0x1398] sm:$0xff]
  %v667 = vld [vmem:[%s1 + $0x13a0] sm:$0xff]
  %v668 = vld [vmem:[%s1 + $0x13a8] sm:$0xff]
  %v669 = vld [vmem:[%s1 + $0x13b0] sm:$0xff]
  %v670 = vld [vmem:[%s1 + $0x13b8] sm:$0xff]
  %v671 = vld [vmem:[%s1 + $0x13c0] sm:$0xff]
  %v672 = vld [vmem:[%s1 + $0x13c8] sm:$0xff]
  %v673 = vld [vmem:[%s1 + $0x13d0] sm:$0xff]
  %v674 = vld [vmem:[%s1 + $0x13d8] sm:$0xff]
  %v675 = vld [vmem:[%s1 + $0x13e0] sm:$0xff]
  %v676 = vld [vmem:[%s1 + $0x13e8] sm:$0xff]
  %v677 = vld [vmem:[%s1 + $0x13f0] sm:$0xff]
  %v678 = vld [vmem:[%s1 + $0x13f8] sm:$0xff]
  %v679 = vld [vmem:[%s1 + $0x1400] sm:$0xff]
  %v680 = vld [vmem:[%s1 + $0x1408] sm:$0xff]
  %v681 = vld [vmem:[%s1 + $0x1410] sm:$0xff]
  %v682 = vld [vmem:[%s1 + $0x1418] sm:$0xff]
  %v683 = vld [vmem:[%s1 + $0x1420] sm:$0xff]
  %v684 = vld [vmem:[%s1 + $0x1428] sm:$0xff]
  %v685 = vld [vmem:[%s1 + $0x1430] sm:$0xff]
  %v686 = vld [vmem:[%s1 + $0x1438] sm:$0xff]
  %v687 = vld [vmem:[%s1 + $0x1440] sm:$0xff]
  %v688 = vld [vmem:[%s1 + $0x1448] sm:$0xff]
  %v689 = vld [vmem:[%s1 + $0x1450] sm:$0xff]
  %v690 = vld [vmem:[%s1 + $0x1458] sm:$0xff]
  %v691 = vld [vmem:[%s1 + $0x1460] sm:$0xff]
  %v692 = vld [vmem:[%s1 + $0x1468] sm:$0xff]
  %v693 = vld [vmem:[%s1 + $0x1470] sm:$0xff]
  %v694 = vld [vmem:[%s1 + $0x1478] sm:$0xff]
  %v695 = vld [vmem:[%s1 + $0x1480] sm:$0xff]
  %v696 = vld [vmem:[%s1 + $0x1488] sm:$0xff]
  %v697 = vld [vmem:[%s1 + $0x1490] sm:$0xff]
  %v698 = vld [vmem:[%s1 + $0x1498] sm:$0xff]
  %v699 = vld [vmem:[%s1 + $0x14a0] sm:$0xff]
  %v700 = vld [vmem:[%s1 + $0x14a8] sm:$0xff]
  %v701 = vld [vmem:[%s1 + $0x14b0] sm:$0xff]
  %v702 = vld [vmem:[%s1 + $0x14b8] sm:$0xff]
  %v703 = vld [vmem:[%s1 + $0x14c0] sm:$0xff]
  %v704 = vld [vmem:[%s1 + $0x14c8] sm:$0xff]
  %v705 = vld [vmem:[%s1 + $0x14d0] sm:$0xff]
  %v706 = vld [vmem:[%s1 + $0x14d8] sm:$0xff]
  %v707 = vld [vmem:[%s1 + $0x14e0] sm:$0xff]
  %v708 = vld [vmem:[%s1 + $0x14e8] sm:$0xff]
  %v709 = vld [vmem:[%s1 + $0x14f0] sm:$0xff]
  %v710 = vld [vmem:[%s1 + $0x14f8] sm:$0xff]
  %v711 = vld [vmem:[%s1 + $0x1500] sm:$0xff]
  %v712 = vld [vmem:[%s1 + $0x1508] sm:$0xff]
  %v713 = vld [vmem:[%s1 + $0x1510] sm:$0xff]
  %v714 = vld [vmem:[%s1 + $0x1518] sm:$0xff]
  %v715 = vld [vmem:[%s1 + $0x1520] sm:$0xff]
  %v716 = vld [vmem:[%s1 + $0x1528] sm:$0xff]
  %v717 = vld [vmem:[%s1 + $0x1530] sm:$0xff]
  %v718 = vld [vmem:[%s1 + $0x1538] sm:$0xff]
  %v719 = vld [vmem:[%s1 + $0x1540] sm:$0xff]
  %v720 = vld [vmem:[%s1 + $0x1548] sm:$0xff]
  %v721 = vld [vmem:[%s1 + $0x1550] sm:$0xff]
  %v722 = vld [vmem:[%s1 + $0x1558] sm:$0xff]
  %v723 = vld [vmem:[%s1 + $0x1560] sm:$0xff]
  %v724 = vld [vmem:[%s1 + $0x1568] sm:$0xff]
  %v725 = vld [vmem:[%s1 + $0x1570] sm:$0xff]
  %v726 = vld [vmem:[%s1 + $0x1578] sm:$0xff]
  %v727 = vld [vmem:[%s1 + $0x1580] sm:$0xff]
  %v728 = vld [vmem:[%s1 + $0x1588] sm:$0xff]
  %v729 = vld [vmem:[%s1 + $0x1590] sm:$0xff]
  %v730 = vld [vmem:[%s1 + $0x1598] sm:$0xff]
  %v731 = vld [vmem:[%s1 + $0x15a0] sm:$0xff]
  %v732 = vld [vmem:[%s1 + $0x15a8] sm:$0xff]
  %v733 = vld [vmem:[%s1 + $0x15b0] sm:$0xff]
  %v734 = vld [vmem:[%s1 + $0x15b8] sm:$0xff]
  %v735 = vld [vmem:[%s1 + $0x15c0] sm:$0xff]
  %v736 = vld [vmem:[%s1 + $0x15c8] sm:$0xff]
  %v737 = vld [vmem:[%s1 + $0x15d0] sm:$0xff]
  %v738 = vld [vmem:[%s1 + $0x15d8] sm:$0xff]
  %v739 = vld [vmem:[%s1 + $0x15e0] sm:$0xff]
  %v740 = vld [vmem:[%s1 + $0x15e8] sm:$0xff]
  %v741 = vld [vmem:[%s1 + $0x15f0] sm:$0xff]
  %v742 = vld [vmem:[%s1 + $0x15f8] sm:$0xff]
  %v743 = vld [vmem:[%s1 + $0x1600] sm:$0xff]
  %v744 = vld [vmem:[%s1 + $0x1608] sm:$0xff]
  %v745 = vld [vmem:[%s1 + $0x1610] sm:$0xff]
  %v746 = vld [vmem:[%s1 + $0x1618] sm:$0xff]
  %v747 = vld [vmem:[%s1 + $0x1620] sm:$0xff]
  %v748 = vld [vmem:[%s1 + $0x1628] sm:$0xff]
  %v749 = vld [vmem:[%s1 + $0x1630] sm:$0xff]
  %v750 = vld [vmem:[%s1 + $0x1638] sm:$0xff]
  %v751 = vld [vmem:[%s1 + $0x1640] sm:$0xff]
  %v752 = vld [vmem:[%s1 + $0x1648] sm:$0xff]
  %v753 = vld [vmem:[%s1 + $0x1650] sm:$0xff]
  %v754 = vld [vmem:[%s1 + $0x1658] sm:$0xff]
  %v755 = vld [vmem:[%s1 + $0x1660] sm:$0xff]
  %v756 = vld [vmem:[%s1 + $0x1668] sm:$0xff]
  %v757 = vld [vmem:[%s1 + $0x1670] sm:$0xff]
  %v758 = vld [vmem:[%s1 + $0x1678] sm:$0xff]
  %v759 = vld [vmem:[%s1 + $0x1680] sm:$0xff]
  %v760 = vld [vmem:[%s1 + $0x1688] sm:$0xff]
  %v761 = vld [vmem:[%s1 + $0x1690] sm:$0xff]
  %v762 = vld [vmem:[%s1 + $0x1698] sm:$0xff]
  %v763 = vld [vmem:[%s1 + $0x16a0] sm:$0xff]
  %v764 = vld [vmem:[%s1 + $0x16a8] sm:$0xff]
  %v765 = vld [vmem:[%s1 + $0x16b0] sm:$0xff]
  %v766 = vld [vmem:[%s1 + $0x16b8] sm:$0xff]
  %v767 = vld [vmem:[%s1 + $0x16c0] sm:$0xff]
  %v768 = vld [vmem:[%s1 + $0x16c8] sm:$0xff]
  %v769 = vld [vmem:[%s1 + $0x16d0] sm:$0xff]
  %v770 = vld [vmem:[%s1 + $0x16d8] sm:$0xff]
  %v771 = vld [vmem:[%s1 + $0x16e0] sm:$0xff]
  %v772 = vld [vmem:[%s1 + $0x16e8] sm:$0xff]
  %v773 = vld [vmem:[%s1 + $0x16f0] sm:$0xff]
  %v774 = vld [vmem:[%s1 + $0x16f8] sm:$0xff]
  %v775 = vld [vmem:[%s1 + $0x1700] sm:$0xff]
  %v776 = vld [vmem:[%s1 + $0x1708] sm:$0xff]
  %v777 = vld [vmem:[%s1 + $0x1710] sm:$0xff]
  %v778 = vld [vmem:[%s1 + $0x1718] sm:$0xff]
  %v779 = vld [vmem:[%s1 + $0x1720] sm:$0xff]
  %v780 = vld [vmem:[%s1 + $0x1728] sm:$0xff]
  %v781 = vld [vmem:[%s1 + $0x1730] sm:$0xff]
  %v782 = vld [vmem:[%s1 + $0x1738] sm:$0xff]
  %v783 = vld [vmem:[%s1 + $0x1740] sm:$0xff]
  %v784 = vld [vmem:[%s1 + $0x1748] sm:$0xff]
  %v785 = vld [vmem:[%s1 + $0x1750] sm:$0xff]
  %v786 = vld [vmem:[%s1 + $0x1758] sm:$0xff]
  %v787 = vld [vmem:[%s1 + $0x1760] sm:$0xff]
  %v788 = vld [vmem:[%s1 + $0x1768] sm:$0xff]
  %v789 = vld [vmem:[%s1 + $0x1770] sm:$0xff]
  %v790 = vld [vmem:[%s1 + $0x1778] sm:$0xff]
  %v791 = vld [vmem:[%s1 + $0x1780] sm:$0xff]
  %v792 = vld [vmem:[%s1 + $0x1788] sm:$0xff]
  %v793 = vld [vmem:[%s1 + $0x1790] sm:$0xff]
  %v794 = vld [vmem:[%s1 + $0x1798] sm:$0xff]
  %v795 = vld [vmem:[%s1 + $0x17a0] sm:$0xff]
  %v796 = vld [vmem:[%s1 + $0x17a8] sm:$0xff]
  %v797 = vld [vmem:[%s1 + $0x17b0] sm:$0xff]
  %v798 = vld [vmem:[%s1 + $0x17b8] sm:$0xff]
  %v799 = vld [vmem:[%s1 + $0x17c0] sm:$0xff]
  %v800 = vld [vmem:[%s1 + $0x17c8] sm:$0xff]
  %v801 = vld [vmem:[%s1 + $0x17d0] sm:$0xff]
  %v802 = vld [vmem:[%s1 + $0x17d8] sm:$0xff]
  %v803 = vld [vmem:[%s1 + $0x17e0] sm:$0xff]
  %v804 = vld [vmem:[%s1 + $0x17e8] sm:$0xff]
  %v805 = vld [vmem:[%s1 + $0x17f0] sm:$0xff]
  %v806 = vld [vmem:[%s1 + $0x17f8] sm:$0xff]
  %v807 = vld [vmem:[%s1 + $0x1800] sm:$0xff]
  %v808 = vld [vmem:[%s1 + $0x1808] sm:$0xff]
  %v809 = vld [vmem:[%s1 + $0x1810] sm:$0xff]
  %v810 = vld [vmem:[%s1 + $0x1818] sm:$0xff]
  %v811 = vld [vmem:[%s1 + $0x1820] sm:$0xff]
  %v812 = vld [vmem:[%s1 + $0x1828] sm:$0xff]
  %v813 = vld [vmem:[%s1 + $0x1830] sm:$0xff]
  %v814 = vld [vmem:[%s1 + $0x1838] sm:$0xff]
  %v815 = vld [vmem:[%s1 + $0x1840] sm:$0xff]
  %v816 = vld [vmem:[%s1 + $0x1848] sm:$0xff]
  %v817 = vld [vmem:[%s1 + $0x1850] sm:$0xff]
  %v818 = vld [vmem:[%s1 + $0x1858] sm:$0xff]
  %v819 = vld [vmem:[%s1 + $0x1860] sm:$0xff]
  %v820 = vld [vmem:[%s1 + $0x1868] sm:$0xff]
  %v821 = vld [vmem:[%s1 + $0x1870] sm:$0xff]
  %v822 = vld [vmem:[%s1 + $0x1878] sm:$0xff]
  %v823 = vld [vmem:[%s1 + $0x1880] sm:$0xff]
  %v824 = vld [vmem:[%s1 + $0x1888] sm:$0xff]
  %v825 = vld [vmem:[%s1 + $0x1890] sm:$0xff]
  %v826 = vld [vmem:[%s1 + $0x1898] sm:$0xff]
  %v827 = vld [vmem:[%s1 + $0x18a0] sm:$0xff]
  %v828 = vld [vmem:[%s1 + $0x18a8] sm:$0xff]
  %v829 = vld [vmem:[%s1 + $0x18b0] sm:$0xff]
  %v830 = vld [vmem:[%s1 + $0x18b8] sm:$0xff]
  %v831 = vld [vmem:[%s1 + $0x18c0] sm:$0xff]
  %v832 = vld [vmem:[%s1 + $0x18c8] sm:$0xff]
  %v833 = vld [vmem:[%s1 + $0x18d0] sm:$0xff]
  %v834 = vld [vmem:[%s1 + $0x18d8] sm:$0xff]
  %v835 = vld [vmem:[%s1 + $0x18e0] sm:$0xff]
  %v836 = vld [vmem:[%s1 + $0x18e8] sm:$0xff]
  %v837 = vld [vmem:[%s1 + $0x18f0] sm:$0xff]
  %v838 = vld [vmem:[%s1 + $0x18f8] sm:$0xff]
  %v839 = vld [vmem:[%s1 + $0x1900] sm:$0xff]
  %v840 = vld [vmem:[%s1 + $0x1908] sm:$0xff]
  %v841 = vld [vmem:[%s1 + $0x1910] sm:$0xff]
  %v842 = vld [vmem:[%s1 + $0x1918] sm:$0xff]
  %v843 = vld [vmem:[%s1 + $0x1920] sm:$0xff]
  %v844 = vld [vmem:[%s1 + $0x1928] sm:$0xff]
  %v845 = vld [vmem:[%s1 + $0x1930] sm:$0xff]
  %v846 = vld [vmem:[%s1 + $0x1938] sm:$0xff]
  %v847 = vld [vmem:[%s1 + $0x1940] sm:$0xff]
  %v848 = vld [vmem:[%s1 + $0x1948] sm:$0xff]
  %v849 = vld [vmem:[%s1 + $0x1950] sm:$0xff]
  %v850 = vld [vmem:[%s1 + $0x1958] sm:$0xff]
  %v851 = vld [vmem:[%s1 + $0x1960] sm:$0xff]
  %v852 = vld [vmem:[%s1 + $0x1968] sm:$0xff]
  %v853 = vld [vmem:[%s1 + $0x1970] sm:$0xff]
  %v854 = vld [vmem:[%s1 + $0x1978] sm:$0xff]
  %v855 = vld [vmem:[%s1 + $0x1980] sm:$0xff]
  %v856 = vld [vmem:[%s1 + $0x1988] sm:$0xff]
  %v857 = vld [vmem:[%s1 + $0x1990] sm:$0xff]
  %v858 = vld [vmem:[%s1 + $0x1998] sm:$0xff]
  %v859 = vld [vmem:[%s1 + $0x19a0] sm:$0xff]
  %v860 = vld [vmem:[%s1 + $0x19a8] sm:$0xff]
  %v861 = vld [vmem:[%s1 + $0x19b0] sm:$0xff]
  %v862 = vld [vmem:[%s1 + $0x19b8] sm:$0xff]
  %v863 = vld [vmem:[%s1 + $0x19c0] sm:$0xff]
  %v864 = vld [vmem:[%s1 + $0x19c8] sm:$0xff]
  %v865 = vld [vmem:[%s1 + $0x19d0] sm:$0xff]
  %v866 = vld [vmem:[%s1 + $0x19d8] sm:$0xff]
  %v867 = vld [vmem:[%s1 + $0x19e0] sm:$0xff]
  %v868 = vld [vmem:[%s1 + $0x19e8] sm:$0xff]
  %v869 = vld [vmem:[%s1 + $0x19f0] sm:$0xff]
  %v870 = vld [vmem:[%s1 + $0x19f8] sm:$0xff]
  %v871 = vld [vmem:[%s1 + $0x1a00] sm:$0xff]
  %v872 = vld [vmem:[%s1 + $0x1a08] sm:$0xff]
  %v873 = vld [vmem:[%s1 + $0x1a10] sm:$0xff]
  %v874 = vld [vmem:[%s1 + $0x1a18] sm:$0xff]
  %v875 = vld [vmem:[%s1 + $0x1a20] sm:$0xff]
  %v876 = vld [vmem:[%s1 + $0x1a28] sm:$0xff]
  %v877 = vld [vmem:[%s1 + $0x1a30] sm:$0xff]
  %v878 = vld [vmem:[%s1 + $0x1a38] sm:$0xff]
  %v879 = vld [vmem:[%s1 + $0x1a40] sm:$0xff]
  %v880 = vld [vmem:[%s1 + $0x1a48] sm:$0xff]
  %v881 = vld [vmem:[%s1 + $0x1a50] sm:$0xff]
  %v882 = vld [vmem:[%s1 + $0x1a58] sm:$0xff]
  %v883 = vld [vmem:[%s1 + $0x1a60] sm:$0xff]
  %v884 = vld [vmem:[%s1 + $0x1a68] sm:$0xff]
  %v885 = vld [vmem:[%s1 + $0x1a70] sm:$0xff]
  %v886 = vld [vmem:[%s1 + $0x1a78] sm:$0xff]
  %v887 = vld [vmem:[%s1 + $0x1a80] sm:$0xff]
  %v888 = vld [vmem:[%s1 + $0x1a88] sm:$0xff]
  %v889 = vld [vmem:[%s1 + $0x1a90] sm:$0xff]
  %v890 = vld [vmem:[%s1 + $0x1a98] sm:$0xff]
  %v891 = vld [vmem:[%s1 + $0x1aa0] sm:$0xff]
  %v892 = vld [vmem:[%s1 + $0x1aa8] sm:$0xff]
  %v893 = vld [vmem:[%s1 + $0x1ab0] sm:$0xff]
  %v894 = vld [vmem:[%s1 + $0x1ab8] sm:$0xff]
  %v895 = vld [vmem:[%s1 + $0x1ac0] sm:$0xff]
  %v896 = vld [vmem:[%s1 + $0x1ac8] sm:$0xff]
  %v897 = vld [vmem:[%s1 + $0x1ad0] sm:$0xff]
  %v898 = vld [vmem:[%s1 + $0x1ad8] sm:$0xff]
  %v899 = vld [vmem:[%s1 + $0x1ae0] sm:$0xff]
  %v900 = vld [vmem:[%s1 + $0x1ae8] sm:$0xff]
  %v901 = vld [vmem:[%s1 + $0x1af0] sm:$0xff]
  %v902 = vld [vmem:[%s1 + $0x1af8] sm:$0xff]
  %v903 = vld [vmem:[%s1 + $0x1b00] sm:$0xff]
  %v904 = vld [vmem:[%s1 + $0x1b08] sm:$0xff]
  %v905 = vld [vmem:[%s1 + $0x1b10] sm:$0xff]
  %v906 = vld [vmem:[%s1 + $0x1b18] sm:$0xff]
  %v907 = vld [vmem:[%s1 + $0x1b20] sm:$0xff]
  %v908 = vld [vmem:[%s1 + $0x1b28] sm:$0xff]
  %v909 = vld [vmem:[%s1 + $0x1b30] sm:$0xff]
  %v910 = vld [vmem:[%s1 + $0x1b38] sm:$0xff]
  %v911 = vld [vmem:[%s1 + $0x1b40] sm:$0xff]
  %v912 = vld [vmem:[%s1 + $0x1b48] sm:$0xff]
  %v913 = vld [vmem:[%s1 + $0x1b50] sm:$0xff]
  %v914 = vld [vmem:[%s1 + $0x1b58] sm:$0xff]
  %v915 = vld [vmem:[%s1 + $0x1b60] sm:$0xff]
  %v916 = vld [vmem:[%s1 + $0x1b68] sm:$0xff]
  %v917 = vld [vmem:[%s1 + $0x1b70] sm:$0xff]
  %v918 = vld [vmem:[%s1 + $0x1b78] sm:$0xff]
  %v919 = vld [vmem:[%s1 + $0x1b80] sm:$0xff]
  %v920 = vld [vmem:[%s1 + $0x1b88] sm:$0xff]
  %v921 = vld [vmem:[%s1 + $0x1b90] sm:$0xff]
  %v922 = vld [vmem:[%s1 + $0x1b98] sm:$0xff]
  %v923 = vld [vmem:[%s1 + $0x1ba0] sm:$0xff]
  %v924 = vld [vmem:[%s1 + $0x1ba8] sm:$0xff]
  %v925 = vld [vmem:[%s1 + $0x1bb0] sm:$0xff]
  %v926 = vld [vmem:[%s1 + $0x1bb8] sm:$0xff]
  %v927 = vld [vmem:[%s1 + $0x1bc0] sm:$0xff]
  %v928 = vld [vmem:[%s1 + $0x1bc8] sm:$0xff]
  %v929 = vld [vmem:[%s1 + $0x1bd0] sm:$0xff]
  %v930 = vld [vmem:[%s1 + $0x1bd8] sm:$0xff]
  %v931 = vld [vmem:[%s1 + $0x1be0] sm:$0xff]
  %v932 = vld [vmem:[%s1 + $0x1be8] sm:$0xff]
  %v933 = vld [vmem:[%s1 + $0x1bf0] sm:$0xff]
  %v934 = vld [vmem:[%s1 + $0x1bf8] sm:$0xff]
  %v935 = vld [vmem:[%s1 + $0x1c00] sm:$0xff]
  %v936 = vld [vmem:[%s1 + $0x1c08] sm:$0xff]
  %v937 = vld [vmem:[%s1 + $0x1c10] sm:$0xff]
  %v938 = vld [vmem:[%s1 + $0x1c18] sm:$0xff]
  %v939 = vld [vmem:[%s1 + $0x1c20] sm:$0xff]
  %v940 = vld [vmem:[%s1 + $0x1c28] sm:$0xff]
  %v941 = vld [vmem:[%s1 + $0x1c30] sm:$0xff]
  %v942 = vld [vmem:[%s1 + $0x1c38] sm:$0xff]
  %v943 = vld [vmem:[%s1 + $0x1c40] sm:$0xff]
  %v944 = vld [vmem:[%s1 + $0x1c48] sm:$0xff]
  %v945 = vld [vmem:[%s1 + $0x1c50] sm:$0xff]
  %v946 = vld [vmem:[%s1 + $0x1c58] sm:$0xff]
  %v947 = vld [vmem:[%s1 + $0x1c60] sm:$0xff]
  %v948 = vld [vmem:[%s1 + $0x1c68] sm:$0xff]
  %v949 = vld [vmem:[%s1 + $0x1c70] sm:$0xff]
  %v950 = vld [vmem:[%s1 + $0x1c78] sm:$0xff]
  %v951 = vld [vmem:[%s1 + $0x1c80] sm:$0xff]
  %v952 = vld [vmem:[%s1 + $0x1c88] sm:$0xff]
  %v953 = vld [vmem:[%s1 + $0x1c90] sm:$0xff]
  %v954 = vld [vmem:[%s1 + $0x1c98] sm:$0xff]
  %v955 = vld [vmem:[%s1 + $0x1ca0] sm:$0xff]
  %v956 = vld [vmem:[%s1 + $0x1ca8] sm:$0xff]
  %v957 = vld [vmem:[%s1 + $0x1cb0] sm:$0xff]
  %v958 = vld [vmem:[%s1 + $0x1cb8] sm:$0xff]
  %v959 = vld [vmem:[%s1 + $0x1cc0] sm:$0xff]
  %v960 = vld [vmem:[%s1 + $0x1cc8] sm:$0xff]
  %v961 = vld [vmem:[%s1 + $0x1cd0] sm:$0xff]
  %v962 = vld [vmem:[%s1 + $0x1cd8] sm:$0xff]
  %v963 = vld [vmem:[%s1 + $0x1ce0] sm:$0xff]
  %v964 = vld [vmem:[%s1 + $0x1ce8] sm:$0xff]
  %v965 = vld [vmem:[%s1 + $0x1cf0] sm:$0xff]
  %v966 = vld [vmem:[%s1 + $0x1cf8] sm:$0xff]
  %v967 = vld [vmem:[%s1 + $0x1d00] sm:$0xff]
  %v968 = vld [vmem:[%s1 + $0x1d08] sm:$0xff]
  %v969 = vld [vmem:[%s1 + $0x1d10] sm:$0xff]
  %v970 = vld [vmem:[%s1 + $0x1d18] sm:$0xff]
  %v971 = vld [vmem:[%s1 + $0x1d20] sm:$0xff]
  %v972 = vld [vmem:[%s1 + $0x1d28] sm:$0xff]
  %v973 = vld [vmem:[%s1 + $0x1d30] sm:$0xff]
  %v974 = vld [vmem:[%s1 + $0x1d38] sm:$0xff]
  %v975 = vld [vmem:[%s1 + $0x1d40] sm:$0xff]
  %v976 = vld [vmem:[%s1 + $0x1d48] sm:$0xff]
  %v977 = vld [vmem:[%s1 + $0x1d50] sm:$0xff]
  %v978 = vld [vmem:[%s1 + $0x1d58] sm:$0xff]
  %v979 = vld [vmem:[%s1 + $0x1d60] sm:$0xff]
  %v980 = vld [vmem:[%s1 + $0x1d68] sm:$0xff]
  %v981 = vld [vmem:[%s1 + $0x1d70] sm:$0xff]
  %v982 = vld [vmem:[%s1 + $0x1d78] sm:$0xff]
  %v983 = vld [vmem:[%s1 + $0x1d80] sm:$0xff]
  %v984 = vld [vmem:[%s1 + $0x1d88] sm:$0xff]
  %v985 = vld [vmem:[%s1 + $0x1d90] sm:$0xff]
  %v986 = vld [vmem:[%s1 + $0x1d98] sm:$0xff]
  %v987 = vld [vmem:[%s1 + $0x1da0] sm:$0xff]
  %v988 = vld [vmem:[%s1 + $0x1da8] sm:$0xff]
  %v989 = vld [vmem:[%s1 + $0x1db0] sm:$0xff]
  %v990 = vld [vmem:[%s1 + $0x1db8] sm:$0xff]
  %v991 = vld [vmem:[%s1 + $0x1dc0] sm:$0xff]
  %v992 = vld [vmem:[%s1 + $0x1dc8] sm:$0xff]
  %v993 = vld [vmem:[%s1 + $0x1dd0] sm:$0xff]
  %v994 = vld [vmem:[%s1 + $0x1dd8] sm:$0xff]
  %v995 = vld [vmem:[%s1 + $0x1de0] sm:$0xff]
  %v996 = vld [vmem:[%s1 + $0x1de8] sm:$0xff]
  %v997 = vld [vmem:[%s1 + $0x1df0] sm:$0xff]
  %v998 = vld [vmem:[%s1 + $0x1df8] sm:$0xff]
  %v999 = vld [vmem:[%s1 + $0x1e00] sm:$0xff]
  %v1000 = vld [vmem:[%s1 + $0x1e08] sm:$0xff]
  %v1001 = vld [vmem:[%s1 + $0x1e10] sm:$0xff]
  %v1002 = vld [vmem:[%s1 + $0x1e18] sm:$0xff]
  %v1003 = vld [vmem:[%s1 + $0x1e20] sm:$0xff]
  %v1004 = vld [vmem:[%s1 + $0x1e28] sm:$0xff]
  %v1005 = vld [vmem:[%s1 + $0x1e30] sm:$0xff]
  %v1006 = vld [vmem:[%s1 + $0x1e38] sm:$0xff]
  %v1007 = vld [vmem:[%s1 + $0x1e40] sm:$0xff]
  %v1008 = vld [vmem:[%s1 + $0x1e48] sm:$0xff]
  %v1009 = vld [vmem:[%s1 + $0x1e50] sm:$0xff]
  %v1010 = vld [vmem:[%s1 + $0x1e58] sm:$0xff]
  %v1011 = vld [vmem:[%s1 + $0x1e60] sm:$0xff]
  %v1012 = vld [vmem:[%s1 + $0x1e68] sm:$0xff]
  %v1013 = vld [vmem:[%s1 + $0x1e70] sm:$0xff]
  %v1014 = vld [vmem:[%s1 + $0x1e78] sm:$0xff]
  %v1015 = vld [vmem:[%s1 + $0x1e80] sm:$0xff]
  %v1016 = vld [vmem:[%s1 + $0x1e88] sm:$0xff]
  %v1017 = vld [vmem:[%s1 + $0x1e90] sm:$0xff]
  %v1018 = vld [vmem:[%s1 + $0x1e98] sm:$0xff]
  %v1019 = vld [vmem:[%s1 + $0x1ea0] sm:$0xff]
  %v1020 = vld [vmem:[%s1 + $0x1ea8] sm:$0xff]
  %v1021 = vld [vmem:[%s1 + $0x1eb0] sm:$0xff]
  %v1022 = vld [vmem:[%s1 + $0x1eb8] sm:$0xff]
  %v1023 = vld [vmem:[%s1 + $0x1ec0] sm:$0xff]
  %v1024 = vld [vmem:[%s1 + $0x1ec8] sm:$0xff]
  %v1025 = vld [vmem:[%s1 + $0x1ed0] sm:$0xff]
  %v1026 = vld [vmem:[%s1 + $0x1ed8] sm:$0xff]
  %v1027 = vld [vmem:[%s1 + $0x1ee0] sm:$0xff]
  %v1028 = vld [vmem:[%s1 + $0x1ee8] sm:$0xff]
  %v1029 = vld [vmem:[%s1 + $0x1ef0] sm:$0xff]
  %v1030 = vld [vmem:[%s1 + $0x1ef8] sm:$0xff]
  %v1031 = vld [vmem:[%s1 + $0x1f00] sm:$0xff]
  %v1032 = vld [vmem:[%s1 + $0x1f08] sm:$0xff]
  %v1033 = vld [vmem:[%s1 + $0x1f10] sm:$0xff]
  %v1034 = vld [vmem:[%s1 + $0x1f18] sm:$0xff]
  %v1035 = vld [vmem:[%s1 + $0x1f20] sm:$0xff]
  %v1036 = vld [vmem:[%s1 + $0x1f28] sm:$0xff]
  %v1037 = vld [vmem:[%s1 + $0x1f30] sm:$0xff]
  %v1038 = vld [vmem:[%s1 + $0x1f38] sm:$0xff]
  %v1039 = vld [vmem:[%s1 + $0x1f40] sm:$0xff]
  %v1040 = vld [vmem:[%s1 + $0x1f48] sm:$0xff]
  %v1041 = vld [vmem:[%s1 + $0x1f50] sm:$0xff]
  %v1042 = vld [vmem:[%s1 + $0x1f58] sm:$0xff]
  %v1043 = vld [vmem:[%s1 + $0x1f60] sm:$0xff]
  %v1044 = vld [vmem:[%s1 + $0x1f68] sm:$0xff]
  %v1045 = vld [vmem:[%s1 + $0x1f70] sm:$0xff]
  %v1046 = vld [vmem:[%s1 + $0x1f78] sm:$0xff]
  %v1047 = vld [vmem:[%s1 + $0x1f80] sm:$0xff]
  %v1048 = vld [vmem:[%s1 + $0x1f88] sm:$0xff]
  %v1049 = vld [vmem:[%s1 + $0x1f90] sm:$0xff]
  %v1050 = vld [vmem:[%s1 + $0x1f98] sm:$0xff]
  %v1051 = vld [vmem:[%s1 + $0x1fa0] sm:$0xff]
  %v1052 = vld [vmem:[%s1 + $0x1fa8] sm:$0xff]
  %v1053 = vld [vmem:[%s1 + $0x1fb0] sm:$0xff]
  %v1054 = vld [vmem:[%s1 + $0x1fb8] sm:$0xff]
  %v1055 = vld [vmem:[%s1 + $0x1fc0] sm:$0xff]
  %v1056 = vld [vmem:[%s1 + $0x1fc8] sm:$0xff]
  %v1057 = vld [vmem:[%s1 + $0x1fd0] sm:$0xff]
  %v1058 = vld [vmem:[%s1 + $0x1fd8] sm:$0xff]
  %v1059 = vld [vmem:[%s1 + $0x1fe0] sm:$0xff]
  %v1060 = vld [vmem:[%s1 + $0x1fe8] sm:$0xff]
  %v1061 = vld [vmem:[%s1 + $0x1ff0] sm:$0xff]
  %v1062 = vld [vmem:[%s1 + $0x1ff8] sm:$0xff]
  %v1063 = vld [vmem:[%s1 + $0x2000] sm:$0xff]
  %v1064 = vld [vmem:[%s1 + $0x2008] sm:$0xff]
  %v1065 = vld [vmem:[%s1 + $0x2010] sm:$0xff]
  %v1066 = vld [vmem:[%s1 + $0x2018] sm:$0xff]
  %v1067 = vld [vmem:[%s1 + $0x2020] sm:$0xff]
  %v1068 = vld [vmem:[%s1 + $0x2028] sm:$0xff]
  %v1069 = vld [vmem:[%s1 + $0x2030] sm:$0xff]
  %v1070 = vld [vmem:[%s1 + $0x2038] sm:$0xff]
  %v1071 = vld [vmem:[%s1 + $0x2040] sm:$0xff]
  %v1072 = vld [vmem:[%s1 + $0x2048] sm:$0xff]
  %v1073 = vld [vmem:[%s1 + $0x2050] sm:$0xff]
  %v1074 = vld [vmem:[%s1 + $0x2058] sm:$0xff]
  %v1075 = vld [vmem:[%s1 + $0x2060] sm:$0xff]
  %v1076 = vld [vmem:[%s1 + $0x2068] sm:$0xff]
  %v1077 = vld [vmem:[%s1 + $0x2070] sm:$0xff]
  %v1078 = vld [vmem:[%s1 + $0x2078] sm:$0xff]
  %v1079 = vld [vmem:[%s1 + $0x2080] sm:$0xff]
  %v1080 = vld [vmem:[%s1 + $0x2088] sm:$0xff]
  %v1081 = vld [vmem:[%s1 + $0x2090] sm:$0xff]
  %v1082 = vld [vmem:[%s1 + $0x2098] sm:$0xff]
  %v1083 = vld [vmem:[%s1 + $0x20a0] sm:$0xff]
  %v1084 = vld [vmem:[%s1 + $0x20a8] sm:$0xff]
  %v1085 = vld [vmem:[%s1 + $0x20b0] sm:$0xff]
  %v1086 = vld [vmem:[%s1 + $0x20b8] sm:$0xff]
  %v1087 = vld [vmem:[%s1 + $0x20c0] sm:$0xff]
  %v1088 = vld [vmem:[%s1 + $0x20c8] sm:$0xff]
  %v1089 = vld [vmem:[%s1 + $0x20d0] sm:$0xff]
  %v1090 = vld [vmem:[%s1 + $0x20d8] sm:$0xff]
  %v1091 = vld [vmem:[%s1 + $0x20e0] sm:$0xff]
  %v1092 = vld [vmem:[%s1 + $0x20e8] sm:$0xff]
  %v1093 = vld [vmem:[%s1 + $0x20f0] sm:$0xff]
  %v1094 = vld [vmem:[%s1 + $0x20f8] sm:$0xff]
  %v1095 = vld [vmem:[%s1 + $0x2100] sm:$0xff]
  %v1096 = vld [vmem:[%s1 + $0x2108] sm:$0xff]
  %v1097 = vld [vmem:[%s1 + $0x2110] sm:$0xff]
  %v1098 = vld [vmem:[%s1 + $0x2118] sm:$0xff]
  %v1099 = vld [vmem:[%s1 + $0x2120] sm:$0xff]
  %v1100 = vld [vmem:[%s1 + $0x2128] sm:$0xff]
  %v1101 = vld [vmem:[%s1 + $0x2130] sm:$0xff]
  %v1102 = vld [vmem:[%s1 + $0x2138] sm:$0xff]
  %v1103 = vld [vmem:[%s1 + $0x2140] sm:$0xff]
  %v1104 = vld [vmem:[%s1 + $0x2148] sm:$0xff]
  %v1105 = vld [vmem:[%s1 + $0x2150] sm:$0xff]
  %v1106 = vld [vmem:[%s1 + $0x2158] sm:$0xff]
  %v1107 = vld [vmem:[%s1 + $0x2160] sm:$0xff]
  %v1108 = vld [vmem:[%s1 + $0x2168] sm:$0xff]
  %v1109 = vld [vmem:[%s1 + $0x2170] sm:$0xff]
  %v1110 = vld [vmem:[%s1 + $0x2178] sm:$0xff]
  %v1111 = vld [vmem:[%s1 + $0x2180] sm:$0xff]
  %v1112 = vld [vmem:[%s1 + $0x2188] sm:$0xff]
  %v1113 = vld [vmem:[%s1 + $0x2190] sm:$0xff]
  %v1114 = vld [vmem:[%s1 + $0x2198] sm:$0xff]
  %v1115 = vld [vmem:[%s1 + $0x21a0] sm:$0xff]
  %v1116 = vld [vmem:[%s1 + $0x21a8] sm:$0xff]
  %v1117 = vld [vmem:[%s1 + $0x21b0] sm:$0xff]
  %v1118 = vld [vmem:[%s1 + $0x21b8] sm:$0xff]
  %v1119 = vld [vmem:[%s1 + $0x21c0] sm:$0xff]
  %v1120 = vld [vmem:[%s1 + $0x21c8] sm:$0xff]
  %v1121 = vld [vmem:[%s1 + $0x21d0] sm:$0xff]
  %v1122 = vld [vmem:[%s1 + $0x21d8] sm:$0xff]
  %v1123 = vld [vmem:[%s1 + $0x21e0] sm:$0xff]
  %v1124 = vld [vmem:[%s1 + $0x21e8] sm:$0xff]
  %v1125 = vld [vmem:[%s1 + $0x21f0] sm:$0xff]
  %v1126 = vld [vmem:[%s1 + $0x21f8] sm:$0xff]
  %v1127 = vld [vmem:[%s1 + $0x2200] sm:$0xff]
  %v1128 = vld [vmem:[%s1 + $0x2208] sm:$0xff]
  %v1129 = vld [vmem:[%s1 + $0x2210] sm:$0xff]
  %v1130 = vld [vmem:[%s1 + $0x2218] sm:$0xff]
  %v1131 = vld [vmem:[%s1 + $0x2220] sm:$0xff]
  %v1132 = vld [vmem:[%s1 + $0x2228] sm:$0xff]
  %v1133 = vld [vmem:[%s1 + $0x2230] sm:$0xff]
  %v1134 = vld [vmem:[%s1 + $0x2238] sm:$0xff]
  %v1135 = vld [vmem:[%s1 + $0x2240] sm:$0xff]
  %v1136 = vld [vmem:[%s1 + $0x2248] sm:$0xff]
  %v1137 = vld [vmem:[%s1 + $0x2250] sm:$0xff]
  %v1138 = vld [vmem:[%s1 + $0x2258] sm:$0xff]
  %v1139 = vld [vmem:[%s1 + $0x2260] sm:$0xff]
  %v1140 = vld [vmem:[%s1 + $0x2268] sm:$0xff]
  %v1141 = vld [vmem:[%s1 + $0x2270] sm:$0xff]
  %v1142 = vld [vmem:[%s1 + $0x2278] sm:$0xff]
  %v1143 = vld [vmem:[%s1 + $0x2280] sm:$0xff]
  %v1144 = vld [vmem:[%s1 + $0x2288] sm:$0xff]
  %v1145 = vld [vmem:[%s1 + $0x2290] sm:$0xff]
  %v1146 = vld [vmem:[%s1 + $0x2298] sm:$0xff]
  %v1147 = vld [vmem:[%s1 + $0x22a0] sm:$0xff]
  %v1148 = vld [vmem:[%s1 + $0x22a8] sm:$0xff]
  %v1149 = vld [vmem:[%s1 + $0x22b0] sm:$0xff]
  %v1150 = vld [vmem:[%s1 + $0x22b8] sm:$0xff]
  %v1151 = vld [vmem:[%s1 + $0x22c0] sm:$0xff]
  %v1152 = vld [vmem:[%s1 + $0x22c8] sm:$0xff]
  %v1153 = vld [vmem:[%s1 + $0x22d0] sm:$0xff]
  %v1154 = vld [vmem:[%s1 + $0x22d8] sm:$0xff]
  %v1155 = vld [vmem:[%s1 + $0x22e0] sm:$0xff]
  %v1156 = vld [vmem:[%s1 + $0x22e8] sm:$0xff]
  %v1157 = vld [vmem:[%s1 + $0x22f0] sm:$0xff]
  %v1158 = vld [vmem:[%s1 + $0x22f8] sm:$0xff]
  %v1159 = vld [vmem:[%s1 + $0x2300] sm:$0xff]
  %v1160 = vld [vmem:[%s1 + $0x2308] sm:$0xff]
  %v1161 = vld [vmem:[%s1 + $0x2310] sm:$0xff]
  %v1162 = vld [vmem:[%s1 + $0x2318] sm:$0xff]
  %v1163 = vld [vmem:[%s1 + $0x2320] sm:$0xff]
  %v1164 = vld [vmem:[%s1 + $0x2328] sm:$0xff]
  %v1165 = vld [vmem:[%s1 + $0x2330] sm:$0xff]
  %v1166 = vld [vmem:[%s1 + $0x2338] sm:$0xff]
  %v1167 = vld [vmem:[%s1 + $0x2340] sm:$0xff]
  %v1168 = vld [vmem:[%s1 + $0x2348] sm:$0xff]
  %v1169 = vld [vmem:[%s1 + $0x2350] sm:$0xff]
  %v1170 = vld [vmem:[%s1 + $0x2358] sm:$0xff]
  %v1171 = vld [vmem:[%s1 + $0x2360] sm:$0xff]
  %v1172 = vld [vmem:[%s1 + $0x2368] sm:$0xff]
  %v1173 = vld [vmem:[%s1 + $0x2370] sm:$0xff]
  %v1174 = vld [vmem:[%s1 + $0x2378] sm:$0xff]
  %v1175 = vld [vmem:[%s1 + $0x2380] sm:$0xff]
  %v1176 = vld [vmem:[%s1 + $0x2388] sm:$0xff]
  %v1177 = vld [vmem:[%s1 + $0x2390] sm:$0xff]
  %v1178 = vld [vmem:[%s1 + $0x2398] sm:$0xff]
  %v1179 = vld [vmem:[%s1 + $0x23a0] sm:$0xff]
  %v1180 = vld [vmem:[%s1 + $0x23a8] sm:$0xff]
  %v1181 = vld [vmem:[%s1 + $0x23b0] sm:$0xff]
  %v1182 = vld [vmem:[%s1 + $0x23b8] sm:$0xff]
  %v1183 = vld [vmem:[%s1 + $0x23c0] sm:$0xff]
  %v1184 = vld [vmem:[%s1 + $0x23c8] sm:$0xff]
  %v1185 = vld [vmem:[%s1 + $0x23d0] sm:$0xff]
  %v1186 = vld [vmem:[%s1 + $0x23d8] sm:$0xff]
  %v1187 = vld [vmem:[%s1 + $0x23e0] sm:$0xff]
  %v1188 = vld [vmem:[%s1 + $0x23e8] sm:$0xff]
  %v1189 = vld [vmem:[%s1 + $0x23f0] sm:$0xff]
  %v1190 = vld [vmem:[%s1 + $0x23f8] sm:$0xff]
  %v1191 = vld [vmem:[%s1 + $0x2400] sm:$0xff]
  %v1192 = vld [vmem:[%s1 + $0x2408] sm:$0xff]
  %v1193 = vld [vmem:[%s1 + $0x2410] sm:$0xff]
  %v1194 = vld [vmem:[%s1 + $0x2418] sm:$0xff]
  %v1195 = vld [vmem:[%s1 + $0x2420] sm:$0xff]
  %v1196 = vld [vmem:[%s1 + $0x2428] sm:$0xff]
  %v1197 = vld [vmem:[%s1 + $0x2430] sm:$0xff]
  %v1198 = vld [vmem:[%s1 + $0x2438] sm:$0xff]
  %v1199 = vld [vmem:[%s1 + $0x2440] sm:$0xff]
  %v1200 = vld [vmem:[%s1 + $0x2448] sm:$0xff]
  %v1201 = vld [vmem:[%s1 + $0x2450] sm:$0xff]
  %v1202 = vld [vmem:[%s1 + $0x2458] sm:$0xff]
  %v1203 = vld [vmem:[%s1 + $0x2460] sm:$0xff]
  %v1204 = vld [vmem:[%s1 + $0x2468] sm:$0xff]
  %v1205 = vld [vmem:[%s1 + $0x2470] sm:$0xff]
  %v1206 = vld [vmem:[%s1 + $0x2478] sm:$0xff]
  %v1207 = vld [vmem:[%s1 + $0x2480] sm:$0xff]
  %v1208 = vld [vmem:[%s1 + $0x2488] sm:$0xff]
  %v1209 = vld [vmem:[%s1 + $0x2490] sm:$0xff]
  %v1210 = vld [vmem:[%s1 + $0x2498] sm:$0xff]
  %v1211 = vld [vmem:[%s1 + $0x24a0] sm:$0xff]
  %v1212 = vld [vmem:[%s1 + $0x24a8] sm:$0xff]
  %v1213 = vld [vmem:[%s1 + $0x24b0] sm:$0xff]
  %v1214 = vld [vmem:[%s1 + $0x24b8] sm:$0xff]
  %v1215 = vld [vmem:[%s1 + $0x24c0] sm:$0xff]
  %v1216 = vld [vmem:[%s1 + $0x24c8] sm:$0xff]
  %v1217 = vld [vmem:[%s1 + $0x24d0] sm:$0xff]
  %v1218 = vld [vmem:[%s1 + $0x24d8] sm:$0xff]
  %v1219 = vld [vmem:[%s1 + $0x24e0] sm:$0xff]
  %v1220 = vld [vmem:[%s1 + $0x24e8] sm:$0xff]
  %v1221 = vld [vmem:[%s1 + $0x24f0] sm:$0xff]
  %v1222 = vld [vmem:[%s1 + $0x24f8] sm:$0xff]
  %v1223 = vld [vmem:[%s1 + $0x2500] sm:$0xff]
  %v1224 = vld [vmem:[%s1 + $0x2508] sm:$0xff]
  %v1225 = vld [vmem:[%s1 + $0x2510] sm:$0xff]
  %v1226 = vld [vmem:[%s1 + $0x2518] sm:$0xff]
  %v1227 = vld [vmem:[%s1 + $0x2520] sm:$0xff]
  %v1228 = vld [vmem:[%s1 + $0x2528] sm:$0xff]
  %v1229 = vld [vmem:[%s1 + $0x2530] sm:$0xff]
  %v1230 = vld [vmem:[%s1 + $0x2538] sm:$0xff]
  %v1231 = vld [vmem:[%s1 + $0x2540] sm:$0xff]
  %v1232 = vld [vmem:[%s1 + $0x2548] sm:$0xff]
  %v1233 = vld [vmem:[%s1 + $0x2550] sm:$0xff]
  %v1234 = vld [vmem:[%s1 + $0x2558] sm:$0xff]
  %v1235 = vld [vmem:[%s1 + $0x2560] sm:$0xff]
  %v1236 = vld [vmem:[%s1 + $0x2568] sm:$0xff]
  %v1237 = vld [vmem:[%s1 + $0x2570] sm:$0xff]
  %v1238 = vld [vmem:[%s1 + $0x2578] sm:$0xff]
  %v1239 = vld [vmem:[%s1 + $0x2580] sm:$0xff]
  %v1240 = vld [vmem:[%s1 + $0x2588] sm:$0xff]
  %v1241 = vld [vmem:[%s1 + $0x2590] sm:$0xff]
  %v1242 = vld [vmem:[%s1 + $0x2598] sm:$0xff]
  %v1243 = vld [vmem:[%s1 + $0x25a0] sm:$0xff]
  %v1244 = vld [vmem:[%s1 + $0x25a8] sm:$0xff]
  %v1245 = vld [vmem:[%s1 + $0x25b0] sm:$0xff]
  %v1246 = vld [vmem:[%s1 + $0x25b8] sm:$0xff]
  %v1247 = vld [vmem:[%s1 + $0x25c0] sm:$0xff]
  %v1248 = vld [vmem:[%s1 + $0x25c8] sm:$0xff]
  %v1249 = vld [vmem:[%s1 + $0x25d0] sm:$0xff]
  %v1250 = vld [vmem:[%s1 + $0x25d8] sm:$0xff]
  %v1251 = vld [vmem:[%s1 + $0x25e0] sm:$0xff]
  %v1252 = vld [vmem:[%s1 + $0x25e8] sm:$0xff]
  %v1253 = vld [vmem:[%s1 + $0x25f0] sm:$0xff]
  %v1254 = vld [vmem:[%s1 + $0x25f8] sm:$0xff]
  %v1255 = vld [vmem:[%s1 + $0x2600] sm:$0xff]
  %v1256 = vld [vmem:[%s1 + $0x2608] sm:$0xff]
  %v1257 = vld [vmem:[%s1 + $0x2610] sm:$0xff]
  %v1258 = vld [vmem:[%s1 + $0x2618] sm:$0xff]
  %v1259 = vld [vmem:[%s1 + $0x2620] sm:$0xff]
  %v1260 = vld [vmem:[%s1 + $0x2628] sm:$0xff]
  %v1261 = vld [vmem:[%s1 + $0x2630] sm:$0xff]
  %v1262 = vld [vmem:[%s1 + $0x2638] sm:$0xff]
  %v1263 = vld [vmem:[%s1 + $0x2640] sm:$0xff]
  %v1264 = vld [vmem:[%s1 + $0x2648] sm:$0xff]
  %v1265 = vld [vmem:[%s1 + $0x2650] sm:$0xff]
  %v1266 = vld [vmem:[%s1 + $0x2658] sm:$0xff]
  %v1267 = vld [vmem:[%s1 + $0x2660] sm:$0xff]
  %v1268 = vld [vmem:[%s1 + $0x2668] sm:$0xff]
  %v1269 = vld [vmem:[%s1 + $0x2670] sm:$0xff]
  %v1270 = vld [vmem:[%s1 + $0x2678] sm:$0xff]
  %v1271 = vld [vmem:[%s1 + $0x2680] sm:$0xff]
  %v1272 = vld [vmem:[%s1 + $0x2688] sm:$0xff]
  %v1273 = vld [vmem:[%s1 + $0x2690] sm:$0xff]
  %v1274 = vld [vmem:[%s1 + $0x2698] sm:$0xff]
  %v1275 = vld [vmem:[%s1 + $0x26a0] sm:$0xff]
  %v1276 = vld [vmem:[%s1 + $0x26a8] sm:$0xff]
  %v1277 = vld [vmem:[%s1 + $0x26b0] sm:$0xff]
  %v1278 = vld [vmem:[%s1 + $0x26b8] sm:$0xff]
  %v1279 = vld [vmem:[%s1 + $0x26c0] sm:$0xff]
  %v1280 = vld [vmem:[%s1 + $0x26c8] sm:$0xff]
  %v1281 = vld [vmem:[%s1 + $0x26d0] sm:$0xff]
  %v1282 = vld [vmem:[%s1 + $0x26d8] sm:$0xff]
  %v1283 = vld [vmem:[%s1 + $0x26e0] sm:$0xff]
  %v1284 = vld [vmem:[%s1 + $0x26e8] sm:$0xff]
  %v1285 = vld [vmem:[%s1 + $0x26f0] sm:$0xff]
  %v1286 = vld [vmem:[%s1 + $0x26f8] sm:$0xff]
  %v1287 = vld [vmem:[%s1 + $0x2700] sm:$0xff]
  %v1288 = vld [vmem:[%s1 + $0x2708] sm:$0xff]
  %v1289 = vld [vmem:[%s1 + $0x2710] sm:$0xff]
  %v1290 = vld [vmem:[%s1 + $0x2718] sm:$0xff]
  %v1291 = vld [vmem:[%s1 + $0x2720] sm:$0xff]
  %v1292 = vld [vmem:[%s1 + $0x2728] sm:$0xff]
  %v1293 = vld [vmem:[%s1 + $0x2730] sm:$0xff]
  %v1294 = vld [vmem:[%s1 + $0x2738] sm:$0xff]
  %v1295 = vld [vmem:[%s1 + $0x2740] sm:$0xff]
  %v1296 = vld [vmem:[%s1 + $0x2748] sm:$0xff]
  %v1297 = vld [vmem:[%s1 + $0x2750] sm:$0xff]
  %v1298 = vld [vmem:[%s1 + $0x2758] sm:$0xff]
  %v1299 = vld [vmem:[%s1 + $0x2760] sm:$0xff]
  %v1300 = vld [vmem:[%s1 + $0x2768] sm:$0xff]
  %v1301 = vld [vmem:[%s1 + $0x2770] sm:$0xff]
  %v1302 = vld [vmem:[%s1 + $0x2778] sm:$0xff]
  %v1303 = vld [vmem:[%s1 + $0x2780] sm:$0xff]
  %v1304 = vld [vmem:[%s1 + $0x2788] sm:$0xff]
  %v1305 = vld [vmem:[%s1 + $0x2790] sm:$0xff]
  %v1306 = vld [vmem:[%s1 + $0x2798] sm:$0xff]
  %v1307 = vld [vmem:[%s1 + $0x27a0] sm:$0xff]
  %v1308 = vld [vmem:[%s1 + $0x27a8] sm:$0xff]
  %v1309 = vld [vmem:[%s1 + $0x27b0] sm:$0xff]
  %v1310 = vld [vmem:[%s1 + $0x27b8] sm:$0xff]
  %v1311 = vld [vmem:[%s1 + $0x27c0] sm:$0xff]
  %v1312 = vld [vmem:[%s1 + $0x27c8] sm:$0xff]
  %v1313 = vld [vmem:[%s1 + $0x27d0] sm:$0xff]
  %v1314 = vld [vmem:[%s1 + $0x27d8] sm:$0xff]
  %v1315 = vld [vmem:[%s1 + $0x27e0] sm:$0xff]
  %v1316 = vld [vmem:[%s1 + $0x27e8] sm:$0xff]
  %v1317 = vld [vmem:[%s1 + $0x27f0] sm:$0xff]
  %v1318 = vld [vmem:[%s1 + $0x27f8] sm:$0xff]
  %v1319 = vld [vmem:[%s1 + $0x2800] sm:$0xff]
  %v1320 = vld [vmem:[%s1 + $0x2808] sm:$0xff]
  %v1321 = vld [vmem:[%s1 + $0x2810] sm:$0xff]
  %v1322 = vld [vmem:[%s1 + $0x2818] sm:$0xff]
  %v1323 = vld [vmem:[%s1 + $0x2820] sm:$0xff]
  %v1324 = vld [vmem:[%s1 + $0x2828] sm:$0xff]
  %v1325 = vld [vmem:[%s1 + $0x2830] sm:$0xff]
  %v1326 = vld [vmem:[%s1 + $0x2838] sm:$0xff]
  %v1327 = vld [vmem:[%s1 + $0x2840] sm:$0xff]
  %v1328 = vld [vmem:[%s1 + $0x2848] sm:$0xff]
  %v1329 = vld [vmem:[%s1 + $0x2850] sm:$0xff]
  %v1330 = vld [vmem:[%s1 + $0x2858] sm:$0xff]
  %v1331 = vld [vmem:[%s1 + $0x2860] sm:$0xff]
  %v1332 = vld [vmem:[%s1 + $0x2868] sm:$0xff]
  %v1333 = vld [vmem:[%s1 + $0x2870] sm:$0xff]
  %v1334 = vld [vmem:[%s1 + $0x2878] sm:$0xff]
  %v1335 = vld [vmem:[%s1 + $0x2880] sm:$0xff]
  %v1336 = vld [vmem:[%s1 + $0x2888] sm:$0xff]
  %v1337 = vld [vmem:[%s1 + $0x2890] sm:$0xff]
  %v1338 = vld [vmem:[%s1 + $0x2898] sm:$0xff]
  %v1339 = vld [vmem:[%s1 + $0x28a0] sm:$0xff]
  %v1340 = vld [vmem:[%s1 + $0x28a8] sm:$0xff]
  %v1341 = vld [vmem:[%s1 + $0x28b0] sm:$0xff]
  %v1342 = vld [vmem:[%s1 + $0x28b8] sm:$0xff]
  %v1343 = vld [vmem:[%s1 + $0x28c0] sm:$0xff]
  %v1344 = vld [vmem:[%s1 + $0x28c8] sm:$0xff]
  %v1345 = vld [vmem:[%s1 + $0x28d0] sm:$0xff]
  %v1346 = vld [vmem:[%s1 + $0x28d8] sm:$0xff]
  %v1347 = vld [vmem:[%s1 + $0x28e0] sm:$0xff]
  %v1348 = vld [vmem:[%s1 + $0x28e8] sm:$0xff]
  %v1349 = vld [vmem:[%s1 + $0x28f0] sm:$0xff]
  %v1350 = vld [vmem:[%s1 + $0x28f8] sm:$0xff]
  %v1351 = vld [vmem:[%s1 + $0x2900] sm:$0xff]
  %v1352 = vld [vmem:[%s1 + $0x2908] sm:$0xff]
  %v1353 = vld [vmem:[%s1 + $0x2910] sm:$0xff]
  %v1354 = vld [vmem:[%s1 + $0x2918] sm:$0xff]
  %v1355 = vld [vmem:[%s1 + $0x2920] sm:$0xff]
  %v1356 = vld [vmem:[%s1 + $0x2928] sm:$0xff]
  %v1357 = vld [vmem:[%s1 + $0x2930] sm:$0xff]
  %v1358 = vld [vmem:[%s1 + $0x2938] sm:$0xff]
  %v1359 = vld [vmem:[%s1 + $0x2940] sm:$0xff]
  %v1360 = vld [vmem:[%s1 + $0x2948] sm:$0xff]
  %v1361 = vld [vmem:[%s1 + $0x2950] sm:$0xff]
  %v1362 = vld [vmem:[%s1 + $0x2958] sm:$0xff]
  %v1363 = vld [vmem:[%s1 + $0x2960] sm:$0xff]
  %v1364 = vld [vmem:[%s1 + $0x2968] sm:$0xff]
  %v1365 = vld [vmem:[%s1 + $0x2970] sm:$0xff]
  %v1366 = vld [vmem:[%s1 + $0x2978] sm:$0xff]
  %v1367 = vld [vmem:[%s1 + $0x2980] sm:$0xff]
  %v1368 = vld [vmem:[%s1 + $0x2988] sm:$0xff]
  %v1369 = vld [vmem:[%s1 + $0x2990] sm:$0xff]
  %v1370 = vld [vmem:[%s1 + $0x2998] sm:$0xff]
  %v1371 = vld [vmem:[%s1 + $0x29a0] sm:$0xff]
  %v1372 = vld [vmem:[%s1 + $0x29a8] sm:$0xff]
  %v1373 = vld [vmem:[%s1 + $0x29b0] sm:$0xff]
  %v1374 = vld [vmem:[%s1 + $0x29b8] sm:$0xff]
  %v1375 = vld [vmem:[%s1 + $0x29c0] sm:$0xff]
  %v1376 = vld [vmem:[%s1 + $0x29c8] sm:$0xff]
  %v1377 = vld [vmem:[%s1 + $0x29d0] sm:$0xff]
  %v1378 = vld [vmem:[%s1 + $0x29d8] sm:$0xff]
  %v1379 = vld [vmem:[%s1 + $0x29e0] sm:$0xff]
  %v1380 = vld [vmem:[%s1 + $0x29e8] sm:$0xff]
  %v1381 = vld [vmem:[%s1 + $0x29f0] sm:$0xff]
  %v1382 = vld [vmem:[%s1 + $0x29f8] sm:$0xff]
  %v1383 = vld [vmem:[%s1 + $0x2a00] sm:$0xff]
  %v1384 = vld [vmem:[%s1 + $0x2a08] sm:$0xff]
  %v1385 = vld [vmem:[%s1 + $0x2a10] sm:$0xff]
  %v1386 = vld [vmem:[%s1 + $0x2a18] sm:$0xff]
  %v1387 = vld [vmem:[%s1 + $0x2a20] sm:$0xff]
  %v1388 = vld [vmem:[%s1 + $0x2a28] sm:$0xff]
  %v1389 = vld [vmem:[%s1 + $0x2a30] sm:$0xff]
  %v1390 = vld [vmem:[%s1 + $0x2a38] sm:$0xff]
  %v1391 = vld [vmem:[%s1 + $0x2a40] sm:$0xff]
  %v1392 = vld [vmem:[%s1 + $0x2a48] sm:$0xff]
  %v1393 = vld [vmem:[%s1 + $0x2a50] sm:$0xff]
  %v1394 = vld [vmem:[%s1 + $0x2a58] sm:$0xff]
  %v1395 = vld [vmem:[%s1 + $0x2a60] sm:$0xff]
  %v1396 = vld [vmem:[%s1 + $0x2a68] sm:$0xff]
  %v1397 = vld [vmem:[%s1 + $0x2a70] sm:$0xff]
  %v1398 = vld [vmem:[%s1 + $0x2a78] sm:$0xff]
  %v1399 = vld [vmem:[%s1 + $0x2a80] sm:$0xff]
  %v1400 = vld [vmem:[%s1 + $0x2a88] sm:$0xff]
  %v1401 = vld [vmem:[%s1 + $0x2a90] sm:$0xff]
  %v1402 = vld [vmem:[%s1 + $0x2a98] sm:$0xff]
  %v1403 = vld [vmem:[%s1 + $0x2aa0] sm:$0xff]
  %v1404 = vld [vmem:[%s1 + $0x2aa8] sm:$0xff]
  %v1405 = vld [vmem:[%s1 + $0x2ab0] sm:$0xff]
  %v1406 = vld [vmem:[%s1 + $0x2ab8] sm:$0xff]
  %v1407 = vld [vmem:[%s1 + $0x2ac0] sm:$0xff]
  %v1408 = vld [vmem:[%s1 + $0x2ac8] sm:$0xff]
  %v1409 = vld [vmem:[%s1 + $0x2ad0] sm:$0xff]
  %v1410 = vld [vmem:[%s1 + $0x2ad8] sm:$0xff]
  %v1411 = vld [vmem:[%s1 + $0x2ae0] sm:$0xff]
  %v1412 = vld [vmem:[%s1 + $0x2ae8] sm:$0xff]
  %v1413 = vld [vmem:[%s1 + $0x2af0] sm:$0xff]
  %v1414 = vld [vmem:[%s1 + $0x2af8] sm:$0xff]
  %v1415 = vld [vmem:[%s1 + $0x2b00] sm:$0xff]
  %v1416 = vld [vmem:[%s1 + $0x2b08] sm:$0xff]
  %v1417 = vld [vmem:[%s1 + $0x2b10] sm:$0xff]
  %v1418 = vld [vmem:[%s1 + $0x2b18] sm:$0xff]
  %v1419 = vld [vmem:[%s1 + $0x2b20] sm:$0xff]
  %v1420 = vld [vmem:[%s1 + $0x2b28] sm:$0xff]
  %v1421 = vld [vmem:[%s1 + $0x2b30] sm:$0xff]
  %v1422 = vld [vmem:[%s1 + $0x2b38] sm:$0xff]
  %v1423 = vld [vmem:[%s1 + $0x2b40] sm:$0xff]
  %v1424 = vld [vmem:[%s1 + $0x2b48] sm:$0xff]
  %v1425 = vld [vmem:[%s1 + $0x2b50] sm:$0xff]
  %v1426 = vld [vmem:[%s1 + $0x2b58] sm:$0xff]
  %v1427 = vld [vmem:[%s1 + $0x2b60] sm:$0xff]
  %v1428 = vld [vmem:[%s1 + $0x2b68] sm:$0xff]
  %v1429 = vld [vmem:[%s1 + $0x2b70] sm:$0xff]
  %v1430 = vld [vmem:[%s1 + $0x2b78] sm:$0xff]
  %v1431 = vld [vmem:[%s1 + $0x2b80] sm:$0xff]
  %v1432 = vld [vmem:[%s1 + $0x2b88] sm:$0xff]
  %v1433 = vld [vmem:[%s1 + $0x2b90] sm:$0xff]
  %v1434 = vld [vmem:[%s1 + $0x2b98] sm:$0xff]
  %v1435 = vld [vmem:[%s1 + $0x2ba0] sm:$0xff]
  %v1436 = vld [vmem:[%s1 + $0x2ba8] sm:$0xff]
  %v1437 = vld [vmem:[%s1 + $0x2bb0] sm:$0xff]
  %v1438 = vld [vmem:[%s1 + $0x2bb8] sm:$0xff]
  %v1439 = vld [vmem:[%s1 + $0x2bc0] sm:$0xff]
  %v1440 = vld [vmem:[%s1 + $0x2bc8] sm:$0xff]
  %v1441 = vld [vmem:[%s1 + $0x2bd0] sm:$0xff]
  %v1442 = vld [vmem:[%s1 + $0x2bd8] sm:$0xff]
  %v1443 = vld [vmem:[%s1 + $0x2be0] sm:$0xff]
  %v1444 = vld [vmem:[%s1 + $0x2be8] sm:$0xff]
  %v1445 = vld [vmem:[%s1 + $0x2bf0] sm:$0xff]
  %v1446 = vld [vmem:[%s1 + $0x2bf8] sm:$0xff]
  %v1447 = vld [vmem:[%s1 + $0x2c00] sm:$0xff]
  %v1448 = vld [vmem:[%s1 + $0x2c08] sm:$0xff]
  %v1449 = vld [vmem:[%s1 + $0x2c10] sm:$0xff]
  %v1450 = vld [vmem:[%s1 + $0x2c18] sm:$0xff]
  %v1451 = vld [vmem:[%s1 + $0x2c20] sm:$0xff]
  %v1452 = vld [vmem:[%s1 + $0x2c28] sm:$0xff]
  %v1453 = vld [vmem:[%s1 + $0x2c30] sm:$0xff]
  %v1454 = vld [vmem:[%s1 + $0x2c38] sm:$0xff]
  %v1455 = vld [vmem:[%s1 + $0x2c40] sm:$0xff]
  %v1456 = vld [vmem:[%s1 + $0x2c48] sm:$0xff]
  %v1457 = vld [vmem:[%s1 + $0x2c50] sm:$0xff]
  %v1458 = vld [vmem:[%s1 + $0x2c58] sm:$0xff]
  %v1459 = vld [vmem:[%s1 + $0x2c60] sm:$0xff]
  %v1460 = vld [vmem:[%s1 + $0x2c68] sm:$0xff]
  %v1461 = vld [vmem:[%s1 + $0x2c70] sm:$0xff]
  %v1462 = vld [vmem:[%s1 + $0x2c78] sm:$0xff]
  %v1463 = vld [vmem:[%s1 + $0x2c80] sm:$0xff]
  %v1464 = vld [vmem:[%s1 + $0x2c88] sm:$0xff]
  %v1465 = vld [vmem:[%s1 + $0x2c90] sm:$0xff]
  %v1466 = vld [vmem:[%s1 + $0x2c98] sm:$0xff]
  %v1467 = vld [vmem:[%s1 + $0x2ca0] sm:$0xff]
  %v1468 = vld [vmem:[%s1 + $0x2ca8] sm:$0xff]
  %v1469 = vld [vmem:[%s1 + $0x2cb0] sm:$0xff]
  %v1470 = vld [vmem:[%s1 + $0x2cb8] sm:$0xff]
  %v1471 = vld [vmem:[%s1 + $0x2cc0] sm:$0xff]
  %v1472 = vld [vmem:[%s1 + $0x2cc8] sm:$0xff]
  %v1473 = vld [vmem:[%s1 + $0x2cd0] sm:$0xff]
  %v1474 = vld [vmem:[%s1 + $0x2cd8] sm:$0xff]
  %v1475 = vld [vmem:[%s1 + $0x2ce0] sm:$0xff]
  %v1476 = vld [vmem:[%s1 + $0x2ce8] sm:$0xff]
  %v1477 = vld [vmem:[%s1 + $0x2cf0] sm:$0xff]
  %v1478 = vld [vmem:[%s1 + $0x2cf8] sm:$0xff]
  %v1479 = vld [vmem:[%s1 + $0x2d00] sm:$0xff]
  %v1480 = vld [vmem:[%s1 + $0x2d08] sm:$0xff]
  %v1481 = vld [vmem:[%s1 + $0x2d10] sm:$0xff]
  %v1482 = vld [vmem:[%s1 + $0x2d18] sm:$0xff]
  %v1483 = vld [vmem:[%s1 + $0x2d20] sm:$0xff]
  %v1484 = vld [vmem:[%s1 + $0x2d28] sm:$0xff]
  %v1485 = vld [vmem:[%s1 + $0x2d30] sm:$0xff]
  %v1486 = vld [vmem:[%s1 + $0x2d38] sm:$0xff]
  %v1487 = vld [vmem:[%s1 + $0x2d40] sm:$0xff]
  %v1488 = vld [vmem:[%s1 + $0x2d48] sm:$0xff]
  %v1489 = vld [vmem:[%s1 + $0x2d50] sm:$0xff]
  %v1490 = vld [vmem:[%s1 + $0x2d58] sm:$0xff]
  %v1491 = vld [vmem:[%s1 + $0x2d60] sm:$0xff]
  %v1492 = vld [vmem:[%s1 + $0x2d68] sm:$0xff]
  %v1493 = vld [vmem:[%s1 + $0x2d70] sm:$0xff]
  %v1494 = vld [vmem:[%s1 + $0x2d78] sm:$0xff]
  %v1495 = vld [vmem:[%s1 + $0x2d80] sm:$0xff]
  %v1496 = vld [vmem:[%s1 + $0x2d88] sm:$0xff]
  %v1497 = vld [vmem:[%s1 + $0x2d90] sm:$0xff]
  %v1498 = vld [vmem:[%s1 + $0x2d98] sm:$0xff]
  %v1499 = vld [vmem:[%s1 + $0x2da0] sm:$0xff]
  %v1500 = vld [vmem:[%s1 + $0x2da8] sm:$0xff]
  %v1501 = vld [vmem:[%s1 + $0x2db0] sm:$0xff]
  %v1502 = vld [vmem:[%s1 + $0x2db8] sm:$0xff]
  %v1503 = vld [vmem:[%s1 + $0x2dc0] sm:$0xff]
  %v1504 = vld [vmem:[%s1 + $0x2dc8] sm:$0xff]
  %v1505 = vld [vmem:[%s1 + $0x2dd0] sm:$0xff]
  %v1506 = vld [vmem:[%s1 + $0x2dd8] sm:$0xff]
  %v1507 = vld [vmem:[%s1 + $0x2de0] sm:$0xff]
  %v1508 = vld [vmem:[%s1 + $0x2de8] sm:$0xff]
  %v1509 = vld [vmem:[%s1 + $0x2df0] sm:$0xff]
  %v1510 = vld [vmem:[%s1 + $0x2df8] sm:$0xff]
  %v1511 = vld [vmem:[%s1 + $0x2e00] sm:$0xff]
  %v1512 = vld [vmem:[%s1 + $0x2e08] sm:$0xff]
  %v1513 = vld [vmem:[%s1 + $0x2e10] sm:$0xff]
  %v1514 = vld [vmem:[%s1 + $0x2e18] sm:$0xff]
  %v1515 = vld [vmem:[%s1 + $0x2e20] sm:$0xff]
  %v1516 = vld [vmem:[%s1 + $0x2e28] sm:$0xff]
  %v1517 = vld [vmem:[%s1 + $0x2e30] sm:$0xff]
  %v1518 = vld [vmem:[%s1 + $0x2e38] sm:$0xff]
  %v1519 = vld [vmem:[%s1 + $0x2e40] sm:$0xff]
  %v1520 = vld [vmem:[%s1 + $0x2e48] sm:$0xff]
  %v1521 = vld [vmem:[%s1 + $0x2e50] sm:$0xff]
  %v1522 = vld [vmem:[%s1 + $0x2e58] sm:$0xff]
  %v1523 = vld [vmem:[%s1 + $0x2e60] sm:$0xff]
  %v1524 = vld [vmem:[%s1 + $0x2e68] sm:$0xff]
  %v1525 = vld [vmem:[%s1 + $0x2e70] sm:$0xff]
  %v1526 = vld [vmem:[%s1 + $0x2e78] sm:$0xff]
  %v1527 = vld [vmem:[%s1 + $0x2e80] sm:$0xff]
  %v1528 = vld [vmem:[%s1 + $0x2e88] sm:$0xff]
  %v1529 = vld [vmem:[%s1 + $0x2e90] sm:$0xff]
  %v1530 = vld [vmem:[%s1 + $0x2e98] sm:$0xff]
  %v1531 = vld [vmem:[%s1 + $0x2ea0] sm:$0xff]
  %v1532 = vld [vmem:[%s1 + $0x2ea8] sm:$0xff]
  %v1533 = vld [vmem:[%s1 + $0x2eb0] sm:$0xff]
  %v1534 = vld [vmem:[%s1 + $0x2eb8] sm:$0xff]
  %v1535 = vld [vmem:[%s1 + $0x2ec0] sm:$0xff]
  %v1536 = vld [vmem:[%s1 + $0x2ec8] sm:$0xff]
  %v1537 = vld [vmem:[%s1 + $0x2ed0] sm:$0xff]
  %v1538 = vld [vmem:[%s1 + $0x2ed8] sm:$0xff]
  %v1539 = vld [vmem:[%s1 + $0x2ee0] sm:$0xff]
  %v1540 = vld [vmem:[%s1 + $0x2ee8] sm:$0xff]
  %v1541 = vld [vmem:[%s1 + $0x2ef0] sm:$0xff]
  %v1542 = vld [vmem:[%s1 + $0x2ef8] sm:$0xff]
  %v1543 = vld [vmem:[%s1 + $0x2f00] sm:$0xff]
  %v1544 = vld [vmem:[%s1 + $0x2f08] sm:$0xff]
  %v1545 = vld [vmem:[%s1 + $0x2f10] sm:$0xff]
  %v1546 = vld [vmem:[%s1 + $0x2f18] sm:$0xff]
  %v1547 = vld [vmem:[%s1 + $0x2f20] sm:$0xff]
  %v1548 = vld [vmem:[%s1 + $0x2f28] sm:$0xff]
  %v1549 = vld [vmem:[%s1 + $0x2f30] sm:$0xff]
  %v1550 = vld [vmem:[%s1 + $0x2f38] sm:$0xff]
  %v1551 = vld [vmem:[%s1 + $0x2f40] sm:$0xff]
  %v1552 = vld [vmem:[%s1 + $0x2f48] sm:$0xff]
  %v1553 = vld [vmem:[%s1 + $0x2f50] sm:$0xff]
  %v1554 = vld [vmem:[%s1 + $0x2f58] sm:$0xff]
  %v1555 = vld [vmem:[%s1 + $0x2f60] sm:$0xff]
  %v1556 = vld [vmem:[%s1 + $0x2f68] sm:$0xff]
  %v1557 = vld [vmem:[%s1 + $0x2f70] sm:$0xff]
  %v1558 = vld [vmem:[%s1 + $0x2f78] sm:$0xff]
  %v1559 = vld [vmem:[%s1 + $0x2f80] sm:$0xff]
  %v1560 = vld [vmem:[%s1 + $0x2f88] sm:$0xff]
  %v1561 = vld [vmem:[%s1 + $0x2f90] sm:$0xff]
  %v1562 = vld [vmem:[%s1 + $0x2f98] sm:$0xff]
  %v1563 = vld [vmem:[%s1 + $0x2fa0] sm:$0xff]
  %v1564 = vld [vmem:[%s1 + $0x2fa8] sm:$0xff]
  %v1565 = vld [vmem:[%s1 + $0x2fb0] sm:$0xff]
  %v1566 = vld [vmem:[%s1 + $0x2fb8] sm:$0xff]
  %v1567 = vld [vmem:[%s1 + $0x2fc0] sm:$0xff]
  %v1568 = vld [vmem:[%s1 + $0x2fc8] sm:$0xff]
  %v1569 = vld [vmem:[%s1 + $0x2fd0] sm:$0xff]
  %v1570 = vld [vmem:[%s1 + $0x2fd8] sm:$0xff]
  %v1571 = vld [vmem:[%s1 + $0x2fe0] sm:$0xff]
  %v1572 = vld [vmem:[%s1 + $0x2fe8] sm:$0xff]
  %v1573 = vld [vmem:[%s1 + $0x2ff0] sm:$0xff]
  %v1574 = vld [vmem:[%s1 + $0x2ff8] sm:$0xff]
  %v1575 = vld [vmem:[%s1 + $0x3000] sm:$0xff]
  %v1576 = vld [vmem:[%s1 + $0x3008] sm:$0xff]
  %v1577 = vld [vmem:[%s1 + $0x3010] sm:$0xff]
  %v1578 = vld [vmem:[%s1 + $0x3018] sm:$0xff]
  %v1579 = vld [vmem:[%s1 + $0x3020] sm:$0xff]
  %v1580 = vld [vmem:[%s1 + $0x3028] sm:$0xff]
  %v1581 = vld [vmem:[%s1 + $0x3030] sm:$0xff]
  %v1582 = vld [vmem:[%s1 + $0x3038] sm:$0xff]
  %v1583 = vld [vmem:[%s1 + $0x3040] sm:$0xff]
  %v1584 = vld [vmem:[%s1 + $0x3048] sm:$0xff]
  %v1585 = vld [vmem:[%s1 + $0x3050] sm:$0xff]
  %v1586 = vld [vmem:[%s1 + $0x3058] sm:$0xff]
  %v1587 = vld [vmem:[%s1 + $0x3060] sm:$0xff]
  %v1588 = vld [vmem:[%s1 + $0x3068] sm:$0xff]
  %v1589 = vld [vmem:[%s1 + $0x3070] sm:$0xff]
  %v1590 = vld [vmem:[%s1 + $0x3078] sm:$0xff]
  %v1591 = vld [vmem:[%s1 + $0x3080] sm:$0xff]
  %v1592 = vld [vmem:[%s1 + $0x3088] sm:$0xff]
  %v1593 = vld [vmem:[%s1 + $0x3090] sm:$0xff]
  %v1594 = vld [vmem:[%s1 + $0x3098] sm:$0xff]
  %v1595 = vld [vmem:[%s1 + $0x30a0] sm:$0xff]
  %v1596 = vld [vmem:[%s1 + $0x30a8] sm:$0xff]
  %v1597 = vld [vmem:[%s1 + $0x30b0] sm:$0xff]
  %v1598 = vld [vmem:[%s1 + $0x30b8] sm:$0xff]
  %v1599 = vld [vmem:[%s1 + $0x30c0] sm:$0xff]
  %v1600 = vld [vmem:[%s1 + $0x30c8] sm:$0xff]
  %v1601 = vld [vmem:[%s1 + $0x30d0] sm:$0xff]
  %v1602 = vld [vmem:[%s1 + $0x30d8] sm:$0xff]
  %v1603 = vld [vmem:[%s1 + $0x30e0] sm:$0xff]
  %v1604 = vld [vmem:[%s1 + $0x30e8] sm:$0xff]
  %v1605 = vld [vmem:[%s1 + $0x30f0] sm:$0xff]
  %v1606 = vld [vmem:[%s1 + $0x30f8] sm:$0xff]
  %v1607 = vld [vmem:[%s1 + $0x3100] sm:$0xff]
  %v1608 = vld [vmem:[%s1 + $0x3108] sm:$0xff]
  %v1609 = vld [vmem:[%s1 + $0x3110] sm:$0xff]
  %v1610 = vld [vmem:[%s1 + $0x3118] sm:$0xff]
  %v1611 = vld [vmem:[%s1 + $0x3120] sm:$0xff]
  %v1612 = vld [vmem:[%s1 + $0x3128] sm:$0xff]
  %v1613 = vld [vmem:[%s1 + $0x3130] sm:$0xff]
  %v1614 = vld [vmem:[%s1 + $0x3138] sm:$0xff]
  %v1615 = vld [vmem:[%s1 + $0x3140] sm:$0xff]
  %v1616 = vld [vmem:[%s1 + $0x3148] sm:$0xff]
  %v1617 = vld [vmem:[%s1 + $0x3150] sm:$0xff]
  %v1618 = vld [vmem:[%s1 + $0x3158] sm:$0xff]
  %v1619 = vld [vmem:[%s1 + $0x3160] sm:$0xff]
  %v1620 = vld [vmem:[%s1 + $0x3168] sm:$0xff]
  %v1621 = vld [vmem:[%s1 + $0x3170] sm:$0xff]
  %v1622 = vld [vmem:[%s1 + $0x3178] sm:$0xff]
  %v1623 = vld [vmem:[%s1 + $0x3180] sm:$0xff]
  %v1624 = vld [vmem:[%s1 + $0x3188] sm:$0xff]
  %v1625 = vld [vmem:[%s1 + $0x3190] sm:$0xff]
  %v1626 = vld [vmem:[%s1 + $0x3198] sm:$0xff]
  %v1627 = vld [vmem:[%s1 + $0x31a0] sm:$0xff]
  %v1628 = vld [vmem:[%s1 + $0x31a8] sm:$0xff]
  %v1629 = vld [vmem:[%s1 + $0x31b0] sm:$0xff]
  %v1630 = vld [vmem:[%s1 + $0x31b8] sm:$0xff]
  %v1631 = vld [vmem:[%s1 + $0x31c0] sm:$0xff]
  %v1632 = vld [vmem:[%s1 + $0x31c8] sm:$0xff]
  %v1633 = vld [vmem:[%s1 + $0x31d0] sm:$0xff]
  %v1634 = vld [vmem:[%s1 + $0x31d8] sm:$0xff]
  %v1635 = vld [vmem:[%s1 + $0x31e0] sm:$0xff]
  %v1636 = vld [vmem:[%s1 + $0x31e8] sm:$0xff]
  %v1637 = vld [vmem:[%s1 + $0x31f0] sm:$0xff]
  %v1638 = vld [vmem:[%s1 + $0x31f8] sm:$0xff]
  %v1639 = vld [vmem:[%s2] sm:$0xff]
  %v1641 = vperm.slane %v1639, 0
  %v1642 = vperm.slane %v1639, 1
  %v1643 = vperm.slane %v1639, 2
  %v1644 = vperm.slane %v1639, 3
  %v1645 = vperm.slane %v1639, 4
  %v1646 = vperm.slane %v1639, 5
  %v1647 = vperm.slane %v1639, 6
  %v1648 = vperm.slane %v1639, 7
  %v1670 = vunpack.c.l.b16 %v26
  %v1671 = vunpack.c.h.b16 %v26
  %v1672 = vunpack.c.l.b16 %v27
  %v1673 = vunpack.c.h.b16 %v27
  %v1674 = vunpack.c.l.b16 %v28
  %v1675 = vunpack.c.h.b16 %v28
  %v1676 = vunpack.c.l.b16 %v29
  %v1677 = vunpack.c.h.b16 %v29
  %v1678 = vunpack.c.l.b16 %v30
  %v1679 = vunpack.c.h.b16 %v30
  %v1680 = vunpack.c.l.b16 %v31
  %v1681 = vunpack.c.h.b16 %v31
  %v1682 = vunpack.c.l.b16 %v32
  %v1683 = vunpack.c.h.b16 %v32
  %v1684 = vunpack.c.l.b16 %v33
  %v1685 = vunpack.c.h.b16 %v33
  %v1686 = vunpack.c.l.b16 %v34
  %v1687 = vunpack.c.h.b16 %v34
  %v1688 = vunpack.c.l.b16 %v35
  %v1689 = vunpack.c.h.b16 %v35
  %v1690 = vunpack.c.l.b16 %v36
  %v1691 = vunpack.c.h.b16 %v36
  %v1692 = vunpack.c.l.b16 %v37
  %v1693 = vunpack.c.h.b16 %v37
  %v1694 = vunpack.c.l.b16 %v38
  %v1695 = vpack.c.b16 %v1670, %v1670
  %v1696 = vpack.c.b16 %v1671, %v1671
  %v1697 = vpack.c.b16 %v1672, %v1672
  %v1698 = vpack.c.b16 %v1673, %v1673
  %v1699 = vpack.c.b16 %v1674, %v1674
  %v1700 = vpack.c.b16 %v1675, %v1675
  %v1701 = vpack.c.b16 %v1676, %v1676
  %v1702 = vpack.c.b16 %v1677, %v1677
  %v1703 = vpack.c.b16 %v1678, %v1678
  %v1704 = vpack.c.b16 %v1679, %v1679
  %v1705 = vpack.c.b16 %v1680, %v1680
  %v1706 = vpack.c.b16 %v1681, %v1681
  %v1707 = vpack.c.b16 %v1682, %v1682
  %v1708 = vpack.c.b16 %v1683, %v1683
  %v1709 = vpack.c.b16 %v1684, %v1684
  %v1710 = vpack.c.b16 %v1685, %v1685
  %v1711 = vpack.c.b16 %v1686, %v1686
  %v1712 = vpack.c.b16 %v1687, %v1687
  %v1713 = vpack.c.b16 %v1688, %v1688
  %v1714 = vpack.c.b16 %v1689, %v1689
  %v1715 = vpack.c.b16 %v1690, %v1690
  %v1716 = vpack.c.b16 %v1691, %v1691
  %v1717 = vpack.c.b16 %v1692, %v1692
  %v1718 = vpack.c.b16 %v1693, %v1693
  %v1719 = vpack.c.b16 %v1694, %v1694
  %v3345 = vunpack.c.l.b16 %v39
  %v3346 = vunpack.c.h.b16 %v39
  %v3347 = vunpack.c.l.b16 %v40
  %v3348 = vunpack.c.h.b16 %v40
  %v3349 = vunpack.c.l.b16 %v41
  %v3350 = vunpack.c.h.b16 %v41
  %v3351 = vunpack.c.l.b16 %v42
  %v3352 = vunpack.c.h.b16 %v42
  %v3353 = vunpack.c.l.b16 %v43
  %v3354 = vunpack.c.h.b16 %v43
  %v3355 = vunpack.c.l.b16 %v44
  %v3356 = vunpack.c.h.b16 %v44
  %v3357 = vunpack.c.l.b16 %v45
  %v3358 = vunpack.c.h.b16 %v45
  %v3359 = vunpack.c.l.b16 %v46
  %v3360 = vunpack.c.h.b16 %v46
  %v3361 = vunpack.c.l.b16 %v47
  %v3362 = vunpack.c.h.b16 %v47
  %v3363 = vunpack.c.l.b16 %v48
  %v3364 = vunpack.c.h.b16 %v48
  %v3365 = vunpack.c.l.b16 %v49
  %v3366 = vunpack.c.h.b16 %v49
  %v3367 = vunpack.c.l.b16 %v50
  %v3368 = vunpack.c.h.b16 %v50
  %v3369 = vunpack.c.l.b16 %v51
  %v3370 = vunpack.c.h.b16 %v51
  %v3371 = vunpack.c.l.b16 %v52
  %v3372 = vunpack.c.h.b16 %v52
  %v3373 = vunpack.c.l.b16 %v53
  %v3374 = vunpack.c.h.b16 %v53
  %v3375 = vunpack.c.l.b16 %v54
  %v3376 = vunpack.c.h.b16 %v54
  %v3377 = vunpack.c.l.b16 %v55
  %v3378 = vunpack.c.h.b16 %v55
  %v3379 = vunpack.c.l.b16 %v56
  %v3380 = vunpack.c.h.b16 %v56
  %v3381 = vunpack.c.l.b16 %v57
  %v3382 = vunpack.c.h.b16 %v57
  %v3383 = vunpack.c.l.b16 %v58
  %v3384 = vunpack.c.h.b16 %v58
  %v3385 = vunpack.c.l.b16 %v59
  %v3386 = vunpack.c.h.b16 %v59
  %v3387 = vunpack.c.l.b16 %v60
  %v3388 = vunpack.c.h.b16 %v60
  %v3389 = vunpack.c.l.b16 %v61
  %v3390 = vunpack.c.h.b16 %v61
  %v3391 = vunpack.c.l.b16 %v62
  %v3392 = vunpack.c.h.b16 %v62
  %v3393 = vunpack.c.l.b16 %v63
  %v3394 = vunpack.c.h.b16 %v63
  %v3395 = vunpack.c.l.b16 %v64
  %v3396 = vunpack.c.h.b16 %v64
  %v3397 = vunpack.c.l.b16 %v65
  %v3398 = vunpack.c.h.b16 %v65
  %v3399 = vunpack.c.l.b16 %v66
  %v3400 = vunpack.c.h.b16 %v66
  %v3401 = vunpack.c.l.b16 %v67
  %v3402 = vunpack.c.h.b16 %v67
  %v3403 = vunpack.c.l.b16 %v68
  %v3404 = vunpack.c.h.b16 %v68
  %v3405 = vunpack.c.l.b16 %v69
  %v3406 = vunpack.c.h.b16 %v69
  %v3407 = vunpack.c.l.b16 %v70
  %v3408 = vunpack.c.h.b16 %v70
  %v3409 = vunpack.c.l.b16 %v71
  %v3410 = vunpack.c.h.b16 %v71
  %v3411 = vunpack.c.l.b16 %v72
  %v3412 = vunpack.c.h.b16 %v72
  %v3413 = vunpack.c.l.b16 %v73
  %v3414 = vunpack.c.h.b16 %v73
  %v3415 = vunpack.c.l.b16 %v74
  %v3416 = vunpack.c.h.b16 %v74
  %v3417 = vunpack.c.l.b16 %v75
  %v3418 = vunpack.c.h.b16 %v75
  %v3419 = vunpack.c.l.b16 %v76
  %v3420 = vunpack.c.h.b16 %v76
  %v3421 = vunpack.c.l.b16 %v77
  %v3422 = vunpack.c.h.b16 %v77
  %v3423 = vunpack.c.l.b16 %v78
  %v3424 = vunpack.c.h.b16 %v78
  %v3425 = vunpack.c.l.b16 %v79
  %v3426 = vunpack.c.h.b16 %v79
  %v3427 = vunpack.c.l.b16 %v80
  %v3428 = vunpack.c.h.b16 %v80
  %v3429 = vunpack.c.l.b16 %v81
  %v3430 = vunpack.c.h.b16 %v81
  %v3431 = vunpack.c.l.b16 %v82
  %v3432 = vunpack.c.h.b16 %v82
  %v3433 = vunpack.c.l.b16 %v83
  %v3434 = vunpack.c.h.b16 %v83
  %v3435 = vunpack.c.l.b16 %v84
  %v3436 = vunpack.c.h.b16 %v84
  %v3437 = vunpack.c.l.b16 %v85
  %v3438 = vunpack.c.h.b16 %v85
  %v3439 = vunpack.c.l.b16 %v86
  %v3440 = vunpack.c.h.b16 %v86
  %v3441 = vunpack.c.l.b16 %v87
  %v3442 = vunpack.c.h.b16 %v87
  %v3443 = vunpack.c.l.b16 %v88
  %v3444 = vunpack.c.h.b16 %v88
  %v3445 = vunpack.c.l.b16 %v89
  %v3446 = vunpack.c.h.b16 %v89
  %v3447 = vunpack.c.l.b16 %v90
  %v3448 = vunpack.c.h.b16 %v90
  %v3449 = vunpack.c.l.b16 %v91
  %v3450 = vunpack.c.h.b16 %v91
  %v3451 = vunpack.c.l.b16 %v92
  %v3452 = vunpack.c.h.b16 %v92
  %v3453 = vunpack.c.l.b16 %v93
  %v3454 = vunpack.c.h.b16 %v93
  %v3455 = vunpack.c.l.b16 %v94
  %v3456 = vunpack.c.h.b16 %v94
  %v3457 = vunpack.c.l.b16 %v95
  %v3458 = vunpack.c.h.b16 %v95
  %v3459 = vunpack.c.l.b16 %v96
  %v3460 = vunpack.c.h.b16 %v96
  %v3461 = vunpack.c.l.b16 %v97
  %v3462 = vunpack.c.h.b16 %v97
  %v3463 = vunpack.c.l.b16 %v98
  %v3464 = vunpack.c.h.b16 %v98
  %v3465 = vunpack.c.l.b16 %v99
  %v3466 = vunpack.c.h.b16 %v99
  %v3467 = vunpack.c.l.b16 %v100
  %v3468 = vunpack.c.h.b16 %v100
  %v3469 = vunpack.c.l.b16 %v101
  %v3470 = vunpack.c.h.b16 %v101
  %v3471 = vunpack.c.l.b16 %v102
  %v3472 = vunpack.c.h.b16 %v102
  %v3473 = vunpack.c.l.b16 %v103
  %v3474 = vunpack.c.h.b16 %v103
  %v3475 = vunpack.c.l.b16 %v104
  %v3476 = vunpack.c.h.b16 %v104
  %v3477 = vunpack.c.l.b16 %v105
  %v3478 = vunpack.c.h.b16 %v105
  %v3479 = vunpack.c.l.b16 %v106
  %v3480 = vunpack.c.h.b16 %v106
  %v3481 = vunpack.c.l.b16 %v107
  %v3482 = vunpack.c.h.b16 %v107
  %v3483 = vunpack.c.l.b16 %v108
  %v3484 = vunpack.c.h.b16 %v108
  %v3485 = vunpack.c.l.b16 %v109
  %v3486 = vunpack.c.h.b16 %v109
  %v3487 = vunpack.c.l.b16 %v110
  %v3488 = vunpack.c.h.b16 %v110
  %v3489 = vunpack.c.l.b16 %v111
  %v3490 = vunpack.c.h.b16 %v111
  %v3491 = vunpack.c.l.b16 %v112
  %v3492 = vunpack.c.h.b16 %v112
  %v3493 = vunpack.c.l.b16 %v113
  %v3494 = vunpack.c.h.b16 %v113
  %v3495 = vunpack.c.l.b16 %v114
  %v3496 = vunpack.c.h.b16 %v114
  %v3497 = vunpack.c.l.b16 %v115
  %v3498 = vunpack.c.h.b16 %v115
  %v3499 = vunpack.c.l.b16 %v116
  %v3500 = vunpack.c.h.b16 %v116
  %v3501 = vunpack.c.l.b16 %v117
  %v3502 = vunpack.c.h.b16 %v117
  %v3503 = vunpack.c.l.b16 %v118
  %v3504 = vunpack.c.h.b16 %v118
  %v3505 = vunpack.c.l.b16 %v119
  %v3506 = vunpack.c.h.b16 %v119
  %v3507 = vunpack.c.l.b16 %v120
  %v3508 = vunpack.c.h.b16 %v120
  %v3509 = vunpack.c.l.b16 %v121
  %v3510 = vunpack.c.h.b16 %v121
  %v3511 = vunpack.c.l.b16 %v122
  %v3512 = vunpack.c.h.b16 %v122
  %v3513 = vunpack.c.l.b16 %v123
  %v3514 = vunpack.c.h.b16 %v123
  %v3515 = vunpack.c.l.b16 %v124
  %v3516 = vunpack.c.h.b16 %v124
  %v3517 = vunpack.c.l.b16 %v125
  %v3518 = vunpack.c.h.b16 %v125
  %v3519 = vunpack.c.l.b16 %v126
  %v3520 = vunpack.c.h.b16 %v126
  %v3521 = vunpack.c.l.b16 %v127
  %v3522 = vunpack.c.h.b16 %v127
  %v3523 = vunpack.c.l.b16 %v128
  %v3524 = vunpack.c.h.b16 %v128
  %v3525 = vunpack.c.l.b16 %v129
  %v3526 = vunpack.c.h.b16 %v129
  %v3527 = vunpack.c.l.b16 %v130
  %v3528 = vunpack.c.h.b16 %v130
  %v3529 = vunpack.c.l.b16 %v131
  %v3530 = vunpack.c.h.b16 %v131
  %v3531 = vunpack.c.l.b16 %v132
  %v3532 = vunpack.c.h.b16 %v132
  %v3533 = vunpack.c.l.b16 %v133
  %v3534 = vunpack.c.h.b16 %v133
  %v3535 = vunpack.c.l.b16 %v134
  %v3536 = vunpack.c.h.b16 %v134
  %v3537 = vunpack.c.l.b16 %v135
  %v3538 = vunpack.c.h.b16 %v135
  %v3539 = vunpack.c.l.b16 %v136
  %v3540 = vunpack.c.h.b16 %v136
  %v3541 = vunpack.c.l.b16 %v137
  %v3542 = vunpack.c.h.b16 %v137
  %v3543 = vunpack.c.l.b16 %v138
  %v3544 = vunpack.c.h.b16 %v138
  %v3545 = vunpack.c.l.b16 %v139
  %v3546 = vunpack.c.h.b16 %v139
  %v3547 = vunpack.c.l.b16 %v140
  %v3548 = vunpack.c.h.b16 %v140
  %v3549 = vunpack.c.l.b16 %v141
  %v3550 = vunpack.c.h.b16 %v141
  %v3551 = vunpack.c.l.b16 %v142
  %v3552 = vunpack.c.h.b16 %v142
  %v3553 = vunpack.c.l.b16 %v143
  %v3554 = vunpack.c.h.b16 %v143
  %v3555 = vunpack.c.l.b16 %v144
  %v3556 = vunpack.c.h.b16 %v144
  %v3557 = vunpack.c.l.b16 %v145
  %v3558 = vunpack.c.h.b16 %v145
  %v3559 = vunpack.c.l.b16 %v146
  %v3560 = vunpack.c.h.b16 %v146
  %v3561 = vunpack.c.l.b16 %v147
  %v3562 = vunpack.c.h.b16 %v147
  %v3563 = vunpack.c.l.b16 %v148
  %v3564 = vunpack.c.h.b16 %v148
  %v3565 = vunpack.c.l.b16 %v149
  %v3566 = vunpack.c.h.b16 %v149
  %v3567 = vunpack.c.l.b16 %v150
  %v3568 = vunpack.c.h.b16 %v150
  %v3569 = vunpack.c.l.b16 %v151
  %v3570 = vunpack.c.h.b16 %v151
  %v3571 = vunpack.c.l.b16 %v152
  %v3572 = vunpack.c.h.b16 %v152
  %v3573 = vunpack.c.l.b16 %v153
  %v3574 = vunpack.c.h.b16 %v153
  %v3575 = vunpack.c.l.b16 %v154
  %v3576 = vunpack.c.h.b16 %v154
  %v3577 = vunpack.c.l.b16 %v155
  %v3578 = vunpack.c.h.b16 %v155
  %v3579 = vunpack.c.l.b16 %v156
  %v3580 = vunpack.c.h.b16 %v156
  %v3581 = vunpack.c.l.b16 %v157
  %v3582 = vunpack.c.h.b16 %v157
  %v3583 = vunpack.c.l.b16 %v158
  %v3584 = vunpack.c.h.b16 %v158
  %v3585 = vunpack.c.l.b16 %v159
  %v3586 = vunpack.c.h.b16 %v159
  %v3587 = vunpack.c.l.b16 %v160
  %v3588 = vunpack.c.h.b16 %v160
  %v3589 = vunpack.c.l.b16 %v161
  %v3590 = vunpack.c.h.b16 %v161
  %v3591 = vunpack.c.l.b16 %v162
  %v3592 = vunpack.c.h.b16 %v162
  %v3593 = vunpack.c.l.b16 %v163
  %v3594 = vunpack.c.h.b16 %v163
  %v3595 = vunpack.c.l.b16 %v164
  %v3596 = vunpack.c.h.b16 %v164
  %v3597 = vunpack.c.l.b16 %v165
  %v3598 = vunpack.c.h.b16 %v165
  %v3599 = vunpack.c.l.b16 %v166
  %v3600 = vunpack.c.h.b16 %v166
  %v3601 = vunpack.c.l.b16 %v167
  %v3602 = vunpack.c.h.b16 %v167
  %v3603 = vunpack.c.l.b16 %v168
  %v3604 = vunpack.c.h.b16 %v168
  %v3605 = vunpack.c.l.b16 %v169
  %v3606 = vunpack.c.h.b16 %v169
  %v3607 = vunpack.c.l.b16 %v170
  %v3608 = vunpack.c.h.b16 %v170
  %v3609 = vunpack.c.l.b16 %v171
  %v3610 = vunpack.c.h.b16 %v171
  %v3611 = vunpack.c.l.b16 %v172
  %v3612 = vunpack.c.h.b16 %v172
  %v3613 = vunpack.c.l.b16 %v173
  %v3614 = vunpack.c.h.b16 %v173
  %v3615 = vunpack.c.l.b16 %v174
  %v3616 = vunpack.c.h.b16 %v174
  %v3617 = vunpack.c.l.b16 %v175
  %v3618 = vunpack.c.h.b16 %v175
  %v3619 = vunpack.c.l.b16 %v176
  %v3620 = vunpack.c.h.b16 %v176
  %v3621 = vunpack.c.l.b16 %v177
  %v3622 = vunpack.c.h.b16 %v177
  %v3623 = vunpack.c.l.b16 %v178
  %v3624 = vunpack.c.h.b16 %v178
  %v3625 = vunpack.c.l.b16 %v179
  %v3626 = vunpack.c.h.b16 %v179
  %v3627 = vunpack.c.l.b16 %v180
  %v3628 = vunpack.c.h.b16 %v180
  %v3629 = vunpack.c.l.b16 %v181
  %v3630 = vunpack.c.h.b16 %v181
  %v3631 = vunpack.c.l.b16 %v182
  %v3632 = vunpack.c.h.b16 %v182
  %v3633 = vunpack.c.l.b16 %v183
  %v3634 = vunpack.c.h.b16 %v183
  %v3635 = vunpack.c.l.b16 %v184
  %v3636 = vunpack.c.h.b16 %v184
  %v3637 = vunpack.c.l.b16 %v185
  %v3638 = vunpack.c.h.b16 %v185
  %v3639 = vunpack.c.l.b16 %v186
  %v3640 = vunpack.c.h.b16 %v186
  %v3641 = vunpack.c.l.b16 %v187
  %v3642 = vunpack.c.h.b16 %v187
  %v3643 = vunpack.c.l.b16 %v188
  %v3644 = vunpack.c.h.b16 %v188
  %v3645 = vunpack.c.l.b16 %v189
  %v3646 = vunpack.c.h.b16 %v189
  %v3647 = vunpack.c.l.b16 %v190
  %v3648 = vunpack.c.h.b16 %v190
  %v3649 = vunpack.c.l.b16 %v191
  %v3650 = vunpack.c.h.b16 %v191
  %v3651 = vunpack.c.l.b16 %v192
  %v3652 = vunpack.c.h.b16 %v192
  %v3653 = vunpack.c.l.b16 %v193
  %v3654 = vunpack.c.h.b16 %v193
  %v3655 = vunpack.c.l.b16 %v194
  %v3656 = vunpack.c.h.b16 %v194
  %v3657 = vunpack.c.l.b16 %v195
  %v3658 = vunpack.c.h.b16 %v195
  %v3659 = vunpack.c.l.b16 %v196
  %v3660 = vunpack.c.h.b16 %v196
  %v3661 = vunpack.c.l.b16 %v197
  %v3662 = vunpack.c.h.b16 %v197
  %v3663 = vunpack.c.l.b16 %v198
  %v3664 = vunpack.c.h.b16 %v198
  %v3665 = vunpack.c.l.b16 %v199
  %v3666 = vunpack.c.h.b16 %v199
  %v3667 = vunpack.c.l.b16 %v200
  %v3668 = vunpack.c.h.b16 %v200
  %v3669 = vunpack.c.l.b16 %v201
  %v3670 = vunpack.c.h.b16 %v201
  %v3671 = vunpack.c.l.b16 %v202
  %v3672 = vunpack.c.h.b16 %v202
  %v3673 = vunpack.c.l.b16 %v203
  %v3674 = vunpack.c.h.b16 %v203
  %v3675 = vunpack.c.l.b16 %v204
  %v3676 = vunpack.c.h.b16 %v204
  %v3677 = vunpack.c.l.b16 %v205
  %v3678 = vunpack.c.h.b16 %v205
  %v3679 = vunpack.c.l.b16 %v206
  %v3680 = vunpack.c.h.b16 %v206
  %v3681 = vunpack.c.l.b16 %v207
  %v3682 = vunpack.c.h.b16 %v207
  %v3683 = vunpack.c.l.b16 %v208
  %v3684 = vunpack.c.h.b16 %v208
  %v3685 = vunpack.c.l.b16 %v209
  %v3686 = vunpack.c.h.b16 %v209
  %v3687 = vunpack.c.l.b16 %v210
  %v3688 = vunpack.c.h.b16 %v210
  %v3689 = vunpack.c.l.b16 %v211
  %v3690 = vunpack.c.h.b16 %v211
  %v3691 = vunpack.c.l.b16 %v212
  %v3692 = vunpack.c.h.b16 %v212
  %v3693 = vunpack.c.l.b16 %v213
  %v3694 = vunpack.c.h.b16 %v213
  %v3695 = vunpack.c.l.b16 %v214
  %v3696 = vunpack.c.h.b16 %v214
  %v3697 = vunpack.c.l.b16 %v215
  %v3698 = vunpack.c.h.b16 %v215
  %v3699 = vunpack.c.l.b16 %v216
  %v3700 = vunpack.c.h.b16 %v216
  %v3701 = vunpack.c.l.b16 %v217
  %v3702 = vunpack.c.h.b16 %v217
  %v3703 = vunpack.c.l.b16 %v218
  %v3704 = vunpack.c.h.b16 %v218
  %v3705 = vunpack.c.l.b16 %v219
  %v3706 = vunpack.c.h.b16 %v219
  %v3707 = vunpack.c.l.b16 %v220
  %v3708 = vunpack.c.h.b16 %v220
  %v3709 = vunpack.c.l.b16 %v221
  %v3710 = vunpack.c.h.b16 %v221
  %v3711 = vunpack.c.l.b16 %v222
  %v3712 = vunpack.c.h.b16 %v222
  %v3713 = vunpack.c.l.b16 %v223
  %v3714 = vunpack.c.h.b16 %v223
  %v3715 = vunpack.c.l.b16 %v224
  %v3716 = vunpack.c.h.b16 %v224
  %v3717 = vunpack.c.l.b16 %v225
  %v3718 = vunpack.c.h.b16 %v225
  %v3719 = vunpack.c.l.b16 %v226
  %v3720 = vunpack.c.h.b16 %v226
  %v3721 = vunpack.c.l.b16 %v227
  %v3722 = vunpack.c.h.b16 %v227
  %v3723 = vunpack.c.l.b16 %v228
  %v3724 = vunpack.c.h.b16 %v228
  %v3725 = vunpack.c.l.b16 %v229
  %v3726 = vunpack.c.h.b16 %v229
  %v3727 = vunpack.c.l.b16 %v230
  %v3728 = vunpack.c.h.b16 %v230
  %v3729 = vunpack.c.l.b16 %v231
  %v3730 = vunpack.c.h.b16 %v231
  %v3731 = vunpack.c.l.b16 %v232
  %v3732 = vunpack.c.h.b16 %v232
  %v3733 = vunpack.c.l.b16 %v233
  %v3734 = vunpack.c.h.b16 %v233
  %v3735 = vunpack.c.l.b16 %v234
  %v3736 = vunpack.c.h.b16 %v234
  %v3737 = vunpack.c.l.b16 %v235
  %v3738 = vunpack.c.h.b16 %v235
  %v3739 = vunpack.c.l.b16 %v236
  %v3740 = vunpack.c.h.b16 %v236
  %v3741 = vunpack.c.l.b16 %v237
  %v3742 = vunpack.c.h.b16 %v237
  %v3743 = vunpack.c.l.b16 %v238
  %v3744 = vunpack.c.h.b16 %v238
  %v3745 = vunpack.c.l.b16 %v239
  %v3746 = vunpack.c.h.b16 %v239
  %v3747 = vunpack.c.l.b16 %v240
  %v3748 = vunpack.c.h.b16 %v240
  %v3749 = vunpack.c.l.b16 %v241
  %v3750 = vunpack.c.h.b16 %v241
  %v3751 = vunpack.c.l.b16 %v242
  %v3752 = vunpack.c.h.b16 %v242
  %v3753 = vunpack.c.l.b16 %v243
  %v3754 = vunpack.c.h.b16 %v243
  %v3755 = vunpack.c.l.b16 %v244
  %v3756 = vunpack.c.h.b16 %v244
  %v3757 = vunpack.c.l.b16 %v245
  %v3758 = vunpack.c.h.b16 %v245
  %v3759 = vunpack.c.l.b16 %v246
  %v3760 = vunpack.c.h.b16 %v246
  %v3761 = vunpack.c.l.b16 %v247
  %v3762 = vunpack.c.h.b16 %v247
  %v3763 = vunpack.c.l.b16 %v248
  %v3764 = vunpack.c.h.b16 %v248
  %v3765 = vunpack.c.l.b16 %v249
  %v3766 = vunpack.c.h.b16 %v249
  %v3767 = vunpack.c.l.b16 %v250
  %v3768 = vunpack.c.h.b16 %v250
  %v3769 = vunpack.c.l.b16 %v251
  %v3770 = vunpack.c.h.b16 %v251
  %v3771 = vunpack.c.l.b16 %v252
  %v3772 = vunpack.c.h.b16 %v252
  %v3773 = vunpack.c.l.b16 %v253
  %v3774 = vunpack.c.h.b16 %v253
  %v3775 = vunpack.c.l.b16 %v254
  %v3776 = vunpack.c.h.b16 %v254
  %v3777 = vunpack.c.l.b16 %v255
  %v3778 = vunpack.c.h.b16 %v255
  %v3779 = vunpack.c.l.b16 %v256
  %v3780 = vunpack.c.h.b16 %v256
  %v3781 = vunpack.c.l.b16 %v257
  %v3782 = vunpack.c.h.b16 %v257
  %v3783 = vunpack.c.l.b16 %v258
  %v3784 = vunpack.c.h.b16 %v258
  %v3785 = vunpack.c.l.b16 %v259
  %v3786 = vunpack.c.h.b16 %v259
  %v3787 = vunpack.c.l.b16 %v260
  %v3788 = vunpack.c.h.b16 %v260
  %v3789 = vunpack.c.l.b16 %v261
  %v3790 = vunpack.c.h.b16 %v261
  %v3791 = vunpack.c.l.b16 %v262
  %v3792 = vunpack.c.h.b16 %v262
  %v3793 = vunpack.c.l.b16 %v263
  %v3794 = vunpack.c.h.b16 %v263
  %v3795 = vunpack.c.l.b16 %v264
  %v3796 = vunpack.c.h.b16 %v264
  %v3797 = vunpack.c.l.b16 %v265
  %v3798 = vunpack.c.h.b16 %v265
  %v3799 = vunpack.c.l.b16 %v266
  %v3800 = vunpack.c.h.b16 %v266
  %v3801 = vunpack.c.l.b16 %v267
  %v3802 = vunpack.c.h.b16 %v267
  %v3803 = vunpack.c.l.b16 %v268
  %v3804 = vunpack.c.h.b16 %v268
  %v3805 = vunpack.c.l.b16 %v269
  %v3806 = vunpack.c.h.b16 %v269
  %v3807 = vunpack.c.l.b16 %v270
  %v3808 = vunpack.c.h.b16 %v270
  %v3809 = vunpack.c.l.b16 %v271
  %v3810 = vunpack.c.h.b16 %v271
  %v3811 = vunpack.c.l.b16 %v272
  %v3812 = vunpack.c.h.b16 %v272
  %v3813 = vunpack.c.l.b16 %v273
  %v3814 = vunpack.c.h.b16 %v273
  %v3815 = vunpack.c.l.b16 %v274
  %v3816 = vunpack.c.h.b16 %v274
  %v3817 = vunpack.c.l.b16 %v275
  %v3818 = vunpack.c.h.b16 %v275
  %v3819 = vunpack.c.l.b16 %v276
  %v3820 = vunpack.c.h.b16 %v276
  %v3821 = vunpack.c.l.b16 %v277
  %v3822 = vunpack.c.h.b16 %v277
  %v3823 = vunpack.c.l.b16 %v278
  %v3824 = vunpack.c.h.b16 %v278
  %v3825 = vunpack.c.l.b16 %v279
  %v3826 = vunpack.c.h.b16 %v279
  %v3827 = vunpack.c.l.b16 %v280
  %v3828 = vunpack.c.h.b16 %v280
  %v3829 = vunpack.c.l.b16 %v281
  %v3830 = vunpack.c.h.b16 %v281
  %v3831 = vunpack.c.l.b16 %v282
  %v3832 = vunpack.c.h.b16 %v282
  %v3833 = vunpack.c.l.b16 %v283
  %v3834 = vunpack.c.h.b16 %v283
  %v3835 = vunpack.c.l.b16 %v284
  %v3836 = vunpack.c.h.b16 %v284
  %v3837 = vunpack.c.l.b16 %v285
  %v3838 = vunpack.c.h.b16 %v285
  %v3839 = vunpack.c.l.b16 %v286
  %v3840 = vunpack.c.h.b16 %v286
  %v3841 = vunpack.c.l.b16 %v287
  %v3842 = vunpack.c.h.b16 %v287
  %v3843 = vunpack.c.l.b16 %v288
  %v3844 = vunpack.c.h.b16 %v288
  %v3845 = vunpack.c.l.b16 %v289
  %v3846 = vunpack.c.h.b16 %v289
  %v3847 = vunpack.c.l.b16 %v290
  %v3848 = vunpack.c.h.b16 %v290
  %v3849 = vunpack.c.l.b16 %v291
  %v3850 = vunpack.c.h.b16 %v291
  %v3851 = vunpack.c.l.b16 %v292
  %v3852 = vunpack.c.h.b16 %v292
  %v3853 = vunpack.c.l.b16 %v293
  %v3854 = vunpack.c.h.b16 %v293
  %v3855 = vunpack.c.l.b16 %v294
  %v3856 = vunpack.c.h.b16 %v294
  %v3857 = vunpack.c.l.b16 %v295
  %v3858 = vunpack.c.h.b16 %v295
  %v3859 = vunpack.c.l.b16 %v296
  %v3860 = vunpack.c.h.b16 %v296
  %v3861 = vunpack.c.l.b16 %v297
  %v3862 = vunpack.c.h.b16 %v297
  %v3863 = vunpack.c.l.b16 %v298
  %v3864 = vunpack.c.h.b16 %v298
  %v3865 = vunpack.c.l.b16 %v299
  %v3866 = vunpack.c.h.b16 %v299
  %v3867 = vunpack.c.l.b16 %v300
  %v3868 = vunpack.c.h.b16 %v300
  %v3869 = vunpack.c.l.b16 %v301
  %v3870 = vunpack.c.h.b16 %v301
  %v3871 = vunpack.c.l.b16 %v302
  %v3872 = vunpack.c.h.b16 %v302
  %v3873 = vunpack.c.l.b16 %v303
  %v3874 = vunpack.c.h.b16 %v303
  %v3875 = vunpack.c.l.b16 %v304
  %v3876 = vunpack.c.h.b16 %v304
  %v3877 = vunpack.c.l.b16 %v305
  %v3878 = vunpack.c.h.b16 %v305
  %v3879 = vunpack.c.l.b16 %v306
  %v3880 = vunpack.c.h.b16 %v306
  %v3881 = vunpack.c.l.b16 %v307
  %v3882 = vunpack.c.h.b16 %v307
  %v3883 = vunpack.c.l.b16 %v308
  %v3884 = vunpack.c.h.b16 %v308
  %v3885 = vunpack.c.l.b16 %v309
  %v3886 = vunpack.c.h.b16 %v309
  %v3887 = vunpack.c.l.b16 %v310
  %v3888 = vunpack.c.h.b16 %v310
  %v3889 = vunpack.c.l.b16 %v311
  %v3890 = vunpack.c.h.b16 %v311
  %v3891 = vunpack.c.l.b16 %v312
  %v3892 = vunpack.c.h.b16 %v312
  %v3893 = vunpack.c.l.b16 %v313
  %v3894 = vunpack.c.h.b16 %v313
  %v3895 = vunpack.c.l.b16 %v314
  %v3896 = vunpack.c.h.b16 %v314
  %v3897 = vunpack.c.l.b16 %v315
  %v3898 = vunpack.c.h.b16 %v315
  %v3899 = vunpack.c.l.b16 %v316
  %v3900 = vunpack.c.h.b16 %v316
  %v3901 = vunpack.c.l.b16 %v317
  %v3902 = vunpack.c.h.b16 %v317
  %v3903 = vunpack.c.l.b16 %v318
  %v3904 = vunpack.c.h.b16 %v318
  %v3905 = vunpack.c.l.b16 %v319
  %v3906 = vunpack.c.h.b16 %v319
  %v3907 = vunpack.c.l.b16 %v320
  %v3908 = vunpack.c.h.b16 %v320
  %v3909 = vunpack.c.l.b16 %v321
  %v3910 = vunpack.c.h.b16 %v321
  %v3911 = vunpack.c.l.b16 %v322
  %v3912 = vunpack.c.h.b16 %v322
  %v3913 = vunpack.c.l.b16 %v323
  %v3914 = vunpack.c.h.b16 %v323
  %v3915 = vunpack.c.l.b16 %v324
  %v3916 = vunpack.c.h.b16 %v324
  %v3917 = vunpack.c.l.b16 %v325
  %v3918 = vunpack.c.h.b16 %v325
  %v3919 = vunpack.c.l.b16 %v326
  %v3920 = vunpack.c.h.b16 %v326
  %v3921 = vunpack.c.l.b16 %v327
  %v3922 = vunpack.c.h.b16 %v327
  %v3923 = vunpack.c.l.b16 %v328
  %v3924 = vunpack.c.h.b16 %v328
  %v3925 = vunpack.c.l.b16 %v329
  %v3926 = vunpack.c.h.b16 %v329
  %v3927 = vunpack.c.l.b16 %v330
  %v3928 = vunpack.c.h.b16 %v330
  %v3929 = vunpack.c.l.b16 %v331
  %v3930 = vunpack.c.h.b16 %v331
  %v3931 = vunpack.c.l.b16 %v332
  %v3932 = vunpack.c.h.b16 %v332
  %v3933 = vunpack.c.l.b16 %v333
  %v3934 = vunpack.c.h.b16 %v333
  %v3935 = vunpack.c.l.b16 %v334
  %v3936 = vunpack.c.h.b16 %v334
  %v3937 = vunpack.c.l.b16 %v335
  %v3938 = vunpack.c.h.b16 %v335
  %v3939 = vunpack.c.l.b16 %v336
  %v3940 = vunpack.c.h.b16 %v336
  %v3941 = vunpack.c.l.b16 %v337
  %v3942 = vunpack.c.h.b16 %v337
  %v3943 = vunpack.c.l.b16 %v338
  %v3944 = vunpack.c.h.b16 %v338
  %v3945 = vunpack.c.l.b16 %v339
  %v3946 = vunpack.c.h.b16 %v339
  %v3947 = vunpack.c.l.b16 %v340
  %v3948 = vunpack.c.h.b16 %v340
  %v3949 = vunpack.c.l.b16 %v341
  %v3950 = vunpack.c.h.b16 %v341
  %v3951 = vunpack.c.l.b16 %v342
  %v3952 = vunpack.c.h.b16 %v342
  %v3953 = vunpack.c.l.b16 %v343
  %v3954 = vunpack.c.h.b16 %v343
  %v3955 = vunpack.c.l.b16 %v344
  %v3956 = vunpack.c.h.b16 %v344
  %v3957 = vunpack.c.l.b16 %v345
  %v3958 = vunpack.c.h.b16 %v345
  %v3959 = vunpack.c.l.b16 %v346
  %v3960 = vunpack.c.h.b16 %v346
  %v3961 = vunpack.c.l.b16 %v347
  %v3962 = vunpack.c.h.b16 %v347
  %v3963 = vunpack.c.l.b16 %v348
  %v3964 = vunpack.c.h.b16 %v348
  %v3965 = vunpack.c.l.b16 %v349
  %v3966 = vunpack.c.h.b16 %v349
  %v3967 = vunpack.c.l.b16 %v350
  %v3968 = vunpack.c.h.b16 %v350
  %v3969 = vunpack.c.l.b16 %v351
  %v3970 = vunpack.c.h.b16 %v351
  %v3971 = vunpack.c.l.b16 %v352
  %v3972 = vunpack.c.h.b16 %v352
  %v3973 = vunpack.c.l.b16 %v353
  %v3974 = vunpack.c.h.b16 %v353
  %v3975 = vunpack.c.l.b16 %v354
  %v3976 = vunpack.c.h.b16 %v354
  %v3977 = vunpack.c.l.b16 %v355
  %v3978 = vunpack.c.h.b16 %v355
  %v3979 = vunpack.c.l.b16 %v356
  %v3980 = vunpack.c.h.b16 %v356
  %v3981 = vunpack.c.l.b16 %v357
  %v3982 = vunpack.c.h.b16 %v357
  %v3983 = vunpack.c.l.b16 %v358
  %v3984 = vunpack.c.h.b16 %v358
  %v3985 = vunpack.c.l.b16 %v359
  %v3986 = vunpack.c.h.b16 %v359
  %v3987 = vunpack.c.l.b16 %v360
  %v3988 = vunpack.c.h.b16 %v360
  %v3989 = vunpack.c.l.b16 %v361
  %v3990 = vunpack.c.h.b16 %v361
  %v3991 = vunpack.c.l.b16 %v362
  %v3992 = vunpack.c.h.b16 %v362
  %v3993 = vunpack.c.l.b16 %v363
  %v3994 = vunpack.c.h.b16 %v363
  %v3995 = vunpack.c.l.b16 %v364
  %v3996 = vunpack.c.h.b16 %v364
  %v3997 = vunpack.c.l.b16 %v365
  %v3998 = vunpack.c.h.b16 %v365
  %v3999 = vunpack.c.l.b16 %v366
  %v4000 = vunpack.c.h.b16 %v366
  %v4001 = vunpack.c.l.b16 %v367
  %v4002 = vunpack.c.h.b16 %v367
  %v4003 = vunpack.c.l.b16 %v368
  %v4004 = vunpack.c.h.b16 %v368
  %v4005 = vunpack.c.l.b16 %v369
  %v4006 = vunpack.c.h.b16 %v369
  %v4007 = vunpack.c.l.b16 %v370
  %v4008 = vunpack.c.h.b16 %v370
  %v4009 = vunpack.c.l.b16 %v371
  %v4010 = vunpack.c.h.b16 %v371
  %v4011 = vunpack.c.l.b16 %v372
  %v4012 = vunpack.c.h.b16 %v372
  %v4013 = vunpack.c.l.b16 %v373
  %v4014 = vunpack.c.h.b16 %v373
  %v4015 = vunpack.c.l.b16 %v374
  %v4016 = vunpack.c.h.b16 %v374
  %v4017 = vunpack.c.l.b16 %v375
  %v4018 = vunpack.c.h.b16 %v375
  %v4019 = vunpack.c.l.b16 %v376
  %v4020 = vunpack.c.h.b16 %v376
  %v4021 = vunpack.c.l.b16 %v377
  %v4022 = vunpack.c.h.b16 %v377
  %v4023 = vunpack.c.l.b16 %v378
  %v4024 = vunpack.c.h.b16 %v378
  %v4025 = vunpack.c.l.b16 %v379
  %v4026 = vunpack.c.h.b16 %v379
  %v4027 = vunpack.c.l.b16 %v380
  %v4028 = vunpack.c.h.b16 %v380
  %v4029 = vunpack.c.l.b16 %v381
  %v4030 = vunpack.c.h.b16 %v381
  %v4031 = vunpack.c.l.b16 %v382
  %v4032 = vunpack.c.h.b16 %v382
  %v4033 = vunpack.c.l.b16 %v383
  %v4034 = vunpack.c.h.b16 %v383
  %v4035 = vunpack.c.l.b16 %v384
  %v4036 = vunpack.c.h.b16 %v384
  %v4037 = vunpack.c.l.b16 %v385
  %v4038 = vunpack.c.h.b16 %v385
  %v4039 = vunpack.c.l.b16 %v386
  %v4040 = vunpack.c.h.b16 %v386
  %v4041 = vunpack.c.l.b16 %v387
  %v4042 = vunpack.c.h.b16 %v387
  %v4043 = vunpack.c.l.b16 %v388
  %v4044 = vunpack.c.h.b16 %v388
  %v4045 = vunpack.c.l.b16 %v389
  %v4046 = vunpack.c.h.b16 %v389
  %v4047 = vunpack.c.l.b16 %v390
  %v4048 = vunpack.c.h.b16 %v390
  %v4049 = vunpack.c.l.b16 %v391
  %v4050 = vunpack.c.h.b16 %v391
  %v4051 = vunpack.c.l.b16 %v392
  %v4052 = vunpack.c.h.b16 %v392
  %v4053 = vunpack.c.l.b16 %v393
  %v4054 = vunpack.c.h.b16 %v393
  %v4055 = vunpack.c.l.b16 %v394
  %v4056 = vunpack.c.h.b16 %v394
  %v4057 = vunpack.c.l.b16 %v395
  %v4058 = vunpack.c.h.b16 %v395
  %v4059 = vunpack.c.l.b16 %v396
  %v4060 = vunpack.c.h.b16 %v396
  %v4061 = vunpack.c.l.b16 %v397
  %v4062 = vunpack.c.h.b16 %v397
  %v4063 = vunpack.c.l.b16 %v398
  %v4064 = vunpack.c.h.b16 %v398
  %v4065 = vunpack.c.l.b16 %v399
  %v4066 = vunpack.c.h.b16 %v399
  %v4067 = vunpack.c.l.b16 %v400
  %v4068 = vunpack.c.h.b16 %v400
  %v4069 = vunpack.c.l.b16 %v401
  %v4070 = vunpack.c.h.b16 %v401
  %v4071 = vunpack.c.l.b16 %v402
  %v4072 = vunpack.c.h.b16 %v402
  %v4073 = vunpack.c.l.b16 %v403
  %v4074 = vunpack.c.h.b16 %v403
  %v4075 = vunpack.c.l.b16 %v404
  %v4076 = vunpack.c.h.b16 %v404
  %v4077 = vunpack.c.l.b16 %v405
  %v4078 = vunpack.c.h.b16 %v405
  %v4079 = vunpack.c.l.b16 %v406
  %v4080 = vunpack.c.h.b16 %v406
  %v4081 = vunpack.c.l.b16 %v407
  %v4082 = vunpack.c.h.b16 %v407
  %v4083 = vunpack.c.l.b16 %v408
  %v4084 = vunpack.c.h.b16 %v408
  %v4085 = vunpack.c.l.b16 %v409
  %v4086 = vunpack.c.h.b16 %v409
  %v4087 = vunpack.c.l.b16 %v410
  %v4088 = vunpack.c.h.b16 %v410
  %v4089 = vunpack.c.l.b16 %v411
  %v4090 = vunpack.c.h.b16 %v411
  %v4091 = vunpack.c.l.b16 %v412
  %v4092 = vunpack.c.h.b16 %v412
  %v4093 = vunpack.c.l.b16 %v413
  %v4094 = vunpack.c.h.b16 %v413
  %v4095 = vunpack.c.l.b16 %v414
  %v4096 = vunpack.c.h.b16 %v414
  %v4097 = vunpack.c.l.b16 %v415
  %v4098 = vunpack.c.h.b16 %v415
  %v4099 = vunpack.c.l.b16 %v416
  %v4100 = vunpack.c.h.b16 %v416
  %v4101 = vunpack.c.l.b16 %v417
  %v4102 = vunpack.c.h.b16 %v417
  %v4103 = vunpack.c.l.b16 %v418
  %v4104 = vunpack.c.h.b16 %v418
  %v4105 = vunpack.c.l.b16 %v419
  %v4106 = vunpack.c.h.b16 %v419
  %v4107 = vunpack.c.l.b16 %v420
  %v4108 = vunpack.c.h.b16 %v420
  %v4109 = vunpack.c.l.b16 %v421
  %v4110 = vunpack.c.h.b16 %v421
  %v4111 = vunpack.c.l.b16 %v422
  %v4112 = vunpack.c.h.b16 %v422
  %v4113 = vunpack.c.l.b16 %v423
  %v4114 = vunpack.c.h.b16 %v423
  %v4115 = vunpack.c.l.b16 %v424
  %v4116 = vunpack.c.h.b16 %v424
  %v4117 = vunpack.c.l.b16 %v425
  %v4118 = vunpack.c.h.b16 %v425
  %v4119 = vunpack.c.l.b16 %v426
  %v4120 = vunpack.c.h.b16 %v426
  %v4121 = vunpack.c.l.b16 %v427
  %v4122 = vunpack.c.h.b16 %v427
  %v4123 = vunpack.c.l.b16 %v428
  %v4124 = vunpack.c.h.b16 %v428
  %v4125 = vunpack.c.l.b16 %v429
  %v4126 = vunpack.c.h.b16 %v429
  %v4127 = vunpack.c.l.b16 %v430
  %v4128 = vunpack.c.h.b16 %v430
  %v4129 = vunpack.c.l.b16 %v431
  %v4130 = vunpack.c.h.b16 %v431
  %v4131 = vunpack.c.l.b16 %v432
  %v4132 = vunpack.c.h.b16 %v432
  %v4133 = vunpack.c.l.b16 %v433
  %v4134 = vunpack.c.h.b16 %v433
  %v4135 = vunpack.c.l.b16 %v434
  %v4136 = vunpack.c.h.b16 %v434
  %v4137 = vunpack.c.l.b16 %v435
  %v4138 = vunpack.c.h.b16 %v435
  %v4139 = vunpack.c.l.b16 %v436
  %v4140 = vunpack.c.h.b16 %v436
  %v4141 = vunpack.c.l.b16 %v437
  %v4142 = vunpack.c.h.b16 %v437
  %v4143 = vunpack.c.l.b16 %v438
  %v4144 = vunpack.c.h.b16 %v438
  %v4145 = vunpack.c.l.b16 %v439
  %v4146 = vunpack.c.h.b16 %v439
  %v4147 = vunpack.c.l.b16 %v440
  %v4148 = vunpack.c.h.b16 %v440
  %v4149 = vunpack.c.l.b16 %v441
  %v4150 = vunpack.c.h.b16 %v441
  %v4151 = vunpack.c.l.b16 %v442
  %v4152 = vunpack.c.h.b16 %v442
  %v4153 = vunpack.c.l.b16 %v443
  %v4154 = vunpack.c.h.b16 %v443
  %v4155 = vunpack.c.l.b16 %v444
  %v4156 = vunpack.c.h.b16 %v444
  %v4157 = vunpack.c.l.b16 %v445
  %v4158 = vunpack.c.h.b16 %v445
  %v4159 = vunpack.c.l.b16 %v446
  %v4160 = vunpack.c.h.b16 %v446
  %v4161 = vunpack.c.l.b16 %v447
  %v4162 = vunpack.c.h.b16 %v447
  %v4163 = vunpack.c.l.b16 %v448
  %v4164 = vunpack.c.h.b16 %v448
  %v4165 = vunpack.c.l.b16 %v449
  %v4166 = vunpack.c.h.b16 %v449
  %v4167 = vunpack.c.l.b16 %v450
  %v4168 = vunpack.c.h.b16 %v450
  %v4169 = vunpack.c.l.b16 %v451
  %v4170 = vunpack.c.h.b16 %v451
  %v4171 = vunpack.c.l.b16 %v452
  %v4172 = vunpack.c.h.b16 %v452
  %v4173 = vunpack.c.l.b16 %v453
  %v4174 = vunpack.c.h.b16 %v453
  %v4175 = vunpack.c.l.b16 %v454
  %v4176 = vunpack.c.h.b16 %v454
  %v4177 = vunpack.c.l.b16 %v455
  %v4178 = vunpack.c.h.b16 %v455
  %v4179 = vunpack.c.l.b16 %v456
  %v4180 = vunpack.c.h.b16 %v456
  %v4181 = vunpack.c.l.b16 %v457
  %v4182 = vunpack.c.h.b16 %v457
  %v4183 = vunpack.c.l.b16 %v458
  %v4184 = vunpack.c.h.b16 %v458
  %v4185 = vunpack.c.l.b16 %v459
  %v4186 = vunpack.c.h.b16 %v459
  %v4187 = vunpack.c.l.b16 %v460
  %v4188 = vunpack.c.h.b16 %v460
  %v4189 = vunpack.c.l.b16 %v461
  %v4190 = vunpack.c.h.b16 %v461
  %v4191 = vunpack.c.l.b16 %v462
  %v4192 = vunpack.c.h.b16 %v462
  %v4193 = vunpack.c.l.b16 %v463
  %v4194 = vunpack.c.h.b16 %v463
  %v4195 = vunpack.c.l.b16 %v464
  %v4196 = vunpack.c.h.b16 %v464
  %v4197 = vunpack.c.l.b16 %v465
  %v4198 = vunpack.c.h.b16 %v465
  %v4199 = vunpack.c.l.b16 %v466
  %v4200 = vunpack.c.h.b16 %v466
  %v4201 = vunpack.c.l.b16 %v467
  %v4202 = vunpack.c.h.b16 %v467
  %v4203 = vunpack.c.l.b16 %v468
  %v4204 = vunpack.c.h.b16 %v468
  %v4205 = vunpack.c.l.b16 %v469
  %v4206 = vunpack.c.h.b16 %v469
  %v4207 = vunpack.c.l.b16 %v470
  %v4208 = vunpack.c.h.b16 %v470
  %v4209 = vunpack.c.l.b16 %v471
  %v4210 = vunpack.c.h.b16 %v471
  %v4211 = vunpack.c.l.b16 %v472
  %v4212 = vunpack.c.h.b16 %v472
  %v4213 = vunpack.c.l.b16 %v473
  %v4214 = vunpack.c.h.b16 %v473
  %v4215 = vunpack.c.l.b16 %v474
  %v4216 = vunpack.c.h.b16 %v474
  %v4217 = vunpack.c.l.b16 %v475
  %v4218 = vunpack.c.h.b16 %v475
  %v4219 = vunpack.c.l.b16 %v476
  %v4220 = vunpack.c.h.b16 %v476
  %v4221 = vunpack.c.l.b16 %v477
  %v4222 = vunpack.c.h.b16 %v477
  %v4223 = vunpack.c.l.b16 %v478
  %v4224 = vunpack.c.h.b16 %v478
  %v4225 = vunpack.c.l.b16 %v479
  %v4226 = vunpack.c.h.b16 %v479
  %v4227 = vunpack.c.l.b16 %v480
  %v4228 = vunpack.c.h.b16 %v480
  %v4229 = vunpack.c.l.b16 %v481
  %v4230 = vunpack.c.h.b16 %v481
  %v4231 = vunpack.c.l.b16 %v482
  %v4232 = vunpack.c.h.b16 %v482
  %v4233 = vunpack.c.l.b16 %v483
  %v4234 = vunpack.c.h.b16 %v483
  %v4235 = vunpack.c.l.b16 %v484
  %v4236 = vunpack.c.h.b16 %v484
  %v4237 = vunpack.c.l.b16 %v485
  %v4238 = vunpack.c.h.b16 %v485
  %v4239 = vunpack.c.l.b16 %v486
  %v4240 = vunpack.c.h.b16 %v486
  %v4241 = vunpack.c.l.b16 %v487
  %v4242 = vunpack.c.h.b16 %v487
  %v4243 = vunpack.c.l.b16 %v488
  %v4244 = vunpack.c.h.b16 %v488
  %v4245 = vunpack.c.l.b16 %v489
  %v4246 = vunpack.c.h.b16 %v489
  %v4247 = vunpack.c.l.b16 %v490
  %v4248 = vunpack.c.h.b16 %v490
  %v4249 = vunpack.c.l.b16 %v491
  %v4250 = vunpack.c.h.b16 %v491
  %v4251 = vunpack.c.l.b16 %v492
  %v4252 = vunpack.c.h.b16 %v492
  %v4253 = vunpack.c.l.b16 %v493
  %v4254 = vunpack.c.h.b16 %v493
  %v4255 = vunpack.c.l.b16 %v494
  %v4256 = vunpack.c.h.b16 %v494
  %v4257 = vunpack.c.l.b16 %v495
  %v4258 = vunpack.c.h.b16 %v495
  %v4259 = vunpack.c.l.b16 %v496
  %v4260 = vunpack.c.h.b16 %v496
  %v4261 = vunpack.c.l.b16 %v497
  %v4262 = vunpack.c.h.b16 %v497
  %v4263 = vunpack.c.l.b16 %v498
  %v4264 = vunpack.c.h.b16 %v498
  %v4265 = vunpack.c.l.b16 %v499
  %v4266 = vunpack.c.h.b16 %v499
  %v4267 = vunpack.c.l.b16 %v500
  %v4268 = vunpack.c.h.b16 %v500
  %v4269 = vunpack.c.l.b16 %v501
  %v4270 = vunpack.c.h.b16 %v501
  %v4271 = vunpack.c.l.b16 %v502
  %v4272 = vunpack.c.h.b16 %v502
  %v4273 = vunpack.c.l.b16 %v503
  %v4274 = vunpack.c.h.b16 %v503
  %v4275 = vunpack.c.l.b16 %v504
  %v4276 = vunpack.c.h.b16 %v504
  %v4277 = vunpack.c.l.b16 %v505
  %v4278 = vunpack.c.h.b16 %v505
  %v4279 = vunpack.c.l.b16 %v506
  %v4280 = vunpack.c.h.b16 %v506
  %v4281 = vunpack.c.l.b16 %v507
  %v4282 = vunpack.c.h.b16 %v507
  %v4283 = vunpack.c.l.b16 %v508
  %v4284 = vunpack.c.h.b16 %v508
  %v4285 = vunpack.c.l.b16 %v509
  %v4286 = vunpack.c.h.b16 %v509
  %v4287 = vunpack.c.l.b16 %v510
  %v4288 = vunpack.c.h.b16 %v510
  %v4289 = vunpack.c.l.b16 %v511
  %v4290 = vunpack.c.h.b16 %v511
  %v4291 = vunpack.c.l.b16 %v512
  %v4292 = vunpack.c.h.b16 %v512
  %v4293 = vunpack.c.l.b16 %v513
  %v4294 = vunpack.c.h.b16 %v513
  %v4295 = vunpack.c.l.b16 %v514
  %v4296 = vunpack.c.h.b16 %v514
  %v4297 = vunpack.c.l.b16 %v515
  %v4298 = vunpack.c.h.b16 %v515
  %v4299 = vunpack.c.l.b16 %v516
  %v4300 = vunpack.c.h.b16 %v516
  %v4301 = vunpack.c.l.b16 %v517
  %v4302 = vunpack.c.h.b16 %v517
  %v4303 = vunpack.c.l.b16 %v518
  %v4304 = vunpack.c.h.b16 %v518
  %v4305 = vunpack.c.l.b16 %v519
  %v4306 = vunpack.c.h.b16 %v519
  %v4307 = vunpack.c.l.b16 %v520
  %v4308 = vunpack.c.h.b16 %v520
  %v4309 = vunpack.c.l.b16 %v521
  %v4310 = vunpack.c.h.b16 %v521
  %v4311 = vunpack.c.l.b16 %v522
  %v4312 = vunpack.c.h.b16 %v522
  %v4313 = vunpack.c.l.b16 %v523
  %v4314 = vunpack.c.h.b16 %v523
  %v4315 = vunpack.c.l.b16 %v524
  %v4316 = vunpack.c.h.b16 %v524
  %v4317 = vunpack.c.l.b16 %v525
  %v4318 = vunpack.c.h.b16 %v525
  %v4319 = vunpack.c.l.b16 %v526
  %v4320 = vunpack.c.h.b16 %v526
  %v4321 = vunpack.c.l.b16 %v527
  %v4322 = vunpack.c.h.b16 %v527
  %v4323 = vunpack.c.l.b16 %v528
  %v4324 = vunpack.c.h.b16 %v528
  %v4325 = vunpack.c.l.b16 %v529
  %v4326 = vunpack.c.h.b16 %v529
  %v4327 = vunpack.c.l.b16 %v530
  %v4328 = vunpack.c.h.b16 %v530
  %v4329 = vunpack.c.l.b16 %v531
  %v4330 = vunpack.c.h.b16 %v531
  %v4331 = vunpack.c.l.b16 %v532
  %v4332 = vunpack.c.h.b16 %v532
  %v4333 = vunpack.c.l.b16 %v533
  %v4334 = vunpack.c.h.b16 %v533
  %v4335 = vunpack.c.l.b16 %v534
  %v4336 = vunpack.c.h.b16 %v534
  %v4337 = vunpack.c.l.b16 %v535
  %v4338 = vunpack.c.h.b16 %v535
  %v4339 = vunpack.c.l.b16 %v536
  %v4340 = vunpack.c.h.b16 %v536
  %v4341 = vunpack.c.l.b16 %v537
  %v4342 = vunpack.c.h.b16 %v537
  %v4343 = vunpack.c.l.b16 %v538
  %v4344 = vunpack.c.h.b16 %v538
  %v4345 = vunpack.c.l.b16 %v539
  %v4346 = vunpack.c.h.b16 %v539
  %v4347 = vunpack.c.l.b16 %v540
  %v4348 = vunpack.c.h.b16 %v540
  %v4349 = vunpack.c.l.b16 %v541
  %v4350 = vunpack.c.h.b16 %v541
  %v4351 = vunpack.c.l.b16 %v542
  %v4352 = vunpack.c.h.b16 %v542
  %v4353 = vunpack.c.l.b16 %v543
  %v4354 = vunpack.c.h.b16 %v543
  %v4355 = vunpack.c.l.b16 %v544
  %v4356 = vunpack.c.h.b16 %v544
  %v4357 = vunpack.c.l.b16 %v545
  %v4358 = vunpack.c.h.b16 %v545
  %v4359 = vunpack.c.l.b16 %v546
  %v4360 = vunpack.c.h.b16 %v546
  %v4361 = vunpack.c.l.b16 %v547
  %v4362 = vunpack.c.h.b16 %v547
  %v4363 = vunpack.c.l.b16 %v548
  %v4364 = vunpack.c.h.b16 %v548
  %v4365 = vunpack.c.l.b16 %v549
  %v4366 = vunpack.c.h.b16 %v549
  %v4367 = vunpack.c.l.b16 %v550
  %v4368 = vunpack.c.h.b16 %v550
  %v4369 = vunpack.c.l.b16 %v551
  %v4370 = vunpack.c.h.b16 %v551
  %v4371 = vunpack.c.l.b16 %v552
  %v4372 = vunpack.c.h.b16 %v552
  %v4373 = vunpack.c.l.b16 %v553
  %v4374 = vunpack.c.h.b16 %v553
  %v4375 = vunpack.c.l.b16 %v554
  %v4376 = vunpack.c.h.b16 %v554
  %v4377 = vunpack.c.l.b16 %v555
  %v4378 = vunpack.c.h.b16 %v555
  %v4379 = vunpack.c.l.b16 %v556
  %v4380 = vunpack.c.h.b16 %v556
  %v4381 = vunpack.c.l.b16 %v557
  %v4382 = vunpack.c.h.b16 %v557
  %v4383 = vunpack.c.l.b16 %v558
  %v4384 = vunpack.c.h.b16 %v558
  %v4385 = vunpack.c.l.b16 %v559
  %v4386 = vunpack.c.h.b16 %v559
  %v4387 = vunpack.c.l.b16 %v560
  %v4388 = vunpack.c.h.b16 %v560
  %v4389 = vunpack.c.l.b16 %v561
  %v4390 = vunpack.c.h.b16 %v561
  %v4391 = vunpack.c.l.b16 %v562
  %v4392 = vunpack.c.h.b16 %v562
  %v4393 = vunpack.c.l.b16 %v563
  %v4394 = vunpack.c.h.b16 %v563
  %v4395 = vunpack.c.l.b16 %v564
  %v4396 = vunpack.c.h.b16 %v564
  %v4397 = vunpack.c.l.b16 %v565
  %v4398 = vunpack.c.h.b16 %v565
  %v4399 = vunpack.c.l.b16 %v566
  %v4400 = vunpack.c.h.b16 %v566
  %v4401 = vunpack.c.l.b16 %v567
  %v4402 = vunpack.c.h.b16 %v567
  %v4403 = vunpack.c.l.b16 %v568
  %v4404 = vunpack.c.h.b16 %v568
  %v4405 = vunpack.c.l.b16 %v569
  %v4406 = vunpack.c.h.b16 %v569
  %v4407 = vunpack.c.l.b16 %v570
  %v4408 = vunpack.c.h.b16 %v570
  %v4409 = vunpack.c.l.b16 %v571
  %v4410 = vunpack.c.h.b16 %v571
  %v4411 = vunpack.c.l.b16 %v572
  %v4412 = vunpack.c.h.b16 %v572
  %v4413 = vunpack.c.l.b16 %v573
  %v4414 = vunpack.c.h.b16 %v573
  %v4415 = vunpack.c.l.b16 %v574
  %v4416 = vunpack.c.h.b16 %v574
  %v4417 = vunpack.c.l.b16 %v575
  %v4418 = vunpack.c.h.b16 %v575
  %v4419 = vunpack.c.l.b16 %v576
  %v4420 = vunpack.c.h.b16 %v576
  %v4421 = vunpack.c.l.b16 %v577
  %v4422 = vunpack.c.h.b16 %v577
  %v4423 = vunpack.c.l.b16 %v578
  %v4424 = vunpack.c.h.b16 %v578
  %v4425 = vunpack.c.l.b16 %v579
  %v4426 = vunpack.c.h.b16 %v579
  %v4427 = vunpack.c.l.b16 %v580
  %v4428 = vunpack.c.h.b16 %v580
  %v4429 = vunpack.c.l.b16 %v581
  %v4430 = vunpack.c.h.b16 %v581
  %v4431 = vunpack.c.l.b16 %v582
  %v4432 = vunpack.c.h.b16 %v582
  %v4433 = vunpack.c.l.b16 %v583
  %v4434 = vunpack.c.h.b16 %v583
  %v4435 = vunpack.c.l.b16 %v584
  %v4436 = vunpack.c.h.b16 %v584
  %v4437 = vunpack.c.l.b16 %v585
  %v4438 = vunpack.c.h.b16 %v585
  %v4439 = vunpack.c.l.b16 %v586
  %v4440 = vunpack.c.h.b16 %v586
  %v4441 = vunpack.c.l.b16 %v587
  %v4442 = vunpack.c.h.b16 %v587
  %v4443 = vunpack.c.l.b16 %v588
  %v4444 = vunpack.c.h.b16 %v588
  %v4445 = vunpack.c.l.b16 %v589
  %v4446 = vunpack.c.h.b16 %v589
  %v4447 = vunpack.c.l.b16 %v590
  %v4448 = vunpack.c.h.b16 %v590
  %v4449 = vunpack.c.l.b16 %v591
  %v4450 = vunpack.c.h.b16 %v591
  %v4451 = vunpack.c.l.b16 %v592
  %v4452 = vunpack.c.h.b16 %v592
  %v4453 = vunpack.c.l.b16 %v593
  %v4454 = vunpack.c.h.b16 %v593
  %v4455 = vunpack.c.l.b16 %v594
  %v4456 = vunpack.c.h.b16 %v594
  %v4457 = vunpack.c.l.b16 %v595
  %v4458 = vunpack.c.h.b16 %v595
  %v4459 = vunpack.c.l.b16 %v596
  %v4460 = vunpack.c.h.b16 %v596
  %v4461 = vunpack.c.l.b16 %v597
  %v4462 = vunpack.c.h.b16 %v597
  %v4463 = vunpack.c.l.b16 %v598
  %v4464 = vunpack.c.h.b16 %v598
  %v4465 = vunpack.c.l.b16 %v599
  %v4466 = vunpack.c.h.b16 %v599
  %v4467 = vunpack.c.l.b16 %v600
  %v4468 = vunpack.c.h.b16 %v600
  %v4469 = vunpack.c.l.b16 %v601
  %v4470 = vunpack.c.h.b16 %v601
  %v4471 = vunpack.c.l.b16 %v602
  %v4472 = vunpack.c.h.b16 %v602
  %v4473 = vunpack.c.l.b16 %v603
  %v4474 = vunpack.c.h.b16 %v603
  %v4475 = vunpack.c.l.b16 %v604
  %v4476 = vunpack.c.h.b16 %v604
  %v4477 = vunpack.c.l.b16 %v605
  %v4478 = vunpack.c.h.b16 %v605
  %v4479 = vunpack.c.l.b16 %v606
  %v4480 = vunpack.c.h.b16 %v606
  %v4481 = vunpack.c.l.b16 %v607
  %v4482 = vunpack.c.h.b16 %v607
  %v4483 = vunpack.c.l.b16 %v608
  %v4484 = vunpack.c.h.b16 %v608
  %v4485 = vunpack.c.l.b16 %v609
  %v4486 = vunpack.c.h.b16 %v609
  %v4487 = vunpack.c.l.b16 %v610
  %v4488 = vunpack.c.h.b16 %v610
  %v4489 = vunpack.c.l.b16 %v611
  %v4490 = vunpack.c.h.b16 %v611
  %v4491 = vunpack.c.l.b16 %v612
  %v4492 = vunpack.c.h.b16 %v612
  %v4493 = vunpack.c.l.b16 %v613
  %v4494 = vunpack.c.h.b16 %v613
  %v4495 = vunpack.c.l.b16 %v614
  %v4496 = vunpack.c.h.b16 %v614
  %v4497 = vunpack.c.l.b16 %v615
  %v4498 = vunpack.c.h.b16 %v615
  %v4499 = vunpack.c.l.b16 %v616
  %v4500 = vunpack.c.h.b16 %v616
  %v4501 = vunpack.c.l.b16 %v617
  %v4502 = vunpack.c.h.b16 %v617
  %v4503 = vunpack.c.l.b16 %v618
  %v4504 = vunpack.c.h.b16 %v618
  %v4505 = vunpack.c.l.b16 %v619
  %v4506 = vunpack.c.h.b16 %v619
  %v4507 = vunpack.c.l.b16 %v620
  %v4508 = vunpack.c.h.b16 %v620
  %v4509 = vunpack.c.l.b16 %v621
  %v4510 = vunpack.c.h.b16 %v621
  %v4511 = vunpack.c.l.b16 %v622
  %v4512 = vunpack.c.h.b16 %v622
  %v4513 = vunpack.c.l.b16 %v623
  %v4514 = vunpack.c.h.b16 %v623
  %v4515 = vunpack.c.l.b16 %v624
  %v4516 = vunpack.c.h.b16 %v624
  %v4517 = vunpack.c.l.b16 %v625
  %v4518 = vunpack.c.h.b16 %v625
  %v4519 = vunpack.c.l.b16 %v626
  %v4520 = vunpack.c.h.b16 %v626
  %v4521 = vunpack.c.l.b16 %v627
  %v4522 = vunpack.c.h.b16 %v627
  %v4523 = vunpack.c.l.b16 %v628
  %v4524 = vunpack.c.h.b16 %v628
  %v4525 = vunpack.c.l.b16 %v629
  %v4526 = vunpack.c.h.b16 %v629
  %v4527 = vunpack.c.l.b16 %v630
  %v4528 = vunpack.c.h.b16 %v630
  %v4529 = vunpack.c.l.b16 %v631
  %v4530 = vunpack.c.h.b16 %v631
  %v4531 = vunpack.c.l.b16 %v632
  %v4532 = vunpack.c.h.b16 %v632
  %v4533 = vunpack.c.l.b16 %v633
  %v4534 = vunpack.c.h.b16 %v633
  %v4535 = vunpack.c.l.b16 %v634
  %v4536 = vunpack.c.h.b16 %v634
  %v4537 = vunpack.c.l.b16 %v635
  %v4538 = vunpack.c.h.b16 %v635
  %v4539 = vunpack.c.l.b16 %v636
  %v4540 = vunpack.c.h.b16 %v636
  %v4541 = vunpack.c.l.b16 %v637
  %v4542 = vunpack.c.h.b16 %v637
  %v4543 = vunpack.c.l.b16 %v638
  %v4544 = vunpack.c.h.b16 %v638
  %v4545 = vunpack.c.l.b16 %v639
  %v4546 = vunpack.c.h.b16 %v639
  %v4547 = vunpack.c.l.b16 %v640
  %v4548 = vunpack.c.h.b16 %v640
  %v4549 = vunpack.c.l.b16 %v641
  %v4550 = vunpack.c.h.b16 %v641
  %v4551 = vunpack.c.l.b16 %v642
  %v4552 = vunpack.c.h.b16 %v642
  %v4553 = vunpack.c.l.b16 %v643
  %v4554 = vunpack.c.h.b16 %v643
  %v4555 = vunpack.c.l.b16 %v644
  %v4556 = vunpack.c.h.b16 %v644
  %v4557 = vunpack.c.l.b16 %v645
  %v4558 = vunpack.c.h.b16 %v645
  %v4559 = vunpack.c.l.b16 %v646
  %v4560 = vunpack.c.h.b16 %v646
  %v4561 = vunpack.c.l.b16 %v647
  %v4562 = vunpack.c.h.b16 %v647
  %v4563 = vunpack.c.l.b16 %v648
  %v4564 = vunpack.c.h.b16 %v648
  %v4565 = vunpack.c.l.b16 %v649
  %v4566 = vunpack.c.h.b16 %v649
  %v4567 = vunpack.c.l.b16 %v650
  %v4568 = vunpack.c.h.b16 %v650
  %v4569 = vunpack.c.l.b16 %v651
  %v4570 = vunpack.c.h.b16 %v651
  %v4571 = vunpack.c.l.b16 %v652
  %v4572 = vunpack.c.h.b16 %v652
  %v4573 = vunpack.c.l.b16 %v653
  %v4574 = vunpack.c.h.b16 %v653
  %v4575 = vunpack.c.l.b16 %v654
  %v4576 = vunpack.c.h.b16 %v654
  %v4577 = vunpack.c.l.b16 %v655
  %v4578 = vunpack.c.h.b16 %v655
  %v4579 = vunpack.c.l.b16 %v656
  %v4580 = vunpack.c.h.b16 %v656
  %v4581 = vunpack.c.l.b16 %v657
  %v4582 = vunpack.c.h.b16 %v657
  %v4583 = vunpack.c.l.b16 %v658
  %v4584 = vunpack.c.h.b16 %v658
  %v4585 = vunpack.c.l.b16 %v659
  %v4586 = vunpack.c.h.b16 %v659
  %v4587 = vunpack.c.l.b16 %v660
  %v4588 = vunpack.c.h.b16 %v660
  %v4589 = vunpack.c.l.b16 %v661
  %v4590 = vunpack.c.h.b16 %v661
  %v4591 = vunpack.c.l.b16 %v662
  %v4592 = vunpack.c.h.b16 %v662
  %v4593 = vunpack.c.l.b16 %v663
  %v4594 = vunpack.c.h.b16 %v663
  %v4595 = vunpack.c.l.b16 %v664
  %v4596 = vunpack.c.h.b16 %v664
  %v4597 = vunpack.c.l.b16 %v665
  %v4598 = vunpack.c.h.b16 %v665
  %v4599 = vunpack.c.l.b16 %v666
  %v4600 = vunpack.c.h.b16 %v666
  %v4601 = vunpack.c.l.b16 %v667
  %v4602 = vunpack.c.h.b16 %v667
  %v4603 = vunpack.c.l.b16 %v668
  %v4604 = vunpack.c.h.b16 %v668
  %v4605 = vunpack.c.l.b16 %v669
  %v4606 = vunpack.c.h.b16 %v669
  %v4607 = vunpack.c.l.b16 %v670
  %v4608 = vunpack.c.h.b16 %v670
  %v4609 = vunpack.c.l.b16 %v671
  %v4610 = vunpack.c.h.b16 %v671
  %v4611 = vunpack.c.l.b16 %v672
  %v4612 = vunpack.c.h.b16 %v672
  %v4613 = vunpack.c.l.b16 %v673
  %v4614 = vunpack.c.h.b16 %v673
  %v4615 = vunpack.c.l.b16 %v674
  %v4616 = vunpack.c.h.b16 %v674
  %v4617 = vunpack.c.l.b16 %v675
  %v4618 = vunpack.c.h.b16 %v675
  %v4619 = vunpack.c.l.b16 %v676
  %v4620 = vunpack.c.h.b16 %v676
  %v4621 = vunpack.c.l.b16 %v677
  %v4622 = vunpack.c.h.b16 %v677
  %v4623 = vunpack.c.l.b16 %v678
  %v4624 = vunpack.c.h.b16 %v678
  %v4625 = vunpack.c.l.b16 %v679
  %v4626 = vunpack.c.h.b16 %v679
  %v4627 = vunpack.c.l.b16 %v680
  %v4628 = vunpack.c.h.b16 %v680
  %v4629 = vunpack.c.l.b16 %v681
  %v4630 = vunpack.c.h.b16 %v681
  %v4631 = vunpack.c.l.b16 %v682
  %v4632 = vunpack.c.h.b16 %v682
  %v4633 = vunpack.c.l.b16 %v683
  %v4634 = vunpack.c.h.b16 %v683
  %v4635 = vunpack.c.l.b16 %v684
  %v4636 = vunpack.c.h.b16 %v684
  %v4637 = vunpack.c.l.b16 %v685
  %v4638 = vunpack.c.h.b16 %v685
  %v4639 = vunpack.c.l.b16 %v686
  %v4640 = vunpack.c.h.b16 %v686
  %v4641 = vunpack.c.l.b16 %v687
  %v4642 = vunpack.c.h.b16 %v687
  %v4643 = vunpack.c.l.b16 %v688
  %v4644 = vunpack.c.h.b16 %v688
  %v4645 = vunpack.c.l.b16 %v689
  %v4646 = vunpack.c.h.b16 %v689
  %v4647 = vunpack.c.l.b16 %v690
  %v4648 = vunpack.c.h.b16 %v690
  %v4649 = vunpack.c.l.b16 %v691
  %v4650 = vunpack.c.h.b16 %v691
  %v4651 = vunpack.c.l.b16 %v692
  %v4652 = vunpack.c.h.b16 %v692
  %v4653 = vunpack.c.l.b16 %v693
  %v4654 = vunpack.c.h.b16 %v693
  %v4655 = vunpack.c.l.b16 %v694
  %v4656 = vunpack.c.h.b16 %v694
  %v4657 = vunpack.c.l.b16 %v695
  %v4658 = vunpack.c.h.b16 %v695
  %v4659 = vunpack.c.l.b16 %v696
  %v4660 = vunpack.c.h.b16 %v696
  %v4661 = vunpack.c.l.b16 %v697
  %v4662 = vunpack.c.h.b16 %v697
  %v4663 = vunpack.c.l.b16 %v698
  %v4664 = vunpack.c.h.b16 %v698
  %v4665 = vunpack.c.l.b16 %v699
  %v4666 = vunpack.c.h.b16 %v699
  %v4667 = vunpack.c.l.b16 %v700
  %v4668 = vunpack.c.h.b16 %v700
  %v4669 = vunpack.c.l.b16 %v701
  %v4670 = vunpack.c.h.b16 %v701
  %v4671 = vunpack.c.l.b16 %v702
  %v4672 = vunpack.c.h.b16 %v702
  %v4673 = vunpack.c.l.b16 %v703
  %v4674 = vunpack.c.h.b16 %v703
  %v4675 = vunpack.c.l.b16 %v704
  %v4676 = vunpack.c.h.b16 %v704
  %v4677 = vunpack.c.l.b16 %v705
  %v4678 = vunpack.c.h.b16 %v705
  %v4679 = vunpack.c.l.b16 %v706
  %v4680 = vunpack.c.h.b16 %v706
  %v4681 = vunpack.c.l.b16 %v707
  %v4682 = vunpack.c.h.b16 %v707
  %v4683 = vunpack.c.l.b16 %v708
  %v4684 = vunpack.c.h.b16 %v708
  %v4685 = vunpack.c.l.b16 %v709
  %v4686 = vunpack.c.h.b16 %v709
  %v4687 = vunpack.c.l.b16 %v710
  %v4688 = vunpack.c.h.b16 %v710
  %v4689 = vunpack.c.l.b16 %v711
  %v4690 = vunpack.c.h.b16 %v711
  %v4691 = vunpack.c.l.b16 %v712
  %v4692 = vunpack.c.h.b16 %v712
  %v4693 = vunpack.c.l.b16 %v713
  %v4694 = vunpack.c.h.b16 %v713
  %v4695 = vunpack.c.l.b16 %v714
  %v4696 = vunpack.c.h.b16 %v714
  %v4697 = vunpack.c.l.b16 %v715
  %v4698 = vunpack.c.h.b16 %v715
  %v4699 = vunpack.c.l.b16 %v716
  %v4700 = vunpack.c.h.b16 %v716
  %v4701 = vunpack.c.l.b16 %v717
  %v4702 = vunpack.c.h.b16 %v717
  %v4703 = vunpack.c.l.b16 %v718
  %v4704 = vunpack.c.h.b16 %v718
  %v4705 = vunpack.c.l.b16 %v719
  %v4706 = vunpack.c.h.b16 %v719
  %v4707 = vunpack.c.l.b16 %v720
  %v4708 = vunpack.c.h.b16 %v720
  %v4709 = vunpack.c.l.b16 %v721
  %v4710 = vunpack.c.h.b16 %v721
  %v4711 = vunpack.c.l.b16 %v722
  %v4712 = vunpack.c.h.b16 %v722
  %v4713 = vunpack.c.l.b16 %v723
  %v4714 = vunpack.c.h.b16 %v723
  %v4715 = vunpack.c.l.b16 %v724
  %v4716 = vunpack.c.h.b16 %v724
  %v4717 = vunpack.c.l.b16 %v725
  %v4718 = vunpack.c.h.b16 %v725
  %v4719 = vunpack.c.l.b16 %v726
  %v4720 = vunpack.c.h.b16 %v726
  %v4721 = vunpack.c.l.b16 %v727
  %v4722 = vunpack.c.h.b16 %v727
  %v4723 = vunpack.c.l.b16 %v728
  %v4724 = vunpack.c.h.b16 %v728
  %v4725 = vunpack.c.l.b16 %v729
  %v4726 = vunpack.c.h.b16 %v729
  %v4727 = vunpack.c.l.b16 %v730
  %v4728 = vunpack.c.h.b16 %v730
  %v4729 = vunpack.c.l.b16 %v731
  %v4730 = vunpack.c.h.b16 %v731
  %v4731 = vunpack.c.l.b16 %v732
  %v4732 = vunpack.c.h.b16 %v732
  %v4733 = vunpack.c.l.b16 %v733
  %v4734 = vunpack.c.h.b16 %v733
  %v4735 = vunpack.c.l.b16 %v734
  %v4736 = vunpack.c.h.b16 %v734
  %v4737 = vunpack.c.l.b16 %v735
  %v4738 = vunpack.c.h.b16 %v735
  %v4739 = vunpack.c.l.b16 %v736
  %v4740 = vunpack.c.h.b16 %v736
  %v4741 = vunpack.c.l.b16 %v737
  %v4742 = vunpack.c.h.b16 %v737
  %v4743 = vunpack.c.l.b16 %v738
  %v4744 = vunpack.c.h.b16 %v738
  %v4745 = vunpack.c.l.b16 %v739
  %v4746 = vunpack.c.h.b16 %v739
  %v4747 = vunpack.c.l.b16 %v740
  %v4748 = vunpack.c.h.b16 %v740
  %v4749 = vunpack.c.l.b16 %v741
  %v4750 = vunpack.c.h.b16 %v741
  %v4751 = vunpack.c.l.b16 %v742
  %v4752 = vunpack.c.h.b16 %v742
  %v4753 = vunpack.c.l.b16 %v743
  %v4754 = vunpack.c.h.b16 %v743
  %v4755 = vunpack.c.l.b16 %v744
  %v4756 = vunpack.c.h.b16 %v744
  %v4757 = vunpack.c.l.b16 %v745
  %v4758 = vunpack.c.h.b16 %v745
  %v4759 = vunpack.c.l.b16 %v746
  %v4760 = vunpack.c.h.b16 %v746
  %v4761 = vunpack.c.l.b16 %v747
  %v4762 = vunpack.c.h.b16 %v747
  %v4763 = vunpack.c.l.b16 %v748
  %v4764 = vunpack.c.h.b16 %v748
  %v4765 = vunpack.c.l.b16 %v749
  %v4766 = vunpack.c.h.b16 %v749
  %v4767 = vunpack.c.l.b16 %v750
  %v4768 = vunpack.c.h.b16 %v750
  %v4769 = vunpack.c.l.b16 %v751
  %v4770 = vunpack.c.h.b16 %v751
  %v4771 = vunpack.c.l.b16 %v752
  %v4772 = vunpack.c.h.b16 %v752
  %v4773 = vunpack.c.l.b16 %v753
  %v4774 = vunpack.c.h.b16 %v753
  %v4775 = vunpack.c.l.b16 %v754
  %v4776 = vunpack.c.h.b16 %v754
  %v4777 = vunpack.c.l.b16 %v755
  %v4778 = vunpack.c.h.b16 %v755
  %v4779 = vunpack.c.l.b16 %v756
  %v4780 = vunpack.c.h.b16 %v756
  %v4781 = vunpack.c.l.b16 %v757
  %v4782 = vunpack.c.h.b16 %v757
  %v4783 = vunpack.c.l.b16 %v758
  %v4784 = vunpack.c.h.b16 %v758
  %v4785 = vunpack.c.l.b16 %v759
  %v4786 = vunpack.c.h.b16 %v759
  %v4787 = vunpack.c.l.b16 %v760
  %v4788 = vunpack.c.h.b16 %v760
  %v4789 = vunpack.c.l.b16 %v761
  %v4790 = vunpack.c.h.b16 %v761
  %v4791 = vunpack.c.l.b16 %v762
  %v4792 = vunpack.c.h.b16 %v762
  %v4793 = vunpack.c.l.b16 %v763
  %v4794 = vunpack.c.h.b16 %v763
  %v4795 = vunpack.c.l.b16 %v764
  %v4796 = vunpack.c.h.b16 %v764
  %v4797 = vunpack.c.l.b16 %v765
  %v4798 = vunpack.c.h.b16 %v765
  %v4799 = vunpack.c.l.b16 %v766
  %v4800 = vunpack.c.h.b16 %v766
  %v4801 = vunpack.c.l.b16 %v767
  %v4802 = vunpack.c.h.b16 %v767
  %v4803 = vunpack.c.l.b16 %v768
  %v4804 = vunpack.c.h.b16 %v768
  %v4805 = vunpack.c.l.b16 %v769
  %v4806 = vunpack.c.h.b16 %v769
  %v4807 = vunpack.c.l.b16 %v770
  %v4808 = vunpack.c.h.b16 %v770
  %v4809 = vunpack.c.l.b16 %v771
  %v4810 = vunpack.c.h.b16 %v771
  %v4811 = vunpack.c.l.b16 %v772
  %v4812 = vunpack.c.h.b16 %v772
  %v4813 = vunpack.c.l.b16 %v773
  %v4814 = vunpack.c.h.b16 %v773
  %v4815 = vunpack.c.l.b16 %v774
  %v4816 = vunpack.c.h.b16 %v774
  %v4817 = vunpack.c.l.b16 %v775
  %v4818 = vunpack.c.h.b16 %v775
  %v4819 = vunpack.c.l.b16 %v776
  %v4820 = vunpack.c.h.b16 %v776
  %v4821 = vunpack.c.l.b16 %v777
  %v4822 = vunpack.c.h.b16 %v777
  %v4823 = vunpack.c.l.b16 %v778
  %v4824 = vunpack.c.h.b16 %v778
  %v4825 = vunpack.c.l.b16 %v779
  %v4826 = vunpack.c.h.b16 %v779
  %v4827 = vunpack.c.l.b16 %v780
  %v4828 = vunpack.c.h.b16 %v780
  %v4829 = vunpack.c.l.b16 %v781
  %v4830 = vunpack.c.h.b16 %v781
  %v4831 = vunpack.c.l.b16 %v782
  %v4832 = vunpack.c.h.b16 %v782
  %v4833 = vunpack.c.l.b16 %v783
  %v4834 = vunpack.c.h.b16 %v783
  %v4835 = vunpack.c.l.b16 %v784
  %v4836 = vunpack.c.h.b16 %v784
  %v4837 = vunpack.c.l.b16 %v785
  %v4838 = vunpack.c.h.b16 %v785
  %v4839 = vunpack.c.l.b16 %v786
  %v4840 = vunpack.c.h.b16 %v786
  %v4841 = vunpack.c.l.b16 %v787
  %v4842 = vunpack.c.h.b16 %v787
  %v4843 = vunpack.c.l.b16 %v788
  %v4844 = vunpack.c.h.b16 %v788
  %v4845 = vunpack.c.l.b16 %v789
  %v4846 = vunpack.c.h.b16 %v789
  %v4847 = vunpack.c.l.b16 %v790
  %v4848 = vunpack.c.h.b16 %v790
  %v4849 = vunpack.c.l.b16 %v791
  %v4850 = vunpack.c.h.b16 %v791
  %v4851 = vunpack.c.l.b16 %v792
  %v4852 = vunpack.c.h.b16 %v792
  %v4853 = vunpack.c.l.b16 %v793
  %v4854 = vunpack.c.h.b16 %v793
  %v4855 = vunpack.c.l.b16 %v794
  %v4856 = vunpack.c.h.b16 %v794
  %v4857 = vunpack.c.l.b16 %v795
  %v4858 = vunpack.c.h.b16 %v795
  %v4859 = vunpack.c.l.b16 %v796
  %v4860 = vunpack.c.h.b16 %v796
  %v4861 = vunpack.c.l.b16 %v797
  %v4862 = vunpack.c.h.b16 %v797
  %v4863 = vunpack.c.l.b16 %v798
  %v4864 = vunpack.c.h.b16 %v798
  %v4865 = vunpack.c.l.b16 %v799
  %v4866 = vunpack.c.h.b16 %v799
  %v4867 = vunpack.c.l.b16 %v800
  %v4868 = vunpack.c.h.b16 %v800
  %v4869 = vunpack.c.l.b16 %v801
  %v4870 = vunpack.c.h.b16 %v801
  %v4871 = vunpack.c.l.b16 %v802
  %v4872 = vunpack.c.h.b16 %v802
  %v4873 = vunpack.c.l.b16 %v803
  %v4874 = vunpack.c.h.b16 %v803
  %v4875 = vunpack.c.l.b16 %v804
  %v4876 = vunpack.c.h.b16 %v804
  %v4877 = vunpack.c.l.b16 %v805
  %v4878 = vunpack.c.h.b16 %v805
  %v4879 = vunpack.c.l.b16 %v806
  %v4880 = vunpack.c.h.b16 %v806
  %v4881 = vunpack.c.l.b16 %v807
  %v4882 = vunpack.c.h.b16 %v807
  %v4883 = vunpack.c.l.b16 %v808
  %v4884 = vunpack.c.h.b16 %v808
  %v4885 = vunpack.c.l.b16 %v809
  %v4886 = vunpack.c.h.b16 %v809
  %v4887 = vunpack.c.l.b16 %v810
  %v4888 = vunpack.c.h.b16 %v810
  %v4889 = vunpack.c.l.b16 %v811
  %v4890 = vunpack.c.h.b16 %v811
  %v4891 = vunpack.c.l.b16 %v812
  %v4892 = vunpack.c.h.b16 %v812
  %v4893 = vunpack.c.l.b16 %v813
  %v4894 = vunpack.c.h.b16 %v813
  %v4895 = vunpack.c.l.b16 %v814
  %v4896 = vunpack.c.h.b16 %v814
  %v4897 = vunpack.c.l.b16 %v815
  %v4898 = vunpack.c.h.b16 %v815
  %v4899 = vunpack.c.l.b16 %v816
  %v4900 = vunpack.c.h.b16 %v816
  %v4901 = vunpack.c.l.b16 %v817
  %v4902 = vunpack.c.h.b16 %v817
  %v4903 = vunpack.c.l.b16 %v818
  %v4904 = vunpack.c.h.b16 %v818
  %v4905 = vunpack.c.l.b16 %v819
  %v4906 = vunpack.c.h.b16 %v819
  %v4907 = vunpack.c.l.b16 %v820
  %v4908 = vunpack.c.h.b16 %v820
  %v4909 = vunpack.c.l.b16 %v821
  %v4910 = vunpack.c.h.b16 %v821
  %v4911 = vunpack.c.l.b16 %v822
  %v4912 = vunpack.c.h.b16 %v822
  %v4913 = vunpack.c.l.b16 %v823
  %v4914 = vunpack.c.h.b16 %v823
  %v4915 = vunpack.c.l.b16 %v824
  %v4916 = vunpack.c.h.b16 %v824
  %v4917 = vunpack.c.l.b16 %v825
  %v4918 = vunpack.c.h.b16 %v825
  %v4919 = vunpack.c.l.b16 %v826
  %v4920 = vunpack.c.h.b16 %v826
  %v4921 = vunpack.c.l.b16 %v827
  %v4922 = vunpack.c.h.b16 %v827
  %v4923 = vunpack.c.l.b16 %v828
  %v4924 = vunpack.c.h.b16 %v828
  %v4925 = vunpack.c.l.b16 %v829
  %v4926 = vunpack.c.h.b16 %v829
  %v4927 = vunpack.c.l.b16 %v830
  %v4928 = vunpack.c.h.b16 %v830
  %v4929 = vunpack.c.l.b16 %v831
  %v4930 = vunpack.c.h.b16 %v831
  %v4931 = vunpack.c.l.b16 %v832
  %v4932 = vunpack.c.h.b16 %v832
  %v4933 = vunpack.c.l.b16 %v833
  %v4934 = vunpack.c.h.b16 %v833
  %v4935 = vunpack.c.l.b16 %v834
  %v4936 = vunpack.c.h.b16 %v834
  %v4937 = vunpack.c.l.b16 %v835
  %v4938 = vunpack.c.h.b16 %v835
  %v4939 = vunpack.c.l.b16 %v836
  %v4940 = vunpack.c.h.b16 %v836
  %v4941 = vunpack.c.l.b16 %v837
  %v4942 = vunpack.c.h.b16 %v837
  %v4943 = vunpack.c.l.b16 %v838
  %v4944 = vunpack.c.h.b16 %v838
  %v4945 = vunpack.c.l.b16 %v839
  %v4946 = vunpack.c.h.b16 %v839
  %v4947 = vunpack.c.l.b16 %v840
  %v4948 = vunpack.c.h.b16 %v840
  %v4949 = vunpack.c.l.b16 %v841
  %v4950 = vunpack.c.h.b16 %v841
  %v4951 = vunpack.c.l.b16 %v842
  %v4952 = vunpack.c.h.b16 %v842
  %v4953 = vunpack.c.l.b16 %v843
  %v4954 = vunpack.c.h.b16 %v843
  %v4955 = vunpack.c.l.b16 %v844
  %v4956 = vunpack.c.h.b16 %v844
  %v4957 = vunpack.c.l.b16 %v845
  %v4958 = vunpack.c.h.b16 %v845
  %v4959 = vunpack.c.l.b16 %v846
  %v4960 = vunpack.c.h.b16 %v846
  %v4961 = vunpack.c.l.b16 %v847
  %v4962 = vunpack.c.h.b16 %v847
  %v4963 = vunpack.c.l.b16 %v848
  %v4964 = vunpack.c.h.b16 %v848
  %v4965 = vunpack.c.l.b16 %v849
  %v4966 = vunpack.c.h.b16 %v849
  %v4967 = vunpack.c.l.b16 %v850
  %v4968 = vunpack.c.h.b16 %v850
  %v4969 = vunpack.c.l.b16 %v851
  %v4970 = vunpack.c.h.b16 %v851
  %v4971 = vunpack.c.l.b16 %v852
  %v4972 = vunpack.c.h.b16 %v852
  %v4973 = vunpack.c.l.b16 %v853
  %v4974 = vunpack.c.h.b16 %v853
  %v4975 = vunpack.c.l.b16 %v854
  %v4976 = vunpack.c.h.b16 %v854
  %v4977 = vunpack.c.l.b16 %v855
  %v4978 = vunpack.c.h.b16 %v855
  %v4979 = vunpack.c.l.b16 %v856
  %v4980 = vunpack.c.h.b16 %v856
  %v4981 = vunpack.c.l.b16 %v857
  %v4982 = vunpack.c.h.b16 %v857
  %v4983 = vunpack.c.l.b16 %v858
  %v4984 = vunpack.c.h.b16 %v858
  %v4985 = vunpack.c.l.b16 %v859
  %v4986 = vunpack.c.h.b16 %v859
  %v4987 = vunpack.c.l.b16 %v860
  %v4988 = vunpack.c.h.b16 %v860
  %v4989 = vunpack.c.l.b16 %v861
  %v4990 = vunpack.c.h.b16 %v861
  %v4991 = vunpack.c.l.b16 %v862
  %v4992 = vunpack.c.h.b16 %v862
  %v4993 = vunpack.c.l.b16 %v863
  %v4994 = vunpack.c.h.b16 %v863
  %v4995 = vunpack.c.l.b16 %v864
  %v4996 = vunpack.c.h.b16 %v864
  %v4997 = vunpack.c.l.b16 %v865
  %v4998 = vunpack.c.h.b16 %v865
  %v4999 = vunpack.c.l.b16 %v866
  %v5000 = vunpack.c.h.b16 %v866
  %v5001 = vunpack.c.l.b16 %v867
  %v5002 = vunpack.c.h.b16 %v867
  %v5003 = vunpack.c.l.b16 %v868
  %v5004 = vunpack.c.h.b16 %v868
  %v5005 = vunpack.c.l.b16 %v869
  %v5006 = vunpack.c.h.b16 %v869
  %v5007 = vunpack.c.l.b16 %v870
  %v5008 = vunpack.c.h.b16 %v870
  %v5009 = vunpack.c.l.b16 %v871
  %v5010 = vunpack.c.h.b16 %v871
  %v5011 = vunpack.c.l.b16 %v872
  %v5012 = vunpack.c.h.b16 %v872
  %v5013 = vunpack.c.l.b16 %v873
  %v5014 = vunpack.c.h.b16 %v873
  %v5015 = vunpack.c.l.b16 %v874
  %v5016 = vunpack.c.h.b16 %v874
  %v5017 = vunpack.c.l.b16 %v875
  %v5018 = vunpack.c.h.b16 %v875
  %v5019 = vunpack.c.l.b16 %v876
  %v5020 = vunpack.c.h.b16 %v876
  %v5021 = vunpack.c.l.b16 %v877
  %v5022 = vunpack.c.h.b16 %v877
  %v5023 = vunpack.c.l.b16 %v878
  %v5024 = vunpack.c.h.b16 %v878
  %v5025 = vunpack.c.l.b16 %v879
  %v5026 = vunpack.c.h.b16 %v879
  %v5027 = vunpack.c.l.b16 %v880
  %v5028 = vunpack.c.h.b16 %v880
  %v5029 = vunpack.c.l.b16 %v881
  %v5030 = vunpack.c.h.b16 %v881
  %v5031 = vunpack.c.l.b16 %v882
  %v5032 = vunpack.c.h.b16 %v882
  %v5033 = vunpack.c.l.b16 %v883
  %v5034 = vunpack.c.h.b16 %v883
  %v5035 = vunpack.c.l.b16 %v884
  %v5036 = vunpack.c.h.b16 %v884
  %v5037 = vunpack.c.l.b16 %v885
  %v5038 = vunpack.c.h.b16 %v885
  %v5039 = vunpack.c.l.b16 %v886
  %v5040 = vunpack.c.h.b16 %v886
  %v5041 = vunpack.c.l.b16 %v887
  %v5042 = vunpack.c.h.b16 %v887
  %v5043 = vunpack.c.l.b16 %v888
  %v5044 = vunpack.c.h.b16 %v888
  %v5045 = vunpack.c.l.b16 %v889
  %v5046 = vunpack.c.h.b16 %v889
  %v5047 = vunpack.c.l.b16 %v890
  %v5048 = vunpack.c.h.b16 %v890
  %v5049 = vunpack.c.l.b16 %v891
  %v5050 = vunpack.c.h.b16 %v891
  %v5051 = vunpack.c.l.b16 %v892
  %v5052 = vunpack.c.h.b16 %v892
  %v5053 = vunpack.c.l.b16 %v893
  %v5054 = vunpack.c.h.b16 %v893
  %v5055 = vunpack.c.l.b16 %v894
  %v5056 = vunpack.c.h.b16 %v894
  %v5057 = vunpack.c.l.b16 %v895
  %v5058 = vunpack.c.h.b16 %v895
  %v5059 = vunpack.c.l.b16 %v896
  %v5060 = vunpack.c.h.b16 %v896
  %v5061 = vunpack.c.l.b16 %v897
  %v5062 = vunpack.c.h.b16 %v897
  %v5063 = vunpack.c.l.b16 %v898
  %v5064 = vunpack.c.h.b16 %v898
  %v5065 = vunpack.c.l.b16 %v899
  %v5066 = vunpack.c.h.b16 %v899
  %v5067 = vunpack.c.l.b16 %v900
  %v5068 = vunpack.c.h.b16 %v900
  %v5069 = vunpack.c.l.b16 %v901
  %v5070 = vunpack.c.h.b16 %v901
  %v5071 = vunpack.c.l.b16 %v902
  %v5072 = vunpack.c.h.b16 %v902
  %v5073 = vunpack.c.l.b16 %v903
  %v5074 = vunpack.c.h.b16 %v903
  %v5075 = vunpack.c.l.b16 %v904
  %v5076 = vunpack.c.h.b16 %v904
  %v5077 = vunpack.c.l.b16 %v905
  %v5078 = vunpack.c.h.b16 %v905
  %v5079 = vunpack.c.l.b16 %v906
  %v5080 = vunpack.c.h.b16 %v906
  %v5081 = vunpack.c.l.b16 %v907
  %v5082 = vunpack.c.h.b16 %v907
  %v5083 = vunpack.c.l.b16 %v908
  %v5084 = vunpack.c.h.b16 %v908
  %v5085 = vunpack.c.l.b16 %v909
  %v5086 = vunpack.c.h.b16 %v909
  %v5087 = vunpack.c.l.b16 %v910
  %v5088 = vunpack.c.h.b16 %v910
  %v5089 = vunpack.c.l.b16 %v911
  %v5090 = vunpack.c.h.b16 %v911
  %v5091 = vunpack.c.l.b16 %v912
  %v5092 = vunpack.c.h.b16 %v912
  %v5093 = vunpack.c.l.b16 %v913
  %v5094 = vunpack.c.h.b16 %v913
  %v5095 = vunpack.c.l.b16 %v914
  %v5096 = vunpack.c.h.b16 %v914
  %v5097 = vunpack.c.l.b16 %v915
  %v5098 = vunpack.c.h.b16 %v915
  %v5099 = vunpack.c.l.b16 %v916
  %v5100 = vunpack.c.h.b16 %v916
  %v5101 = vunpack.c.l.b16 %v917
  %v5102 = vunpack.c.h.b16 %v917
  %v5103 = vunpack.c.l.b16 %v918
  %v5104 = vunpack.c.h.b16 %v918
  %v5105 = vunpack.c.l.b16 %v919
  %v5106 = vunpack.c.h.b16 %v919
  %v5107 = vunpack.c.l.b16 %v920
  %v5108 = vunpack.c.h.b16 %v920
  %v5109 = vunpack.c.l.b16 %v921
  %v5110 = vunpack.c.h.b16 %v921
  %v5111 = vunpack.c.l.b16 %v922
  %v5112 = vunpack.c.h.b16 %v922
  %v5113 = vunpack.c.l.b16 %v923
  %v5114 = vunpack.c.h.b16 %v923
  %v5115 = vunpack.c.l.b16 %v924
  %v5116 = vunpack.c.h.b16 %v924
  %v5117 = vunpack.c.l.b16 %v925
  %v5118 = vunpack.c.h.b16 %v925
  %v5119 = vunpack.c.l.b16 %v926
  %v5120 = vunpack.c.h.b16 %v926
  %v5121 = vunpack.c.l.b16 %v927
  %v5122 = vunpack.c.h.b16 %v927
  %v5123 = vunpack.c.l.b16 %v928
  %v5124 = vunpack.c.h.b16 %v928
  %v5125 = vunpack.c.l.b16 %v929
  %v5126 = vunpack.c.h.b16 %v929
  %v5127 = vunpack.c.l.b16 %v930
  %v5128 = vunpack.c.h.b16 %v930
  %v5129 = vunpack.c.l.b16 %v931
  %v5130 = vunpack.c.h.b16 %v931
  %v5131 = vunpack.c.l.b16 %v932
  %v5132 = vunpack.c.h.b16 %v932
  %v5133 = vunpack.c.l.b16 %v933
  %v5134 = vunpack.c.h.b16 %v933
  %v5135 = vunpack.c.l.b16 %v934
  %v5136 = vunpack.c.h.b16 %v934
  %v5137 = vunpack.c.l.b16 %v935
  %v5138 = vunpack.c.h.b16 %v935
  %v5139 = vunpack.c.l.b16 %v936
  %v5140 = vunpack.c.h.b16 %v936
  %v5141 = vunpack.c.l.b16 %v937
  %v5142 = vunpack.c.h.b16 %v937
  %v5143 = vunpack.c.l.b16 %v938
  %v5144 = vunpack.c.h.b16 %v938
  %v5145 = vunpack.c.l.b16 %v939
  %v5146 = vunpack.c.h.b16 %v939
  %v5147 = vunpack.c.l.b16 %v940
  %v5148 = vunpack.c.h.b16 %v940
  %v5149 = vunpack.c.l.b16 %v941
  %v5150 = vunpack.c.h.b16 %v941
  %v5151 = vunpack.c.l.b16 %v942
  %v5152 = vunpack.c.h.b16 %v942
  %v5153 = vunpack.c.l.b16 %v943
  %v5154 = vunpack.c.h.b16 %v943
  %v5155 = vunpack.c.l.b16 %v944
  %v5156 = vunpack.c.h.b16 %v944
  %v5157 = vunpack.c.l.b16 %v945
  %v5158 = vunpack.c.h.b16 %v945
  %v5159 = vunpack.c.l.b16 %v946
  %v5160 = vunpack.c.h.b16 %v946
  %v5161 = vunpack.c.l.b16 %v947
  %v5162 = vunpack.c.h.b16 %v947
  %v5163 = vunpack.c.l.b16 %v948
  %v5164 = vunpack.c.h.b16 %v948
  %v5165 = vunpack.c.l.b16 %v949
  %v5166 = vunpack.c.h.b16 %v949
  %v5167 = vunpack.c.l.b16 %v950
  %v5168 = vunpack.c.h.b16 %v950
  %v5169 = vunpack.c.l.b16 %v951
  %v5170 = vunpack.c.h.b16 %v951
  %v5171 = vunpack.c.l.b16 %v952
  %v5172 = vunpack.c.h.b16 %v952
  %v5173 = vunpack.c.l.b16 %v953
  %v5174 = vunpack.c.h.b16 %v953
  %v5175 = vunpack.c.l.b16 %v954
  %v5176 = vunpack.c.h.b16 %v954
  %v5177 = vunpack.c.l.b16 %v955
  %v5178 = vunpack.c.h.b16 %v955
  %v5179 = vunpack.c.l.b16 %v956
  %v5180 = vunpack.c.h.b16 %v956
  %v5181 = vunpack.c.l.b16 %v957
  %v5182 = vunpack.c.h.b16 %v957
  %v5183 = vunpack.c.l.b16 %v958
  %v5184 = vunpack.c.h.b16 %v958
  %v5185 = vunpack.c.l.b16 %v959
  %v5186 = vunpack.c.h.b16 %v959
  %v5187 = vunpack.c.l.b16 %v960
  %v5188 = vunpack.c.h.b16 %v960
  %v5189 = vunpack.c.l.b16 %v961
  %v5190 = vunpack.c.h.b16 %v961
  %v5191 = vunpack.c.l.b16 %v962
  %v5192 = vunpack.c.h.b16 %v962
  %v5193 = vunpack.c.l.b16 %v963
  %v5194 = vunpack.c.h.b16 %v963
  %v5195 = vunpack.c.l.b16 %v964
  %v5196 = vunpack.c.h.b16 %v964
  %v5197 = vunpack.c.l.b16 %v965
  %v5198 = vunpack.c.h.b16 %v965
  %v5199 = vunpack.c.l.b16 %v966
  %v5200 = vunpack.c.h.b16 %v966
  %v5201 = vunpack.c.l.b16 %v967
  %v5202 = vunpack.c.h.b16 %v967
  %v5203 = vunpack.c.l.b16 %v968
  %v5204 = vunpack.c.h.b16 %v968
  %v5205 = vunpack.c.l.b16 %v969
  %v5206 = vunpack.c.h.b16 %v969
  %v5207 = vunpack.c.l.b16 %v970
  %v5208 = vunpack.c.h.b16 %v970
  %v5209 = vunpack.c.l.b16 %v971
  %v5210 = vunpack.c.h.b16 %v971
  %v5211 = vunpack.c.l.b16 %v972
  %v5212 = vunpack.c.h.b16 %v972
  %v5213 = vunpack.c.l.b16 %v973
  %v5214 = vunpack.c.h.b16 %v973
  %v5215 = vunpack.c.l.b16 %v974
  %v5216 = vunpack.c.h.b16 %v974
  %v5217 = vunpack.c.l.b16 %v975
  %v5218 = vunpack.c.h.b16 %v975
  %v5219 = vunpack.c.l.b16 %v976
  %v5220 = vunpack.c.h.b16 %v976
  %v5221 = vunpack.c.l.b16 %v977
  %v5222 = vunpack.c.h.b16 %v977
  %v5223 = vunpack.c.l.b16 %v978
  %v5224 = vunpack.c.h.b16 %v978
  %v5225 = vunpack.c.l.b16 %v979
  %v5226 = vunpack.c.h.b16 %v979
  %v5227 = vunpack.c.l.b16 %v980
  %v5228 = vunpack.c.h.b16 %v980
  %v5229 = vunpack.c.l.b16 %v981
  %v5230 = vunpack.c.h.b16 %v981
  %v5231 = vunpack.c.l.b16 %v982
  %v5232 = vunpack.c.h.b16 %v982
  %v5233 = vunpack.c.l.b16 %v983
  %v5234 = vunpack.c.h.b16 %v983
  %v5235 = vunpack.c.l.b16 %v984
  %v5236 = vunpack.c.h.b16 %v984
  %v5237 = vunpack.c.l.b16 %v985
  %v5238 = vunpack.c.h.b16 %v985
  %v5239 = vunpack.c.l.b16 %v986
  %v5240 = vunpack.c.h.b16 %v986
  %v5241 = vunpack.c.l.b16 %v987
  %v5242 = vunpack.c.h.b16 %v987
  %v5243 = vunpack.c.l.b16 %v988
  %v5244 = vunpack.c.h.b16 %v988
  %v5245 = vunpack.c.l.b16 %v989
  %v5246 = vunpack.c.h.b16 %v989
  %v5247 = vunpack.c.l.b16 %v990
  %v5248 = vunpack.c.h.b16 %v990
  %v5249 = vunpack.c.l.b16 %v991
  %v5250 = vunpack.c.h.b16 %v991
  %v5251 = vunpack.c.l.b16 %v992
  %v5252 = vunpack.c.h.b16 %v992
  %v5253 = vunpack.c.l.b16 %v993
  %v5254 = vunpack.c.h.b16 %v993
  %v5255 = vunpack.c.l.b16 %v994
  %v5256 = vunpack.c.h.b16 %v994
  %v5257 = vunpack.c.l.b16 %v995
  %v5258 = vunpack.c.h.b16 %v995
  %v5259 = vunpack.c.l.b16 %v996
  %v5260 = vunpack.c.h.b16 %v996
  %v5261 = vunpack.c.l.b16 %v997
  %v5262 = vunpack.c.h.b16 %v997
  %v5263 = vunpack.c.l.b16 %v998
  %v5264 = vunpack.c.h.b16 %v998
  %v5265 = vunpack.c.l.b16 %v999
  %v5266 = vunpack.c.h.b16 %v999
  %v5267 = vunpack.c.l.b16 %v1000
  %v5268 = vunpack.c.h.b16 %v1000
  %v5269 = vunpack.c.l.b16 %v1001
  %v5270 = vunpack.c.h.b16 %v1001
  %v5271 = vunpack.c.l.b16 %v1002
  %v5272 = vunpack.c.h.b16 %v1002
  %v5273 = vunpack.c.l.b16 %v1003
  %v5274 = vunpack.c.h.b16 %v1003
  %v5275 = vunpack.c.l.b16 %v1004
  %v5276 = vunpack.c.h.b16 %v1004
  %v5277 = vunpack.c.l.b16 %v1005
  %v5278 = vunpack.c.h.b16 %v1005
  %v5279 = vunpack.c.l.b16 %v1006
  %v5280 = vunpack.c.h.b16 %v1006
  %v5281 = vunpack.c.l.b16 %v1007
  %v5282 = vunpack.c.h.b16 %v1007
  %v5283 = vunpack.c.l.b16 %v1008
  %v5284 = vunpack.c.h.b16 %v1008
  %v5285 = vunpack.c.l.b16 %v1009
  %v5286 = vunpack.c.h.b16 %v1009
  %v5287 = vunpack.c.l.b16 %v1010
  %v5288 = vunpack.c.h.b16 %v1010
  %v5289 = vunpack.c.l.b16 %v1011
  %v5290 = vunpack.c.h.b16 %v1011
  %v5291 = vunpack.c.l.b16 %v1012
  %v5292 = vunpack.c.h.b16 %v1012
  %v5293 = vunpack.c.l.b16 %v1013
  %v5294 = vunpack.c.h.b16 %v1013
  %v5295 = vunpack.c.l.b16 %v1014
  %v5296 = vunpack.c.h.b16 %v1014
  %v5297 = vunpack.c.l.b16 %v1015
  %v5298 = vunpack.c.h.b16 %v1015
  %v5299 = vunpack.c.l.b16 %v1016
  %v5300 = vunpack.c.h.b16 %v1016
  %v5301 = vunpack.c.l.b16 %v1017
  %v5302 = vunpack.c.h.b16 %v1017
  %v5303 = vunpack.c.l.b16 %v1018
  %v5304 = vunpack.c.h.b16 %v1018
  %v5305 = vunpack.c.l.b16 %v1019
  %v5306 = vunpack.c.h.b16 %v1019
  %v5307 = vunpack.c.l.b16 %v1020
  %v5308 = vunpack.c.h.b16 %v1020
  %v5309 = vunpack.c.l.b16 %v1021
  %v5310 = vunpack.c.h.b16 %v1021
  %v5311 = vunpack.c.l.b16 %v1022
  %v5312 = vunpack.c.h.b16 %v1022
  %v5313 = vunpack.c.l.b16 %v1023
  %v5314 = vunpack.c.h.b16 %v1023
  %v5315 = vunpack.c.l.b16 %v1024
  %v5316 = vunpack.c.h.b16 %v1024
  %v5317 = vunpack.c.l.b16 %v1025
  %v5318 = vunpack.c.h.b16 %v1025
  %v5319 = vunpack.c.l.b16 %v1026
  %v5320 = vunpack.c.h.b16 %v1026
  %v5321 = vunpack.c.l.b16 %v1027
  %v5322 = vunpack.c.h.b16 %v1027
  %v5323 = vunpack.c.l.b16 %v1028
  %v5324 = vunpack.c.h.b16 %v1028
  %v5325 = vunpack.c.l.b16 %v1029
  %v5326 = vunpack.c.h.b16 %v1029
  %v5327 = vunpack.c.l.b16 %v1030
  %v5328 = vunpack.c.h.b16 %v1030
  %v5329 = vunpack.c.l.b16 %v1031
  %v5330 = vunpack.c.h.b16 %v1031
  %v5331 = vunpack.c.l.b16 %v1032
  %v5332 = vunpack.c.h.b16 %v1032
  %v5333 = vunpack.c.l.b16 %v1033
  %v5334 = vunpack.c.h.b16 %v1033
  %v5335 = vunpack.c.l.b16 %v1034
  %v5336 = vunpack.c.h.b16 %v1034
  %v5337 = vunpack.c.l.b16 %v1035
  %v5338 = vunpack.c.h.b16 %v1035
  %v5339 = vunpack.c.l.b16 %v1036
  %v5340 = vunpack.c.h.b16 %v1036
  %v5341 = vunpack.c.l.b16 %v1037
  %v5342 = vunpack.c.h.b16 %v1037
  %v5343 = vunpack.c.l.b16 %v1038
  %v5344 = vunpack.c.h.b16 %v1038
  %v5345 = vunpack.c.l.b16 %v1039
  %v5346 = vunpack.c.h.b16 %v1039
  %v5347 = vunpack.c.l.b16 %v1040
  %v5348 = vunpack.c.h.b16 %v1040
  %v5349 = vunpack.c.l.b16 %v1041
  %v5350 = vunpack.c.h.b16 %v1041
  %v5351 = vunpack.c.l.b16 %v1042
  %v5352 = vunpack.c.h.b16 %v1042
  %v5353 = vunpack.c.l.b16 %v1043
  %v5354 = vunpack.c.h.b16 %v1043
  %v5355 = vunpack.c.l.b16 %v1044
  %v5356 = vunpack.c.h.b16 %v1044
  %v5357 = vunpack.c.l.b16 %v1045
  %v5358 = vunpack.c.h.b16 %v1045
  %v5359 = vunpack.c.l.b16 %v1046
  %v5360 = vunpack.c.h.b16 %v1046
  %v5361 = vunpack.c.l.b16 %v1047
  %v5362 = vunpack.c.h.b16 %v1047
  %v5363 = vunpack.c.l.b16 %v1048
  %v5364 = vunpack.c.h.b16 %v1048
  %v5365 = vunpack.c.l.b16 %v1049
  %v5366 = vunpack.c.h.b16 %v1049
  %v5367 = vunpack.c.l.b16 %v1050
  %v5368 = vunpack.c.h.b16 %v1050
  %v5369 = vunpack.c.l.b16 %v1051
  %v5370 = vunpack.c.h.b16 %v1051
  %v5371 = vunpack.c.l.b16 %v1052
  %v5372 = vunpack.c.h.b16 %v1052
  %v5373 = vunpack.c.l.b16 %v1053
  %v5374 = vunpack.c.h.b16 %v1053
  %v5375 = vunpack.c.l.b16 %v1054
  %v5376 = vunpack.c.h.b16 %v1054
  %v5377 = vunpack.c.l.b16 %v1055
  %v5378 = vunpack.c.h.b16 %v1055
  %v5379 = vunpack.c.l.b16 %v1056
  %v5380 = vunpack.c.h.b16 %v1056
  %v5381 = vunpack.c.l.b16 %v1057
  %v5382 = vunpack.c.h.b16 %v1057
  %v5383 = vunpack.c.l.b16 %v1058
  %v5384 = vunpack.c.h.b16 %v1058
  %v5385 = vunpack.c.l.b16 %v1059
  %v5386 = vunpack.c.h.b16 %v1059
  %v5387 = vunpack.c.l.b16 %v1060
  %v5388 = vunpack.c.h.b16 %v1060
  %v5389 = vunpack.c.l.b16 %v1061
  %v5390 = vunpack.c.h.b16 %v1061
  %v5391 = vunpack.c.l.b16 %v1062
  %v5392 = vunpack.c.h.b16 %v1062
  %v5393 = vunpack.c.l.b16 %v1063
  %v5394 = vunpack.c.h.b16 %v1063
  %v5395 = vunpack.c.l.b16 %v1064
  %v5396 = vunpack.c.h.b16 %v1064
  %v5397 = vunpack.c.l.b16 %v1065
  %v5398 = vunpack.c.h.b16 %v1065
  %v5399 = vunpack.c.l.b16 %v1066
  %v5400 = vunpack.c.h.b16 %v1066
  %v5401 = vunpack.c.l.b16 %v1067
  %v5402 = vunpack.c.h.b16 %v1067
  %v5403 = vunpack.c.l.b16 %v1068
  %v5404 = vunpack.c.h.b16 %v1068
  %v5405 = vunpack.c.l.b16 %v1069
  %v5406 = vunpack.c.h.b16 %v1069
  %v5407 = vunpack.c.l.b16 %v1070
  %v5408 = vunpack.c.h.b16 %v1070
  %v5409 = vunpack.c.l.b16 %v1071
  %v5410 = vunpack.c.h.b16 %v1071
  %v5411 = vunpack.c.l.b16 %v1072
  %v5412 = vunpack.c.h.b16 %v1072
  %v5413 = vunpack.c.l.b16 %v1073
  %v5414 = vunpack.c.h.b16 %v1073
  %v5415 = vunpack.c.l.b16 %v1074
  %v5416 = vunpack.c.h.b16 %v1074
  %v5417 = vunpack.c.l.b16 %v1075
  %v5418 = vunpack.c.h.b16 %v1075
  %v5419 = vunpack.c.l.b16 %v1076
  %v5420 = vunpack.c.h.b16 %v1076
  %v5421 = vunpack.c.l.b16 %v1077
  %v5422 = vunpack.c.h.b16 %v1077
  %v5423 = vunpack.c.l.b16 %v1078
  %v5424 = vunpack.c.h.b16 %v1078
  %v5425 = vunpack.c.l.b16 %v1079
  %v5426 = vunpack.c.h.b16 %v1079
  %v5427 = vunpack.c.l.b16 %v1080
  %v5428 = vunpack.c.h.b16 %v1080
  %v5429 = vunpack.c.l.b16 %v1081
  %v5430 = vunpack.c.h.b16 %v1081
  %v5431 = vunpack.c.l.b16 %v1082
  %v5432 = vunpack.c.h.b16 %v1082
  %v5433 = vunpack.c.l.b16 %v1083
  %v5434 = vunpack.c.h.b16 %v1083
  %v5435 = vunpack.c.l.b16 %v1084
  %v5436 = vunpack.c.h.b16 %v1084
  %v5437 = vunpack.c.l.b16 %v1085
  %v5438 = vunpack.c.h.b16 %v1085
  %v5439 = vunpack.c.l.b16 %v1086
  %v5440 = vunpack.c.h.b16 %v1086
  %v5441 = vunpack.c.l.b16 %v1087
  %v5442 = vunpack.c.h.b16 %v1087
  %v5443 = vunpack.c.l.b16 %v1088
  %v5444 = vunpack.c.h.b16 %v1088
  %v5445 = vunpack.c.l.b16 %v1089
  %v5446 = vunpack.c.h.b16 %v1089
  %v5447 = vunpack.c.l.b16 %v1090
  %v5448 = vunpack.c.h.b16 %v1090
  %v5449 = vunpack.c.l.b16 %v1091
  %v5450 = vunpack.c.h.b16 %v1091
  %v5451 = vunpack.c.l.b16 %v1092
  %v5452 = vunpack.c.h.b16 %v1092
  %v5453 = vunpack.c.l.b16 %v1093
  %v5454 = vunpack.c.h.b16 %v1093
  %v5455 = vunpack.c.l.b16 %v1094
  %v5456 = vunpack.c.h.b16 %v1094
  %v5457 = vunpack.c.l.b16 %v1095
  %v5458 = vunpack.c.h.b16 %v1095
  %v5459 = vunpack.c.l.b16 %v1096
  %v5460 = vunpack.c.h.b16 %v1096
  %v5461 = vunpack.c.l.b16 %v1097
  %v5462 = vunpack.c.h.b16 %v1097
  %v5463 = vunpack.c.l.b16 %v1098
  %v5464 = vunpack.c.h.b16 %v1098
  %v5465 = vunpack.c.l.b16 %v1099
  %v5466 = vunpack.c.h.b16 %v1099
  %v5467 = vunpack.c.l.b16 %v1100
  %v5468 = vunpack.c.h.b16 %v1100
  %v5469 = vunpack.c.l.b16 %v1101
  %v5470 = vunpack.c.h.b16 %v1101
  %v5471 = vunpack.c.l.b16 %v1102
  %v5472 = vunpack.c.h.b16 %v1102
  %v5473 = vunpack.c.l.b16 %v1103
  %v5474 = vunpack.c.h.b16 %v1103
  %v5475 = vunpack.c.l.b16 %v1104
  %v5476 = vunpack.c.h.b16 %v1104
  %v5477 = vunpack.c.l.b16 %v1105
  %v5478 = vunpack.c.h.b16 %v1105
  %v5479 = vunpack.c.l.b16 %v1106
  %v5480 = vunpack.c.h.b16 %v1106
  %v5481 = vunpack.c.l.b16 %v1107
  %v5482 = vunpack.c.h.b16 %v1107
  %v5483 = vunpack.c.l.b16 %v1108
  %v5484 = vunpack.c.h.b16 %v1108
  %v5485 = vunpack.c.l.b16 %v1109
  %v5486 = vunpack.c.h.b16 %v1109
  %v5487 = vunpack.c.l.b16 %v1110
  %v5488 = vunpack.c.h.b16 %v1110
  %v5489 = vunpack.c.l.b16 %v1111
  %v5490 = vunpack.c.h.b16 %v1111
  %v5491 = vunpack.c.l.b16 %v1112
  %v5492 = vunpack.c.h.b16 %v1112
  %v5493 = vunpack.c.l.b16 %v1113
  %v5494 = vunpack.c.h.b16 %v1113
  %v5495 = vunpack.c.l.b16 %v1114
  %v5496 = vunpack.c.h.b16 %v1114
  %v5497 = vunpack.c.l.b16 %v1115
  %v5498 = vunpack.c.h.b16 %v1115
  %v5499 = vunpack.c.l.b16 %v1116
  %v5500 = vunpack.c.h.b16 %v1116
  %v5501 = vunpack.c.l.b16 %v1117
  %v5502 = vunpack.c.h.b16 %v1117
  %v5503 = vunpack.c.l.b16 %v1118
  %v5504 = vunpack.c.h.b16 %v1118
  %v5505 = vunpack.c.l.b16 %v1119
  %v5506 = vunpack.c.h.b16 %v1119
  %v5507 = vunpack.c.l.b16 %v1120
  %v5508 = vunpack.c.h.b16 %v1120
  %v5509 = vunpack.c.l.b16 %v1121
  %v5510 = vunpack.c.h.b16 %v1121
  %v5511 = vunpack.c.l.b16 %v1122
  %v5512 = vunpack.c.h.b16 %v1122
  %v5513 = vunpack.c.l.b16 %v1123
  %v5514 = vunpack.c.h.b16 %v1123
  %v5515 = vunpack.c.l.b16 %v1124
  %v5516 = vunpack.c.h.b16 %v1124
  %v5517 = vunpack.c.l.b16 %v1125
  %v5518 = vunpack.c.h.b16 %v1125
  %v5519 = vunpack.c.l.b16 %v1126
  %v5520 = vunpack.c.h.b16 %v1126
  %v5521 = vunpack.c.l.b16 %v1127
  %v5522 = vunpack.c.h.b16 %v1127
  %v5523 = vunpack.c.l.b16 %v1128
  %v5524 = vunpack.c.h.b16 %v1128
  %v5525 = vunpack.c.l.b16 %v1129
  %v5526 = vunpack.c.h.b16 %v1129
  %v5527 = vunpack.c.l.b16 %v1130
  %v5528 = vunpack.c.h.b16 %v1130
  %v5529 = vunpack.c.l.b16 %v1131
  %v5530 = vunpack.c.h.b16 %v1131
  %v5531 = vunpack.c.l.b16 %v1132
  %v5532 = vunpack.c.h.b16 %v1132
  %v5533 = vunpack.c.l.b16 %v1133
  %v5534 = vunpack.c.h.b16 %v1133
  %v5535 = vunpack.c.l.b16 %v1134
  %v5536 = vunpack.c.h.b16 %v1134
  %v5537 = vunpack.c.l.b16 %v1135
  %v5538 = vunpack.c.h.b16 %v1135
  %v5539 = vunpack.c.l.b16 %v1136
  %v5540 = vunpack.c.h.b16 %v1136
  %v5541 = vunpack.c.l.b16 %v1137
  %v5542 = vunpack.c.h.b16 %v1137
  %v5543 = vunpack.c.l.b16 %v1138
  %v5544 = vunpack.c.h.b16 %v1138
  %v5545 = vunpack.c.l.b16 %v1139
  %v5546 = vunpack.c.h.b16 %v1139
  %v5547 = vunpack.c.l.b16 %v1140
  %v5548 = vunpack.c.h.b16 %v1140
  %v5549 = vunpack.c.l.b16 %v1141
  %v5550 = vunpack.c.h.b16 %v1141
  %v5551 = vunpack.c.l.b16 %v1142
  %v5552 = vunpack.c.h.b16 %v1142
  %v5553 = vunpack.c.l.b16 %v1143
  %v5554 = vunpack.c.h.b16 %v1143
  %v5555 = vunpack.c.l.b16 %v1144
  %v5556 = vunpack.c.h.b16 %v1144
  %v5557 = vunpack.c.l.b16 %v1145
  %v5558 = vunpack.c.h.b16 %v1145
  %v5559 = vunpack.c.l.b16 %v1146
  %v5560 = vunpack.c.h.b16 %v1146
  %v5561 = vunpack.c.l.b16 %v1147
  %v5562 = vunpack.c.h.b16 %v1147
  %v5563 = vunpack.c.l.b16 %v1148
  %v5564 = vunpack.c.h.b16 %v1148
  %v5565 = vunpack.c.l.b16 %v1149
  %v5566 = vunpack.c.h.b16 %v1149
  %v5567 = vunpack.c.l.b16 %v1150
  %v5568 = vunpack.c.h.b16 %v1150
  %v5569 = vunpack.c.l.b16 %v1151
  %v5570 = vunpack.c.h.b16 %v1151
  %v5571 = vunpack.c.l.b16 %v1152
  %v5572 = vunpack.c.h.b16 %v1152
  %v5573 = vunpack.c.l.b16 %v1153
  %v5574 = vunpack.c.h.b16 %v1153
  %v5575 = vunpack.c.l.b16 %v1154
  %v5576 = vunpack.c.h.b16 %v1154
  %v5577 = vunpack.c.l.b16 %v1155
  %v5578 = vunpack.c.h.b16 %v1155
  %v5579 = vunpack.c.l.b16 %v1156
  %v5580 = vunpack.c.h.b16 %v1156
  %v5581 = vunpack.c.l.b16 %v1157
  %v5582 = vunpack.c.h.b16 %v1157
  %v5583 = vunpack.c.l.b16 %v1158
  %v5584 = vunpack.c.h.b16 %v1158
  %v5585 = vunpack.c.l.b16 %v1159
  %v5586 = vunpack.c.h.b16 %v1159
  %v5587 = vunpack.c.l.b16 %v1160
  %v5588 = vunpack.c.h.b16 %v1160
  %v5589 = vunpack.c.l.b16 %v1161
  %v5590 = vunpack.c.h.b16 %v1161
  %v5591 = vunpack.c.l.b16 %v1162
  %v5592 = vunpack.c.h.b16 %v1162
  %v5593 = vunpack.c.l.b16 %v1163
  %v5594 = vunpack.c.h.b16 %v1163
  %v5595 = vunpack.c.l.b16 %v1164
  %v5596 = vunpack.c.h.b16 %v1164
  %v5597 = vunpack.c.l.b16 %v1165
  %v5598 = vunpack.c.h.b16 %v1165
  %v5599 = vunpack.c.l.b16 %v1166
  %v5600 = vunpack.c.h.b16 %v1166
  %v5601 = vunpack.c.l.b16 %v1167
  %v5602 = vunpack.c.h.b16 %v1167
  %v5603 = vunpack.c.l.b16 %v1168
  %v5604 = vunpack.c.h.b16 %v1168
  %v5605 = vunpack.c.l.b16 %v1169
  %v5606 = vunpack.c.h.b16 %v1169
  %v5607 = vunpack.c.l.b16 %v1170
  %v5608 = vunpack.c.h.b16 %v1170
  %v5609 = vunpack.c.l.b16 %v1171
  %v5610 = vunpack.c.h.b16 %v1171
  %v5611 = vunpack.c.l.b16 %v1172
  %v5612 = vunpack.c.h.b16 %v1172
  %v5613 = vunpack.c.l.b16 %v1173
  %v5614 = vunpack.c.h.b16 %v1173
  %v5615 = vunpack.c.l.b16 %v1174
  %v5616 = vunpack.c.h.b16 %v1174
  %v5617 = vunpack.c.l.b16 %v1175
  %v5618 = vunpack.c.h.b16 %v1175
  %v5619 = vunpack.c.l.b16 %v1176
  %v5620 = vunpack.c.h.b16 %v1176
  %v5621 = vunpack.c.l.b16 %v1177
  %v5622 = vunpack.c.h.b16 %v1177
  %v5623 = vunpack.c.l.b16 %v1178
  %v5624 = vunpack.c.h.b16 %v1178
  %v5625 = vunpack.c.l.b16 %v1179
  %v5626 = vunpack.c.h.b16 %v1179
  %v5627 = vunpack.c.l.b16 %v1180
  %v5628 = vunpack.c.h.b16 %v1180
  %v5629 = vunpack.c.l.b16 %v1181
  %v5630 = vunpack.c.h.b16 %v1181
  %v5631 = vunpack.c.l.b16 %v1182
  %v5632 = vunpack.c.h.b16 %v1182
  %v5633 = vunpack.c.l.b16 %v1183
  %v5634 = vunpack.c.h.b16 %v1183
  %v5635 = vunpack.c.l.b16 %v1184
  %v5636 = vunpack.c.h.b16 %v1184
  %v5637 = vunpack.c.l.b16 %v1185
  %v5638 = vunpack.c.h.b16 %v1185
  %v5639 = vunpack.c.l.b16 %v1186
  %v5640 = vunpack.c.h.b16 %v1186
  %v5641 = vunpack.c.l.b16 %v1187
  %v5642 = vunpack.c.h.b16 %v1187
  %v5643 = vunpack.c.l.b16 %v1188
  %v5644 = vunpack.c.h.b16 %v1188
  %v5645 = vunpack.c.l.b16 %v1189
  %v5646 = vunpack.c.h.b16 %v1189
  %v5647 = vunpack.c.l.b16 %v1190
  %v5648 = vunpack.c.h.b16 %v1190
  %v5649 = vunpack.c.l.b16 %v1191
  %v5650 = vunpack.c.h.b16 %v1191
  %v5651 = vunpack.c.l.b16 %v1192
  %v5652 = vunpack.c.h.b16 %v1192
  %v5653 = vunpack.c.l.b16 %v1193
  %v5654 = vunpack.c.h.b16 %v1193
  %v5655 = vunpack.c.l.b16 %v1194
  %v5656 = vunpack.c.h.b16 %v1194
  %v5657 = vunpack.c.l.b16 %v1195
  %v5658 = vunpack.c.h.b16 %v1195
  %v5659 = vunpack.c.l.b16 %v1196
  %v5660 = vunpack.c.h.b16 %v1196
  %v5661 = vunpack.c.l.b16 %v1197
  %v5662 = vunpack.c.h.b16 %v1197
  %v5663 = vunpack.c.l.b16 %v1198
  %v5664 = vunpack.c.h.b16 %v1198
  %v5665 = vunpack.c.l.b16 %v1199
  %v5666 = vunpack.c.h.b16 %v1199
  %v5667 = vunpack.c.l.b16 %v1200
  %v5668 = vunpack.c.h.b16 %v1200
  %v5669 = vunpack.c.l.b16 %v1201
  %v5670 = vunpack.c.h.b16 %v1201
  %v5671 = vunpack.c.l.b16 %v1202
  %v5672 = vunpack.c.h.b16 %v1202
  %v5673 = vunpack.c.l.b16 %v1203
  %v5674 = vunpack.c.h.b16 %v1203
  %v5675 = vunpack.c.l.b16 %v1204
  %v5676 = vunpack.c.h.b16 %v1204
  %v5677 = vunpack.c.l.b16 %v1205
  %v5678 = vunpack.c.h.b16 %v1205
  %v5679 = vunpack.c.l.b16 %v1206
  %v5680 = vunpack.c.h.b16 %v1206
  %v5681 = vunpack.c.l.b16 %v1207
  %v5682 = vunpack.c.h.b16 %v1207
  %v5683 = vunpack.c.l.b16 %v1208
  %v5684 = vunpack.c.h.b16 %v1208
  %v5685 = vunpack.c.l.b16 %v1209
  %v5686 = vunpack.c.h.b16 %v1209
  %v5687 = vunpack.c.l.b16 %v1210
  %v5688 = vunpack.c.h.b16 %v1210
  %v5689 = vunpack.c.l.b16 %v1211
  %v5690 = vunpack.c.h.b16 %v1211
  %v5691 = vunpack.c.l.b16 %v1212
  %v5692 = vunpack.c.h.b16 %v1212
  %v5693 = vunpack.c.l.b16 %v1213
  %v5694 = vunpack.c.h.b16 %v1213
  %v5695 = vunpack.c.l.b16 %v1214
  %v5696 = vunpack.c.h.b16 %v1214
  %v5697 = vunpack.c.l.b16 %v1215
  %v5698 = vunpack.c.h.b16 %v1215
  %v5699 = vunpack.c.l.b16 %v1216
  %v5700 = vunpack.c.h.b16 %v1216
  %v5701 = vunpack.c.l.b16 %v1217
  %v5702 = vunpack.c.h.b16 %v1217
  %v5703 = vunpack.c.l.b16 %v1218
  %v5704 = vunpack.c.h.b16 %v1218
  %v5705 = vunpack.c.l.b16 %v1219
  %v5706 = vunpack.c.h.b16 %v1219
  %v5707 = vunpack.c.l.b16 %v1220
  %v5708 = vunpack.c.h.b16 %v1220
  %v5709 = vunpack.c.l.b16 %v1221
  %v5710 = vunpack.c.h.b16 %v1221
  %v5711 = vunpack.c.l.b16 %v1222
  %v5712 = vunpack.c.h.b16 %v1222
  %v5713 = vunpack.c.l.b16 %v1223
  %v5714 = vunpack.c.h.b16 %v1223
  %v5715 = vunpack.c.l.b16 %v1224
  %v5716 = vunpack.c.h.b16 %v1224
  %v5717 = vunpack.c.l.b16 %v1225
  %v5718 = vunpack.c.h.b16 %v1225
  %v5719 = vunpack.c.l.b16 %v1226
  %v5720 = vunpack.c.h.b16 %v1226
  %v5721 = vunpack.c.l.b16 %v1227
  %v5722 = vunpack.c.h.b16 %v1227
  %v5723 = vunpack.c.l.b16 %v1228
  %v5724 = vunpack.c.h.b16 %v1228
  %v5725 = vunpack.c.l.b16 %v1229
  %v5726 = vunpack.c.h.b16 %v1229
  %v5727 = vunpack.c.l.b16 %v1230
  %v5728 = vunpack.c.h.b16 %v1230
  %v5729 = vunpack.c.l.b16 %v1231
  %v5730 = vunpack.c.h.b16 %v1231
  %v5731 = vunpack.c.l.b16 %v1232
  %v5732 = vunpack.c.h.b16 %v1232
  %v5733 = vunpack.c.l.b16 %v1233
  %v5734 = vunpack.c.h.b16 %v1233
  %v5735 = vunpack.c.l.b16 %v1234
  %v5736 = vunpack.c.h.b16 %v1234
  %v5737 = vunpack.c.l.b16 %v1235
  %v5738 = vunpack.c.h.b16 %v1235
  %v5739 = vunpack.c.l.b16 %v1236
  %v5740 = vunpack.c.h.b16 %v1236
  %v5741 = vunpack.c.l.b16 %v1237
  %v5742 = vunpack.c.h.b16 %v1237
  %v5743 = vunpack.c.l.b16 %v1238
  %v5744 = vunpack.c.h.b16 %v1238
  %v5745 = vunpack.c.l.b16 %v1239
  %v5746 = vunpack.c.h.b16 %v1239
  %v5747 = vunpack.c.l.b16 %v1240
  %v5748 = vunpack.c.h.b16 %v1240
  %v5749 = vunpack.c.l.b16 %v1241
  %v5750 = vunpack.c.h.b16 %v1241
  %v5751 = vunpack.c.l.b16 %v1242
  %v5752 = vunpack.c.h.b16 %v1242
  %v5753 = vunpack.c.l.b16 %v1243
  %v5754 = vunpack.c.h.b16 %v1243
  %v5755 = vunpack.c.l.b16 %v1244
  %v5756 = vunpack.c.h.b16 %v1244
  %v5757 = vunpack.c.l.b16 %v1245
  %v5758 = vunpack.c.h.b16 %v1245
  %v5759 = vunpack.c.l.b16 %v1246
  %v5760 = vunpack.c.h.b16 %v1246
  %v5761 = vunpack.c.l.b16 %v1247
  %v5762 = vunpack.c.h.b16 %v1247
  %v5763 = vunpack.c.l.b16 %v1248
  %v5764 = vunpack.c.h.b16 %v1248
  %v5765 = vunpack.c.l.b16 %v1249
  %v5766 = vunpack.c.h.b16 %v1249
  %v5767 = vunpack.c.l.b16 %v1250
  %v5768 = vunpack.c.h.b16 %v1250
  %v5769 = vunpack.c.l.b16 %v1251
  %v5770 = vunpack.c.h.b16 %v1251
  %v5771 = vunpack.c.l.b16 %v1252
  %v5772 = vunpack.c.h.b16 %v1252
  %v5773 = vunpack.c.l.b16 %v1253
  %v5774 = vunpack.c.h.b16 %v1253
  %v5775 = vunpack.c.l.b16 %v1254
  %v5776 = vunpack.c.h.b16 %v1254
  %v5777 = vunpack.c.l.b16 %v1255
  %v5778 = vunpack.c.h.b16 %v1255
  %v5779 = vunpack.c.l.b16 %v1256
  %v5780 = vunpack.c.h.b16 %v1256
  %v5781 = vunpack.c.l.b16 %v1257
  %v5782 = vunpack.c.h.b16 %v1257
  %v5783 = vunpack.c.l.b16 %v1258
  %v5784 = vunpack.c.h.b16 %v1258
  %v5785 = vunpack.c.l.b16 %v1259
  %v5786 = vunpack.c.h.b16 %v1259
  %v5787 = vunpack.c.l.b16 %v1260
  %v5788 = vunpack.c.h.b16 %v1260
  %v5789 = vunpack.c.l.b16 %v1261
  %v5790 = vunpack.c.h.b16 %v1261
  %v5791 = vunpack.c.l.b16 %v1262
  %v5792 = vunpack.c.h.b16 %v1262
  %v5793 = vunpack.c.l.b16 %v1263
  %v5794 = vunpack.c.h.b16 %v1263
  %v5795 = vunpack.c.l.b16 %v1264
  %v5796 = vunpack.c.h.b16 %v1264
  %v5797 = vunpack.c.l.b16 %v1265
  %v5798 = vunpack.c.h.b16 %v1265
  %v5799 = vunpack.c.l.b16 %v1266
  %v5800 = vunpack.c.h.b16 %v1266
  %v5801 = vunpack.c.l.b16 %v1267
  %v5802 = vunpack.c.h.b16 %v1267
  %v5803 = vunpack.c.l.b16 %v1268
  %v5804 = vunpack.c.h.b16 %v1268
  %v5805 = vunpack.c.l.b16 %v1269
  %v5806 = vunpack.c.h.b16 %v1269
  %v5807 = vunpack.c.l.b16 %v1270
  %v5808 = vunpack.c.h.b16 %v1270
  %v5809 = vunpack.c.l.b16 %v1271
  %v5810 = vunpack.c.h.b16 %v1271
  %v5811 = vunpack.c.l.b16 %v1272
  %v5812 = vunpack.c.h.b16 %v1272
  %v5813 = vunpack.c.l.b16 %v1273
  %v5814 = vunpack.c.h.b16 %v1273
  %v5815 = vunpack.c.l.b16 %v1274
  %v5816 = vunpack.c.h.b16 %v1274
  %v5817 = vunpack.c.l.b16 %v1275
  %v5818 = vunpack.c.h.b16 %v1275
  %v5819 = vunpack.c.l.b16 %v1276
  %v5820 = vunpack.c.h.b16 %v1276
  %v5821 = vunpack.c.l.b16 %v1277
  %v5822 = vunpack.c.h.b16 %v1277
  %v5823 = vunpack.c.l.b16 %v1278
  %v5824 = vunpack.c.h.b16 %v1278
  %v5825 = vunpack.c.l.b16 %v1279
  %v5826 = vunpack.c.h.b16 %v1279
  %v5827 = vunpack.c.l.b16 %v1280
  %v5828 = vunpack.c.h.b16 %v1280
  %v5829 = vunpack.c.l.b16 %v1281
  %v5830 = vunpack.c.h.b16 %v1281
  %v5831 = vunpack.c.l.b16 %v1282
  %v5832 = vunpack.c.h.b16 %v1282
  %v5833 = vunpack.c.l.b16 %v1283
  %v5834 = vunpack.c.h.b16 %v1283
  %v5835 = vunpack.c.l.b16 %v1284
  %v5836 = vunpack.c.h.b16 %v1284
  %v5837 = vunpack.c.l.b16 %v1285
  %v5838 = vunpack.c.h.b16 %v1285
  %v5839 = vunpack.c.l.b16 %v1286
  %v5840 = vunpack.c.h.b16 %v1286
  %v5841 = vunpack.c.l.b16 %v1287
  %v5842 = vunpack.c.h.b16 %v1287
  %v5843 = vunpack.c.l.b16 %v1288
  %v5844 = vunpack.c.h.b16 %v1288
  %v5845 = vunpack.c.l.b16 %v1289
  %v5846 = vunpack.c.h.b16 %v1289
  %v5847 = vunpack.c.l.b16 %v1290
  %v5848 = vunpack.c.h.b16 %v1290
  %v5849 = vunpack.c.l.b16 %v1291
  %v5850 = vunpack.c.h.b16 %v1291
  %v5851 = vunpack.c.l.b16 %v1292
  %v5852 = vunpack.c.h.b16 %v1292
  %v5853 = vunpack.c.l.b16 %v1293
  %v5854 = vunpack.c.h.b16 %v1293
  %v5855 = vunpack.c.l.b16 %v1294
  %v5856 = vunpack.c.h.b16 %v1294
  %v5857 = vunpack.c.l.b16 %v1295
  %v5858 = vunpack.c.h.b16 %v1295
  %v5859 = vunpack.c.l.b16 %v1296
  %v5860 = vunpack.c.h.b16 %v1296
  %v5861 = vunpack.c.l.b16 %v1297
  %v5862 = vunpack.c.h.b16 %v1297
  %v5863 = vunpack.c.l.b16 %v1298
  %v5864 = vunpack.c.h.b16 %v1298
  %v5865 = vunpack.c.l.b16 %v1299
  %v5866 = vunpack.c.h.b16 %v1299
  %v5867 = vunpack.c.l.b16 %v1300
  %v5868 = vunpack.c.h.b16 %v1300
  %v5869 = vunpack.c.l.b16 %v1301
  %v5870 = vunpack.c.h.b16 %v1301
  %v5871 = vunpack.c.l.b16 %v1302
  %v5872 = vunpack.c.h.b16 %v1302
  %v5873 = vunpack.c.l.b16 %v1303
  %v5874 = vunpack.c.h.b16 %v1303
  %v5875 = vunpack.c.l.b16 %v1304
  %v5876 = vunpack.c.h.b16 %v1304
  %v5877 = vunpack.c.l.b16 %v1305
  %v5878 = vunpack.c.h.b16 %v1305
  %v5879 = vunpack.c.l.b16 %v1306
  %v5880 = vunpack.c.h.b16 %v1306
  %v5881 = vunpack.c.l.b16 %v1307
  %v5882 = vunpack.c.h.b16 %v1307
  %v5883 = vunpack.c.l.b16 %v1308
  %v5884 = vunpack.c.h.b16 %v1308
  %v5885 = vunpack.c.l.b16 %v1309
  %v5886 = vunpack.c.h.b16 %v1309
  %v5887 = vunpack.c.l.b16 %v1310
  %v5888 = vunpack.c.h.b16 %v1310
  %v5889 = vunpack.c.l.b16 %v1311
  %v5890 = vunpack.c.h.b16 %v1311
  %v5891 = vunpack.c.l.b16 %v1312
  %v5892 = vunpack.c.h.b16 %v1312
  %v5893 = vunpack.c.l.b16 %v1313
  %v5894 = vunpack.c.h.b16 %v1313
  %v5895 = vunpack.c.l.b16 %v1314
  %v5896 = vunpack.c.h.b16 %v1314
  %v5897 = vunpack.c.l.b16 %v1315
  %v5898 = vunpack.c.h.b16 %v1315
  %v5899 = vunpack.c.l.b16 %v1316
  %v5900 = vunpack.c.h.b16 %v1316
  %v5901 = vunpack.c.l.b16 %v1317
  %v5902 = vunpack.c.h.b16 %v1317
  %v5903 = vunpack.c.l.b16 %v1318
  %v5904 = vunpack.c.h.b16 %v1318
  %v5905 = vunpack.c.l.b16 %v1319
  %v5906 = vunpack.c.h.b16 %v1319
  %v5907 = vunpack.c.l.b16 %v1320
  %v5908 = vunpack.c.h.b16 %v1320
  %v5909 = vunpack.c.l.b16 %v1321
  %v5910 = vunpack.c.h.b16 %v1321
  %v5911 = vunpack.c.l.b16 %v1322
  %v5912 = vunpack.c.h.b16 %v1322
  %v5913 = vunpack.c.l.b16 %v1323
  %v5914 = vunpack.c.h.b16 %v1323
  %v5915 = vunpack.c.l.b16 %v1324
  %v5916 = vunpack.c.h.b16 %v1324
  %v5917 = vunpack.c.l.b16 %v1325
  %v5918 = vunpack.c.h.b16 %v1325
  %v5919 = vunpack.c.l.b16 %v1326
  %v5920 = vunpack.c.h.b16 %v1326
  %v5921 = vunpack.c.l.b16 %v1327
  %v5922 = vunpack.c.h.b16 %v1327
  %v5923 = vunpack.c.l.b16 %v1328
  %v5924 = vunpack.c.h.b16 %v1328
  %v5925 = vunpack.c.l.b16 %v1329
  %v5926 = vunpack.c.h.b16 %v1329
  %v5927 = vunpack.c.l.b16 %v1330
  %v5928 = vunpack.c.h.b16 %v1330
  %v5929 = vunpack.c.l.b16 %v1331
  %v5930 = vunpack.c.h.b16 %v1331
  %v5931 = vunpack.c.l.b16 %v1332
  %v5932 = vunpack.c.h.b16 %v1332
  %v5933 = vunpack.c.l.b16 %v1333
  %v5934 = vunpack.c.h.b16 %v1333
  %v5935 = vunpack.c.l.b16 %v1334
  %v5936 = vunpack.c.h.b16 %v1334
  %v5937 = vunpack.c.l.b16 %v1335
  %v5938 = vunpack.c.h.b16 %v1335
  %v5939 = vunpack.c.l.b16 %v1336
  %v5940 = vunpack.c.h.b16 %v1336
  %v5941 = vunpack.c.l.b16 %v1337
  %v5942 = vunpack.c.h.b16 %v1337
  %v5943 = vunpack.c.l.b16 %v1338
  %v5944 = vunpack.c.h.b16 %v1338
  %v5945 = vunpack.c.l.b16 %v1339
  %v5946 = vunpack.c.h.b16 %v1339
  %v5947 = vunpack.c.l.b16 %v1340
  %v5948 = vunpack.c.h.b16 %v1340
  %v5949 = vunpack.c.l.b16 %v1341
  %v5950 = vunpack.c.h.b16 %v1341
  %v5951 = vunpack.c.l.b16 %v1342
  %v5952 = vunpack.c.h.b16 %v1342
  %v5953 = vunpack.c.l.b16 %v1343
  %v5954 = vunpack.c.h.b16 %v1343
  %v5955 = vunpack.c.l.b16 %v1344
  %v5956 = vunpack.c.h.b16 %v1344
  %v5957 = vunpack.c.l.b16 %v1345
  %v5958 = vunpack.c.h.b16 %v1345
  %v5959 = vunpack.c.l.b16 %v1346
  %v5960 = vunpack.c.h.b16 %v1346
  %v5961 = vunpack.c.l.b16 %v1347
  %v5962 = vunpack.c.h.b16 %v1347
  %v5963 = vunpack.c.l.b16 %v1348
  %v5964 = vunpack.c.h.b16 %v1348
  %v5965 = vunpack.c.l.b16 %v1349
  %v5966 = vunpack.c.h.b16 %v1349
  %v5967 = vunpack.c.l.b16 %v1350
  %v5968 = vunpack.c.h.b16 %v1350
  %v5969 = vunpack.c.l.b16 %v1351
  %v5970 = vunpack.c.h.b16 %v1351
  %v5971 = vunpack.c.l.b16 %v1352
  %v5972 = vunpack.c.h.b16 %v1352
  %v5973 = vunpack.c.l.b16 %v1353
  %v5974 = vunpack.c.h.b16 %v1353
  %v5975 = vunpack.c.l.b16 %v1354
  %v5976 = vunpack.c.h.b16 %v1354
  %v5977 = vunpack.c.l.b16 %v1355
  %v5978 = vunpack.c.h.b16 %v1355
  %v5979 = vunpack.c.l.b16 %v1356
  %v5980 = vunpack.c.h.b16 %v1356
  %v5981 = vunpack.c.l.b16 %v1357
  %v5982 = vunpack.c.h.b16 %v1357
  %v5983 = vunpack.c.l.b16 %v1358
  %v5984 = vunpack.c.h.b16 %v1358
  %v5985 = vunpack.c.l.b16 %v1359
  %v5986 = vunpack.c.h.b16 %v1359
  %v5987 = vunpack.c.l.b16 %v1360
  %v5988 = vunpack.c.h.b16 %v1360
  %v5989 = vunpack.c.l.b16 %v1361
  %v5990 = vunpack.c.h.b16 %v1361
  %v5991 = vunpack.c.l.b16 %v1362
  %v5992 = vunpack.c.h.b16 %v1362
  %v5993 = vunpack.c.l.b16 %v1363
  %v5994 = vunpack.c.h.b16 %v1363
  %v5995 = vunpack.c.l.b16 %v1364
  %v5996 = vunpack.c.h.b16 %v1364
  %v5997 = vunpack.c.l.b16 %v1365
  %v5998 = vunpack.c.h.b16 %v1365
  %v5999 = vunpack.c.l.b16 %v1366
  %v6000 = vunpack.c.h.b16 %v1366
  %v6001 = vunpack.c.l.b16 %v1367
  %v6002 = vunpack.c.h.b16 %v1367
  %v6003 = vunpack.c.l.b16 %v1368
  %v6004 = vunpack.c.h.b16 %v1368
  %v6005 = vunpack.c.l.b16 %v1369
  %v6006 = vunpack.c.h.b16 %v1369
  %v6007 = vunpack.c.l.b16 %v1370
  %v6008 = vunpack.c.h.b16 %v1370
  %v6009 = vunpack.c.l.b16 %v1371
  %v6010 = vunpack.c.h.b16 %v1371
  %v6011 = vunpack.c.l.b16 %v1372
  %v6012 = vunpack.c.h.b16 %v1372
  %v6013 = vunpack.c.l.b16 %v1373
  %v6014 = vunpack.c.h.b16 %v1373
  %v6015 = vunpack.c.l.b16 %v1374
  %v6016 = vunpack.c.h.b16 %v1374
  %v6017 = vunpack.c.l.b16 %v1375
  %v6018 = vunpack.c.h.b16 %v1375
  %v6019 = vunpack.c.l.b16 %v1376
  %v6020 = vunpack.c.h.b16 %v1376
  %v6021 = vunpack.c.l.b16 %v1377
  %v6022 = vunpack.c.h.b16 %v1377
  %v6023 = vunpack.c.l.b16 %v1378
  %v6024 = vunpack.c.h.b16 %v1378
  %v6025 = vunpack.c.l.b16 %v1379
  %v6026 = vunpack.c.h.b16 %v1379
  %v6027 = vunpack.c.l.b16 %v1380
  %v6028 = vunpack.c.h.b16 %v1380
  %v6029 = vunpack.c.l.b16 %v1381
  %v6030 = vunpack.c.h.b16 %v1381
  %v6031 = vunpack.c.l.b16 %v1382
  %v6032 = vunpack.c.h.b16 %v1382
  %v6033 = vunpack.c.l.b16 %v1383
  %v6034 = vunpack.c.h.b16 %v1383
  %v6035 = vunpack.c.l.b16 %v1384
  %v6036 = vunpack.c.h.b16 %v1384
  %v6037 = vunpack.c.l.b16 %v1385
  %v6038 = vunpack.c.h.b16 %v1385
  %v6039 = vunpack.c.l.b16 %v1386
  %v6040 = vunpack.c.h.b16 %v1386
  %v6041 = vunpack.c.l.b16 %v1387
  %v6042 = vunpack.c.h.b16 %v1387
  %v6043 = vunpack.c.l.b16 %v1388
  %v6044 = vunpack.c.h.b16 %v1388
  %v6045 = vunpack.c.l.b16 %v1389
  %v6046 = vunpack.c.h.b16 %v1389
  %v6047 = vunpack.c.l.b16 %v1390
  %v6048 = vunpack.c.h.b16 %v1390
  %v6049 = vunpack.c.l.b16 %v1391
  %v6050 = vunpack.c.h.b16 %v1391
  %v6051 = vunpack.c.l.b16 %v1392
  %v6052 = vunpack.c.h.b16 %v1392
  %v6053 = vunpack.c.l.b16 %v1393
  %v6054 = vunpack.c.h.b16 %v1393
  %v6055 = vunpack.c.l.b16 %v1394
  %v6056 = vunpack.c.h.b16 %v1394
  %v6057 = vunpack.c.l.b16 %v1395
  %v6058 = vunpack.c.h.b16 %v1395
  %v6059 = vunpack.c.l.b16 %v1396
  %v6060 = vunpack.c.h.b16 %v1396
  %v6061 = vunpack.c.l.b16 %v1397
  %v6062 = vunpack.c.h.b16 %v1397
  %v6063 = vunpack.c.l.b16 %v1398
  %v6064 = vunpack.c.h.b16 %v1398
  %v6065 = vunpack.c.l.b16 %v1399
  %v6066 = vunpack.c.h.b16 %v1399
  %v6067 = vunpack.c.l.b16 %v1400
  %v6068 = vunpack.c.h.b16 %v1400
  %v6069 = vunpack.c.l.b16 %v1401
  %v6070 = vunpack.c.h.b16 %v1401
  %v6071 = vunpack.c.l.b16 %v1402
  %v6072 = vunpack.c.h.b16 %v1402
  %v6073 = vunpack.c.l.b16 %v1403
  %v6074 = vunpack.c.h.b16 %v1403
  %v6075 = vunpack.c.l.b16 %v1404
  %v6076 = vunpack.c.h.b16 %v1404
  %v6077 = vunpack.c.l.b16 %v1405
  %v6078 = vunpack.c.h.b16 %v1405
  %v6079 = vunpack.c.l.b16 %v1406
  %v6080 = vunpack.c.h.b16 %v1406
  %v6081 = vunpack.c.l.b16 %v1407
  %v6082 = vunpack.c.h.b16 %v1407
  %v6083 = vunpack.c.l.b16 %v1408
  %v6084 = vunpack.c.h.b16 %v1408
  %v6085 = vunpack.c.l.b16 %v1409
  %v6086 = vunpack.c.h.b16 %v1409
  %v6087 = vunpack.c.l.b16 %v1410
  %v6088 = vunpack.c.h.b16 %v1410
  %v6089 = vunpack.c.l.b16 %v1411
  %v6090 = vunpack.c.h.b16 %v1411
  %v6091 = vunpack.c.l.b16 %v1412
  %v6092 = vunpack.c.h.b16 %v1412
  %v6093 = vunpack.c.l.b16 %v1413
  %v6094 = vunpack.c.h.b16 %v1413
  %v6095 = vunpack.c.l.b16 %v1414
  %v6096 = vunpack.c.h.b16 %v1414
  %v6097 = vunpack.c.l.b16 %v1415
  %v6098 = vunpack.c.h.b16 %v1415
  %v6099 = vunpack.c.l.b16 %v1416
  %v6100 = vunpack.c.h.b16 %v1416
  %v6101 = vunpack.c.l.b16 %v1417
  %v6102 = vunpack.c.h.b16 %v1417
  %v6103 = vunpack.c.l.b16 %v1418
  %v6104 = vunpack.c.h.b16 %v1418
  %v6105 = vunpack.c.l.b16 %v1419
  %v6106 = vunpack.c.h.b16 %v1419
  %v6107 = vunpack.c.l.b16 %v1420
  %v6108 = vunpack.c.h.b16 %v1420
  %v6109 = vunpack.c.l.b16 %v1421
  %v6110 = vunpack.c.h.b16 %v1421
  %v6111 = vunpack.c.l.b16 %v1422
  %v6112 = vunpack.c.h.b16 %v1422
  %v6113 = vunpack.c.l.b16 %v1423
  %v6114 = vunpack.c.h.b16 %v1423
  %v6115 = vunpack.c.l.b16 %v1424
  %v6116 = vunpack.c.h.b16 %v1424
  %v6117 = vunpack.c.l.b16 %v1425
  %v6118 = vunpack.c.h.b16 %v1425
  %v6119 = vunpack.c.l.b16 %v1426
  %v6120 = vunpack.c.h.b16 %v1426
  %v6121 = vunpack.c.l.b16 %v1427
  %v6122 = vunpack.c.h.b16 %v1427
  %v6123 = vunpack.c.l.b16 %v1428
  %v6124 = vunpack.c.h.b16 %v1428
  %v6125 = vunpack.c.l.b16 %v1429
  %v6126 = vunpack.c.h.b16 %v1429
  %v6127 = vunpack.c.l.b16 %v1430
  %v6128 = vunpack.c.h.b16 %v1430
  %v6129 = vunpack.c.l.b16 %v1431
  %v6130 = vunpack.c.h.b16 %v1431
  %v6131 = vunpack.c.l.b16 %v1432
  %v6132 = vunpack.c.h.b16 %v1432
  %v6133 = vunpack.c.l.b16 %v1433
  %v6134 = vunpack.c.h.b16 %v1433
  %v6135 = vunpack.c.l.b16 %v1434
  %v6136 = vunpack.c.h.b16 %v1434
  %v6137 = vunpack.c.l.b16 %v1435
  %v6138 = vunpack.c.h.b16 %v1435
  %v6139 = vunpack.c.l.b16 %v1436
  %v6140 = vunpack.c.h.b16 %v1436
  %v6141 = vunpack.c.l.b16 %v1437
  %v6142 = vunpack.c.h.b16 %v1437
  %v6143 = vunpack.c.l.b16 %v1438
  %v6144 = vunpack.c.h.b16 %v1438
  %v6145 = vunpack.c.l.b16 %v1439
  %v6146 = vunpack.c.h.b16 %v1439
  %v6147 = vunpack.c.l.b16 %v1440
  %v6148 = vunpack.c.h.b16 %v1440
  %v6149 = vunpack.c.l.b16 %v1441
  %v6150 = vunpack.c.h.b16 %v1441
  %v6151 = vunpack.c.l.b16 %v1442
  %v6152 = vunpack.c.h.b16 %v1442
  %v6153 = vunpack.c.l.b16 %v1443
  %v6154 = vunpack.c.h.b16 %v1443
  %v6155 = vunpack.c.l.b16 %v1444
  %v6156 = vunpack.c.h.b16 %v1444
  %v6157 = vunpack.c.l.b16 %v1445
  %v6158 = vunpack.c.h.b16 %v1445
  %v6159 = vunpack.c.l.b16 %v1446
  %v6160 = vunpack.c.h.b16 %v1446
  %v6161 = vunpack.c.l.b16 %v1447
  %v6162 = vunpack.c.h.b16 %v1447
  %v6163 = vunpack.c.l.b16 %v1448
  %v6164 = vunpack.c.h.b16 %v1448
  %v6165 = vunpack.c.l.b16 %v1449
  %v6166 = vunpack.c.h.b16 %v1449
  %v6167 = vunpack.c.l.b16 %v1450
  %v6168 = vunpack.c.h.b16 %v1450
  %v6169 = vunpack.c.l.b16 %v1451
  %v6170 = vunpack.c.h.b16 %v1451
  %v6171 = vunpack.c.l.b16 %v1452
  %v6172 = vunpack.c.h.b16 %v1452
  %v6173 = vunpack.c.l.b16 %v1453
  %v6174 = vunpack.c.h.b16 %v1453
  %v6175 = vunpack.c.l.b16 %v1454
  %v6176 = vunpack.c.h.b16 %v1454
  %v6177 = vunpack.c.l.b16 %v1455
  %v6178 = vunpack.c.h.b16 %v1455
  %v6179 = vunpack.c.l.b16 %v1456
  %v6180 = vunpack.c.h.b16 %v1456
  %v6181 = vunpack.c.l.b16 %v1457
  %v6182 = vunpack.c.h.b16 %v1457
  %v6183 = vunpack.c.l.b16 %v1458
  %v6184 = vunpack.c.h.b16 %v1458
  %v6185 = vunpack.c.l.b16 %v1459
  %v6186 = vunpack.c.h.b16 %v1459
  %v6187 = vunpack.c.l.b16 %v1460
  %v6188 = vunpack.c.h.b16 %v1460
  %v6189 = vunpack.c.l.b16 %v1461
  %v6190 = vunpack.c.h.b16 %v1461
  %v6191 = vunpack.c.l.b16 %v1462
  %v6192 = vunpack.c.h.b16 %v1462
  %v6193 = vunpack.c.l.b16 %v1463
  %v6194 = vunpack.c.h.b16 %v1463
  %v6195 = vunpack.c.l.b16 %v1464
  %v6196 = vunpack.c.h.b16 %v1464
  %v6197 = vunpack.c.l.b16 %v1465
  %v6198 = vunpack.c.h.b16 %v1465
  %v6199 = vunpack.c.l.b16 %v1466
  %v6200 = vunpack.c.h.b16 %v1466
  %v6201 = vunpack.c.l.b16 %v1467
  %v6202 = vunpack.c.h.b16 %v1467
  %v6203 = vunpack.c.l.b16 %v1468
  %v6204 = vunpack.c.h.b16 %v1468
  %v6205 = vunpack.c.l.b16 %v1469
  %v6206 = vunpack.c.h.b16 %v1469
  %v6207 = vunpack.c.l.b16 %v1470
  %v6208 = vunpack.c.h.b16 %v1470
  %v6209 = vunpack.c.l.b16 %v1471
  %v6210 = vunpack.c.h.b16 %v1471
  %v6211 = vunpack.c.l.b16 %v1472
  %v6212 = vunpack.c.h.b16 %v1472
  %v6213 = vunpack.c.l.b16 %v1473
  %v6214 = vunpack.c.h.b16 %v1473
  %v6215 = vunpack.c.l.b16 %v1474
  %v6216 = vunpack.c.h.b16 %v1474
  %v6217 = vunpack.c.l.b16 %v1475
  %v6218 = vunpack.c.h.b16 %v1475
  %v6219 = vunpack.c.l.b16 %v1476
  %v6220 = vunpack.c.h.b16 %v1476
  %v6221 = vunpack.c.l.b16 %v1477
  %v6222 = vunpack.c.h.b16 %v1477
  %v6223 = vunpack.c.l.b16 %v1478
  %v6224 = vunpack.c.h.b16 %v1478
  %v6225 = vunpack.c.l.b16 %v1479
  %v6226 = vunpack.c.h.b16 %v1479
  %v6227 = vunpack.c.l.b16 %v1480
  %v6228 = vunpack.c.h.b16 %v1480
  %v6229 = vunpack.c.l.b16 %v1481
  %v6230 = vunpack.c.h.b16 %v1481
  %v6231 = vunpack.c.l.b16 %v1482
  %v6232 = vunpack.c.h.b16 %v1482
  %v6233 = vunpack.c.l.b16 %v1483
  %v6234 = vunpack.c.h.b16 %v1483
  %v6235 = vunpack.c.l.b16 %v1484
  %v6236 = vunpack.c.h.b16 %v1484
  %v6237 = vunpack.c.l.b16 %v1485
  %v6238 = vunpack.c.h.b16 %v1485
  %v6239 = vunpack.c.l.b16 %v1486
  %v6240 = vunpack.c.h.b16 %v1486
  %v6241 = vunpack.c.l.b16 %v1487
  %v6242 = vunpack.c.h.b16 %v1487
  %v6243 = vunpack.c.l.b16 %v1488
  %v6244 = vunpack.c.h.b16 %v1488
  %v6245 = vunpack.c.l.b16 %v1489
  %v6246 = vunpack.c.h.b16 %v1489
  %v6247 = vunpack.c.l.b16 %v1490
  %v6248 = vunpack.c.h.b16 %v1490
  %v6249 = vunpack.c.l.b16 %v1491
  %v6250 = vunpack.c.h.b16 %v1491
  %v6251 = vunpack.c.l.b16 %v1492
  %v6252 = vunpack.c.h.b16 %v1492
  %v6253 = vunpack.c.l.b16 %v1493
  %v6254 = vunpack.c.h.b16 %v1493
  %v6255 = vunpack.c.l.b16 %v1494
  %v6256 = vunpack.c.h.b16 %v1494
  %v6257 = vunpack.c.l.b16 %v1495
  %v6258 = vunpack.c.h.b16 %v1495
  %v6259 = vunpack.c.l.b16 %v1496
  %v6260 = vunpack.c.h.b16 %v1496
  %v6261 = vunpack.c.l.b16 %v1497
  %v6262 = vunpack.c.h.b16 %v1497
  %v6263 = vunpack.c.l.b16 %v1498
  %v6264 = vunpack.c.h.b16 %v1498
  %v6265 = vunpack.c.l.b16 %v1499
  %v6266 = vunpack.c.h.b16 %v1499
  %v6267 = vunpack.c.l.b16 %v1500
  %v6268 = vunpack.c.h.b16 %v1500
  %v6269 = vunpack.c.l.b16 %v1501
  %v6270 = vunpack.c.h.b16 %v1501
  %v6271 = vunpack.c.l.b16 %v1502
  %v6272 = vunpack.c.h.b16 %v1502
  %v6273 = vunpack.c.l.b16 %v1503
  %v6274 = vunpack.c.h.b16 %v1503
  %v6275 = vunpack.c.l.b16 %v1504
  %v6276 = vunpack.c.h.b16 %v1504
  %v6277 = vunpack.c.l.b16 %v1505
  %v6278 = vunpack.c.h.b16 %v1505
  %v6279 = vunpack.c.l.b16 %v1506
  %v6280 = vunpack.c.h.b16 %v1506
  %v6281 = vunpack.c.l.b16 %v1507
  %v6282 = vunpack.c.h.b16 %v1507
  %v6283 = vunpack.c.l.b16 %v1508
  %v6284 = vunpack.c.h.b16 %v1508
  %v6285 = vunpack.c.l.b16 %v1509
  %v6286 = vunpack.c.h.b16 %v1509
  %v6287 = vunpack.c.l.b16 %v1510
  %v6288 = vunpack.c.h.b16 %v1510
  %v6289 = vunpack.c.l.b16 %v1511
  %v6290 = vunpack.c.h.b16 %v1511
  %v6291 = vunpack.c.l.b16 %v1512
  %v6292 = vunpack.c.h.b16 %v1512
  %v6293 = vunpack.c.l.b16 %v1513
  %v6294 = vunpack.c.h.b16 %v1513
  %v6295 = vunpack.c.l.b16 %v1514
  %v6296 = vunpack.c.h.b16 %v1514
  %v6297 = vunpack.c.l.b16 %v1515
  %v6298 = vunpack.c.h.b16 %v1515
  %v6299 = vunpack.c.l.b16 %v1516
  %v6300 = vunpack.c.h.b16 %v1516
  %v6301 = vunpack.c.l.b16 %v1517
  %v6302 = vunpack.c.h.b16 %v1517
  %v6303 = vunpack.c.l.b16 %v1518
  %v6304 = vunpack.c.h.b16 %v1518
  %v6305 = vunpack.c.l.b16 %v1519
  %v6306 = vunpack.c.h.b16 %v1519
  %v6307 = vunpack.c.l.b16 %v1520
  %v6308 = vunpack.c.h.b16 %v1520
  %v6309 = vunpack.c.l.b16 %v1521
  %v6310 = vunpack.c.h.b16 %v1521
  %v6311 = vunpack.c.l.b16 %v1522
  %v6312 = vunpack.c.h.b16 %v1522
  %v6313 = vunpack.c.l.b16 %v1523
  %v6314 = vunpack.c.h.b16 %v1523
  %v6315 = vunpack.c.l.b16 %v1524
  %v6316 = vunpack.c.h.b16 %v1524
  %v6317 = vunpack.c.l.b16 %v1525
  %v6318 = vunpack.c.h.b16 %v1525
  %v6319 = vunpack.c.l.b16 %v1526
  %v6320 = vunpack.c.h.b16 %v1526
  %v6321 = vunpack.c.l.b16 %v1527
  %v6322 = vunpack.c.h.b16 %v1527
  %v6323 = vunpack.c.l.b16 %v1528
  %v6324 = vunpack.c.h.b16 %v1528
  %v6325 = vunpack.c.l.b16 %v1529
  %v6326 = vunpack.c.h.b16 %v1529
  %v6327 = vunpack.c.l.b16 %v1530
  %v6328 = vunpack.c.h.b16 %v1530
  %v6329 = vunpack.c.l.b16 %v1531
  %v6330 = vunpack.c.h.b16 %v1531
  %v6331 = vunpack.c.l.b16 %v1532
  %v6332 = vunpack.c.h.b16 %v1532
  %v6333 = vunpack.c.l.b16 %v1533
  %v6334 = vunpack.c.h.b16 %v1533
  %v6335 = vunpack.c.l.b16 %v1534
  %v6336 = vunpack.c.h.b16 %v1534
  %v6337 = vunpack.c.l.b16 %v1535
  %v6338 = vunpack.c.h.b16 %v1535
  %v6339 = vunpack.c.l.b16 %v1536
  %v6340 = vunpack.c.h.b16 %v1536
  %v6341 = vunpack.c.l.b16 %v1537
  %v6342 = vunpack.c.h.b16 %v1537
  %v6343 = vunpack.c.l.b16 %v1538
  %v6344 = vunpack.c.h.b16 %v1538
  %v6345 = vunpack.c.l.b16 %v1539
  %v6346 = vunpack.c.h.b16 %v1539
  %v6347 = vunpack.c.l.b16 %v1540
  %v6348 = vunpack.c.h.b16 %v1540
  %v6349 = vunpack.c.l.b16 %v1541
  %v6350 = vunpack.c.h.b16 %v1541
  %v6351 = vunpack.c.l.b16 %v1542
  %v6352 = vunpack.c.h.b16 %v1542
  %v6353 = vunpack.c.l.b16 %v1543
  %v6354 = vunpack.c.h.b16 %v1543
  %v6355 = vunpack.c.l.b16 %v1544
  %v6356 = vunpack.c.h.b16 %v1544
  %v6357 = vunpack.c.l.b16 %v1545
  %v6358 = vunpack.c.h.b16 %v1545
  %v6359 = vunpack.c.l.b16 %v1546
  %v6360 = vunpack.c.h.b16 %v1546
  %v6361 = vunpack.c.l.b16 %v1547
  %v6362 = vunpack.c.h.b16 %v1547
  %v6363 = vunpack.c.l.b16 %v1548
  %v6364 = vunpack.c.h.b16 %v1548
  %v6365 = vunpack.c.l.b16 %v1549
  %v6366 = vunpack.c.h.b16 %v1549
  %v6367 = vunpack.c.l.b16 %v1550
  %v6368 = vunpack.c.h.b16 %v1550
  %v6369 = vunpack.c.l.b16 %v1551
  %v6370 = vunpack.c.h.b16 %v1551
  %v6371 = vunpack.c.l.b16 %v1552
  %v6372 = vunpack.c.h.b16 %v1552
  %v6373 = vunpack.c.l.b16 %v1553
  %v6374 = vunpack.c.h.b16 %v1553
  %v6375 = vunpack.c.l.b16 %v1554
  %v6376 = vunpack.c.h.b16 %v1554
  %v6377 = vunpack.c.l.b16 %v1555
  %v6378 = vunpack.c.h.b16 %v1555
  %v6379 = vunpack.c.l.b16 %v1556
  %v6380 = vunpack.c.h.b16 %v1556
  %v6381 = vunpack.c.l.b16 %v1557
  %v6382 = vunpack.c.h.b16 %v1557
  %v6383 = vunpack.c.l.b16 %v1558
  %v6384 = vunpack.c.h.b16 %v1558
  %v6385 = vunpack.c.l.b16 %v1559
  %v6386 = vunpack.c.h.b16 %v1559
  %v6387 = vunpack.c.l.b16 %v1560
  %v6388 = vunpack.c.h.b16 %v1560
  %v6389 = vunpack.c.l.b16 %v1561
  %v6390 = vunpack.c.h.b16 %v1561
  %v6391 = vunpack.c.l.b16 %v1562
  %v6392 = vunpack.c.h.b16 %v1562
  %v6393 = vunpack.c.l.b16 %v1563
  %v6394 = vunpack.c.h.b16 %v1563
  %v6395 = vunpack.c.l.b16 %v1564
  %v6396 = vunpack.c.h.b16 %v1564
  %v6397 = vunpack.c.l.b16 %v1565
  %v6398 = vunpack.c.h.b16 %v1565
  %v6399 = vunpack.c.l.b16 %v1566
  %v6400 = vunpack.c.h.b16 %v1566
  %v6401 = vunpack.c.l.b16 %v1567
  %v6402 = vunpack.c.h.b16 %v1567
  %v6403 = vunpack.c.l.b16 %v1568
  %v6404 = vunpack.c.h.b16 %v1568
  %v6405 = vunpack.c.l.b16 %v1569
  %v6406 = vunpack.c.h.b16 %v1569
  %v6407 = vunpack.c.l.b16 %v1570
  %v6408 = vunpack.c.h.b16 %v1570
  %v6409 = vunpack.c.l.b16 %v1571
  %v6410 = vunpack.c.h.b16 %v1571
  %v6411 = vunpack.c.l.b16 %v1572
  %v6412 = vunpack.c.h.b16 %v1572
  %v6413 = vunpack.c.l.b16 %v1573
  %v6414 = vunpack.c.h.b16 %v1573
  %v6415 = vunpack.c.l.b16 %v1574
  %v6416 = vunpack.c.h.b16 %v1574
  %v6417 = vunpack.c.l.b16 %v1575
  %v6418 = vunpack.c.h.b16 %v1575
  %v6419 = vunpack.c.l.b16 %v1576
  %v6420 = vunpack.c.h.b16 %v1576
  %v6421 = vunpack.c.l.b16 %v1577
  %v6422 = vunpack.c.h.b16 %v1577
  %v6423 = vunpack.c.l.b16 %v1578
  %v6424 = vunpack.c.h.b16 %v1578
  %v6425 = vunpack.c.l.b16 %v1579
  %v6426 = vunpack.c.h.b16 %v1579
  %v6427 = vunpack.c.l.b16 %v1580
  %v6428 = vunpack.c.h.b16 %v1580
  %v6429 = vunpack.c.l.b16 %v1581
  %v6430 = vunpack.c.h.b16 %v1581
  %v6431 = vunpack.c.l.b16 %v1582
  %v6432 = vunpack.c.h.b16 %v1582
  %v6433 = vunpack.c.l.b16 %v1583
  %v6434 = vunpack.c.h.b16 %v1583
  %v6435 = vunpack.c.l.b16 %v1584
  %v6436 = vunpack.c.h.b16 %v1584
  %v6437 = vunpack.c.l.b16 %v1585
  %v6438 = vunpack.c.h.b16 %v1585
  %v6439 = vunpack.c.l.b16 %v1586
  %v6440 = vunpack.c.h.b16 %v1586
  %v6441 = vunpack.c.l.b16 %v1587
  %v6442 = vunpack.c.h.b16 %v1587
  %v6443 = vunpack.c.l.b16 %v1588
  %v6444 = vunpack.c.h.b16 %v1588
  %v6445 = vunpack.c.l.b16 %v1589
  %v6446 = vunpack.c.h.b16 %v1589
  %v6447 = vunpack.c.l.b16 %v1590
  %v6448 = vunpack.c.h.b16 %v1590
  %v6449 = vunpack.c.l.b16 %v1591
  %v6450 = vunpack.c.h.b16 %v1591
  %v6451 = vunpack.c.l.b16 %v1592
  %v6452 = vunpack.c.h.b16 %v1592
  %v6453 = vunpack.c.l.b16 %v1593
  %v6454 = vunpack.c.h.b16 %v1593
  %v6455 = vunpack.c.l.b16 %v1594
  %v6456 = vunpack.c.h.b16 %v1594
  %v6457 = vunpack.c.l.b16 %v1595
  %v6458 = vunpack.c.h.b16 %v1595
  %v6459 = vunpack.c.l.b16 %v1596
  %v6460 = vunpack.c.h.b16 %v1596
  %v6461 = vunpack.c.l.b16 %v1597
  %v6462 = vunpack.c.h.b16 %v1597
  %v6463 = vunpack.c.l.b16 %v1598
  %v6464 = vunpack.c.h.b16 %v1598
  %v6465 = vunpack.c.l.b16 %v1599
  %v6466 = vunpack.c.h.b16 %v1599
  %v6467 = vunpack.c.l.b16 %v1600
  %v6468 = vunpack.c.h.b16 %v1600
  %v6469 = vunpack.c.l.b16 %v1601
  %v6470 = vunpack.c.h.b16 %v1601
  %v6471 = vunpack.c.l.b16 %v1602
  %v6472 = vunpack.c.h.b16 %v1602
  %v6473 = vunpack.c.l.b16 %v1603
  %v6474 = vunpack.c.h.b16 %v1603
  %v6475 = vunpack.c.l.b16 %v1604
  %v6476 = vunpack.c.h.b16 %v1604
  %v6477 = vunpack.c.l.b16 %v1605
  %v6478 = vunpack.c.h.b16 %v1605
  %v6479 = vunpack.c.l.b16 %v1606
  %v6480 = vunpack.c.h.b16 %v1606
  %v6481 = vunpack.c.l.b16 %v1607
  %v6482 = vunpack.c.h.b16 %v1607
  %v6483 = vunpack.c.l.b16 %v1608
  %v6484 = vunpack.c.h.b16 %v1608
  %v6485 = vunpack.c.l.b16 %v1609
  %v6486 = vunpack.c.h.b16 %v1609
  %v6487 = vunpack.c.l.b16 %v1610
  %v6488 = vunpack.c.h.b16 %v1610
  %v6489 = vunpack.c.l.b16 %v1611
  %v6490 = vunpack.c.h.b16 %v1611
  %v6491 = vunpack.c.l.b16 %v1612
  %v6492 = vunpack.c.h.b16 %v1612
  %v6493 = vunpack.c.l.b16 %v1613
  %v6494 = vunpack.c.h.b16 %v1613
  %v6495 = vunpack.c.l.b16 %v1614
  %v6496 = vunpack.c.h.b16 %v1614
  %v6497 = vunpack.c.l.b16 %v1615
  %v6498 = vunpack.c.h.b16 %v1615
  %v6499 = vunpack.c.l.b16 %v1616
  %v6500 = vunpack.c.h.b16 %v1616
  %v6501 = vunpack.c.l.b16 %v1617
  %v6502 = vunpack.c.h.b16 %v1617
  %v6503 = vunpack.c.l.b16 %v1618
  %v6504 = vunpack.c.h.b16 %v1618
  %v6505 = vunpack.c.l.b16 %v1619
  %v6506 = vunpack.c.h.b16 %v1619
  %v6507 = vunpack.c.l.b16 %v1620
  %v6508 = vunpack.c.h.b16 %v1620
  %v6509 = vunpack.c.l.b16 %v1621
  %v6510 = vunpack.c.h.b16 %v1621
  %v6511 = vunpack.c.l.b16 %v1622
  %v6512 = vunpack.c.h.b16 %v1622
  %v6513 = vunpack.c.l.b16 %v1623
  %v6514 = vunpack.c.h.b16 %v1623
  %v6515 = vunpack.c.l.b16 %v1624
  %v6516 = vunpack.c.h.b16 %v1624
  %v6517 = vunpack.c.l.b16 %v1625
  %v6518 = vunpack.c.h.b16 %v1625
  %v6519 = vunpack.c.l.b16 %v1626
  %v6520 = vunpack.c.h.b16 %v1626
  %v6521 = vunpack.c.l.b16 %v1627
  %v6522 = vunpack.c.h.b16 %v1627
  %v6523 = vunpack.c.l.b16 %v1628
  %v6524 = vunpack.c.h.b16 %v1628
  %v6525 = vunpack.c.l.b16 %v1629
  %v6526 = vunpack.c.h.b16 %v1629
  %v6527 = vunpack.c.l.b16 %v1630
  %v6528 = vunpack.c.h.b16 %v1630
  %v6529 = vunpack.c.l.b16 %v1631
  %v6530 = vunpack.c.h.b16 %v1631
  %v6531 = vunpack.c.l.b16 %v1632
  %v6532 = vunpack.c.h.b16 %v1632
  %v6533 = vunpack.c.l.b16 %v1633
  %v6534 = vunpack.c.h.b16 %v1633
  %v6535 = vunpack.c.l.b16 %v1634
  %v6536 = vunpack.c.h.b16 %v1634
  %v6537 = vunpack.c.l.b16 %v1635
  %v6538 = vunpack.c.h.b16 %v1635
  %v6539 = vunpack.c.l.b16 %v1636
  %v6540 = vunpack.c.h.b16 %v1636
  %v6541 = vunpack.c.l.b16 %v1637
  %v6542 = vunpack.c.h.b16 %v1637
  %v6543 = vunpack.c.l.b16 %v1638
  %v6544 = vunpack.c.h.b16 %v1638
  %v6545 = vpack.c.b16 %v3353, %v3345
  %v6546 = vpack.c.b16 %v3354, %v3346
  %v6547 = vpack.c.b16 %v3355, %v3347
  %v6548 = vpack.c.b16 %v3356, %v3348
  %v6549 = vpack.c.b16 %v3357, %v3349
  %v6550 = vpack.c.b16 %v3358, %v3350
  %v6551 = vpack.c.b16 %v3359, %v3351
  %v6552 = vpack.c.b16 %v3360, %v3352
  %v6553 = vpack.c.b16 %v3369, %v3361
  %v6554 = vpack.c.b16 %v3370, %v3362
  %v6555 = vpack.c.b16 %v3371, %v3363
  %v6556 = vpack.c.b16 %v3372, %v3364
  %v6557 = vpack.c.b16 %v3373, %v3365
  %v6558 = vpack.c.b16 %v3374, %v3366
  %v6559 = vpack.c.b16 %v3375, %v3367
  %v6560 = vpack.c.b16 %v3376, %v3368
  %v6561 = vpack.c.b16 %v3385, %v3377
  %v6562 = vpack.c.b16 %v3386, %v3378
  %v6563 = vpack.c.b16 %v3387, %v3379
  %v6564 = vpack.c.b16 %v3388, %v3380
  %v6565 = vpack.c.b16 %v3389, %v3381
  %v6566 = vpack.c.b16 %v3390, %v3382
  %v6567 = vpack.c.b16 %v3391, %v3383
  %v6568 = vpack.c.b16 %v3392, %v3384
  %v6569 = vpack.c.b16 %v3401, %v3393
  %v6570 = vpack.c.b16 %v3402, %v3394
  %v6571 = vpack.c.b16 %v3403, %v3395
  %v6572 = vpack.c.b16 %v3404, %v3396
  %v6573 = vpack.c.b16 %v3405, %v3397
  %v6574 = vpack.c.b16 %v3406, %v3398
  %v6575 = vpack.c.b16 %v3407, %v3399
  %v6576 = vpack.c.b16 %v3408, %v3400
  %v6577 = vpack.c.b16 %v3417, %v3409
  %v6578 = vpack.c.b16 %v3418, %v3410
  %v6579 = vpack.c.b16 %v3419, %v3411
  %v6580 = vpack.c.b16 %v3420, %v3412
  %v6581 = vpack.c.b16 %v3421, %v3413
  %v6582 = vpack.c.b16 %v3422, %v3414
  %v6583 = vpack.c.b16 %v3423, %v3415
  %v6584 = vpack.c.b16 %v3424, %v3416
  %v6585 = vpack.c.b16 %v3433, %v3425
  %v6586 = vpack.c.b16 %v3434, %v3426
  %v6587 = vpack.c.b16 %v3435, %v3427
  %v6588 = vpack.c.b16 %v3436, %v3428
  %v6589 = vpack.c.b16 %v3437, %v3429
  %v6590 = vpack.c.b16 %v3438, %v3430
  %v6591 = vpack.c.b16 %v3439, %v3431
  %v6592 = vpack.c.b16 %v3440, %v3432
  %v6593 = vpack.c.b16 %v3449, %v3441
  %v6594 = vpack.c.b16 %v3450, %v3442
  %v6595 = vpack.c.b16 %v3451, %v3443
  %v6596 = vpack.c.b16 %v3452, %v3444
  %v6597 = vpack.c.b16 %v3453, %v3445
  %v6598 = vpack.c.b16 %v3454, %v3446
  %v6599 = vpack.c.b16 %v3455, %v3447
  %v6600 = vpack.c.b16 %v3456, %v3448
  %v6601 = vpack.c.b16 %v3465, %v3457
  %v6602 = vpack.c.b16 %v3466, %v3458
  %v6603 = vpack.c.b16 %v3467, %v3459
  %v6604 = vpack.c.b16 %v3468, %v3460
  %v6605 = vpack.c.b16 %v3469, %v3461
  %v6606 = vpack.c.b16 %v3470, %v3462
  %v6607 = vpack.c.b16 %v3471, %v3463
  %v6608 = vpack.c.b16 %v3472, %v3464
  %v6609 = vpack.c.b16 %v3481, %v3473
  %v6610 = vpack.c.b16 %v3482, %v3474
  %v6611 = vpack.c.b16 %v3483, %v3475
  %v6612 = vpack.c.b16 %v3484, %v3476
  %v6613 = vpack.c.b16 %v3485, %v3477
  %v6614 = vpack.c.b16 %v3486, %v3478
  %v6615 = vpack.c.b16 %v3487, %v3479
  %v6616 = vpack.c.b16 %v3488, %v3480
  %v6617 = vpack.c.b16 %v3497, %v3489
  %v6618 = vpack.c.b16 %v3498, %v3490
  %v6619 = vpack.c.b16 %v3499, %v3491
  %v6620 = vpack.c.b16 %v3500, %v3492
  %v6621 = vpack.c.b16 %v3501, %v3493
  %v6622 = vpack.c.b16 %v3502, %v3494
  %v6623 = vpack.c.b16 %v3503, %v3495
  %v6624 = vpack.c.b16 %v3504, %v3496
  %v6625 = vpack.c.b16 %v3513, %v3505
  %v6626 = vpack.c.b16 %v3514, %v3506
  %v6627 = vpack.c.b16 %v3515, %v3507
  %v6628 = vpack.c.b16 %v3516, %v3508
  %v6629 = vpack.c.b16 %v3517, %v3509
  %v6630 = vpack.c.b16 %v3518, %v3510
  %v6631 = vpack.c.b16 %v3519, %v3511
  %v6632 = vpack.c.b16 %v3520, %v3512
  %v6633 = vpack.c.b16 %v3529, %v3521
  %v6634 = vpack.c.b16 %v3530, %v3522
  %v6635 = vpack.c.b16 %v3531, %v3523
  %v6636 = vpack.c.b16 %v3532, %v3524
  %v6637 = vpack.c.b16 %v3533, %v3525
  %v6638 = vpack.c.b16 %v3534, %v3526
  %v6639 = vpack.c.b16 %v3535, %v3527
  %v6640 = vpack.c.b16 %v3536, %v3528
  %v6641 = vpack.c.b16 %v3545, %v3537
  %v6642 = vpack.c.b16 %v3546, %v3538
  %v6643 = vpack.c.b16 %v3547, %v3539
  %v6644 = vpack.c.b16 %v3548, %v3540
  %v6645 = vpack.c.b16 %v3549, %v3541
  %v6646 = vpack.c.b16 %v3550, %v3542
  %v6647 = vpack.c.b16 %v3551, %v3543
  %v6648 = vpack.c.b16 %v3552, %v3544
  %v6649 = vpack.c.b16 %v3561, %v3553
  %v6650 = vpack.c.b16 %v3562, %v3554
  %v6651 = vpack.c.b16 %v3563, %v3555
  %v6652 = vpack.c.b16 %v3564, %v3556
  %v6653 = vpack.c.b16 %v3565, %v3557
  %v6654 = vpack.c.b16 %v3566, %v3558
  %v6655 = vpack.c.b16 %v3567, %v3559
  %v6656 = vpack.c.b16 %v3568, %v3560
  %v6657 = vpack.c.b16 %v3577, %v3569
  %v6658 = vpack.c.b16 %v3578, %v3570
  %v6659 = vpack.c.b16 %v3579, %v3571
  %v6660 = vpack.c.b16 %v3580, %v3572
  %v6661 = vpack.c.b16 %v3581, %v3573
  %v6662 = vpack.c.b16 %v3582, %v3574
  %v6663 = vpack.c.b16 %v3583, %v3575
  %v6664 = vpack.c.b16 %v3584, %v3576
  %v6665 = vpack.c.b16 %v3593, %v3585
  %v6666 = vpack.c.b16 %v3594, %v3586
  %v6667 = vpack.c.b16 %v3595, %v3587
  %v6668 = vpack.c.b16 %v3596, %v3588
  %v6669 = vpack.c.b16 %v3597, %v3589
  %v6670 = vpack.c.b16 %v3598, %v3590
  %v6671 = vpack.c.b16 %v3599, %v3591
  %v6672 = vpack.c.b16 %v3600, %v3592
  %v6673 = vpack.c.b16 %v3609, %v3601
  %v6674 = vpack.c.b16 %v3610, %v3602
  %v6675 = vpack.c.b16 %v3611, %v3603
  %v6676 = vpack.c.b16 %v3612, %v3604
  %v6677 = vpack.c.b16 %v3613, %v3605
  %v6678 = vpack.c.b16 %v3614, %v3606
  %v6679 = vpack.c.b16 %v3615, %v3607
  %v6680 = vpack.c.b16 %v3616, %v3608
  %v6681 = vpack.c.b16 %v3625, %v3617
  %v6682 = vpack.c.b16 %v3626, %v3618
  %v6683 = vpack.c.b16 %v3627, %v3619
  %v6684 = vpack.c.b16 %v3628, %v3620
  %v6685 = vpack.c.b16 %v3629, %v3621
  %v6686 = vpack.c.b16 %v3630, %v3622
  %v6687 = vpack.c.b16 %v3631, %v3623
  %v6688 = vpack.c.b16 %v3632, %v3624
  %v6689 = vpack.c.b16 %v3641, %v3633
  %v6690 = vpack.c.b16 %v3642, %v3634
  %v6691 = vpack.c.b16 %v3643, %v3635
  %v6692 = vpack.c.b16 %v3644, %v3636
  %v6693 = vpack.c.b16 %v3645, %v3637
  %v6694 = vpack.c.b16 %v3646, %v3638
  %v6695 = vpack.c.b16 %v3647, %v3639
  %v6696 = vpack.c.b16 %v3648, %v3640
  %v6697 = vpack.c.b16 %v3657, %v3649
  %v6698 = vpack.c.b16 %v3658, %v3650
  %v6699 = vpack.c.b16 %v3659, %v3651
  %v6700 = vpack.c.b16 %v3660, %v3652
  %v6701 = vpack.c.b16 %v3661, %v3653
  %v6702 = vpack.c.b16 %v3662, %v3654
  %v6703 = vpack.c.b16 %v3663, %v3655
  %v6704 = vpack.c.b16 %v3664, %v3656
  %v6705 = vpack.c.b16 %v3673, %v3665
  %v6706 = vpack.c.b16 %v3674, %v3666
  %v6707 = vpack.c.b16 %v3675, %v3667
  %v6708 = vpack.c.b16 %v3676, %v3668
  %v6709 = vpack.c.b16 %v3677, %v3669
  %v6710 = vpack.c.b16 %v3678, %v3670
  %v6711 = vpack.c.b16 %v3679, %v3671
  %v6712 = vpack.c.b16 %v3680, %v3672
  %v6713 = vpack.c.b16 %v3689, %v3681
  %v6714 = vpack.c.b16 %v3690, %v3682
  %v6715 = vpack.c.b16 %v3691, %v3683
  %v6716 = vpack.c.b16 %v3692, %v3684
  %v6717 = vpack.c.b16 %v3693, %v3685
  %v6718 = vpack.c.b16 %v3694, %v3686
  %v6719 = vpack.c.b16 %v3695, %v3687
  %v6720 = vpack.c.b16 %v3696, %v3688
  %v6721 = vpack.c.b16 %v3705, %v3697
  %v6722 = vpack.c.b16 %v3706, %v3698
  %v6723 = vpack.c.b16 %v3707, %v3699
  %v6724 = vpack.c.b16 %v3708, %v3700
  %v6725 = vpack.c.b16 %v3709, %v3701
  %v6726 = vpack.c.b16 %v3710, %v3702
  %v6727 = vpack.c.b16 %v3711, %v3703
  %v6728 = vpack.c.b16 %v3712, %v3704
  %v6729 = vpack.c.b16 %v3721, %v3713
  %v6730 = vpack.c.b16 %v3722, %v3714
  %v6731 = vpack.c.b16 %v3723, %v3715
  %v6732 = vpack.c.b16 %v3724, %v3716
  %v6733 = vpack.c.b16 %v3725, %v3717
  %v6734 = vpack.c.b16 %v3726, %v3718
  %v6735 = vpack.c.b16 %v3727, %v3719
  %v6736 = vpack.c.b16 %v3728, %v3720
  %v6737 = vpack.c.b16 %v3737, %v3729
  %v6738 = vpack.c.b16 %v3738, %v3730
  %v6739 = vpack.c.b16 %v3739, %v3731
  %v6740 = vpack.c.b16 %v3740, %v3732
  %v6741 = vpack.c.b16 %v3741, %v3733
  %v6742 = vpack.c.b16 %v3742, %v3734
  %v6743 = vpack.c.b16 %v3743, %v3735
  %v6744 = vpack.c.b16 %v3744, %v3736
  %v6745 = vpack.c.b16 %v3753, %v3745
  %v6746 = vpack.c.b16 %v3754, %v3746
  %v6747 = vpack.c.b16 %v3755, %v3747
  %v6748 = vpack.c.b16 %v3756, %v3748
  %v6749 = vpack.c.b16 %v3757, %v3749
  %v6750 = vpack.c.b16 %v3758, %v3750
  %v6751 = vpack.c.b16 %v3759, %v3751
  %v6752 = vpack.c.b16 %v3760, %v3752
  %v6753 = vpack.c.b16 %v3769, %v3761
  %v6754 = vpack.c.b16 %v3770, %v3762
  %v6755 = vpack.c.b16 %v3771, %v3763
  %v6756 = vpack.c.b16 %v3772, %v3764
  %v6757 = vpack.c.b16 %v3773, %v3765
  %v6758 = vpack.c.b16 %v3774, %v3766
  %v6759 = vpack.c.b16 %v3775, %v3767
  %v6760 = vpack.c.b16 %v3776, %v3768
  %v6761 = vpack.c.b16 %v3785, %v3777
  %v6762 = vpack.c.b16 %v3786, %v3778
  %v6763 = vpack.c.b16 %v3787, %v3779
  %v6764 = vpack.c.b16 %v3788, %v3780
  %v6765 = vpack.c.b16 %v3789, %v3781
  %v6766 = vpack.c.b16 %v3790, %v3782
  %v6767 = vpack.c.b16 %v3791, %v3783
  %v6768 = vpack.c.b16 %v3792, %v3784
  %v6769 = vpack.c.b16 %v3801, %v3793
  %v6770 = vpack.c.b16 %v3802, %v3794
  %v6771 = vpack.c.b16 %v3803, %v3795
  %v6772 = vpack.c.b16 %v3804, %v3796
  %v6773 = vpack.c.b16 %v3805, %v3797
  %v6774 = vpack.c.b16 %v3806, %v3798
  %v6775 = vpack.c.b16 %v3807, %v3799
  %v6776 = vpack.c.b16 %v3808, %v3800
  %v6777 = vpack.c.b16 %v3817, %v3809
  %v6778 = vpack.c.b16 %v3818, %v3810
  %v6779 = vpack.c.b16 %v3819, %v3811
  %v6780 = vpack.c.b16 %v3820, %v3812
  %v6781 = vpack.c.b16 %v3821, %v3813
  %v6782 = vpack.c.b16 %v3822, %v3814
  %v6783 = vpack.c.b16 %v3823, %v3815
  %v6784 = vpack.c.b16 %v3824, %v3816
  %v6785 = vpack.c.b16 %v3833, %v3825
  %v6786 = vpack.c.b16 %v3834, %v3826
  %v6787 = vpack.c.b16 %v3835, %v3827
  %v6788 = vpack.c.b16 %v3836, %v3828
  %v6789 = vpack.c.b16 %v3837, %v3829
  %v6790 = vpack.c.b16 %v3838, %v3830
  %v6791 = vpack.c.b16 %v3839, %v3831
  %v6792 = vpack.c.b16 %v3840, %v3832
  %v6793 = vpack.c.b16 %v3849, %v3841
  %v6794 = vpack.c.b16 %v3850, %v3842
  %v6795 = vpack.c.b16 %v3851, %v3843
  %v6796 = vpack.c.b16 %v3852, %v3844
  %v6797 = vpack.c.b16 %v3853, %v3845
  %v6798 = vpack.c.b16 %v3854, %v3846
  %v6799 = vpack.c.b16 %v3855, %v3847
  %v6800 = vpack.c.b16 %v3856, %v3848
  %v6801 = vpack.c.b16 %v3865, %v3857
  %v6802 = vpack.c.b16 %v3866, %v3858
  %v6803 = vpack.c.b16 %v3867, %v3859
  %v6804 = vpack.c.b16 %v3868, %v3860
  %v6805 = vpack.c.b16 %v3869, %v3861
  %v6806 = vpack.c.b16 %v3870, %v3862
  %v6807 = vpack.c.b16 %v3871, %v3863
  %v6808 = vpack.c.b16 %v3872, %v3864
  %v6809 = vpack.c.b16 %v3881, %v3873
  %v6810 = vpack.c.b16 %v3882, %v3874
  %v6811 = vpack.c.b16 %v3883, %v3875
  %v6812 = vpack.c.b16 %v3884, %v3876
  %v6813 = vpack.c.b16 %v3885, %v3877
  %v6814 = vpack.c.b16 %v3886, %v3878
  %v6815 = vpack.c.b16 %v3887, %v3879
  %v6816 = vpack.c.b16 %v3888, %v3880
  %v6817 = vpack.c.b16 %v3897, %v3889
  %v6818 = vpack.c.b16 %v3898, %v3890
  %v6819 = vpack.c.b16 %v3899, %v3891
  %v6820 = vpack.c.b16 %v3900, %v3892
  %v6821 = vpack.c.b16 %v3901, %v3893
  %v6822 = vpack.c.b16 %v3902, %v3894
  %v6823 = vpack.c.b16 %v3903, %v3895
  %v6824 = vpack.c.b16 %v3904, %v3896
  %v6825 = vpack.c.b16 %v3913, %v3905
  %v6826 = vpack.c.b16 %v3914, %v3906
  %v6827 = vpack.c.b16 %v3915, %v3907
  %v6828 = vpack.c.b16 %v3916, %v3908
  %v6829 = vpack.c.b16 %v3917, %v3909
  %v6830 = vpack.c.b16 %v3918, %v3910
  %v6831 = vpack.c.b16 %v3919, %v3911
  %v6832 = vpack.c.b16 %v3920, %v3912
  %v6833 = vpack.c.b16 %v3929, %v3921
  %v6834 = vpack.c.b16 %v3930, %v3922
  %v6835 = vpack.c.b16 %v3931, %v3923
  %v6836 = vpack.c.b16 %v3932, %v3924
  %v6837 = vpack.c.b16 %v3933, %v3925
  %v6838 = vpack.c.b16 %v3934, %v3926
  %v6839 = vpack.c.b16 %v3935, %v3927
  %v6840 = vpack.c.b16 %v3936, %v3928
  %v6841 = vpack.c.b16 %v3945, %v3937
  %v6842 = vpack.c.b16 %v3946, %v3938
  %v6843 = vpack.c.b16 %v3947, %v3939
  %v6844 = vpack.c.b16 %v3948, %v3940
  %v6845 = vpack.c.b16 %v3949, %v3941
  %v6846 = vpack.c.b16 %v3950, %v3942
  %v6847 = vpack.c.b16 %v3951, %v3943
  %v6848 = vpack.c.b16 %v3952, %v3944
  %v6849 = vpack.c.b16 %v3961, %v3953
  %v6850 = vpack.c.b16 %v3962, %v3954
  %v6851 = vpack.c.b16 %v3963, %v3955
  %v6852 = vpack.c.b16 %v3964, %v3956
  %v6853 = vpack.c.b16 %v3965, %v3957
  %v6854 = vpack.c.b16 %v3966, %v3958
  %v6855 = vpack.c.b16 %v3967, %v3959
  %v6856 = vpack.c.b16 %v3968, %v3960
  %v6857 = vpack.c.b16 %v3977, %v3969
  %v6858 = vpack.c.b16 %v3978, %v3970
  %v6859 = vpack.c.b16 %v3979, %v3971
  %v6860 = vpack.c.b16 %v3980, %v3972
  %v6861 = vpack.c.b16 %v3981, %v3973
  %v6862 = vpack.c.b16 %v3982, %v3974
  %v6863 = vpack.c.b16 %v3983, %v3975
  %v6864 = vpack.c.b16 %v3984, %v3976
  %v6865 = vpack.c.b16 %v3993, %v3985
  %v6866 = vpack.c.b16 %v3994, %v3986
  %v6867 = vpack.c.b16 %v3995, %v3987
  %v6868 = vpack.c.b16 %v3996, %v3988
  %v6869 = vpack.c.b16 %v3997, %v3989
  %v6870 = vpack.c.b16 %v3998, %v3990
  %v6871 = vpack.c.b16 %v3999, %v3991
  %v6872 = vpack.c.b16 %v4000, %v3992
  %v6873 = vpack.c.b16 %v4009, %v4001
  %v6874 = vpack.c.b16 %v4010, %v4002
  %v6875 = vpack.c.b16 %v4011, %v4003
  %v6876 = vpack.c.b16 %v4012, %v4004
  %v6877 = vpack.c.b16 %v4013, %v4005
  %v6878 = vpack.c.b16 %v4014, %v4006
  %v6879 = vpack.c.b16 %v4015, %v4007
  %v6880 = vpack.c.b16 %v4016, %v4008
  %v6881 = vpack.c.b16 %v4025, %v4017
  %v6882 = vpack.c.b16 %v4026, %v4018
  %v6883 = vpack.c.b16 %v4027, %v4019
  %v6884 = vpack.c.b16 %v4028, %v4020
  %v6885 = vpack.c.b16 %v4029, %v4021
  %v6886 = vpack.c.b16 %v4030, %v4022
  %v6887 = vpack.c.b16 %v4031, %v4023
  %v6888 = vpack.c.b16 %v4032, %v4024
  %v6889 = vpack.c.b16 %v4041, %v4033
  %v6890 = vpack.c.b16 %v4042, %v4034
  %v6891 = vpack.c.b16 %v4043, %v4035
  %v6892 = vpack.c.b16 %v4044, %v4036
  %v6893 = vpack.c.b16 %v4045, %v4037
  %v6894 = vpack.c.b16 %v4046, %v4038
  %v6895 = vpack.c.b16 %v4047, %v4039
  %v6896 = vpack.c.b16 %v4048, %v4040
  %v6897 = vpack.c.b16 %v4057, %v4049
  %v6898 = vpack.c.b16 %v4058, %v4050
  %v6899 = vpack.c.b16 %v4059, %v4051
  %v6900 = vpack.c.b16 %v4060, %v4052
  %v6901 = vpack.c.b16 %v4061, %v4053
  %v6902 = vpack.c.b16 %v4062, %v4054
  %v6903 = vpack.c.b16 %v4063, %v4055
  %v6904 = vpack.c.b16 %v4064, %v4056
  %v6905 = vpack.c.b16 %v4073, %v4065
  %v6906 = vpack.c.b16 %v4074, %v4066
  %v6907 = vpack.c.b16 %v4075, %v4067
  %v6908 = vpack.c.b16 %v4076, %v4068
  %v6909 = vpack.c.b16 %v4077, %v4069
  %v6910 = vpack.c.b16 %v4078, %v4070
  %v6911 = vpack.c.b16 %v4079, %v4071
  %v6912 = vpack.c.b16 %v4080, %v4072
  %v6913 = vpack.c.b16 %v4089, %v4081
  %v6914 = vpack.c.b16 %v4090, %v4082
  %v6915 = vpack.c.b16 %v4091, %v4083
  %v6916 = vpack.c.b16 %v4092, %v4084
  %v6917 = vpack.c.b16 %v4093, %v4085
  %v6918 = vpack.c.b16 %v4094, %v4086
  %v6919 = vpack.c.b16 %v4095, %v4087
  %v6920 = vpack.c.b16 %v4096, %v4088
  %v6921 = vpack.c.b16 %v4105, %v4097
  %v6922 = vpack.c.b16 %v4106, %v4098
  %v6923 = vpack.c.b16 %v4107, %v4099
  %v6924 = vpack.c.b16 %v4108, %v4100
  %v6925 = vpack.c.b16 %v4109, %v4101
  %v6926 = vpack.c.b16 %v4110, %v4102
  %v6927 = vpack.c.b16 %v4111, %v4103
  %v6928 = vpack.c.b16 %v4112, %v4104
  %v6929 = vpack.c.b16 %v4121, %v4113
  %v6930 = vpack.c.b16 %v4122, %v4114
  %v6931 = vpack.c.b16 %v4123, %v4115
  %v6932 = vpack.c.b16 %v4124, %v4116
  %v6933 = vpack.c.b16 %v4125, %v4117
  %v6934 = vpack.c.b16 %v4126, %v4118
  %v6935 = vpack.c.b16 %v4127, %v4119
  %v6936 = vpack.c.b16 %v4128, %v4120
  %v6937 = vpack.c.b16 %v4137, %v4129
  %v6938 = vpack.c.b16 %v4138, %v4130
  %v6939 = vpack.c.b16 %v4139, %v4131
  %v6940 = vpack.c.b16 %v4140, %v4132
  %v6941 = vpack.c.b16 %v4141, %v4133
  %v6942 = vpack.c.b16 %v4142, %v4134
  %v6943 = vpack.c.b16 %v4143, %v4135
  %v6944 = vpack.c.b16 %v4144, %v4136
  %v6945 = vpack.c.b16 %v4153, %v4145
  %v6946 = vpack.c.b16 %v4154, %v4146
  %v6947 = vpack.c.b16 %v4155, %v4147
  %v6948 = vpack.c.b16 %v4156, %v4148
  %v6949 = vpack.c.b16 %v4157, %v4149
  %v6950 = vpack.c.b16 %v4158, %v4150
  %v6951 = vpack.c.b16 %v4159, %v4151
  %v6952 = vpack.c.b16 %v4160, %v4152
  %v6953 = vpack.c.b16 %v4169, %v4161
  %v6954 = vpack.c.b16 %v4170, %v4162
  %v6955 = vpack.c.b16 %v4171, %v4163
  %v6956 = vpack.c.b16 %v4172, %v4164
  %v6957 = vpack.c.b16 %v4173, %v4165
  %v6958 = vpack.c.b16 %v4174, %v4166
  %v6959 = vpack.c.b16 %v4175, %v4167
  %v6960 = vpack.c.b16 %v4176, %v4168
  %v6961 = vpack.c.b16 %v4185, %v4177
  %v6962 = vpack.c.b16 %v4186, %v4178
  %v6963 = vpack.c.b16 %v4187, %v4179
  %v6964 = vpack.c.b16 %v4188, %v4180
  %v6965 = vpack.c.b16 %v4189, %v4181
  %v6966 = vpack.c.b16 %v4190, %v4182
  %v6967 = vpack.c.b16 %v4191, %v4183
  %v6968 = vpack.c.b16 %v4192, %v4184
  %v6969 = vpack.c.b16 %v4201, %v4193
  %v6970 = vpack.c.b16 %v4202, %v4194
  %v6971 = vpack.c.b16 %v4203, %v4195
  %v6972 = vpack.c.b16 %v4204, %v4196
  %v6973 = vpack.c.b16 %v4205, %v4197
  %v6974 = vpack.c.b16 %v4206, %v4198
  %v6975 = vpack.c.b16 %v4207, %v4199
  %v6976 = vpack.c.b16 %v4208, %v4200
  %v6977 = vpack.c.b16 %v4217, %v4209
  %v6978 = vpack.c.b16 %v4218, %v4210
  %v6979 = vpack.c.b16 %v4219, %v4211
  %v6980 = vpack.c.b16 %v4220, %v4212
  %v6981 = vpack.c.b16 %v4221, %v4213
  %v6982 = vpack.c.b16 %v4222, %v4214
  %v6983 = vpack.c.b16 %v4223, %v4215
  %v6984 = vpack.c.b16 %v4224, %v4216
  %v6985 = vpack.c.b16 %v4233, %v4225
  %v6986 = vpack.c.b16 %v4234, %v4226
  %v6987 = vpack.c.b16 %v4235, %v4227
  %v6988 = vpack.c.b16 %v4236, %v4228
  %v6989 = vpack.c.b16 %v4237, %v4229
  %v6990 = vpack.c.b16 %v4238, %v4230
  %v6991 = vpack.c.b16 %v4239, %v4231
  %v6992 = vpack.c.b16 %v4240, %v4232
  %v6993 = vpack.c.b16 %v4249, %v4241
  %v6994 = vpack.c.b16 %v4250, %v4242
  %v6995 = vpack.c.b16 %v4251, %v4243
  %v6996 = vpack.c.b16 %v4252, %v4244
  %v6997 = vpack.c.b16 %v4253, %v4245
  %v6998 = vpack.c.b16 %v4254, %v4246
  %v6999 = vpack.c.b16 %v4255, %v4247
  %v7000 = vpack.c.b16 %v4256, %v4248
  %v7001 = vpack.c.b16 %v4265, %v4257
  %v7002 = vpack.c.b16 %v4266, %v4258
  %v7003 = vpack.c.b16 %v4267, %v4259
  %v7004 = vpack.c.b16 %v4268, %v4260
  %v7005 = vpack.c.b16 %v4269, %v4261
  %v7006 = vpack.c.b16 %v4270, %v4262
  %v7007 = vpack.c.b16 %v4271, %v4263
  %v7008 = vpack.c.b16 %v4272, %v4264
  %v7009 = vpack.c.b16 %v4281, %v4273
  %v7010 = vpack.c.b16 %v4282, %v4274
  %v7011 = vpack.c.b16 %v4283, %v4275
  %v7012 = vpack.c.b16 %v4284, %v4276
  %v7013 = vpack.c.b16 %v4285, %v4277
  %v7014 = vpack.c.b16 %v4286, %v4278
  %v7015 = vpack.c.b16 %v4287, %v4279
  %v7016 = vpack.c.b16 %v4288, %v4280
  %v7017 = vpack.c.b16 %v4297, %v4289
  %v7018 = vpack.c.b16 %v4298, %v4290
  %v7019 = vpack.c.b16 %v4299, %v4291
  %v7020 = vpack.c.b16 %v4300, %v4292
  %v7021 = vpack.c.b16 %v4301, %v4293
  %v7022 = vpack.c.b16 %v4302, %v4294
  %v7023 = vpack.c.b16 %v4303, %v4295
  %v7024 = vpack.c.b16 %v4304, %v4296
  %v7025 = vpack.c.b16 %v4313, %v4305
  %v7026 = vpack.c.b16 %v4314, %v4306
  %v7027 = vpack.c.b16 %v4315, %v4307
  %v7028 = vpack.c.b16 %v4316, %v4308
  %v7029 = vpack.c.b16 %v4317, %v4309
  %v7030 = vpack.c.b16 %v4318, %v4310
  %v7031 = vpack.c.b16 %v4319, %v4311
  %v7032 = vpack.c.b16 %v4320, %v4312
  %v7033 = vpack.c.b16 %v4329, %v4321
  %v7034 = vpack.c.b16 %v4330, %v4322
  %v7035 = vpack.c.b16 %v4331, %v4323
  %v7036 = vpack.c.b16 %v4332, %v4324
  %v7037 = vpack.c.b16 %v4333, %v4325
  %v7038 = vpack.c.b16 %v4334, %v4326
  %v7039 = vpack.c.b16 %v4335, %v4327
  %v7040 = vpack.c.b16 %v4336, %v4328
  %v7041 = vpack.c.b16 %v4345, %v4337
  %v7042 = vpack.c.b16 %v4346, %v4338
  %v7043 = vpack.c.b16 %v4347, %v4339
  %v7044 = vpack.c.b16 %v4348, %v4340
  %v7045 = vpack.c.b16 %v4349, %v4341
  %v7046 = vpack.c.b16 %v4350, %v4342
  %v7047 = vpack.c.b16 %v4351, %v4343
  %v7048 = vpack.c.b16 %v4352, %v4344
  %v7049 = vpack.c.b16 %v4361, %v4353
  %v7050 = vpack.c.b16 %v4362, %v4354
  %v7051 = vpack.c.b16 %v4363, %v4355
  %v7052 = vpack.c.b16 %v4364, %v4356
  %v7053 = vpack.c.b16 %v4365, %v4357
  %v7054 = vpack.c.b16 %v4366, %v4358
  %v7055 = vpack.c.b16 %v4367, %v4359
  %v7056 = vpack.c.b16 %v4368, %v4360
  %v7057 = vpack.c.b16 %v4377, %v4369
  %v7058 = vpack.c.b16 %v4378, %v4370
  %v7059 = vpack.c.b16 %v4379, %v4371
  %v7060 = vpack.c.b16 %v4380, %v4372
  %v7061 = vpack.c.b16 %v4381, %v4373
  %v7062 = vpack.c.b16 %v4382, %v4374
  %v7063 = vpack.c.b16 %v4383, %v4375
  %v7064 = vpack.c.b16 %v4384, %v4376
  %v7065 = vpack.c.b16 %v4393, %v4385
  %v7066 = vpack.c.b16 %v4394, %v4386
  %v7067 = vpack.c.b16 %v4395, %v4387
  %v7068 = vpack.c.b16 %v4396, %v4388
  %v7069 = vpack.c.b16 %v4397, %v4389
  %v7070 = vpack.c.b16 %v4398, %v4390
  %v7071 = vpack.c.b16 %v4399, %v4391
  %v7072 = vpack.c.b16 %v4400, %v4392
  %v7073 = vpack.c.b16 %v4409, %v4401
  %v7074 = vpack.c.b16 %v4410, %v4402
  %v7075 = vpack.c.b16 %v4411, %v4403
  %v7076 = vpack.c.b16 %v4412, %v4404
  %v7077 = vpack.c.b16 %v4413, %v4405
  %v7078 = vpack.c.b16 %v4414, %v4406
  %v7079 = vpack.c.b16 %v4415, %v4407
  %v7080 = vpack.c.b16 %v4416, %v4408
  %v7081 = vpack.c.b16 %v4425, %v4417
  %v7082 = vpack.c.b16 %v4426, %v4418
  %v7083 = vpack.c.b16 %v4427, %v4419
  %v7084 = vpack.c.b16 %v4428, %v4420
  %v7085 = vpack.c.b16 %v4429, %v4421
  %v7086 = vpack.c.b16 %v4430, %v4422
  %v7087 = vpack.c.b16 %v4431, %v4423
  %v7088 = vpack.c.b16 %v4432, %v4424
  %v7089 = vpack.c.b16 %v4441, %v4433
  %v7090 = vpack.c.b16 %v4442, %v4434
  %v7091 = vpack.c.b16 %v4443, %v4435
  %v7092 = vpack.c.b16 %v4444, %v4436
  %v7093 = vpack.c.b16 %v4445, %v4437
  %v7094 = vpack.c.b16 %v4446, %v4438
  %v7095 = vpack.c.b16 %v4447, %v4439
  %v7096 = vpack.c.b16 %v4448, %v4440
  %v7097 = vpack.c.b16 %v4457, %v4449
  %v7098 = vpack.c.b16 %v4458, %v4450
  %v7099 = vpack.c.b16 %v4459, %v4451
  %v7100 = vpack.c.b16 %v4460, %v4452
  %v7101 = vpack.c.b16 %v4461, %v4453
  %v7102 = vpack.c.b16 %v4462, %v4454
  %v7103 = vpack.c.b16 %v4463, %v4455
  %v7104 = vpack.c.b16 %v4464, %v4456
  %v7105 = vpack.c.b16 %v4473, %v4465
  %v7106 = vpack.c.b16 %v4474, %v4466
  %v7107 = vpack.c.b16 %v4475, %v4467
  %v7108 = vpack.c.b16 %v4476, %v4468
  %v7109 = vpack.c.b16 %v4477, %v4469
  %v7110 = vpack.c.b16 %v4478, %v4470
  %v7111 = vpack.c.b16 %v4479, %v4471
  %v7112 = vpack.c.b16 %v4480, %v4472
  %v7113 = vpack.c.b16 %v4489, %v4481
  %v7114 = vpack.c.b16 %v4490, %v4482
  %v7115 = vpack.c.b16 %v4491, %v4483
  %v7116 = vpack.c.b16 %v4492, %v4484
  %v7117 = vpack.c.b16 %v4493, %v4485
  %v7118 = vpack.c.b16 %v4494, %v4486
  %v7119 = vpack.c.b16 %v4495, %v4487
  %v7120 = vpack.c.b16 %v4496, %v4488
  %v7121 = vpack.c.b16 %v4505, %v4497
  %v7122 = vpack.c.b16 %v4506, %v4498
  %v7123 = vpack.c.b16 %v4507, %v4499
  %v7124 = vpack.c.b16 %v4508, %v4500
  %v7125 = vpack.c.b16 %v4509, %v4501
  %v7126 = vpack.c.b16 %v4510, %v4502
  %v7127 = vpack.c.b16 %v4511, %v4503
  %v7128 = vpack.c.b16 %v4512, %v4504
  %v7129 = vpack.c.b16 %v4521, %v4513
  %v7130 = vpack.c.b16 %v4522, %v4514
  %v7131 = vpack.c.b16 %v4523, %v4515
  %v7132 = vpack.c.b16 %v4524, %v4516
  %v7133 = vpack.c.b16 %v4525, %v4517
  %v7134 = vpack.c.b16 %v4526, %v4518
  %v7135 = vpack.c.b16 %v4527, %v4519
  %v7136 = vpack.c.b16 %v4528, %v4520
  %v7137 = vpack.c.b16 %v4537, %v4529
  %v7138 = vpack.c.b16 %v4538, %v4530
  %v7139 = vpack.c.b16 %v4539, %v4531
  %v7140 = vpack.c.b16 %v4540, %v4532
  %v7141 = vpack.c.b16 %v4541, %v4533
  %v7142 = vpack.c.b16 %v4542, %v4534
  %v7143 = vpack.c.b16 %v4543, %v4535
  %v7144 = vpack.c.b16 %v4544, %v4536
  %v7145 = vpack.c.b16 %v4553, %v4545
  %v7146 = vpack.c.b16 %v4554, %v4546
  %v7147 = vpack.c.b16 %v4555, %v4547
  %v7148 = vpack.c.b16 %v4556, %v4548
  %v7149 = vpack.c.b16 %v4557, %v4549
  %v7150 = vpack.c.b16 %v4558, %v4550
  %v7151 = vpack.c.b16 %v4559, %v4551
  %v7152 = vpack.c.b16 %v4560, %v4552
  %v7153 = vpack.c.b16 %v4569, %v4561
  %v7154 = vpack.c.b16 %v4570, %v4562
  %v7155 = vpack.c.b16 %v4571, %v4563
  %v7156 = vpack.c.b16 %v4572, %v4564
  %v7157 = vpack.c.b16 %v4573, %v4565
  %v7158 = vpack.c.b16 %v4574, %v4566
  %v7159 = vpack.c.b16 %v4575, %v4567
  %v7160 = vpack.c.b16 %v4576, %v4568
  %v7161 = vpack.c.b16 %v4585, %v4577
  %v7162 = vpack.c.b16 %v4586, %v4578
  %v7163 = vpack.c.b16 %v4587, %v4579
  %v7164 = vpack.c.b16 %v4588, %v4580
  %v7165 = vpack.c.b16 %v4589, %v4581
  %v7166 = vpack.c.b16 %v4590, %v4582
  %v7167 = vpack.c.b16 %v4591, %v4583
  %v7168 = vpack.c.b16 %v4592, %v4584
  %v7169 = vpack.c.b16 %v4601, %v4593
  %v7170 = vpack.c.b16 %v4602, %v4594
  %v7171 = vpack.c.b16 %v4603, %v4595
  %v7172 = vpack.c.b16 %v4604, %v4596
  %v7173 = vpack.c.b16 %v4605, %v4597
  %v7174 = vpack.c.b16 %v4606, %v4598
  %v7175 = vpack.c.b16 %v4607, %v4599
  %v7176 = vpack.c.b16 %v4608, %v4600
  %v7177 = vpack.c.b16 %v4617, %v4609
  %v7178 = vpack.c.b16 %v4618, %v4610
  %v7179 = vpack.c.b16 %v4619, %v4611
  %v7180 = vpack.c.b16 %v4620, %v4612
  %v7181 = vpack.c.b16 %v4621, %v4613
  %v7182 = vpack.c.b16 %v4622, %v4614
  %v7183 = vpack.c.b16 %v4623, %v4615
  %v7184 = vpack.c.b16 %v4624, %v4616
  %v7185 = vpack.c.b16 %v4633, %v4625
  %v7186 = vpack.c.b16 %v4634, %v4626
  %v7187 = vpack.c.b16 %v4635, %v4627
  %v7188 = vpack.c.b16 %v4636, %v4628
  %v7189 = vpack.c.b16 %v4637, %v4629
  %v7190 = vpack.c.b16 %v4638, %v4630
  %v7191 = vpack.c.b16 %v4639, %v4631
  %v7192 = vpack.c.b16 %v4640, %v4632
  %v7193 = vpack.c.b16 %v4649, %v4641
  %v7194 = vpack.c.b16 %v4650, %v4642
  %v7195 = vpack.c.b16 %v4651, %v4643
  %v7196 = vpack.c.b16 %v4652, %v4644
  %v7197 = vpack.c.b16 %v4653, %v4645
  %v7198 = vpack.c.b16 %v4654, %v4646
  %v7199 = vpack.c.b16 %v4655, %v4647
  %v7200 = vpack.c.b16 %v4656, %v4648
  %v7201 = vpack.c.b16 %v4665, %v4657
  %v7202 = vpack.c.b16 %v4666, %v4658
  %v7203 = vpack.c.b16 %v4667, %v4659
  %v7204 = vpack.c.b16 %v4668, %v4660
  %v7205 = vpack.c.b16 %v4669, %v4661
  %v7206 = vpack.c.b16 %v4670, %v4662
  %v7207 = vpack.c.b16 %v4671, %v4663
  %v7208 = vpack.c.b16 %v4672, %v4664
  %v7209 = vpack.c.b16 %v4681, %v4673
  %v7210 = vpack.c.b16 %v4682, %v4674
  %v7211 = vpack.c.b16 %v4683, %v4675
  %v7212 = vpack.c.b16 %v4684, %v4676
  %v7213 = vpack.c.b16 %v4685, %v4677
  %v7214 = vpack.c.b16 %v4686, %v4678
  %v7215 = vpack.c.b16 %v4687, %v4679
  %v7216 = vpack.c.b16 %v4688, %v4680
  %v7217 = vpack.c.b16 %v4697, %v4689
  %v7218 = vpack.c.b16 %v4698, %v4690
  %v7219 = vpack.c.b16 %v4699, %v4691
  %v7220 = vpack.c.b16 %v4700, %v4692
  %v7221 = vpack.c.b16 %v4701, %v4693
  %v7222 = vpack.c.b16 %v4702, %v4694
  %v7223 = vpack.c.b16 %v4703, %v4695
  %v7224 = vpack.c.b16 %v4704, %v4696
  %v7225 = vpack.c.b16 %v4713, %v4705
  %v7226 = vpack.c.b16 %v4714, %v4706
  %v7227 = vpack.c.b16 %v4715, %v4707
  %v7228 = vpack.c.b16 %v4716, %v4708
  %v7229 = vpack.c.b16 %v4717, %v4709
  %v7230 = vpack.c.b16 %v4718, %v4710
  %v7231 = vpack.c.b16 %v4719, %v4711
  %v7232 = vpack.c.b16 %v4720, %v4712
  %v7233 = vpack.c.b16 %v4729, %v4721
  %v7234 = vpack.c.b16 %v4730, %v4722
  %v7235 = vpack.c.b16 %v4731, %v4723
  %v7236 = vpack.c.b16 %v4732, %v4724
  %v7237 = vpack.c.b16 %v4733, %v4725
  %v7238 = vpack.c.b16 %v4734, %v4726
  %v7239 = vpack.c.b16 %v4735, %v4727
  %v7240 = vpack.c.b16 %v4736, %v4728
  %v7241 = vpack.c.b16 %v4745, %v4737
  %v7242 = vpack.c.b16 %v4746, %v4738
  %v7243 = vpack.c.b16 %v4747, %v4739
  %v7244 = vpack.c.b16 %v4748, %v4740
  %v7245 = vpack.c.b16 %v4749, %v4741
  %v7246 = vpack.c.b16 %v4750, %v4742
  %v7247 = vpack.c.b16 %v4751, %v4743
  %v7248 = vpack.c.b16 %v4752, %v4744
  %v7249 = vpack.c.b16 %v4761, %v4753
  %v7250 = vpack.c.b16 %v4762, %v4754
  %v7251 = vpack.c.b16 %v4763, %v4755
  %v7252 = vpack.c.b16 %v4764, %v4756
  %v7253 = vpack.c.b16 %v4765, %v4757
  %v7254 = vpack.c.b16 %v4766, %v4758
  %v7255 = vpack.c.b16 %v4767, %v4759
  %v7256 = vpack.c.b16 %v4768, %v4760
  %v7257 = vpack.c.b16 %v4777, %v4769
  %v7258 = vpack.c.b16 %v4778, %v4770
  %v7259 = vpack.c.b16 %v4779, %v4771
  %v7260 = vpack.c.b16 %v4780, %v4772
  %v7261 = vpack.c.b16 %v4781, %v4773
  %v7262 = vpack.c.b16 %v4782, %v4774
  %v7263 = vpack.c.b16 %v4783, %v4775
  %v7264 = vpack.c.b16 %v4784, %v4776
  %v7265 = vpack.c.b16 %v4793, %v4785
  %v7266 = vpack.c.b16 %v4794, %v4786
  %v7267 = vpack.c.b16 %v4795, %v4787
  %v7268 = vpack.c.b16 %v4796, %v4788
  %v7269 = vpack.c.b16 %v4797, %v4789
  %v7270 = vpack.c.b16 %v4798, %v4790
  %v7271 = vpack.c.b16 %v4799, %v4791
  %v7272 = vpack.c.b16 %v4800, %v4792
  %v7273 = vpack.c.b16 %v4809, %v4801
  %v7274 = vpack.c.b16 %v4810, %v4802
  %v7275 = vpack.c.b16 %v4811, %v4803
  %v7276 = vpack.c.b16 %v4812, %v4804
  %v7277 = vpack.c.b16 %v4813, %v4805
  %v7278 = vpack.c.b16 %v4814, %v4806
  %v7279 = vpack.c.b16 %v4815, %v4807
  %v7280 = vpack.c.b16 %v4816, %v4808
  %v7281 = vpack.c.b16 %v4825, %v4817
  %v7282 = vpack.c.b16 %v4826, %v4818
  %v7283 = vpack.c.b16 %v4827, %v4819
  %v7284 = vpack.c.b16 %v4828, %v4820
  %v7285 = vpack.c.b16 %v4829, %v4821
  %v7286 = vpack.c.b16 %v4830, %v4822
  %v7287 = vpack.c.b16 %v4831, %v4823
  %v7288 = vpack.c.b16 %v4832, %v4824
  %v7289 = vpack.c.b16 %v4841, %v4833
  %v7290 = vpack.c.b16 %v4842, %v4834
  %v7291 = vpack.c.b16 %v4843, %v4835
  %v7292 = vpack.c.b16 %v4844, %v4836
  %v7293 = vpack.c.b16 %v4845, %v4837
  %v7294 = vpack.c.b16 %v4846, %v4838
  %v7295 = vpack.c.b16 %v4847, %v4839
  %v7296 = vpack.c.b16 %v4848, %v4840
  %v7297 = vpack.c.b16 %v4857, %v4849
  %v7298 = vpack.c.b16 %v4858, %v4850
  %v7299 = vpack.c.b16 %v4859, %v4851
  %v7300 = vpack.c.b16 %v4860, %v4852
  %v7301 = vpack.c.b16 %v4861, %v4853
  %v7302 = vpack.c.b16 %v4862, %v4854
  %v7303 = vpack.c.b16 %v4863, %v4855
  %v7304 = vpack.c.b16 %v4864, %v4856
  %v7305 = vpack.c.b16 %v4873, %v4865
  %v7306 = vpack.c.b16 %v4874, %v4866
  %v7307 = vpack.c.b16 %v4875, %v4867
  %v7308 = vpack.c.b16 %v4876, %v4868
  %v7309 = vpack.c.b16 %v4877, %v4869
  %v7310 = vpack.c.b16 %v4878, %v4870
  %v7311 = vpack.c.b16 %v4879, %v4871
  %v7312 = vpack.c.b16 %v4880, %v4872
  %v7313 = vpack.c.b16 %v4889, %v4881
  %v7314 = vpack.c.b16 %v4890, %v4882
  %v7315 = vpack.c.b16 %v4891, %v4883
  %v7316 = vpack.c.b16 %v4892, %v4884
  %v7317 = vpack.c.b16 %v4893, %v4885
  %v7318 = vpack.c.b16 %v4894, %v4886
  %v7319 = vpack.c.b16 %v4895, %v4887
  %v7320 = vpack.c.b16 %v4896, %v4888
  %v7321 = vpack.c.b16 %v4905, %v4897
  %v7322 = vpack.c.b16 %v4906, %v4898
  %v7323 = vpack.c.b16 %v4907, %v4899
  %v7324 = vpack.c.b16 %v4908, %v4900
  %v7325 = vpack.c.b16 %v4909, %v4901
  %v7326 = vpack.c.b16 %v4910, %v4902
  %v7327 = vpack.c.b16 %v4911, %v4903
  %v7328 = vpack.c.b16 %v4912, %v4904
  %v7329 = vpack.c.b16 %v4921, %v4913
  %v7330 = vpack.c.b16 %v4922, %v4914
  %v7331 = vpack.c.b16 %v4923, %v4915
  %v7332 = vpack.c.b16 %v4924, %v4916
  %v7333 = vpack.c.b16 %v4925, %v4917
  %v7334 = vpack.c.b16 %v4926, %v4918
  %v7335 = vpack.c.b16 %v4927, %v4919
  %v7336 = vpack.c.b16 %v4928, %v4920
  %v7337 = vpack.c.b16 %v4937, %v4929
  %v7338 = vpack.c.b16 %v4938, %v4930
  %v7339 = vpack.c.b16 %v4939, %v4931
  %v7340 = vpack.c.b16 %v4940, %v4932
  %v7341 = vpack.c.b16 %v4941, %v4933
  %v7342 = vpack.c.b16 %v4942, %v4934
  %v7343 = vpack.c.b16 %v4943, %v4935
  %v7344 = vpack.c.b16 %v4944, %v4936
  %v7345 = vpack.c.b16 %v4953, %v4945
  %v7346 = vpack.c.b16 %v4954, %v4946
  %v7347 = vpack.c.b16 %v4955, %v4947
  %v7348 = vpack.c.b16 %v4956, %v4948
  %v7349 = vpack.c.b16 %v4957, %v4949
  %v7350 = vpack.c.b16 %v4958, %v4950
  %v7351 = vpack.c.b16 %v4959, %v4951
  %v7352 = vpack.c.b16 %v4960, %v4952
  %v7353 = vpack.c.b16 %v4969, %v4961
  %v7354 = vpack.c.b16 %v4970, %v4962
  %v7355 = vpack.c.b16 %v4971, %v4963
  %v7356 = vpack.c.b16 %v4972, %v4964
  %v7357 = vpack.c.b16 %v4973, %v4965
  %v7358 = vpack.c.b16 %v4974, %v4966
  %v7359 = vpack.c.b16 %v4975, %v4967
  %v7360 = vpack.c.b16 %v4976, %v4968
  %v7361 = vpack.c.b16 %v4985, %v4977
  %v7362 = vpack.c.b16 %v4986, %v4978
  %v7363 = vpack.c.b16 %v4987, %v4979
  %v7364 = vpack.c.b16 %v4988, %v4980
  %v7365 = vpack.c.b16 %v4989, %v4981
  %v7366 = vpack.c.b16 %v4990, %v4982
  %v7367 = vpack.c.b16 %v4991, %v4983
  %v7368 = vpack.c.b16 %v4992, %v4984
  %v7369 = vpack.c.b16 %v5001, %v4993
  %v7370 = vpack.c.b16 %v5002, %v4994
  %v7371 = vpack.c.b16 %v5003, %v4995
  %v7372 = vpack.c.b16 %v5004, %v4996
  %v7373 = vpack.c.b16 %v5005, %v4997
  %v7374 = vpack.c.b16 %v5006, %v4998
  %v7375 = vpack.c.b16 %v5007, %v4999
  %v7376 = vpack.c.b16 %v5008, %v5000
  %v7377 = vpack.c.b16 %v5017, %v5009
  %v7378 = vpack.c.b16 %v5018, %v5010
  %v7379 = vpack.c.b16 %v5019, %v5011
  %v7380 = vpack.c.b16 %v5020, %v5012
  %v7381 = vpack.c.b16 %v5021, %v5013
  %v7382 = vpack.c.b16 %v5022, %v5014
  %v7383 = vpack.c.b16 %v5023, %v5015
  %v7384 = vpack.c.b16 %v5024, %v5016
  %v7385 = vpack.c.b16 %v5033, %v5025
  %v7386 = vpack.c.b16 %v5034, %v5026
  %v7387 = vpack.c.b16 %v5035, %v5027
  %v7388 = vpack.c.b16 %v5036, %v5028
  %v7389 = vpack.c.b16 %v5037, %v5029
  %v7390 = vpack.c.b16 %v5038, %v5030
  %v7391 = vpack.c.b16 %v5039, %v5031
  %v7392 = vpack.c.b16 %v5040, %v5032
  %v7393 = vpack.c.b16 %v5049, %v5041
  %v7394 = vpack.c.b16 %v5050, %v5042
  %v7395 = vpack.c.b16 %v5051, %v5043
  %v7396 = vpack.c.b16 %v5052, %v5044
  %v7397 = vpack.c.b16 %v5053, %v5045
  %v7398 = vpack.c.b16 %v5054, %v5046
  %v7399 = vpack.c.b16 %v5055, %v5047
  %v7400 = vpack.c.b16 %v5056, %v5048
  %v7401 = vpack.c.b16 %v5065, %v5057
  %v7402 = vpack.c.b16 %v5066, %v5058
  %v7403 = vpack.c.b16 %v5067, %v5059
  %v7404 = vpack.c.b16 %v5068, %v5060
  %v7405 = vpack.c.b16 %v5069, %v5061
  %v7406 = vpack.c.b16 %v5070, %v5062
  %v7407 = vpack.c.b16 %v5071, %v5063
  %v7408 = vpack.c.b16 %v5072, %v5064
  %v7409 = vpack.c.b16 %v5081, %v5073
  %v7410 = vpack.c.b16 %v5082, %v5074
  %v7411 = vpack.c.b16 %v5083, %v5075
  %v7412 = vpack.c.b16 %v5084, %v5076
  %v7413 = vpack.c.b16 %v5085, %v5077
  %v7414 = vpack.c.b16 %v5086, %v5078
  %v7415 = vpack.c.b16 %v5087, %v5079
  %v7416 = vpack.c.b16 %v5088, %v5080
  %v7417 = vpack.c.b16 %v5097, %v5089
  %v7418 = vpack.c.b16 %v5098, %v5090
  %v7419 = vpack.c.b16 %v5099, %v5091
  %v7420 = vpack.c.b16 %v5100, %v5092
  %v7421 = vpack.c.b16 %v5101, %v5093
  %v7422 = vpack.c.b16 %v5102, %v5094
  %v7423 = vpack.c.b16 %v5103, %v5095
  %v7424 = vpack.c.b16 %v5104, %v5096
  %v7425 = vpack.c.b16 %v5113, %v5105
  %v7426 = vpack.c.b16 %v5114, %v5106
  %v7427 = vpack.c.b16 %v5115, %v5107
  %v7428 = vpack.c.b16 %v5116, %v5108
  %v7429 = vpack.c.b16 %v5117, %v5109
  %v7430 = vpack.c.b16 %v5118, %v5110
  %v7431 = vpack.c.b16 %v5119, %v5111
  %v7432 = vpack.c.b16 %v5120, %v5112
  %v7433 = vpack.c.b16 %v5129, %v5121
  %v7434 = vpack.c.b16 %v5130, %v5122
  %v7435 = vpack.c.b16 %v5131, %v5123
  %v7436 = vpack.c.b16 %v5132, %v5124
  %v7437 = vpack.c.b16 %v5133, %v5125
  %v7438 = vpack.c.b16 %v5134, %v5126
  %v7439 = vpack.c.b16 %v5135, %v5127
  %v7440 = vpack.c.b16 %v5136, %v5128
  %v7441 = vpack.c.b16 %v5145, %v5137
  %v7442 = vpack.c.b16 %v5146, %v5138
  %v7443 = vpack.c.b16 %v5147, %v5139
  %v7444 = vpack.c.b16 %v5148, %v5140
  %v7445 = vpack.c.b16 %v5149, %v5141
  %v7446 = vpack.c.b16 %v5150, %v5142
  %v7447 = vpack.c.b16 %v5151, %v5143
  %v7448 = vpack.c.b16 %v5152, %v5144
  %v7449 = vpack.c.b16 %v5161, %v5153
  %v7450 = vpack.c.b16 %v5162, %v5154
  %v7451 = vpack.c.b16 %v5163, %v5155
  %v7452 = vpack.c.b16 %v5164, %v5156
  %v7453 = vpack.c.b16 %v5165, %v5157
  %v7454 = vpack.c.b16 %v5166, %v5158
  %v7455 = vpack.c.b16 %v5167, %v5159
  %v7456 = vpack.c.b16 %v5168, %v5160
  %v7457 = vpack.c.b16 %v5177, %v5169
  %v7458 = vpack.c.b16 %v5178, %v5170
  %v7459 = vpack.c.b16 %v5179, %v5171
  %v7460 = vpack.c.b16 %v5180, %v5172
  %v7461 = vpack.c.b16 %v5181, %v5173
  %v7462 = vpack.c.b16 %v5182, %v5174
  %v7463 = vpack.c.b16 %v5183, %v5175
  %v7464 = vpack.c.b16 %v5184, %v5176
  %v7465 = vpack.c.b16 %v5193, %v5185
  %v7466 = vpack.c.b16 %v5194, %v5186
  %v7467 = vpack.c.b16 %v5195, %v5187
  %v7468 = vpack.c.b16 %v5196, %v5188
  %v7469 = vpack.c.b16 %v5197, %v5189
  %v7470 = vpack.c.b16 %v5198, %v5190
  %v7471 = vpack.c.b16 %v5199, %v5191
  %v7472 = vpack.c.b16 %v5200, %v5192
  %v7473 = vpack.c.b16 %v5209, %v5201
  %v7474 = vpack.c.b16 %v5210, %v5202
  %v7475 = vpack.c.b16 %v5211, %v5203
  %v7476 = vpack.c.b16 %v5212, %v5204
  %v7477 = vpack.c.b16 %v5213, %v5205
  %v7478 = vpack.c.b16 %v5214, %v5206
  %v7479 = vpack.c.b16 %v5215, %v5207
  %v7480 = vpack.c.b16 %v5216, %v5208
  %v7481 = vpack.c.b16 %v5225, %v5217
  %v7482 = vpack.c.b16 %v5226, %v5218
  %v7483 = vpack.c.b16 %v5227, %v5219
  %v7484 = vpack.c.b16 %v5228, %v5220
  %v7485 = vpack.c.b16 %v5229, %v5221
  %v7486 = vpack.c.b16 %v5230, %v5222
  %v7487 = vpack.c.b16 %v5231, %v5223
  %v7488 = vpack.c.b16 %v5232, %v5224
  %v7489 = vpack.c.b16 %v5241, %v5233
  %v7490 = vpack.c.b16 %v5242, %v5234
  %v7491 = vpack.c.b16 %v5243, %v5235
  %v7492 = vpack.c.b16 %v5244, %v5236
  %v7493 = vpack.c.b16 %v5245, %v5237
  %v7494 = vpack.c.b16 %v5246, %v5238
  %v7495 = vpack.c.b16 %v5247, %v5239
  %v7496 = vpack.c.b16 %v5248, %v5240
  %v7497 = vpack.c.b16 %v5257, %v5249
  %v7498 = vpack.c.b16 %v5258, %v5250
  %v7499 = vpack.c.b16 %v5259, %v5251
  %v7500 = vpack.c.b16 %v5260, %v5252
  %v7501 = vpack.c.b16 %v5261, %v5253
  %v7502 = vpack.c.b16 %v5262, %v5254
  %v7503 = vpack.c.b16 %v5263, %v5255
  %v7504 = vpack.c.b16 %v5264, %v5256
  %v7505 = vpack.c.b16 %v5273, %v5265
  %v7506 = vpack.c.b16 %v5274, %v5266
  %v7507 = vpack.c.b16 %v5275, %v5267
  %v7508 = vpack.c.b16 %v5276, %v5268
  %v7509 = vpack.c.b16 %v5277, %v5269
  %v7510 = vpack.c.b16 %v5278, %v5270
  %v7511 = vpack.c.b16 %v5279, %v5271
  %v7512 = vpack.c.b16 %v5280, %v5272
  %v7513 = vpack.c.b16 %v5289, %v5281
  %v7514 = vpack.c.b16 %v5290, %v5282
  %v7515 = vpack.c.b16 %v5291, %v5283
  %v7516 = vpack.c.b16 %v5292, %v5284
  %v7517 = vpack.c.b16 %v5293, %v5285
  %v7518 = vpack.c.b16 %v5294, %v5286
  %v7519 = vpack.c.b16 %v5295, %v5287
  %v7520 = vpack.c.b16 %v5296, %v5288
  %v7521 = vpack.c.b16 %v5305, %v5297
  %v7522 = vpack.c.b16 %v5306, %v5298
  %v7523 = vpack.c.b16 %v5307, %v5299
  %v7524 = vpack.c.b16 %v5308, %v5300
  %v7525 = vpack.c.b16 %v5309, %v5301
  %v7526 = vpack.c.b16 %v5310, %v5302
  %v7527 = vpack.c.b16 %v5311, %v5303
  %v7528 = vpack.c.b16 %v5312, %v5304
  %v7529 = vpack.c.b16 %v5321, %v5313
  %v7530 = vpack.c.b16 %v5322, %v5314
  %v7531 = vpack.c.b16 %v5323, %v5315
  %v7532 = vpack.c.b16 %v5324, %v5316
  %v7533 = vpack.c.b16 %v5325, %v5317
  %v7534 = vpack.c.b16 %v5326, %v5318
  %v7535 = vpack.c.b16 %v5327, %v5319
  %v7536 = vpack.c.b16 %v5328, %v5320
  %v7537 = vpack.c.b16 %v5337, %v5329
  %v7538 = vpack.c.b16 %v5338, %v5330
  %v7539 = vpack.c.b16 %v5339, %v5331
  %v7540 = vpack.c.b16 %v5340, %v5332
  %v7541 = vpack.c.b16 %v5341, %v5333
  %v7542 = vpack.c.b16 %v5342, %v5334
  %v7543 = vpack.c.b16 %v5343, %v5335
  %v7544 = vpack.c.b16 %v5344, %v5336
  %v7545 = vpack.c.b16 %v5353, %v5345
  %v7546 = vpack.c.b16 %v5354, %v5346
  %v7547 = vpack.c.b16 %v5355, %v5347
  %v7548 = vpack.c.b16 %v5356, %v5348
  %v7549 = vpack.c.b16 %v5357, %v5349
  %v7550 = vpack.c.b16 %v5358, %v5350
  %v7551 = vpack.c.b16 %v5359, %v5351
  %v7552 = vpack.c.b16 %v5360, %v5352
  %v7553 = vpack.c.b16 %v5369, %v5361
  %v7554 = vpack.c.b16 %v5370, %v5362
  %v7555 = vpack.c.b16 %v5371, %v5363
  %v7556 = vpack.c.b16 %v5372, %v5364
  %v7557 = vpack.c.b16 %v5373, %v5365
  %v7558 = vpack.c.b16 %v5374, %v5366
  %v7559 = vpack.c.b16 %v5375, %v5367
  %v7560 = vpack.c.b16 %v5376, %v5368
  %v7561 = vpack.c.b16 %v5385, %v5377
  %v7562 = vpack.c.b16 %v5386, %v5378
  %v7563 = vpack.c.b16 %v5387, %v5379
  %v7564 = vpack.c.b16 %v5388, %v5380
  %v7565 = vpack.c.b16 %v5389, %v5381
  %v7566 = vpack.c.b16 %v5390, %v5382
  %v7567 = vpack.c.b16 %v5391, %v5383
  %v7568 = vpack.c.b16 %v5392, %v5384
  %v7569 = vpack.c.b16 %v5401, %v5393
  %v7570 = vpack.c.b16 %v5402, %v5394
  %v7571 = vpack.c.b16 %v5403, %v5395
  %v7572 = vpack.c.b16 %v5404, %v5396
  %v7573 = vpack.c.b16 %v5405, %v5397
  %v7574 = vpack.c.b16 %v5406, %v5398
  %v7575 = vpack.c.b16 %v5407, %v5399
  %v7576 = vpack.c.b16 %v5408, %v5400
  %v7577 = vpack.c.b16 %v5417, %v5409
  %v7578 = vpack.c.b16 %v5418, %v5410
  %v7579 = vpack.c.b16 %v5419, %v5411
  %v7580 = vpack.c.b16 %v5420, %v5412
  %v7581 = vpack.c.b16 %v5421, %v5413
  %v7582 = vpack.c.b16 %v5422, %v5414
  %v7583 = vpack.c.b16 %v5423, %v5415
  %v7584 = vpack.c.b16 %v5424, %v5416
  %v7585 = vpack.c.b16 %v5433, %v5425
  %v7586 = vpack.c.b16 %v5434, %v5426
  %v7587 = vpack.c.b16 %v5435, %v5427
  %v7588 = vpack.c.b16 %v5436, %v5428
  %v7589 = vpack.c.b16 %v5437, %v5429
  %v7590 = vpack.c.b16 %v5438, %v5430
  %v7591 = vpack.c.b16 %v5439, %v5431
  %v7592 = vpack.c.b16 %v5440, %v5432
  %v7593 = vpack.c.b16 %v5449, %v5441
  %v7594 = vpack.c.b16 %v5450, %v5442
  %v7595 = vpack.c.b16 %v5451, %v5443
  %v7596 = vpack.c.b16 %v5452, %v5444
  %v7597 = vpack.c.b16 %v5453, %v5445
  %v7598 = vpack.c.b16 %v5454, %v5446
  %v7599 = vpack.c.b16 %v5455, %v5447
  %v7600 = vpack.c.b16 %v5456, %v5448
  %v7601 = vpack.c.b16 %v5465, %v5457
  %v7602 = vpack.c.b16 %v5466, %v5458
  %v7603 = vpack.c.b16 %v5467, %v5459
  %v7604 = vpack.c.b16 %v5468, %v5460
  %v7605 = vpack.c.b16 %v5469, %v5461
  %v7606 = vpack.c.b16 %v5470, %v5462
  %v7607 = vpack.c.b16 %v5471, %v5463
  %v7608 = vpack.c.b16 %v5472, %v5464
  %v7609 = vpack.c.b16 %v5481, %v5473
  %v7610 = vpack.c.b16 %v5482, %v5474
  %v7611 = vpack.c.b16 %v5483, %v5475
  %v7612 = vpack.c.b16 %v5484, %v5476
  %v7613 = vpack.c.b16 %v5485, %v5477
  %v7614 = vpack.c.b16 %v5486, %v5478
  %v7615 = vpack.c.b16 %v5487, %v5479
  %v7616 = vpack.c.b16 %v5488, %v5480
  %v7617 = vpack.c.b16 %v5497, %v5489
  %v7618 = vpack.c.b16 %v5498, %v5490
  %v7619 = vpack.c.b16 %v5499, %v5491
  %v7620 = vpack.c.b16 %v5500, %v5492
  %v7621 = vpack.c.b16 %v5501, %v5493
  %v7622 = vpack.c.b16 %v5502, %v5494
  %v7623 = vpack.c.b16 %v5503, %v5495
  %v7624 = vpack.c.b16 %v5504, %v5496
  %v7625 = vpack.c.b16 %v5513, %v5505
  %v7626 = vpack.c.b16 %v5514, %v5506
  %v7627 = vpack.c.b16 %v5515, %v5507
  %v7628 = vpack.c.b16 %v5516, %v5508
  %v7629 = vpack.c.b16 %v5517, %v5509
  %v7630 = vpack.c.b16 %v5518, %v5510
  %v7631 = vpack.c.b16 %v5519, %v5511
  %v7632 = vpack.c.b16 %v5520, %v5512
  %v7633 = vpack.c.b16 %v5529, %v5521
  %v7634 = vpack.c.b16 %v5530, %v5522
  %v7635 = vpack.c.b16 %v5531, %v5523
  %v7636 = vpack.c.b16 %v5532, %v5524
  %v7637 = vpack.c.b16 %v5533, %v5525
  %v7638 = vpack.c.b16 %v5534, %v5526
  %v7639 = vpack.c.b16 %v5535, %v5527
  %v7640 = vpack.c.b16 %v5536, %v5528
  %v7641 = vpack.c.b16 %v5545, %v5537
  %v7642 = vpack.c.b16 %v5546, %v5538
  %v7643 = vpack.c.b16 %v5547, %v5539
  %v7644 = vpack.c.b16 %v5548, %v5540
  %v7645 = vpack.c.b16 %v5549, %v5541
  %v7646 = vpack.c.b16 %v5550, %v5542
  %v7647 = vpack.c.b16 %v5551, %v5543
  %v7648 = vpack.c.b16 %v5552, %v5544
  %v7649 = vpack.c.b16 %v5561, %v5553
  %v7650 = vpack.c.b16 %v5562, %v5554
  %v7651 = vpack.c.b16 %v5563, %v5555
  %v7652 = vpack.c.b16 %v5564, %v5556
  %v7653 = vpack.c.b16 %v5565, %v5557
  %v7654 = vpack.c.b16 %v5566, %v5558
  %v7655 = vpack.c.b16 %v5567, %v5559
  %v7656 = vpack.c.b16 %v5568, %v5560
  %v7657 = vpack.c.b16 %v5577, %v5569
  %v7658 = vpack.c.b16 %v5578, %v5570
  %v7659 = vpack.c.b16 %v5579, %v5571
  %v7660 = vpack.c.b16 %v5580, %v5572
  %v7661 = vpack.c.b16 %v5581, %v5573
  %v7662 = vpack.c.b16 %v5582, %v5574
  %v7663 = vpack.c.b16 %v5583, %v5575
  %v7664 = vpack.c.b16 %v5584, %v5576
  %v7665 = vpack.c.b16 %v5593, %v5585
  %v7666 = vpack.c.b16 %v5594, %v5586
  %v7667 = vpack.c.b16 %v5595, %v5587
  %v7668 = vpack.c.b16 %v5596, %v5588
  %v7669 = vpack.c.b16 %v5597, %v5589
  %v7670 = vpack.c.b16 %v5598, %v5590
  %v7671 = vpack.c.b16 %v5599, %v5591
  %v7672 = vpack.c.b16 %v5600, %v5592
  %v7673 = vpack.c.b16 %v5609, %v5601
  %v7674 = vpack.c.b16 %v5610, %v5602
  %v7675 = vpack.c.b16 %v5611, %v5603
  %v7676 = vpack.c.b16 %v5612, %v5604
  %v7677 = vpack.c.b16 %v5613, %v5605
  %v7678 = vpack.c.b16 %v5614, %v5606
  %v7679 = vpack.c.b16 %v5615, %v5607
  %v7680 = vpack.c.b16 %v5616, %v5608
  %v7681 = vpack.c.b16 %v5625, %v5617
  %v7682 = vpack.c.b16 %v5626, %v5618
  %v7683 = vpack.c.b16 %v5627, %v5619
  %v7684 = vpack.c.b16 %v5628, %v5620
  %v7685 = vpack.c.b16 %v5629, %v5621
  %v7686 = vpack.c.b16 %v5630, %v5622
  %v7687 = vpack.c.b16 %v5631, %v5623
  %v7688 = vpack.c.b16 %v5632, %v5624
  %v7689 = vpack.c.b16 %v5641, %v5633
  %v7690 = vpack.c.b16 %v5642, %v5634
  %v7691 = vpack.c.b16 %v5643, %v5635
  %v7692 = vpack.c.b16 %v5644, %v5636
  %v7693 = vpack.c.b16 %v5645, %v5637
  %v7694 = vpack.c.b16 %v5646, %v5638
  %v7695 = vpack.c.b16 %v5647, %v5639
  %v7696 = vpack.c.b16 %v5648, %v5640
  %v7697 = vpack.c.b16 %v5657, %v5649
  %v7698 = vpack.c.b16 %v5658, %v5650
  %v7699 = vpack.c.b16 %v5659, %v5651
  %v7700 = vpack.c.b16 %v5660, %v5652
  %v7701 = vpack.c.b16 %v5661, %v5653
  %v7702 = vpack.c.b16 %v5662, %v5654
  %v7703 = vpack.c.b16 %v5663, %v5655
  %v7704 = vpack.c.b16 %v5664, %v5656
  %v7705 = vpack.c.b16 %v5673, %v5665
  %v7706 = vpack.c.b16 %v5674, %v5666
  %v7707 = vpack.c.b16 %v5675, %v5667
  %v7708 = vpack.c.b16 %v5676, %v5668
  %v7709 = vpack.c.b16 %v5677, %v5669
  %v7710 = vpack.c.b16 %v5678, %v5670
  %v7711 = vpack.c.b16 %v5679, %v5671
  %v7712 = vpack.c.b16 %v5680, %v5672
  %v7713 = vpack.c.b16 %v5689, %v5681
  %v7714 = vpack.c.b16 %v5690, %v5682
  %v7715 = vpack.c.b16 %v5691, %v5683
  %v7716 = vpack.c.b16 %v5692, %v5684
  %v7717 = vpack.c.b16 %v5693, %v5685
  %v7718 = vpack.c.b16 %v5694, %v5686
  %v7719 = vpack.c.b16 %v5695, %v5687
  %v7720 = vpack.c.b16 %v5696, %v5688
  %v7721 = vpack.c.b16 %v5705, %v5697
  %v7722 = vpack.c.b16 %v5706, %v5698
  %v7723 = vpack.c.b16 %v5707, %v5699
  %v7724 = vpack.c.b16 %v5708, %v5700
  %v7725 = vpack.c.b16 %v5709, %v5701
  %v7726 = vpack.c.b16 %v5710, %v5702
  %v7727 = vpack.c.b16 %v5711, %v5703
  %v7728 = vpack.c.b16 %v5712, %v5704
  %v7729 = vpack.c.b16 %v5721, %v5713
  %v7730 = vpack.c.b16 %v5722, %v5714
  %v7731 = vpack.c.b16 %v5723, %v5715
  %v7732 = vpack.c.b16 %v5724, %v5716
  %v7733 = vpack.c.b16 %v5725, %v5717
  %v7734 = vpack.c.b16 %v5726, %v5718
  %v7735 = vpack.c.b16 %v5727, %v5719
  %v7736 = vpack.c.b16 %v5728, %v5720
  %v7737 = vpack.c.b16 %v5737, %v5729
  %v7738 = vpack.c.b16 %v5738, %v5730
  %v7739 = vpack.c.b16 %v5739, %v5731
  %v7740 = vpack.c.b16 %v5740, %v5732
  %v7741 = vpack.c.b16 %v5741, %v5733
  %v7742 = vpack.c.b16 %v5742, %v5734
  %v7743 = vpack.c.b16 %v5743, %v5735
  %v7744 = vpack.c.b16 %v5744, %v5736
  %v7745 = vpack.c.b16 %v5753, %v5745
  %v7746 = vpack.c.b16 %v5754, %v5746
  %v7747 = vpack.c.b16 %v5755, %v5747
  %v7748 = vpack.c.b16 %v5756, %v5748
  %v7749 = vpack.c.b16 %v5757, %v5749
  %v7750 = vpack.c.b16 %v5758, %v5750
  %v7751 = vpack.c.b16 %v5759, %v5751
  %v7752 = vpack.c.b16 %v5760, %v5752
  %v7753 = vpack.c.b16 %v5769, %v5761
  %v7754 = vpack.c.b16 %v5770, %v5762
  %v7755 = vpack.c.b16 %v5771, %v5763
  %v7756 = vpack.c.b16 %v5772, %v5764
  %v7757 = vpack.c.b16 %v5773, %v5765
  %v7758 = vpack.c.b16 %v5774, %v5766
  %v7759 = vpack.c.b16 %v5775, %v5767
  %v7760 = vpack.c.b16 %v5776, %v5768
  %v7761 = vpack.c.b16 %v5785, %v5777
  %v7762 = vpack.c.b16 %v5786, %v5778
  %v7763 = vpack.c.b16 %v5787, %v5779
  %v7764 = vpack.c.b16 %v5788, %v5780
  %v7765 = vpack.c.b16 %v5789, %v5781
  %v7766 = vpack.c.b16 %v5790, %v5782
  %v7767 = vpack.c.b16 %v5791, %v5783
  %v7768 = vpack.c.b16 %v5792, %v5784
  %v7769 = vpack.c.b16 %v5801, %v5793
  %v7770 = vpack.c.b16 %v5802, %v5794
  %v7771 = vpack.c.b16 %v5803, %v5795
  %v7772 = vpack.c.b16 %v5804, %v5796
  %v7773 = vpack.c.b16 %v5805, %v5797
  %v7774 = vpack.c.b16 %v5806, %v5798
  %v7775 = vpack.c.b16 %v5807, %v5799
  %v7776 = vpack.c.b16 %v5808, %v5800
  %v7777 = vpack.c.b16 %v5817, %v5809
  %v7778 = vpack.c.b16 %v5818, %v5810
  %v7779 = vpack.c.b16 %v5819, %v5811
  %v7780 = vpack.c.b16 %v5820, %v5812
  %v7781 = vpack.c.b16 %v5821, %v5813
  %v7782 = vpack.c.b16 %v5822, %v5814
  %v7783 = vpack.c.b16 %v5823, %v5815
  %v7784 = vpack.c.b16 %v5824, %v5816
  %v7785 = vpack.c.b16 %v5833, %v5825
  %v7786 = vpack.c.b16 %v5834, %v5826
  %v7787 = vpack.c.b16 %v5835, %v5827
  %v7788 = vpack.c.b16 %v5836, %v5828
  %v7789 = vpack.c.b16 %v5837, %v5829
  %v7790 = vpack.c.b16 %v5838, %v5830
  %v7791 = vpack.c.b16 %v5839, %v5831
  %v7792 = vpack.c.b16 %v5840, %v5832
  %v7793 = vpack.c.b16 %v5849, %v5841
  %v7794 = vpack.c.b16 %v5850, %v5842
  %v7795 = vpack.c.b16 %v5851, %v5843
  %v7796 = vpack.c.b16 %v5852, %v5844
  %v7797 = vpack.c.b16 %v5853, %v5845
  %v7798 = vpack.c.b16 %v5854, %v5846
  %v7799 = vpack.c.b16 %v5855, %v5847
  %v7800 = vpack.c.b16 %v5856, %v5848
  %v7801 = vpack.c.b16 %v5865, %v5857
  %v7802 = vpack.c.b16 %v5866, %v5858
  %v7803 = vpack.c.b16 %v5867, %v5859
  %v7804 = vpack.c.b16 %v5868, %v5860
  %v7805 = vpack.c.b16 %v5869, %v5861
  %v7806 = vpack.c.b16 %v5870, %v5862
  %v7807 = vpack.c.b16 %v5871, %v5863
  %v7808 = vpack.c.b16 %v5872, %v5864
  %v7809 = vpack.c.b16 %v5881, %v5873
  %v7810 = vpack.c.b16 %v5882, %v5874
  %v7811 = vpack.c.b16 %v5883, %v5875
  %v7812 = vpack.c.b16 %v5884, %v5876
  %v7813 = vpack.c.b16 %v5885, %v5877
  %v7814 = vpack.c.b16 %v5886, %v5878
  %v7815 = vpack.c.b16 %v5887, %v5879
  %v7816 = vpack.c.b16 %v5888, %v5880
  %v7817 = vpack.c.b16 %v5897, %v5889
  %v7818 = vpack.c.b16 %v5898, %v5890
  %v7819 = vpack.c.b16 %v5899, %v5891
  %v7820 = vpack.c.b16 %v5900, %v5892
  %v7821 = vpack.c.b16 %v5901, %v5893
  %v7822 = vpack.c.b16 %v5902, %v5894
  %v7823 = vpack.c.b16 %v5903, %v5895
  %v7824 = vpack.c.b16 %v5904, %v5896
  %v7825 = vpack.c.b16 %v5913, %v5905
  %v7826 = vpack.c.b16 %v5914, %v5906
  %v7827 = vpack.c.b16 %v5915, %v5907
  %v7828 = vpack.c.b16 %v5916, %v5908
  %v7829 = vpack.c.b16 %v5917, %v5909
  %v7830 = vpack.c.b16 %v5918, %v5910
  %v7831 = vpack.c.b16 %v5919, %v5911
  %v7832 = vpack.c.b16 %v5920, %v5912
  %v7833 = vpack.c.b16 %v5929, %v5921
  %v7834 = vpack.c.b16 %v5930, %v5922
  %v7835 = vpack.c.b16 %v5931, %v5923
  %v7836 = vpack.c.b16 %v5932, %v5924
  %v7837 = vpack.c.b16 %v5933, %v5925
  %v7838 = vpack.c.b16 %v5934, %v5926
  %v7839 = vpack.c.b16 %v5935, %v5927
  %v7840 = vpack.c.b16 %v5936, %v5928
  %v7841 = vpack.c.b16 %v5945, %v5937
  %v7842 = vpack.c.b16 %v5946, %v5938
  %v7843 = vpack.c.b16 %v5947, %v5939
  %v7844 = vpack.c.b16 %v5948, %v5940
  %v7845 = vpack.c.b16 %v5949, %v5941
  %v7846 = vpack.c.b16 %v5950, %v5942
  %v7847 = vpack.c.b16 %v5951, %v5943
  %v7848 = vpack.c.b16 %v5952, %v5944
  %v7849 = vpack.c.b16 %v5961, %v5953
  %v7850 = vpack.c.b16 %v5962, %v5954
  %v7851 = vpack.c.b16 %v5963, %v5955
  %v7852 = vpack.c.b16 %v5964, %v5956
  %v7853 = vpack.c.b16 %v5965, %v5957
  %v7854 = vpack.c.b16 %v5966, %v5958
  %v7855 = vpack.c.b16 %v5967, %v5959
  %v7856 = vpack.c.b16 %v5968, %v5960
  %v7857 = vpack.c.b16 %v5977, %v5969
  %v7858 = vpack.c.b16 %v5978, %v5970
  %v7859 = vpack.c.b16 %v5979, %v5971
  %v7860 = vpack.c.b16 %v5980, %v5972
  %v7861 = vpack.c.b16 %v5981, %v5973
  %v7862 = vpack.c.b16 %v5982, %v5974
  %v7863 = vpack.c.b16 %v5983, %v5975
  %v7864 = vpack.c.b16 %v5984, %v5976
  %v7865 = vpack.c.b16 %v5993, %v5985
  %v7866 = vpack.c.b16 %v5994, %v5986
  %v7867 = vpack.c.b16 %v5995, %v5987
  %v7868 = vpack.c.b16 %v5996, %v5988
  %v7869 = vpack.c.b16 %v5997, %v5989
  %v7870 = vpack.c.b16 %v5998, %v5990
  %v7871 = vpack.c.b16 %v5999, %v5991
  %v7872 = vpack.c.b16 %v6000, %v5992
  %v7873 = vpack.c.b16 %v6009, %v6001
  %v7874 = vpack.c.b16 %v6010, %v6002
  %v7875 = vpack.c.b16 %v6011, %v6003
  %v7876 = vpack.c.b16 %v6012, %v6004
  %v7877 = vpack.c.b16 %v6013, %v6005
  %v7878 = vpack.c.b16 %v6014, %v6006
  %v7879 = vpack.c.b16 %v6015, %v6007
  %v7880 = vpack.c.b16 %v6016, %v6008
  %v7881 = vpack.c.b16 %v6025, %v6017
  %v7882 = vpack.c.b16 %v6026, %v6018
  %v7883 = vpack.c.b16 %v6027, %v6019
  %v7884 = vpack.c.b16 %v6028, %v6020
  %v7885 = vpack.c.b16 %v6029, %v6021
  %v7886 = vpack.c.b16 %v6030, %v6022
  %v7887 = vpack.c.b16 %v6031, %v6023
  %v7888 = vpack.c.b16 %v6032, %v6024
  %v7889 = vpack.c.b16 %v6041, %v6033
  %v7890 = vpack.c.b16 %v6042, %v6034
  %v7891 = vpack.c.b16 %v6043, %v6035
  %v7892 = vpack.c.b16 %v6044, %v6036
  %v7893 = vpack.c.b16 %v6045, %v6037
  %v7894 = vpack.c.b16 %v6046, %v6038
  %v7895 = vpack.c.b16 %v6047, %v6039
  %v7896 = vpack.c.b16 %v6048, %v6040
  %v7897 = vpack.c.b16 %v6057, %v6049
  %v7898 = vpack.c.b16 %v6058, %v6050
  %v7899 = vpack.c.b16 %v6059, %v6051
  %v7900 = vpack.c.b16 %v6060, %v6052
  %v7901 = vpack.c.b16 %v6061, %v6053
  %v7902 = vpack.c.b16 %v6062, %v6054
  %v7903 = vpack.c.b16 %v6063, %v6055
  %v7904 = vpack.c.b16 %v6064, %v6056
  %v7905 = vpack.c.b16 %v6073, %v6065
  %v7906 = vpack.c.b16 %v6074, %v6066
  %v7907 = vpack.c.b16 %v6075, %v6067
  %v7908 = vpack.c.b16 %v6076, %v6068
  %v7909 = vpack.c.b16 %v6077, %v6069
  %v7910 = vpack.c.b16 %v6078, %v6070
  %v7911 = vpack.c.b16 %v6079, %v6071
  %v7912 = vpack.c.b16 %v6080, %v6072
  %v7913 = vpack.c.b16 %v6089, %v6081
  %v7914 = vpack.c.b16 %v6090, %v6082
  %v7915 = vpack.c.b16 %v6091, %v6083
  %v7916 = vpack.c.b16 %v6092, %v6084
  %v7917 = vpack.c.b16 %v6093, %v6085
  %v7918 = vpack.c.b16 %v6094, %v6086
  %v7919 = vpack.c.b16 %v6095, %v6087
  %v7920 = vpack.c.b16 %v6096, %v6088
  %v7921 = vpack.c.b16 %v6105, %v6097
  %v7922 = vpack.c.b16 %v6106, %v6098
  %v7923 = vpack.c.b16 %v6107, %v6099
  %v7924 = vpack.c.b16 %v6108, %v6100
  %v7925 = vpack.c.b16 %v6109, %v6101
  %v7926 = vpack.c.b16 %v6110, %v6102
  %v7927 = vpack.c.b16 %v6111, %v6103
  %v7928 = vpack.c.b16 %v6112, %v6104
  %v7929 = vpack.c.b16 %v6121, %v6113
  %v7930 = vpack.c.b16 %v6122, %v6114
  %v7931 = vpack.c.b16 %v6123, %v6115
  %v7932 = vpack.c.b16 %v6124, %v6116
  %v7933 = vpack.c.b16 %v6125, %v6117
  %v7934 = vpack.c.b16 %v6126, %v6118
  %v7935 = vpack.c.b16 %v6127, %v6119
  %v7936 = vpack.c.b16 %v6128, %v6120
  %v7937 = vpack.c.b16 %v6137, %v6129
  %v7938 = vpack.c.b16 %v6138, %v6130
  %v7939 = vpack.c.b16 %v6139, %v6131
  %v7940 = vpack.c.b16 %v6140, %v6132
  %v7941 = vpack.c.b16 %v6141, %v6133
  %v7942 = vpack.c.b16 %v6142, %v6134
  %v7943 = vpack.c.b16 %v6143, %v6135
  %v7944 = vpack.c.b16 %v6144, %v6136
  %v7945 = vpack.c.b16 %v6153, %v6145
  %v7946 = vpack.c.b16 %v6154, %v6146
  %v7947 = vpack.c.b16 %v6155, %v6147
  %v7948 = vpack.c.b16 %v6156, %v6148
  %v7949 = vpack.c.b16 %v6157, %v6149
  %v7950 = vpack.c.b16 %v6158, %v6150
  %v7951 = vpack.c.b16 %v6159, %v6151
  %v7952 = vpack.c.b16 %v6160, %v6152
  %v7953 = vpack.c.b16 %v6169, %v6161
  %v7954 = vpack.c.b16 %v6170, %v6162
  %v7955 = vpack.c.b16 %v6171, %v6163
  %v7956 = vpack.c.b16 %v6172, %v6164
  %v7957 = vpack.c.b16 %v6173, %v6165
  %v7958 = vpack.c.b16 %v6174, %v6166
  %v7959 = vpack.c.b16 %v6175, %v6167
  %v7960 = vpack.c.b16 %v6176, %v6168
  %v7961 = vpack.c.b16 %v6185, %v6177
  %v7962 = vpack.c.b16 %v6186, %v6178
  %v7963 = vpack.c.b16 %v6187, %v6179
  %v7964 = vpack.c.b16 %v6188, %v6180
  %v7965 = vpack.c.b16 %v6189, %v6181
  %v7966 = vpack.c.b16 %v6190, %v6182
  %v7967 = vpack.c.b16 %v6191, %v6183
  %v7968 = vpack.c.b16 %v6192, %v6184
  %v7969 = vpack.c.b16 %v6201, %v6193
  %v7970 = vpack.c.b16 %v6202, %v6194
  %v7971 = vpack.c.b16 %v6203, %v6195
  %v7972 = vpack.c.b16 %v6204, %v6196
  %v7973 = vpack.c.b16 %v6205, %v6197
  %v7974 = vpack.c.b16 %v6206, %v6198
  %v7975 = vpack.c.b16 %v6207, %v6199
  %v7976 = vpack.c.b16 %v6208, %v6200
  %v7977 = vpack.c.b16 %v6217, %v6209
  %v7978 = vpack.c.b16 %v6218, %v6210
  %v7979 = vpack.c.b16 %v6219, %v6211
  %v7980 = vpack.c.b16 %v6220, %v6212
  %v7981 = vpack.c.b16 %v6221, %v6213
  %v7982 = vpack.c.b16 %v6222, %v6214
  %v7983 = vpack.c.b16 %v6223, %v6215
  %v7984 = vpack.c.b16 %v6224, %v6216
  %v7985 = vpack.c.b16 %v6233, %v6225
  %v7986 = vpack.c.b16 %v6234, %v6226
  %v7987 = vpack.c.b16 %v6235, %v6227
  %v7988 = vpack.c.b16 %v6236, %v6228
  %v7989 = vpack.c.b16 %v6237, %v6229
  %v7990 = vpack.c.b16 %v6238, %v6230
  %v7991 = vpack.c.b16 %v6239, %v6231
  %v7992 = vpack.c.b16 %v6240, %v6232
  %v7993 = vpack.c.b16 %v6249, %v6241
  %v7994 = vpack.c.b16 %v6250, %v6242
  %v7995 = vpack.c.b16 %v6251, %v6243
  %v7996 = vpack.c.b16 %v6252, %v6244
  %v7997 = vpack.c.b16 %v6253, %v6245
  %v7998 = vpack.c.b16 %v6254, %v6246
  %v7999 = vpack.c.b16 %v6255, %v6247
  %v8000 = vpack.c.b16 %v6256, %v6248
  %v8001 = vpack.c.b16 %v6265, %v6257
  %v8002 = vpack.c.b16 %v6266, %v6258
  %v8003 = vpack.c.b16 %v6267, %v6259
  %v8004 = vpack.c.b16 %v6268, %v6260
  %v8005 = vpack.c.b16 %v6269, %v6261
  %v8006 = vpack.c.b16 %v6270, %v6262
  %v8007 = vpack.c.b16 %v6271, %v6263
  %v8008 = vpack.c.b16 %v6272, %v6264
  %v8009 = vpack.c.b16 %v6281, %v6273
  %v8010 = vpack.c.b16 %v6282, %v6274
  %v8011 = vpack.c.b16 %v6283, %v6275
  %v8012 = vpack.c.b16 %v6284, %v6276
  %v8013 = vpack.c.b16 %v6285, %v6277
  %v8014 = vpack.c.b16 %v6286, %v6278
  %v8015 = vpack.c.b16 %v6287, %v6279
  %v8016 = vpack.c.b16 %v6288, %v6280
  %v8017 = vpack.c.b16 %v6297, %v6289
  %v8018 = vpack.c.b16 %v6298, %v6290
  %v8019 = vpack.c.b16 %v6299, %v6291
  %v8020 = vpack.c.b16 %v6300, %v6292
  %v8021 = vpack.c.b16 %v6301, %v6293
  %v8022 = vpack.c.b16 %v6302, %v6294
  %v8023 = vpack.c.b16 %v6303, %v6295
  %v8024 = vpack.c.b16 %v6304, %v6296
  %v8025 = vpack.c.b16 %v6313, %v6305
  %v8026 = vpack.c.b16 %v6314, %v6306
  %v8027 = vpack.c.b16 %v6315, %v6307
  %v8028 = vpack.c.b16 %v6316, %v6308
  %v8029 = vpack.c.b16 %v6317, %v6309
  %v8030 = vpack.c.b16 %v6318, %v6310
  %v8031 = vpack.c.b16 %v6319, %v6311
  %v8032 = vpack.c.b16 %v6320, %v6312
  %v8033 = vpack.c.b16 %v6329, %v6321
  %v8034 = vpack.c.b16 %v6330, %v6322
  %v8035 = vpack.c.b16 %v6331, %v6323
  %v8036 = vpack.c.b16 %v6332, %v6324
  %v8037 = vpack.c.b16 %v6333, %v6325
  %v8038 = vpack.c.b16 %v6334, %v6326
  %v8039 = vpack.c.b16 %v6335, %v6327
  %v8040 = vpack.c.b16 %v6336, %v6328
  %v8041 = vpack.c.b16 %v6345, %v6337
  %v8042 = vpack.c.b16 %v6346, %v6338
  %v8043 = vpack.c.b16 %v6347, %v6339
  %v8044 = vpack.c.b16 %v6348, %v6340
  %v8045 = vpack.c.b16 %v6349, %v6341
  %v8046 = vpack.c.b16 %v6350, %v6342
  %v8047 = vpack.c.b16 %v6351, %v6343
  %v8048 = vpack.c.b16 %v6352, %v6344
  %v8049 = vpack.c.b16 %v6361, %v6353
  %v8050 = vpack.c.b16 %v6362, %v6354
  %v8051 = vpack.c.b16 %v6363, %v6355
  %v8052 = vpack.c.b16 %v6364, %v6356
  %v8053 = vpack.c.b16 %v6365, %v6357
  %v8054 = vpack.c.b16 %v6366, %v6358
  %v8055 = vpack.c.b16 %v6367, %v6359
  %v8056 = vpack.c.b16 %v6368, %v6360
  %v8057 = vpack.c.b16 %v6377, %v6369
  %v8058 = vpack.c.b16 %v6378, %v6370
  %v8059 = vpack.c.b16 %v6379, %v6371
  %v8060 = vpack.c.b16 %v6380, %v6372
  %v8061 = vpack.c.b16 %v6381, %v6373
  %v8062 = vpack.c.b16 %v6382, %v6374
  %v8063 = vpack.c.b16 %v6383, %v6375
  %v8064 = vpack.c.b16 %v6384, %v6376
  %v8065 = vpack.c.b16 %v6393, %v6385
  %v8066 = vpack.c.b16 %v6394, %v6386
  %v8067 = vpack.c.b16 %v6395, %v6387
  %v8068 = vpack.c.b16 %v6396, %v6388
  %v8069 = vpack.c.b16 %v6397, %v6389
  %v8070 = vpack.c.b16 %v6398, %v6390
  %v8071 = vpack.c.b16 %v6399, %v6391
  %v8072 = vpack.c.b16 %v6400, %v6392
  %v8073 = vpack.c.b16 %v6409, %v6401
  %v8074 = vpack.c.b16 %v6410, %v6402
  %v8075 = vpack.c.b16 %v6411, %v6403
  %v8076 = vpack.c.b16 %v6412, %v6404
  %v8077 = vpack.c.b16 %v6413, %v6405
  %v8078 = vpack.c.b16 %v6414, %v6406
  %v8079 = vpack.c.b16 %v6415, %v6407
  %v8080 = vpack.c.b16 %v6416, %v6408
  %v8081 = vpack.c.b16 %v6425, %v6417
  %v8082 = vpack.c.b16 %v6426, %v6418
  %v8083 = vpack.c.b16 %v6427, %v6419
  %v8084 = vpack.c.b16 %v6428, %v6420
  %v8085 = vpack.c.b16 %v6429, %v6421
  %v8086 = vpack.c.b16 %v6430, %v6422
  %v8087 = vpack.c.b16 %v6431, %v6423
  %v8088 = vpack.c.b16 %v6432, %v6424
  %v8089 = vpack.c.b16 %v6441, %v6433
  %v8090 = vpack.c.b16 %v6442, %v6434
  %v8091 = vpack.c.b16 %v6443, %v6435
  %v8092 = vpack.c.b16 %v6444, %v6436
  %v8093 = vpack.c.b16 %v6445, %v6437
  %v8094 = vpack.c.b16 %v6446, %v6438
  %v8095 = vpack.c.b16 %v6447, %v6439
  %v8096 = vpack.c.b16 %v6448, %v6440
  %v8097 = vpack.c.b16 %v6457, %v6449
  %v8098 = vpack.c.b16 %v6458, %v6450
  %v8099 = vpack.c.b16 %v6459, %v6451
  %v8100 = vpack.c.b16 %v6460, %v6452
  %v8101 = vpack.c.b16 %v6461, %v6453
  %v8102 = vpack.c.b16 %v6462, %v6454
  %v8103 = vpack.c.b16 %v6463, %v6455
  %v8104 = vpack.c.b16 %v6464, %v6456
  %v8105 = vpack.c.b16 %v6473, %v6465
  %v8106 = vpack.c.b16 %v6474, %v6466
  %v8107 = vpack.c.b16 %v6475, %v6467
  %v8108 = vpack.c.b16 %v6476, %v6468
  %v8109 = vpack.c.b16 %v6477, %v6469
  %v8110 = vpack.c.b16 %v6478, %v6470
  %v8111 = vpack.c.b16 %v6479, %v6471
  %v8112 = vpack.c.b16 %v6480, %v6472
  %v8113 = vpack.c.b16 %v6489, %v6481
  %v8114 = vpack.c.b16 %v6490, %v6482
  %v8115 = vpack.c.b16 %v6491, %v6483
  %v8116 = vpack.c.b16 %v6492, %v6484
  %v8117 = vpack.c.b16 %v6493, %v6485
  %v8118 = vpack.c.b16 %v6494, %v6486
  %v8119 = vpack.c.b16 %v6495, %v6487
  %v8120 = vpack.c.b16 %v6496, %v6488
  %v8121 = vpack.c.b16 %v6505, %v6497
  %v8122 = vpack.c.b16 %v6506, %v6498
  %v8123 = vpack.c.b16 %v6507, %v6499
  %v8124 = vpack.c.b16 %v6508, %v6500
  %v8125 = vpack.c.b16 %v6509, %v6501
  %v8126 = vpack.c.b16 %v6510, %v6502
  %v8127 = vpack.c.b16 %v6511, %v6503
  %v8128 = vpack.c.b16 %v6512, %v6504
  %v8129 = vpack.c.b16 %v6521, %v6513
  %v8130 = vpack.c.b16 %v6522, %v6514
  %v8131 = vpack.c.b16 %v6523, %v6515
  %v8132 = vpack.c.b16 %v6524, %v6516
  %v8133 = vpack.c.b16 %v6525, %v6517
  %v8134 = vpack.c.b16 %v6526, %v6518
  %v8135 = vpack.c.b16 %v6527, %v6519
  %v8136 = vpack.c.b16 %v6528, %v6520
  %v8137 = vpack.c.b16 %v6537, %v6529
  %v8138 = vpack.c.b16 %v6538, %v6530
  %v8139 = vpack.c.b16 %v6539, %v6531
  %v8140 = vpack.c.b16 %v6540, %v6532
  %v8141 = vpack.c.b16 %v6541, %v6533
  %v8142 = vpack.c.b16 %v6542, %v6534
  %v8143 = vpack.c.b16 %v6543, %v6535
  %v8144 = vpack.c.b16 %v6544, %v6536
  %9745 = vmatpush.bf16.msra.mxu0 %v6601
  %9746 = vmatpush.bf16.msra.mxu0 %v6593
  %9747 = vmatpush.bf16.msra.mxu0 %v6585
  %9748 = vmatpush.bf16.msra.mxu0 %v6577
  %9749 = vmatpush.bf16.msra.mxu0 %v6569
  %9750 = vmatpush.bf16.msra.mxu0 %v6561
  %9751 = vmatpush.bf16.msra.mxu0 %v6553
  %9752 = vmatpush.bf16.msra.mxu0 %v6545
  %9753 = vmatmul.bf16.gmra.mxu0 %v1695
  %v9754 = vpop.f32.mrf.mxu0
  %v9755 = vadd.f32 %v1641, %v9754
  %v9756 = vpop.f32.mrf.mxu0
  %9757 = vdwg.mxu0
  %9758 = vmatpush.bf16.msra.mxu0 %v6665
  %9759 = vmatpush.bf16.msra.mxu0 %v6657
  %9760 = vmatpush.bf16.msra.mxu0 %v6649
  %9761 = vmatpush.bf16.msra.mxu0 %v6641
  %9762 = vmatpush.bf16.msra.mxu0 %v6633
  %9763 = vmatpush.bf16.msra.mxu0 %v6625
  %9764 = vmatpush.bf16.msra.mxu0 %v6617
  %9765 = vmatpush.bf16.msra.mxu0 %v6609
  %9766 = vmatmul.bf16.gmra.mxu0 %v1696
  %v9767 = vpop.f32.mrf.mxu0
  %v9768 = vadd.f32 %v9755, %v9767
  %v9769 = vpop.f32.mrf.mxu0
  %9770 = vdwg.mxu0
  %9771 = vmatpush.bf16.msra.mxu0 %v6729
  %9772 = vmatpush.bf16.msra.mxu0 %v6721
  %9773 = vmatpush.bf16.msra.mxu0 %v6713
  %9774 = vmatpush.bf16.msra.mxu0 %v6705
  %9775 = vmatpush.bf16.msra.mxu0 %v6697
  %9776 = vmatpush.bf16.msra.mxu0 %v6689
  %9777 = vmatpush.bf16.msra.mxu0 %v6681
  %9778 = vmatpush.bf16.msra.mxu0 %v6673
  %9779 = vmatmul.bf16.gmra.mxu0 %v1697
  %v9780 = vpop.f32.mrf.mxu0
  %v9781 = vadd.f32 %v9768, %v9780
  %v9782 = vpop.f32.mrf.mxu0
  %9783 = vdwg.mxu0
  %9784 = vmatpush.bf16.msra.mxu0 %v6793
  %9785 = vmatpush.bf16.msra.mxu0 %v6785
  %9786 = vmatpush.bf16.msra.mxu0 %v6777
  %9787 = vmatpush.bf16.msra.mxu0 %v6769
  %9788 = vmatpush.bf16.msra.mxu0 %v6761
  %9789 = vmatpush.bf16.msra.mxu0 %v6753
  %9790 = vmatpush.bf16.msra.mxu0 %v6745
  %9791 = vmatpush.bf16.msra.mxu0 %v6737
  %9792 = vmatmul.bf16.gmra.mxu0 %v1698
  %v9793 = vpop.f32.mrf.mxu0
  %v9794 = vadd.f32 %v9781, %v9793
  %v9795 = vpop.f32.mrf.mxu0
  %9796 = vdwg.mxu0
  %9797 = vmatpush.bf16.msra.mxu0 %v6857
  %9798 = vmatpush.bf16.msra.mxu0 %v6849
  %9799 = vmatpush.bf16.msra.mxu0 %v6841
  %9800 = vmatpush.bf16.msra.mxu0 %v6833
  %9801 = vmatpush.bf16.msra.mxu0 %v6825
  %9802 = vmatpush.bf16.msra.mxu0 %v6817
  %9803 = vmatpush.bf16.msra.mxu0 %v6809
  %9804 = vmatpush.bf16.msra.mxu0 %v6801
  %9805 = vmatmul.bf16.gmra.mxu0 %v1699
  %v9806 = vpop.f32.mrf.mxu0
  %v9807 = vadd.f32 %v9794, %v9806
  %v9808 = vpop.f32.mrf.mxu0
  %9809 = vdwg.mxu0
  %9810 = vmatpush.bf16.msra.mxu0 %v6921
  %9811 = vmatpush.bf16.msra.mxu0 %v6913
  %9812 = vmatpush.bf16.msra.mxu0 %v6905
  %9813 = vmatpush.bf16.msra.mxu0 %v6897
  %9814 = vmatpush.bf16.msra.mxu0 %v6889
  %9815 = vmatpush.bf16.msra.mxu0 %v6881
  %9816 = vmatpush.bf16.msra.mxu0 %v6873
  %9817 = vmatpush.bf16.msra.mxu0 %v6865
  %9818 = vmatmul.bf16.gmra.mxu0 %v1700
  %v9819 = vpop.f32.mrf.mxu0
  %v9820 = vadd.f32 %v9807, %v9819
  %v9821 = vpop.f32.mrf.mxu0
  %9822 = vdwg.mxu0
  %9823 = vmatpush.bf16.msra.mxu0 %v6985
  %9824 = vmatpush.bf16.msra.mxu0 %v6977
  %9825 = vmatpush.bf16.msra.mxu0 %v6969
  %9826 = vmatpush.bf16.msra.mxu0 %v6961
  %9827 = vmatpush.bf16.msra.mxu0 %v6953
  %9828 = vmatpush.bf16.msra.mxu0 %v6945
  %9829 = vmatpush.bf16.msra.mxu0 %v6937
  %9830 = vmatpush.bf16.msra.mxu0 %v6929
  %9831 = vmatmul.bf16.gmra.mxu0 %v1701
  %v9832 = vpop.f32.mrf.mxu0
  %v9833 = vadd.f32 %v9820, %v9832
  %v9834 = vpop.f32.mrf.mxu0
  %9835 = vdwg.mxu0
  %9836 = vmatpush.bf16.msra.mxu0 %v7049
  %9837 = vmatpush.bf16.msra.mxu0 %v7041
  %9838 = vmatpush.bf16.msra.mxu0 %v7033
  %9839 = vmatpush.bf16.msra.mxu0 %v7025
  %9840 = vmatpush.bf16.msra.mxu0 %v7017
  %9841 = vmatpush.bf16.msra.mxu0 %v7009
  %9842 = vmatpush.bf16.msra.mxu0 %v7001
  %9843 = vmatpush.bf16.msra.mxu0 %v6993
  %9844 = vmatmul.bf16.gmra.mxu0 %v1702
  %v9845 = vpop.f32.mrf.mxu0
  %v9846 = vadd.f32 %v9833, %v9845
  %v9847 = vpop.f32.mrf.mxu0
  %9848 = vdwg.mxu0
  %9849 = vmatpush.bf16.msra.mxu0 %v7113
  %9850 = vmatpush.bf16.msra.mxu0 %v7105
  %9851 = vmatpush.bf16.msra.mxu0 %v7097
  %9852 = vmatpush.bf16.msra.mxu0 %v7089
  %9853 = vmatpush.bf16.msra.mxu0 %v7081
  %9854 = vmatpush.bf16.msra.mxu0 %v7073
  %9855 = vmatpush.bf16.msra.mxu0 %v7065
  %9856 = vmatpush.bf16.msra.mxu0 %v7057
  %9857 = vmatmul.bf16.gmra.mxu0 %v1703
  %v9858 = vpop.f32.mrf.mxu0
  %v9859 = vadd.f32 %v9846, %v9858
  %v9860 = vpop.f32.mrf.mxu0
  %9861 = vdwg.mxu0
  %9862 = vmatpush.bf16.msra.mxu0 %v7177
  %9863 = vmatpush.bf16.msra.mxu0 %v7169
  %9864 = vmatpush.bf16.msra.mxu0 %v7161
  %9865 = vmatpush.bf16.msra.mxu0 %v7153
  %9866 = vmatpush.bf16.msra.mxu0 %v7145
  %9867 = vmatpush.bf16.msra.mxu0 %v7137
  %9868 = vmatpush.bf16.msra.mxu0 %v7129
  %9869 = vmatpush.bf16.msra.mxu0 %v7121
  %9870 = vmatmul.bf16.gmra.mxu0 %v1704
  %v9871 = vpop.f32.mrf.mxu0
  %v9872 = vadd.f32 %v9859, %v9871
  %v9873 = vpop.f32.mrf.mxu0
  %9874 = vdwg.mxu0
  %9875 = vmatpush.bf16.msra.mxu0 %v7241
  %9876 = vmatpush.bf16.msra.mxu0 %v7233
  %9877 = vmatpush.bf16.msra.mxu0 %v7225
  %9878 = vmatpush.bf16.msra.mxu0 %v7217
  %9879 = vmatpush.bf16.msra.mxu0 %v7209
  %9880 = vmatpush.bf16.msra.mxu0 %v7201
  %9881 = vmatpush.bf16.msra.mxu0 %v7193
  %9882 = vmatpush.bf16.msra.mxu0 %v7185
  %9883 = vmatmul.bf16.gmra.mxu0 %v1705
  %v9884 = vpop.f32.mrf.mxu0
  %v9885 = vadd.f32 %v9872, %v9884
  %v9886 = vpop.f32.mrf.mxu0
  %9887 = vdwg.mxu0
  %9888 = vmatpush.bf16.msra.mxu0 %v7305
  %9889 = vmatpush.bf16.msra.mxu0 %v7297
  %9890 = vmatpush.bf16.msra.mxu0 %v7289
  %9891 = vmatpush.bf16.msra.mxu0 %v7281
  %9892 = vmatpush.bf16.msra.mxu0 %v7273
  %9893 = vmatpush.bf16.msra.mxu0 %v7265
  %9894 = vmatpush.bf16.msra.mxu0 %v7257
  %9895 = vmatpush.bf16.msra.mxu0 %v7249
  %9896 = vmatmul.bf16.gmra.mxu0 %v1706
  %v9897 = vpop.f32.mrf.mxu0
  %v9898 = vadd.f32 %v9885, %v9897
  %v9899 = vpop.f32.mrf.mxu0
  %9900 = vdwg.mxu0
  %9901 = vmatpush.bf16.msra.mxu0 %v7369
  %9902 = vmatpush.bf16.msra.mxu0 %v7361
  %9903 = vmatpush.bf16.msra.mxu0 %v7353
  %9904 = vmatpush.bf16.msra.mxu0 %v7345
  %9905 = vmatpush.bf16.msra.mxu0 %v7337
  %9906 = vmatpush.bf16.msra.mxu0 %v7329
  %9907 = vmatpush.bf16.msra.mxu0 %v7321
  %9908 = vmatpush.bf16.msra.mxu0 %v7313
  %9909 = vmatmul.bf16.gmra.mxu0 %v1707
  %v9910 = vpop.f32.mrf.mxu0
  %v9911 = vadd.f32 %v9898, %v9910
  %v9912 = vpop.f32.mrf.mxu0
  %9913 = vdwg.mxu0
  %9914 = vmatpush.bf16.msra.mxu0 %v7433
  %9915 = vmatpush.bf16.msra.mxu0 %v7425
  %9916 = vmatpush.bf16.msra.mxu0 %v7417
  %9917 = vmatpush.bf16.msra.mxu0 %v7409
  %9918 = vmatpush.bf16.msra.mxu0 %v7401
  %9919 = vmatpush.bf16.msra.mxu0 %v7393
  %9920 = vmatpush.bf16.msra.mxu0 %v7385
  %9921 = vmatpush.bf16.msra.mxu0 %v7377
  %9922 = vmatmul.bf16.gmra.mxu0 %v1708
  %v9923 = vpop.f32.mrf.mxu0
  %v9924 = vadd.f32 %v9911, %v9923
  %v9925 = vpop.f32.mrf.mxu0
  %9926 = vdwg.mxu0
  %9927 = vmatpush.bf16.msra.mxu0 %v7497
  %9928 = vmatpush.bf16.msra.mxu0 %v7489
  %9929 = vmatpush.bf16.msra.mxu0 %v7481
  %9930 = vmatpush.bf16.msra.mxu0 %v7473
  %9931 = vmatpush.bf16.msra.mxu0 %v7465
  %9932 = vmatpush.bf16.msra.mxu0 %v7457
  %9933 = vmatpush.bf16.msra.mxu0 %v7449
  %9934 = vmatpush.bf16.msra.mxu0 %v7441
  %9935 = vmatmul.bf16.gmra.mxu0 %v1709
  %v9936 = vpop.f32.mrf.mxu0
  %v9937 = vadd.f32 %v9924, %v9936
  %v9938 = vpop.f32.mrf.mxu0
  %9939 = vdwg.mxu0
  %9940 = vmatpush.bf16.msra.mxu0 %v7561
  %9941 = vmatpush.bf16.msra.mxu0 %v7553
  %9942 = vmatpush.bf16.msra.mxu0 %v7545
  %9943 = vmatpush.bf16.msra.mxu0 %v7537
  %9944 = vmatpush.bf16.msra.mxu0 %v7529
  %9945 = vmatpush.bf16.msra.mxu0 %v7521
  %9946 = vmatpush.bf16.msra.mxu0 %v7513
  %9947 = vmatpush.bf16.msra.mxu0 %v7505
  %9948 = vmatmul.bf16.gmra.mxu0 %v1710
  %v9949 = vpop.f32.mrf.mxu0
  %v9950 = vadd.f32 %v9937, %v9949
  %v9951 = vpop.f32.mrf.mxu0
  %9952 = vdwg.mxu0
  %9953 = vmatpush.bf16.msra.mxu0 %v7625
  %9954 = vmatpush.bf16.msra.mxu0 %v7617
  %9955 = vmatpush.bf16.msra.mxu0 %v7609
  %9956 = vmatpush.bf16.msra.mxu0 %v7601
  %9957 = vmatpush.bf16.msra.mxu0 %v7593
  %9958 = vmatpush.bf16.msra.mxu0 %v7585
  %9959 = vmatpush.bf16.msra.mxu0 %v7577
  %9960 = vmatpush.bf16.msra.mxu0 %v7569
  %9961 = vmatmul.bf16.gmra.mxu0 %v1711
  %v9962 = vpop.f32.mrf.mxu0
  %v9963 = vadd.f32 %v9950, %v9962
  %v9964 = vpop.f32.mrf.mxu0
  %9965 = vdwg.mxu0
  %9966 = vmatpush.bf16.msra.mxu0 %v7689
  %9967 = vmatpush.bf16.msra.mxu0 %v7681
  %9968 = vmatpush.bf16.msra.mxu0 %v7673
  %9969 = vmatpush.bf16.msra.mxu0 %v7665
  %9970 = vmatpush.bf16.msra.mxu0 %v7657
  %9971 = vmatpush.bf16.msra.mxu0 %v7649
  %9972 = vmatpush.bf16.msra.mxu0 %v7641
  %9973 = vmatpush.bf16.msra.mxu0 %v7633
  %9974 = vmatmul.bf16.gmra.mxu0 %v1712
  %v9975 = vpop.f32.mrf.mxu0
  %v9976 = vadd.f32 %v9963, %v9975
  %v9977 = vpop.f32.mrf.mxu0
  %9978 = vdwg.mxu0
  %9979 = vmatpush.bf16.msra.mxu0 %v7753
  %9980 = vmatpush.bf16.msra.mxu0 %v7745
  %9981 = vmatpush.bf16.msra.mxu0 %v7737
  %9982 = vmatpush.bf16.msra.mxu0 %v7729
  %9983 = vmatpush.bf16.msra.mxu0 %v7721
  %9984 = vmatpush.bf16.msra.mxu0 %v7713
  %9985 = vmatpush.bf16.msra.mxu0 %v7705
  %9986 = vmatpush.bf16.msra.mxu0 %v7697
  %9987 = vmatmul.bf16.gmra.mxu0 %v1713
  %v9988 = vpop.f32.mrf.mxu0
  %v9989 = vadd.f32 %v9976, %v9988
  %v9990 = vpop.f32.mrf.mxu0
  %9991 = vdwg.mxu0
  %9992 = vmatpush.bf16.msra.mxu0 %v7817
  %9993 = vmatpush.bf16.msra.mxu0 %v7809
  %9994 = vmatpush.bf16.msra.mxu0 %v7801
  %9995 = vmatpush.bf16.msra.mxu0 %v7793
  %9996 = vmatpush.bf16.msra.mxu0 %v7785
  %9997 = vmatpush.bf16.msra.mxu0 %v7777
  %9998 = vmatpush.bf16.msra.mxu0 %v7769
  %9999 = vmatpush.bf16.msra.mxu0 %v7761
  %10000 = vmatmul.bf16.gmra.mxu0 %v1714
  %v10001 = vpop.f32.mrf.mxu0
  %v10002 = vadd.f32 %v9989, %v10001
  %v10003 = vpop.f32.mrf.mxu0
  %10004 = vdwg.mxu0
  %10005 = vmatpush.bf16.msra.mxu0 %v7881
  %10006 = vmatpush.bf16.msra.mxu0 %v7873
  %10007 = vmatpush.bf16.msra.mxu0 %v7865
  %10008 = vmatpush.bf16.msra.mxu0 %v7857
  %10009 = vmatpush.bf16.msra.mxu0 %v7849
  %10010 = vmatpush.bf16.msra.mxu0 %v7841
  %10011 = vmatpush.bf16.msra.mxu0 %v7833
  %10012 = vmatpush.bf16.msra.mxu0 %v7825
  %10013 = vmatmul.bf16.gmra.mxu0 %v1715
  %v10014 = vpop.f32.mrf.mxu0
  %v10015 = vadd.f32 %v10002, %v10014
  %v10016 = vpop.f32.mrf.mxu0
  %10017 = vdwg.mxu0
  %10018 = vmatpush.bf16.msra.mxu0 %v7945
  %10019 = vmatpush.bf16.msra.mxu0 %v7937
  %10020 = vmatpush.bf16.msra.mxu0 %v7929
  %10021 = vmatpush.bf16.msra.mxu0 %v7921
  %10022 = vmatpush.bf16.msra.mxu0 %v7913
  %10023 = vmatpush.bf16.msra.mxu0 %v7905
  %10024 = vmatpush.bf16.msra.mxu0 %v7897
  %10025 = vmatpush.bf16.msra.mxu0 %v7889
  %10026 = vmatmul.bf16.gmra.mxu0 %v1716
  %v10027 = vpop.f32.mrf.mxu0
  %v10028 = vadd.f32 %v10015, %v10027
  %v10029 = vpop.f32.mrf.mxu0
  %10030 = vdwg.mxu0
  %10031 = vmatpush.bf16.msra.mxu0 %v8009
  %10032 = vmatpush.bf16.msra.mxu0 %v8001
  %10033 = vmatpush.bf16.msra.mxu0 %v7993
  %10034 = vmatpush.bf16.msra.mxu0 %v7985
  %10035 = vmatpush.bf16.msra.mxu0 %v7977
  %10036 = vmatpush.bf16.msra.mxu0 %v7969
  %10037 = vmatpush.bf16.msra.mxu0 %v7961
  %10038 = vmatpush.bf16.msra.mxu0 %v7953
  %10039 = vmatmul.bf16.gmra.mxu0 %v1717
  %v10040 = vpop.f32.mrf.mxu0
  %v10041 = vadd.f32 %v10028, %v10040
  %v10042 = vpop.f32.mrf.mxu0
  %10043 = vdwg.mxu0
  %10044 = vmatpush.bf16.msra.mxu0 %v8073
  %10045 = vmatpush.bf16.msra.mxu0 %v8065
  %10046 = vmatpush.bf16.msra.mxu0 %v8057
  %10047 = vmatpush.bf16.msra.mxu0 %v8049
  %10048 = vmatpush.bf16.msra.mxu0 %v8041
  %10049 = vmatpush.bf16.msra.mxu0 %v8033
  %10050 = vmatpush.bf16.msra.mxu0 %v8025
  %10051 = vmatpush.bf16.msra.mxu0 %v8017
  %10052 = vmatmul.bf16.gmra.mxu0 %v1718
  %v10053 = vpop.f32.mrf.mxu0
  %v10054 = vadd.f32 %v10041, %v10053
  %v10055 = vpop.f32.mrf.mxu0
  %10056 = vdwg.mxu0
  %10057 = vmatpush.bf16.msra.mxu0 %v8137
  %10058 = vmatpush.bf16.msra.mxu0 %v8129
  %10059 = vmatpush.bf16.msra.mxu0 %v8121
  %10060 = vmatpush.bf16.msra.mxu0 %v8113
  %10061 = vmatpush.bf16.msra.mxu0 %v8105
  %10062 = vmatpush.bf16.msra.mxu0 %v8097
  %10063 = vmatpush.bf16.msra.mxu0 %v8089
  %10064 = vmatpush.bf16.msra.mxu0 %v8081
  %10065 = vmatmul.bf16.gmra.mxu0 %v1719
  %v10066 = vpop.f32.mrf.mxu0
  %v10067 = vadd.f32 %v10054, %v10066
  %v10068 = vpop.f32.mrf.mxu0
  %10069 = vdwg.mxu0
  %10070 = vmatpush.bf16.msra.mxu0 %v6602
  %10071 = vmatpush.bf16.msra.mxu0 %v6594
  %10072 = vmatpush.bf16.msra.mxu0 %v6586
  %10073 = vmatpush.bf16.msra.mxu0 %v6578
  %10074 = vmatpush.bf16.msra.mxu0 %v6570
  %10075 = vmatpush.bf16.msra.mxu0 %v6562
  %10076 = vmatpush.bf16.msra.mxu0 %v6554
  %10077 = vmatpush.bf16.msra.mxu0 %v6546
  %10078 = vmatmul.bf16.gmra.mxu0 %v1695
  %v10079 = vpop.f32.mrf.mxu0
  %v10080 = vadd.f32 %v1642, %v10079
  %v10081 = vpop.f32.mrf.mxu0
  %10082 = vdwg.mxu0
  %10083 = vmatpush.bf16.msra.mxu0 %v6666
  %10084 = vmatpush.bf16.msra.mxu0 %v6658
  %10085 = vmatpush.bf16.msra.mxu0 %v6650
  %10086 = vmatpush.bf16.msra.mxu0 %v6642
  %10087 = vmatpush.bf16.msra.mxu0 %v6634
  %10088 = vmatpush.bf16.msra.mxu0 %v6626
  %10089 = vmatpush.bf16.msra.mxu0 %v6618
  %10090 = vmatpush.bf16.msra.mxu0 %v6610
  %10091 = vmatmul.bf16.gmra.mxu0 %v1696
  %v10092 = vpop.f32.mrf.mxu0
  %v10093 = vadd.f32 %v10080, %v10092
  %v10094 = vpop.f32.mrf.mxu0
  %10095 = vdwg.mxu0
  %10096 = vmatpush.bf16.msra.mxu0 %v6730
  %10097 = vmatpush.bf16.msra.mxu0 %v6722
  %10098 = vmatpush.bf16.msra.mxu0 %v6714
  %10099 = vmatpush.bf16.msra.mxu0 %v6706
  %10100 = vmatpush.bf16.msra.mxu0 %v6698
  %10101 = vmatpush.bf16.msra.mxu0 %v6690
  %10102 = vmatpush.bf16.msra.mxu0 %v6682
  %10103 = vmatpush.bf16.msra.mxu0 %v6674
  %10104 = vmatmul.bf16.gmra.mxu0 %v1697
  %v10105 = vpop.f32.mrf.mxu0
  %v10106 = vadd.f32 %v10093, %v10105
  %v10107 = vpop.f32.mrf.mxu0
  %10108 = vdwg.mxu0
  %10109 = vmatpush.bf16.msra.mxu0 %v6794
  %10110 = vmatpush.bf16.msra.mxu0 %v6786
  %10111 = vmatpush.bf16.msra.mxu0 %v6778
  %10112 = vmatpush.bf16.msra.mxu0 %v6770
  %10113 = vmatpush.bf16.msra.mxu0 %v6762
  %10114 = vmatpush.bf16.msra.mxu0 %v6754
  %10115 = vmatpush.bf16.msra.mxu0 %v6746
  %10116 = vmatpush.bf16.msra.mxu0 %v6738
  %10117 = vmatmul.bf16.gmra.mxu0 %v1698
  %v10118 = vpop.f32.mrf.mxu0
  %v10119 = vadd.f32 %v10106, %v10118
  %v10120 = vpop.f32.mrf.mxu0
  %10121 = vdwg.mxu0
  %10122 = vmatpush.bf16.msra.mxu0 %v6858
  %10123 = vmatpush.bf16.msra.mxu0 %v6850
  %10124 = vmatpush.bf16.msra.mxu0 %v6842
  %10125 = vmatpush.bf16.msra.mxu0 %v6834
  %10126 = vmatpush.bf16.msra.mxu0 %v6826
  %10127 = vmatpush.bf16.msra.mxu0 %v6818
  %10128 = vmatpush.bf16.msra.mxu0 %v6810
  %10129 = vmatpush.bf16.msra.mxu0 %v6802
  %10130 = vmatmul.bf16.gmra.mxu0 %v1699
  %v10131 = vpop.f32.mrf.mxu0
  %v10132 = vadd.f32 %v10119, %v10131
  %v10133 = vpop.f32.mrf.mxu0
  %10134 = vdwg.mxu0
  %10135 = vmatpush.bf16.msra.mxu0 %v6922
  %10136 = vmatpush.bf16.msra.mxu0 %v6914
  %10137 = vmatpush.bf16.msra.mxu0 %v6906
  %10138 = vmatpush.bf16.msra.mxu0 %v6898
  %10139 = vmatpush.bf16.msra.mxu0 %v6890
  %10140 = vmatpush.bf16.msra.mxu0 %v6882
  %10141 = vmatpush.bf16.msra.mxu0 %v6874
  %10142 = vmatpush.bf16.msra.mxu0 %v6866
  %10143 = vmatmul.bf16.gmra.mxu0 %v1700
  %v10144 = vpop.f32.mrf.mxu0
  %v10145 = vadd.f32 %v10132, %v10144
  %v10146 = vpop.f32.mrf.mxu0
  %10147 = vdwg.mxu0
  %10148 = vmatpush.bf16.msra.mxu0 %v6986
  %10149 = vmatpush.bf16.msra.mxu0 %v6978
  %10150 = vmatpush.bf16.msra.mxu0 %v6970
  %10151 = vmatpush.bf16.msra.mxu0 %v6962
  %10152 = vmatpush.bf16.msra.mxu0 %v6954
  %10153 = vmatpush.bf16.msra.mxu0 %v6946
  %10154 = vmatpush.bf16.msra.mxu0 %v6938
  %10155 = vmatpush.bf16.msra.mxu0 %v6930
  %10156 = vmatmul.bf16.gmra.mxu0 %v1701
  %v10157 = vpop.f32.mrf.mxu0
  %v10158 = vadd.f32 %v10145, %v10157
  %v10159 = vpop.f32.mrf.mxu0
  %10160 = vdwg.mxu0
  %10161 = vmatpush.bf16.msra.mxu0 %v7050
  %10162 = vmatpush.bf16.msra.mxu0 %v7042
  %10163 = vmatpush.bf16.msra.mxu0 %v7034
  %10164 = vmatpush.bf16.msra.mxu0 %v7026
  %10165 = vmatpush.bf16.msra.mxu0 %v7018
  %10166 = vmatpush.bf16.msra.mxu0 %v7010
  %10167 = vmatpush.bf16.msra.mxu0 %v7002
  %10168 = vmatpush.bf16.msra.mxu0 %v6994
  %10169 = vmatmul.bf16.gmra.mxu0 %v1702
  %v10170 = vpop.f32.mrf.mxu0
  %v10171 = vadd.f32 %v10158, %v10170
  %v10172 = vpop.f32.mrf.mxu0
  %10173 = vdwg.mxu0
  %10174 = vmatpush.bf16.msra.mxu0 %v7114
  %10175 = vmatpush.bf16.msra.mxu0 %v7106
  %10176 = vmatpush.bf16.msra.mxu0 %v7098
  %10177 = vmatpush.bf16.msra.mxu0 %v7090
  %10178 = vmatpush.bf16.msra.mxu0 %v7082
  %10179 = vmatpush.bf16.msra.mxu0 %v7074
  %10180 = vmatpush.bf16.msra.mxu0 %v7066
  %10181 = vmatpush.bf16.msra.mxu0 %v7058
  %10182 = vmatmul.bf16.gmra.mxu0 %v1703
  %v10183 = vpop.f32.mrf.mxu0
  %v10184 = vadd.f32 %v10171, %v10183
  %v10185 = vpop.f32.mrf.mxu0
  %10186 = vdwg.mxu0
  %10187 = vmatpush.bf16.msra.mxu0 %v7178
  %10188 = vmatpush.bf16.msra.mxu0 %v7170
  %10189 = vmatpush.bf16.msra.mxu0 %v7162
  %10190 = vmatpush.bf16.msra.mxu0 %v7154
  %10191 = vmatpush.bf16.msra.mxu0 %v7146
  %10192 = vmatpush.bf16.msra.mxu0 %v7138
  %10193 = vmatpush.bf16.msra.mxu0 %v7130
  %10194 = vmatpush.bf16.msra.mxu0 %v7122
  %10195 = vmatmul.bf16.gmra.mxu0 %v1704
  %v10196 = vpop.f32.mrf.mxu0
  %v10197 = vadd.f32 %v10184, %v10196
  %v10198 = vpop.f32.mrf.mxu0
  %10199 = vdwg.mxu0
  %10200 = vmatpush.bf16.msra.mxu0 %v7242
  %10201 = vmatpush.bf16.msra.mxu0 %v7234
  %10202 = vmatpush.bf16.msra.mxu0 %v7226
  %10203 = vmatpush.bf16.msra.mxu0 %v7218
  %10204 = vmatpush.bf16.msra.mxu0 %v7210
  %10205 = vmatpush.bf16.msra.mxu0 %v7202
  %10206 = vmatpush.bf16.msra.mxu0 %v7194
  %10207 = vmatpush.bf16.msra.mxu0 %v7186
  %10208 = vmatmul.bf16.gmra.mxu0 %v1705
  %v10209 = vpop.f32.mrf.mxu0
  %v10210 = vadd.f32 %v10197, %v10209
  %v10211 = vpop.f32.mrf.mxu0
  %10212 = vdwg.mxu0
  %10213 = vmatpush.bf16.msra.mxu0 %v7306
  %10214 = vmatpush.bf16.msra.mxu0 %v7298
  %10215 = vmatpush.bf16.msra.mxu0 %v7290
  %10216 = vmatpush.bf16.msra.mxu0 %v7282
  %10217 = vmatpush.bf16.msra.mxu0 %v7274
  %10218 = vmatpush.bf16.msra.mxu0 %v7266
  %10219 = vmatpush.bf16.msra.mxu0 %v7258
  %10220 = vmatpush.bf16.msra.mxu0 %v7250
  %10221 = vmatmul.bf16.gmra.mxu0 %v1706
  %v10222 = vpop.f32.mrf.mxu0
  %v10223 = vadd.f32 %v10210, %v10222
  %v10224 = vpop.f32.mrf.mxu0
  %10225 = vdwg.mxu0
  %10226 = vmatpush.bf16.msra.mxu0 %v7370
  %10227 = vmatpush.bf16.msra.mxu0 %v7362
  %10228 = vmatpush.bf16.msra.mxu0 %v7354
  %10229 = vmatpush.bf16.msra.mxu0 %v7346
  %10230 = vmatpush.bf16.msra.mxu0 %v7338
  %10231 = vmatpush.bf16.msra.mxu0 %v7330
  %10232 = vmatpush.bf16.msra.mxu0 %v7322
  %10233 = vmatpush.bf16.msra.mxu0 %v7314
  %10234 = vmatmul.bf16.gmra.mxu0 %v1707
  %v10235 = vpop.f32.mrf.mxu0
  %v10236 = vadd.f32 %v10223, %v10235
  %v10237 = vpop.f32.mrf.mxu0
  %10238 = vdwg.mxu0
  %10239 = vmatpush.bf16.msra.mxu0 %v7434
  %10240 = vmatpush.bf16.msra.mxu0 %v7426
  %10241 = vmatpush.bf16.msra.mxu0 %v7418
  %10242 = vmatpush.bf16.msra.mxu0 %v7410
  %10243 = vmatpush.bf16.msra.mxu0 %v7402
  %10244 = vmatpush.bf16.msra.mxu0 %v7394
  %10245 = vmatpush.bf16.msra.mxu0 %v7386
  %10246 = vmatpush.bf16.msra.mxu0 %v7378
  %10247 = vmatmul.bf16.gmra.mxu0 %v1708
  %v10248 = vpop.f32.mrf.mxu0
  %v10249 = vadd.f32 %v10236, %v10248
  %v10250 = vpop.f32.mrf.mxu0
  %10251 = vdwg.mxu0
  %10252 = vmatpush.bf16.msra.mxu0 %v7498
  %10253 = vmatpush.bf16.msra.mxu0 %v7490
  %10254 = vmatpush.bf16.msra.mxu0 %v7482
  %10255 = vmatpush.bf16.msra.mxu0 %v7474
  %10256 = vmatpush.bf16.msra.mxu0 %v7466
  %10257 = vmatpush.bf16.msra.mxu0 %v7458
  %10258 = vmatpush.bf16.msra.mxu0 %v7450
  %10259 = vmatpush.bf16.msra.mxu0 %v7442
  %10260 = vmatmul.bf16.gmra.mxu0 %v1709
  %v10261 = vpop.f32.mrf.mxu0
  %v10262 = vadd.f32 %v10249, %v10261
  %v10263 = vpop.f32.mrf.mxu0
  %10264 = vdwg.mxu0
  %10265 = vmatpush.bf16.msra.mxu0 %v7562
  %10266 = vmatpush.bf16.msra.mxu0 %v7554
  %10267 = vmatpush.bf16.msra.mxu0 %v7546
  %10268 = vmatpush.bf16.msra.mxu0 %v7538
  %10269 = vmatpush.bf16.msra.mxu0 %v7530
  %10270 = vmatpush.bf16.msra.mxu0 %v7522
  %10271 = vmatpush.bf16.msra.mxu0 %v7514
  %10272 = vmatpush.bf16.msra.mxu0 %v7506
  %10273 = vmatmul.bf16.gmra.mxu0 %v1710
  %v10274 = vpop.f32.mrf.mxu0
  %v10275 = vadd.f32 %v10262, %v10274
  %v10276 = vpop.f32.mrf.mxu0
  %10277 = vdwg.mxu0
  %10278 = vmatpush.bf16.msra.mxu0 %v7626
  %10279 = vmatpush.bf16.msra.mxu0 %v7618
  %10280 = vmatpush.bf16.msra.mxu0 %v7610
  %10281 = vmatpush.bf16.msra.mxu0 %v7602
  %10282 = vmatpush.bf16.msra.mxu0 %v7594
  %10283 = vmatpush.bf16.msra.mxu0 %v7586
  %10284 = vmatpush.bf16.msra.mxu0 %v7578
  %10285 = vmatpush.bf16.msra.mxu0 %v7570
  %10286 = vmatmul.bf16.gmra.mxu0 %v1711
  %v10287 = vpop.f32.mrf.mxu0
  %v10288 = vadd.f32 %v10275, %v10287
  %v10289 = vpop.f32.mrf.mxu0
  %10290 = vdwg.mxu0
  %10291 = vmatpush.bf16.msra.mxu0 %v7690
  %10292 = vmatpush.bf16.msra.mxu0 %v7682
  %10293 = vmatpush.bf16.msra.mxu0 %v7674
  %10294 = vmatpush.bf16.msra.mxu0 %v7666
  %10295 = vmatpush.bf16.msra.mxu0 %v7658
  %10296 = vmatpush.bf16.msra.mxu0 %v7650
  %10297 = vmatpush.bf16.msra.mxu0 %v7642
  %10298 = vmatpush.bf16.msra.mxu0 %v7634
  %10299 = vmatmul.bf16.gmra.mxu0 %v1712
  %v10300 = vpop.f32.mrf.mxu0
  %v10301 = vadd.f32 %v10288, %v10300
  %v10302 = vpop.f32.mrf.mxu0
  %10303 = vdwg.mxu0
  %10304 = vmatpush.bf16.msra.mxu0 %v7754
  %10305 = vmatpush.bf16.msra.mxu0 %v7746
  %10306 = vmatpush.bf16.msra.mxu0 %v7738
  %10307 = vmatpush.bf16.msra.mxu0 %v7730
  %10308 = vmatpush.bf16.msra.mxu0 %v7722
  %10309 = vmatpush.bf16.msra.mxu0 %v7714
  %10310 = vmatpush.bf16.msra.mxu0 %v7706
  %10311 = vmatpush.bf16.msra.mxu0 %v7698
  %10312 = vmatmul.bf16.gmra.mxu0 %v1713
  %v10313 = vpop.f32.mrf.mxu0
  %v10314 = vadd.f32 %v10301, %v10313
  %v10315 = vpop.f32.mrf.mxu0
  %10316 = vdwg.mxu0
  %10317 = vmatpush.bf16.msra.mxu0 %v7818
  %10318 = vmatpush.bf16.msra.mxu0 %v7810
  %10319 = vmatpush.bf16.msra.mxu0 %v7802
  %10320 = vmatpush.bf16.msra.mxu0 %v7794
  %10321 = vmatpush.bf16.msra.mxu0 %v7786
  %10322 = vmatpush.bf16.msra.mxu0 %v7778
  %10323 = vmatpush.bf16.msra.mxu0 %v7770
  %10324 = vmatpush.bf16.msra.mxu0 %v7762
  %10325 = vmatmul.bf16.gmra.mxu0 %v1714
  %v10326 = vpop.f32.mrf.mxu0
  %v10327 = vadd.f32 %v10314, %v10326
  %v10328 = vpop.f32.mrf.mxu0
  %10329 = vdwg.mxu0
  %10330 = vmatpush.bf16.msra.mxu0 %v7882
  %10331 = vmatpush.bf16.msra.mxu0 %v7874
  %10332 = vmatpush.bf16.msra.mxu0 %v7866
  %10333 = vmatpush.bf16.msra.mxu0 %v7858
  %10334 = vmatpush.bf16.msra.mxu0 %v7850
  %10335 = vmatpush.bf16.msra.mxu0 %v7842
  %10336 = vmatpush.bf16.msra.mxu0 %v7834
  %10337 = vmatpush.bf16.msra.mxu0 %v7826
  %10338 = vmatmul.bf16.gmra.mxu0 %v1715
  %v10339 = vpop.f32.mrf.mxu0
  %v10340 = vadd.f32 %v10327, %v10339
  %v10341 = vpop.f32.mrf.mxu0
  %10342 = vdwg.mxu0
  %10343 = vmatpush.bf16.msra.mxu0 %v7946
  %10344 = vmatpush.bf16.msra.mxu0 %v7938
  %10345 = vmatpush.bf16.msra.mxu0 %v7930
  %10346 = vmatpush.bf16.msra.mxu0 %v7922
  %10347 = vmatpush.bf16.msra.mxu0 %v7914
  %10348 = vmatpush.bf16.msra.mxu0 %v7906
  %10349 = vmatpush.bf16.msra.mxu0 %v7898
  %10350 = vmatpush.bf16.msra.mxu0 %v7890
  %10351 = vmatmul.bf16.gmra.mxu0 %v1716
  %v10352 = vpop.f32.mrf.mxu0
  %v10353 = vadd.f32 %v10340, %v10352
  %v10354 = vpop.f32.mrf.mxu0
  %10355 = vdwg.mxu0
  %10356 = vmatpush.bf16.msra.mxu0 %v8010
  %10357 = vmatpush.bf16.msra.mxu0 %v8002
  %10358 = vmatpush.bf16.msra.mxu0 %v7994
  %10359 = vmatpush.bf16.msra.mxu0 %v7986
  %10360 = vmatpush.bf16.msra.mxu0 %v7978
  %10361 = vmatpush.bf16.msra.mxu0 %v7970
  %10362 = vmatpush.bf16.msra.mxu0 %v7962
  %10363 = vmatpush.bf16.msra.mxu0 %v7954
  %10364 = vmatmul.bf16.gmra.mxu0 %v1717
  %v10365 = vpop.f32.mrf.mxu0
  %v10366 = vadd.f32 %v10353, %v10365
  %v10367 = vpop.f32.mrf.mxu0
  %10368 = vdwg.mxu0
  %10369 = vmatpush.bf16.msra.mxu0 %v8074
  %10370 = vmatpush.bf16.msra.mxu0 %v8066
  %10371 = vmatpush.bf16.msra.mxu0 %v8058
  %10372 = vmatpush.bf16.msra.mxu0 %v8050
  %10373 = vmatpush.bf16.msra.mxu0 %v8042
  %10374 = vmatpush.bf16.msra.mxu0 %v8034
  %10375 = vmatpush.bf16.msra.mxu0 %v8026
  %10376 = vmatpush.bf16.msra.mxu0 %v8018
  %10377 = vmatmul.bf16.gmra.mxu0 %v1718
  %v10378 = vpop.f32.mrf.mxu0
  %v10379 = vadd.f32 %v10366, %v10378
  %v10380 = vpop.f32.mrf.mxu0
  %10381 = vdwg.mxu0
  %10382 = vmatpush.bf16.msra.mxu0 %v8138
  %10383 = vmatpush.bf16.msra.mxu0 %v8130
  %10384 = vmatpush.bf16.msra.mxu0 %v8122
  %10385 = vmatpush.bf16.msra.mxu0 %v8114
  %10386 = vmatpush.bf16.msra.mxu0 %v8106
  %10387 = vmatpush.bf16.msra.mxu0 %v8098
  %10388 = vmatpush.bf16.msra.mxu0 %v8090
  %10389 = vmatpush.bf16.msra.mxu0 %v8082
  %10390 = vmatmul.bf16.gmra.mxu0 %v1719
  %v10391 = vpop.f32.mrf.mxu0
  %v10392 = vadd.f32 %v10379, %v10391
  %v10393 = vpop.f32.mrf.mxu0
  %10394 = vdwg.mxu0
  %10395 = vmatpush.bf16.msra.mxu0 %v6603
  %10396 = vmatpush.bf16.msra.mxu0 %v6595
  %10397 = vmatpush.bf16.msra.mxu0 %v6587
  %10398 = vmatpush.bf16.msra.mxu0 %v6579
  %10399 = vmatpush.bf16.msra.mxu0 %v6571
  %10400 = vmatpush.bf16.msra.mxu0 %v6563
  %10401 = vmatpush.bf16.msra.mxu0 %v6555
  %10402 = vmatpush.bf16.msra.mxu0 %v6547
  %10403 = vmatmul.bf16.gmra.mxu0 %v1695
  %v10404 = vpop.f32.mrf.mxu0
  %v10405 = vadd.f32 %v1643, %v10404
  %v10406 = vpop.f32.mrf.mxu0
  %10407 = vdwg.mxu0
  %10408 = vmatpush.bf16.msra.mxu0 %v6667
  %10409 = vmatpush.bf16.msra.mxu0 %v6659
  %10410 = vmatpush.bf16.msra.mxu0 %v6651
  %10411 = vmatpush.bf16.msra.mxu0 %v6643
  %10412 = vmatpush.bf16.msra.mxu0 %v6635
  %10413 = vmatpush.bf16.msra.mxu0 %v6627
  %10414 = vmatpush.bf16.msra.mxu0 %v6619
  %10415 = vmatpush.bf16.msra.mxu0 %v6611
  %10416 = vmatmul.bf16.gmra.mxu0 %v1696
  %v10417 = vpop.f32.mrf.mxu0
  %v10418 = vadd.f32 %v10405, %v10417
  %v10419 = vpop.f32.mrf.mxu0
  %10420 = vdwg.mxu0
  %10421 = vmatpush.bf16.msra.mxu0 %v6731
  %10422 = vmatpush.bf16.msra.mxu0 %v6723
  %10423 = vmatpush.bf16.msra.mxu0 %v6715
  %10424 = vmatpush.bf16.msra.mxu0 %v6707
  %10425 = vmatpush.bf16.msra.mxu0 %v6699
  %10426 = vmatpush.bf16.msra.mxu0 %v6691
  %10427 = vmatpush.bf16.msra.mxu0 %v6683
  %10428 = vmatpush.bf16.msra.mxu0 %v6675
  %10429 = vmatmul.bf16.gmra.mxu0 %v1697
  %v10430 = vpop.f32.mrf.mxu0
  %v10431 = vadd.f32 %v10418, %v10430
  %v10432 = vpop.f32.mrf.mxu0
  %10433 = vdwg.mxu0
  %10434 = vmatpush.bf16.msra.mxu0 %v6795
  %10435 = vmatpush.bf16.msra.mxu0 %v6787
  %10436 = vmatpush.bf16.msra.mxu0 %v6779
  %10437 = vmatpush.bf16.msra.mxu0 %v6771
  %10438 = vmatpush.bf16.msra.mxu0 %v6763
  %10439 = vmatpush.bf16.msra.mxu0 %v6755
  %10440 = vmatpush.bf16.msra.mxu0 %v6747
  %10441 = vmatpush.bf16.msra.mxu0 %v6739
  %10442 = vmatmul.bf16.gmra.mxu0 %v1698
  %v10443 = vpop.f32.mrf.mxu0
  %v10444 = vadd.f32 %v10431, %v10443
  %v10445 = vpop.f32.mrf.mxu0
  %10446 = vdwg.mxu0
  %10447 = vmatpush.bf16.msra.mxu0 %v6859
  %10448 = vmatpush.bf16.msra.mxu0 %v6851
  %10449 = vmatpush.bf16.msra.mxu0 %v6843
  %10450 = vmatpush.bf16.msra.mxu0 %v6835
  %10451 = vmatpush.bf16.msra.mxu0 %v6827
  %10452 = vmatpush.bf16.msra.mxu0 %v6819
  %10453 = vmatpush.bf16.msra.mxu0 %v6811
  %10454 = vmatpush.bf16.msra.mxu0 %v6803
  %10455 = vmatmul.bf16.gmra.mxu0 %v1699
  %v10456 = vpop.f32.mrf.mxu0
  %v10457 = vadd.f32 %v10444, %v10456
  %v10458 = vpop.f32.mrf.mxu0
  %10459 = vdwg.mxu0
  %10460 = vmatpush.bf16.msra.mxu0 %v6923
  %10461 = vmatpush.bf16.msra.mxu0 %v6915
  %10462 = vmatpush.bf16.msra.mxu0 %v6907
  %10463 = vmatpush.bf16.msra.mxu0 %v6899
  %10464 = vmatpush.bf16.msra.mxu0 %v6891
  %10465 = vmatpush.bf16.msra.mxu0 %v6883
  %10466 = vmatpush.bf16.msra.mxu0 %v6875
  %10467 = vmatpush.bf16.msra.mxu0 %v6867
  %10468 = vmatmul.bf16.gmra.mxu0 %v1700
  %v10469 = vpop.f32.mrf.mxu0
  %v10470 = vadd.f32 %v10457, %v10469
  %v10471 = vpop.f32.mrf.mxu0
  %10472 = vdwg.mxu0
  %10473 = vmatpush.bf16.msra.mxu0 %v6987
  %10474 = vmatpush.bf16.msra.mxu0 %v6979
  %10475 = vmatpush.bf16.msra.mxu0 %v6971
  %10476 = vmatpush.bf16.msra.mxu0 %v6963
  %10477 = vmatpush.bf16.msra.mxu0 %v6955
  %10478 = vmatpush.bf16.msra.mxu0 %v6947
  %10479 = vmatpush.bf16.msra.mxu0 %v6939
  %10480 = vmatpush.bf16.msra.mxu0 %v6931
  %10481 = vmatmul.bf16.gmra.mxu0 %v1701
  %v10482 = vpop.f32.mrf.mxu0
  %v10483 = vadd.f32 %v10470, %v10482
  %v10484 = vpop.f32.mrf.mxu0
  %10485 = vdwg.mxu0
  %10486 = vmatpush.bf16.msra.mxu0 %v7051
  %10487 = vmatpush.bf16.msra.mxu0 %v7043
  %10488 = vmatpush.bf16.msra.mxu0 %v7035
  %10489 = vmatpush.bf16.msra.mxu0 %v7027
  %10490 = vmatpush.bf16.msra.mxu0 %v7019
  %10491 = vmatpush.bf16.msra.mxu0 %v7011
  %10492 = vmatpush.bf16.msra.mxu0 %v7003
  %10493 = vmatpush.bf16.msra.mxu0 %v6995
  %10494 = vmatmul.bf16.gmra.mxu0 %v1702
  %v10495 = vpop.f32.mrf.mxu0
  %v10496 = vadd.f32 %v10483, %v10495
  %v10497 = vpop.f32.mrf.mxu0
  %10498 = vdwg.mxu0
  %10499 = vmatpush.bf16.msra.mxu0 %v7115
  %10500 = vmatpush.bf16.msra.mxu0 %v7107
  %10501 = vmatpush.bf16.msra.mxu0 %v7099
  %10502 = vmatpush.bf16.msra.mxu0 %v7091
  %10503 = vmatpush.bf16.msra.mxu0 %v7083
  %10504 = vmatpush.bf16.msra.mxu0 %v7075
  %10505 = vmatpush.bf16.msra.mxu0 %v7067
  %10506 = vmatpush.bf16.msra.mxu0 %v7059
  %10507 = vmatmul.bf16.gmra.mxu0 %v1703
  %v10508 = vpop.f32.mrf.mxu0
  %v10509 = vadd.f32 %v10496, %v10508
  %v10510 = vpop.f32.mrf.mxu0
  %10511 = vdwg.mxu0
  %10512 = vmatpush.bf16.msra.mxu0 %v7179
  %10513 = vmatpush.bf16.msra.mxu0 %v7171
  %10514 = vmatpush.bf16.msra.mxu0 %v7163
  %10515 = vmatpush.bf16.msra.mxu0 %v7155
  %10516 = vmatpush.bf16.msra.mxu0 %v7147
  %10517 = vmatpush.bf16.msra.mxu0 %v7139
  %10518 = vmatpush.bf16.msra.mxu0 %v7131
  %10519 = vmatpush.bf16.msra.mxu0 %v7123
  %10520 = vmatmul.bf16.gmra.mxu0 %v1704
  %v10521 = vpop.f32.mrf.mxu0
  %v10522 = vadd.f32 %v10509, %v10521
  %v10523 = vpop.f32.mrf.mxu0
  %10524 = vdwg.mxu0
  %10525 = vmatpush.bf16.msra.mxu0 %v7243
  %10526 = vmatpush.bf16.msra.mxu0 %v7235
  %10527 = vmatpush.bf16.msra.mxu0 %v7227
  %10528 = vmatpush.bf16.msra.mxu0 %v7219
  %10529 = vmatpush.bf16.msra.mxu0 %v7211
  %10530 = vmatpush.bf16.msra.mxu0 %v7203
  %10531 = vmatpush.bf16.msra.mxu0 %v7195
  %10532 = vmatpush.bf16.msra.mxu0 %v7187
  %10533 = vmatmul.bf16.gmra.mxu0 %v1705
  %v10534 = vpop.f32.mrf.mxu0
  %v10535 = vadd.f32 %v10522, %v10534
  %v10536 = vpop.f32.mrf.mxu0
  %10537 = vdwg.mxu0
  %10538 = vmatpush.bf16.msra.mxu0 %v7307
  %10539 = vmatpush.bf16.msra.mxu0 %v7299
  %10540 = vmatpush.bf16.msra.mxu0 %v7291
  %10541 = vmatpush.bf16.msra.mxu0 %v7283
  %10542 = vmatpush.bf16.msra.mxu0 %v7275
  %10543 = vmatpush.bf16.msra.mxu0 %v7267
  %10544 = vmatpush.bf16.msra.mxu0 %v7259
  %10545 = vmatpush.bf16.msra.mxu0 %v7251
  %10546 = vmatmul.bf16.gmra.mxu0 %v1706
  %v10547 = vpop.f32.mrf.mxu0
  %v10548 = vadd.f32 %v10535, %v10547
  %v10549 = vpop.f32.mrf.mxu0
  %10550 = vdwg.mxu0
  %10551 = vmatpush.bf16.msra.mxu0 %v7371
  %10552 = vmatpush.bf16.msra.mxu0 %v7363
  %10553 = vmatpush.bf16.msra.mxu0 %v7355
  %10554 = vmatpush.bf16.msra.mxu0 %v7347
  %10555 = vmatpush.bf16.msra.mxu0 %v7339
  %10556 = vmatpush.bf16.msra.mxu0 %v7331
  %10557 = vmatpush.bf16.msra.mxu0 %v7323
  %10558 = vmatpush.bf16.msra.mxu0 %v7315
  %10559 = vmatmul.bf16.gmra.mxu0 %v1707
  %v10560 = vpop.f32.mrf.mxu0
  %v10561 = vadd.f32 %v10548, %v10560
  %v10562 = vpop.f32.mrf.mxu0
  %10563 = vdwg.mxu0
  %10564 = vmatpush.bf16.msra.mxu0 %v7435
  %10565 = vmatpush.bf16.msra.mxu0 %v7427
  %10566 = vmatpush.bf16.msra.mxu0 %v7419
  %10567 = vmatpush.bf16.msra.mxu0 %v7411
  %10568 = vmatpush.bf16.msra.mxu0 %v7403
  %10569 = vmatpush.bf16.msra.mxu0 %v7395
  %10570 = vmatpush.bf16.msra.mxu0 %v7387
  %10571 = vmatpush.bf16.msra.mxu0 %v7379
  %10572 = vmatmul.bf16.gmra.mxu0 %v1708
  %v10573 = vpop.f32.mrf.mxu0
  %v10574 = vadd.f32 %v10561, %v10573
  %v10575 = vpop.f32.mrf.mxu0
  %10576 = vdwg.mxu0
  %10577 = vmatpush.bf16.msra.mxu0 %v7499
  %10578 = vmatpush.bf16.msra.mxu0 %v7491
  %10579 = vmatpush.bf16.msra.mxu0 %v7483
  %10580 = vmatpush.bf16.msra.mxu0 %v7475
  %10581 = vmatpush.bf16.msra.mxu0 %v7467
  %10582 = vmatpush.bf16.msra.mxu0 %v7459
  %10583 = vmatpush.bf16.msra.mxu0 %v7451
  %10584 = vmatpush.bf16.msra.mxu0 %v7443
  %10585 = vmatmul.bf16.gmra.mxu0 %v1709
  %v10586 = vpop.f32.mrf.mxu0
  %v10587 = vadd.f32 %v10574, %v10586
  %v10588 = vpop.f32.mrf.mxu0
  %10589 = vdwg.mxu0
  %10590 = vmatpush.bf16.msra.mxu0 %v7563
  %10591 = vmatpush.bf16.msra.mxu0 %v7555
  %10592 = vmatpush.bf16.msra.mxu0 %v7547
  %10593 = vmatpush.bf16.msra.mxu0 %v7539
  %10594 = vmatpush.bf16.msra.mxu0 %v7531
  %10595 = vmatpush.bf16.msra.mxu0 %v7523
  %10596 = vmatpush.bf16.msra.mxu0 %v7515
  %10597 = vmatpush.bf16.msra.mxu0 %v7507
  %10598 = vmatmul.bf16.gmra.mxu0 %v1710
  %v10599 = vpop.f32.mrf.mxu0
  %v10600 = vadd.f32 %v10587, %v10599
  %v10601 = vpop.f32.mrf.mxu0
  %10602 = vdwg.mxu0
  %10603 = vmatpush.bf16.msra.mxu0 %v7627
  %10604 = vmatpush.bf16.msra.mxu0 %v7619
  %10605 = vmatpush.bf16.msra.mxu0 %v7611
  %10606 = vmatpush.bf16.msra.mxu0 %v7603
  %10607 = vmatpush.bf16.msra.mxu0 %v7595
  %10608 = vmatpush.bf16.msra.mxu0 %v7587
  %10609 = vmatpush.bf16.msra.mxu0 %v7579
  %10610 = vmatpush.bf16.msra.mxu0 %v7571
  %10611 = vmatmul.bf16.gmra.mxu0 %v1711
  %v10612 = vpop.f32.mrf.mxu0
  %v10613 = vadd.f32 %v10600, %v10612
  %v10614 = vpop.f32.mrf.mxu0
  %10615 = vdwg.mxu0
  %10616 = vmatpush.bf16.msra.mxu0 %v7691
  %10617 = vmatpush.bf16.msra.mxu0 %v7683
  %10618 = vmatpush.bf16.msra.mxu0 %v7675
  %10619 = vmatpush.bf16.msra.mxu0 %v7667
  %10620 = vmatpush.bf16.msra.mxu0 %v7659
  %10621 = vmatpush.bf16.msra.mxu0 %v7651
  %10622 = vmatpush.bf16.msra.mxu0 %v7643
  %10623 = vmatpush.bf16.msra.mxu0 %v7635
  %10624 = vmatmul.bf16.gmra.mxu0 %v1712
  %v10625 = vpop.f32.mrf.mxu0
  %v10626 = vadd.f32 %v10613, %v10625
  %v10627 = vpop.f32.mrf.mxu0
  %10628 = vdwg.mxu0
  %10629 = vmatpush.bf16.msra.mxu0 %v7755
  %10630 = vmatpush.bf16.msra.mxu0 %v7747
  %10631 = vmatpush.bf16.msra.mxu0 %v7739
  %10632 = vmatpush.bf16.msra.mxu0 %v7731
  %10633 = vmatpush.bf16.msra.mxu0 %v7723
  %10634 = vmatpush.bf16.msra.mxu0 %v7715
  %10635 = vmatpush.bf16.msra.mxu0 %v7707
  %10636 = vmatpush.bf16.msra.mxu0 %v7699
  %10637 = vmatmul.bf16.gmra.mxu0 %v1713
  %v10638 = vpop.f32.mrf.mxu0
  %v10639 = vadd.f32 %v10626, %v10638
  %v10640 = vpop.f32.mrf.mxu0
  %10641 = vdwg.mxu0
  %10642 = vmatpush.bf16.msra.mxu0 %v7819
  %10643 = vmatpush.bf16.msra.mxu0 %v7811
  %10644 = vmatpush.bf16.msra.mxu0 %v7803
  %10645 = vmatpush.bf16.msra.mxu0 %v7795
  %10646 = vmatpush.bf16.msra.mxu0 %v7787
  %10647 = vmatpush.bf16.msra.mxu0 %v7779
  %10648 = vmatpush.bf16.msra.mxu0 %v7771
  %10649 = vmatpush.bf16.msra.mxu0 %v7763
  %10650 = vmatmul.bf16.gmra.mxu0 %v1714
  %v10651 = vpop.f32.mrf.mxu0
  %v10652 = vadd.f32 %v10639, %v10651
  %v10653 = vpop.f32.mrf.mxu0
  %10654 = vdwg.mxu0
  %10655 = vmatpush.bf16.msra.mxu0 %v7883
  %10656 = vmatpush.bf16.msra.mxu0 %v7875
  %10657 = vmatpush.bf16.msra.mxu0 %v7867
  %10658 = vmatpush.bf16.msra.mxu0 %v7859
  %10659 = vmatpush.bf16.msra.mxu0 %v7851
  %10660 = vmatpush.bf16.msra.mxu0 %v7843
  %10661 = vmatpush.bf16.msra.mxu0 %v7835
  %10662 = vmatpush.bf16.msra.mxu0 %v7827
  %10663 = vmatmul.bf16.gmra.mxu0 %v1715
  %v10664 = vpop.f32.mrf.mxu0
  %v10665 = vadd.f32 %v10652, %v10664
  %v10666 = vpop.f32.mrf.mxu0
  %10667 = vdwg.mxu0
  %10668 = vmatpush.bf16.msra.mxu0 %v7947
  %10669 = vmatpush.bf16.msra.mxu0 %v7939
  %10670 = vmatpush.bf16.msra.mxu0 %v7931
  %10671 = vmatpush.bf16.msra.mxu0 %v7923
  %10672 = vmatpush.bf16.msra.mxu0 %v7915
  %10673 = vmatpush.bf16.msra.mxu0 %v7907
  %10674 = vmatpush.bf16.msra.mxu0 %v7899
  %10675 = vmatpush.bf16.msra.mxu0 %v7891
  %10676 = vmatmul.bf16.gmra.mxu0 %v1716
  %v10677 = vpop.f32.mrf.mxu0
  %v10678 = vadd.f32 %v10665, %v10677
  %v10679 = vpop.f32.mrf.mxu0
  %10680 = vdwg.mxu0
  %10681 = vmatpush.bf16.msra.mxu0 %v8011
  %10682 = vmatpush.bf16.msra.mxu0 %v8003
  %10683 = vmatpush.bf16.msra.mxu0 %v7995
  %10684 = vmatpush.bf16.msra.mxu0 %v7987
  %10685 = vmatpush.bf16.msra.mxu0 %v7979
  %10686 = vmatpush.bf16.msra.mxu0 %v7971
  %10687 = vmatpush.bf16.msra.mxu0 %v7963
  %10688 = vmatpush.bf16.msra.mxu0 %v7955
  %10689 = vmatmul.bf16.gmra.mxu0 %v1717
  %v10690 = vpop.f32.mrf.mxu0
  %v10691 = vadd.f32 %v10678, %v10690
  %v10692 = vpop.f32.mrf.mxu0
  %10693 = vdwg.mxu0
  %10694 = vmatpush.bf16.msra.mxu0 %v8075
  %10695 = vmatpush.bf16.msra.mxu0 %v8067
  %10696 = vmatpush.bf16.msra.mxu0 %v8059
  %10697 = vmatpush.bf16.msra.mxu0 %v8051
  %10698 = vmatpush.bf16.msra.mxu0 %v8043
  %10699 = vmatpush.bf16.msra.mxu0 %v8035
  %10700 = vmatpush.bf16.msra.mxu0 %v8027
  %10701 = vmatpush.bf16.msra.mxu0 %v8019
  %10702 = vmatmul.bf16.gmra.mxu0 %v1718
  %v10703 = vpop.f32.mrf.mxu0
  %v10704 = vadd.f32 %v10691, %v10703
  %v10705 = vpop.f32.mrf.mxu0
  %10706 = vdwg.mxu0
  %10707 = vmatpush.bf16.msra.mxu0 %v8139
  %10708 = vmatpush.bf16.msra.mxu0 %v8131
  %10709 = vmatpush.bf16.msra.mxu0 %v8123
  %10710 = vmatpush.bf16.msra.mxu0 %v8115
  %10711 = vmatpush.bf16.msra.mxu0 %v8107
  %10712 = vmatpush.bf16.msra.mxu0 %v8099
  %10713 = vmatpush.bf16.msra.mxu0 %v8091
  %10714 = vmatpush.bf16.msra.mxu0 %v8083
  %10715 = vmatmul.bf16.gmra.mxu0 %v1719
  %v10716 = vpop.f32.mrf.mxu0
  %v10717 = vadd.f32 %v10704, %v10716
  %v10718 = vpop.f32.mrf.mxu0
  %10719 = vdwg.mxu0
  %10720 = vmatpush.bf16.msra.mxu0 %v6604
  %10721 = vmatpush.bf16.msra.mxu0 %v6596
  %10722 = vmatpush.bf16.msra.mxu0 %v6588
  %10723 = vmatpush.bf16.msra.mxu0 %v6580
  %10724 = vmatpush.bf16.msra.mxu0 %v6572
  %10725 = vmatpush.bf16.msra.mxu0 %v6564
  %10726 = vmatpush.bf16.msra.mxu0 %v6556
  %10727 = vmatpush.bf16.msra.mxu0 %v6548
  %10728 = vmatmul.bf16.gmra.mxu0 %v1695
  %v10729 = vpop.f32.mrf.mxu0
  %v10730 = vadd.f32 %v1644, %v10729
  %v10731 = vpop.f32.mrf.mxu0
  %10732 = vdwg.mxu0
  %10733 = vmatpush.bf16.msra.mxu0 %v6668
  %10734 = vmatpush.bf16.msra.mxu0 %v6660
  %10735 = vmatpush.bf16.msra.mxu0 %v6652
  %10736 = vmatpush.bf16.msra.mxu0 %v6644
  %10737 = vmatpush.bf16.msra.mxu0 %v6636
  %10738 = vmatpush.bf16.msra.mxu0 %v6628
  %10739 = vmatpush.bf16.msra.mxu0 %v6620
  %10740 = vmatpush.bf16.msra.mxu0 %v6612
  %10741 = vmatmul.bf16.gmra.mxu0 %v1696
  %v10742 = vpop.f32.mrf.mxu0
  %v10743 = vadd.f32 %v10730, %v10742
  %v10744 = vpop.f32.mrf.mxu0
  %10745 = vdwg.mxu0
  %10746 = vmatpush.bf16.msra.mxu0 %v6732
  %10747 = vmatpush.bf16.msra.mxu0 %v6724
  %10748 = vmatpush.bf16.msra.mxu0 %v6716
  %10749 = vmatpush.bf16.msra.mxu0 %v6708
  %10750 = vmatpush.bf16.msra.mxu0 %v6700
  %10751 = vmatpush.bf16.msra.mxu0 %v6692
  %10752 = vmatpush.bf16.msra.mxu0 %v6684
  %10753 = vmatpush.bf16.msra.mxu0 %v6676
  %10754 = vmatmul.bf16.gmra.mxu0 %v1697
  %v10755 = vpop.f32.mrf.mxu0
  %v10756 = vadd.f32 %v10743, %v10755
  %v10757 = vpop.f32.mrf.mxu0
  %10758 = vdwg.mxu0
  %10759 = vmatpush.bf16.msra.mxu0 %v6796
  %10760 = vmatpush.bf16.msra.mxu0 %v6788
  %10761 = vmatpush.bf16.msra.mxu0 %v6780
  %10762 = vmatpush.bf16.msra.mxu0 %v6772
  %10763 = vmatpush.bf16.msra.mxu0 %v6764
  %10764 = vmatpush.bf16.msra.mxu0 %v6756
  %10765 = vmatpush.bf16.msra.mxu0 %v6748
  %10766 = vmatpush.bf16.msra.mxu0 %v6740
  %10767 = vmatmul.bf16.gmra.mxu0 %v1698
  %v10768 = vpop.f32.mrf.mxu0
  %v10769 = vadd.f32 %v10756, %v10768
  %v10770 = vpop.f32.mrf.mxu0
  %10771 = vdwg.mxu0
  %10772 = vmatpush.bf16.msra.mxu0 %v6860
  %10773 = vmatpush.bf16.msra.mxu0 %v6852
  %10774 = vmatpush.bf16.msra.mxu0 %v6844
  %10775 = vmatpush.bf16.msra.mxu0 %v6836
  %10776 = vmatpush.bf16.msra.mxu0 %v6828
  %10777 = vmatpush.bf16.msra.mxu0 %v6820
  %10778 = vmatpush.bf16.msra.mxu0 %v6812
  %10779 = vmatpush.bf16.msra.mxu0 %v6804
  %10780 = vmatmul.bf16.gmra.mxu0 %v1699
  %v10781 = vpop.f32.mrf.mxu0
  %v10782 = vadd.f32 %v10769, %v10781
  %v10783 = vpop.f32.mrf.mxu0
  %10784 = vdwg.mxu0
  %10785 = vmatpush.bf16.msra.mxu0 %v6924
  %10786 = vmatpush.bf16.msra.mxu0 %v6916
  %10787 = vmatpush.bf16.msra.mxu0 %v6908
  %10788 = vmatpush.bf16.msra.mxu0 %v6900
  %10789 = vmatpush.bf16.msra.mxu0 %v6892
  %10790 = vmatpush.bf16.msra.mxu0 %v6884
  %10791 = vmatpush.bf16.msra.mxu0 %v6876
  %10792 = vmatpush.bf16.msra.mxu0 %v6868
  %10793 = vmatmul.bf16.gmra.mxu0 %v1700
  %v10794 = vpop.f32.mrf.mxu0
  %v10795 = vadd.f32 %v10782, %v10794
  %v10796 = vpop.f32.mrf.mxu0
  %10797 = vdwg.mxu0
  %10798 = vmatpush.bf16.msra.mxu0 %v6988
  %10799 = vmatpush.bf16.msra.mxu0 %v6980
  %10800 = vmatpush.bf16.msra.mxu0 %v6972
  %10801 = vmatpush.bf16.msra.mxu0 %v6964
  %10802 = vmatpush.bf16.msra.mxu0 %v6956
  %10803 = vmatpush.bf16.msra.mxu0 %v6948
  %10804 = vmatpush.bf16.msra.mxu0 %v6940
  %10805 = vmatpush.bf16.msra.mxu0 %v6932
  %10806 = vmatmul.bf16.gmra.mxu0 %v1701
  %v10807 = vpop.f32.mrf.mxu0
  %v10808 = vadd.f32 %v10795, %v10807
  %v10809 = vpop.f32.mrf.mxu0
  %10810 = vdwg.mxu0
  %10811 = vmatpush.bf16.msra.mxu0 %v7052
  %10812 = vmatpush.bf16.msra.mxu0 %v7044
  %10813 = vmatpush.bf16.msra.mxu0 %v7036
  %10814 = vmatpush.bf16.msra.mxu0 %v7028
  %10815 = vmatpush.bf16.msra.mxu0 %v7020
  %10816 = vmatpush.bf16.msra.mxu0 %v7012
  %10817 = vmatpush.bf16.msra.mxu0 %v7004
  %10818 = vmatpush.bf16.msra.mxu0 %v6996
  %10819 = vmatmul.bf16.gmra.mxu0 %v1702
  %v10820 = vpop.f32.mrf.mxu0
  %v10821 = vadd.f32 %v10808, %v10820
  %v10822 = vpop.f32.mrf.mxu0
  %10823 = vdwg.mxu0
  %10824 = vmatpush.bf16.msra.mxu0 %v7116
  %10825 = vmatpush.bf16.msra.mxu0 %v7108
  %10826 = vmatpush.bf16.msra.mxu0 %v7100
  %10827 = vmatpush.bf16.msra.mxu0 %v7092
  %10828 = vmatpush.bf16.msra.mxu0 %v7084
  %10829 = vmatpush.bf16.msra.mxu0 %v7076
  %10830 = vmatpush.bf16.msra.mxu0 %v7068
  %10831 = vmatpush.bf16.msra.mxu0 %v7060
  %10832 = vmatmul.bf16.gmra.mxu0 %v1703
  %v10833 = vpop.f32.mrf.mxu0
  %v10834 = vadd.f32 %v10821, %v10833
  %v10835 = vpop.f32.mrf.mxu0
  %10836 = vdwg.mxu0
  %10837 = vmatpush.bf16.msra.mxu0 %v7180
  %10838 = vmatpush.bf16.msra.mxu0 %v7172
  %10839 = vmatpush.bf16.msra.mxu0 %v7164
  %10840 = vmatpush.bf16.msra.mxu0 %v7156
  %10841 = vmatpush.bf16.msra.mxu0 %v7148
  %10842 = vmatpush.bf16.msra.mxu0 %v7140
  %10843 = vmatpush.bf16.msra.mxu0 %v7132
  %10844 = vmatpush.bf16.msra.mxu0 %v7124
  %10845 = vmatmul.bf16.gmra.mxu0 %v1704
  %v10846 = vpop.f32.mrf.mxu0
  %v10847 = vadd.f32 %v10834, %v10846
  %v10848 = vpop.f32.mrf.mxu0
  %10849 = vdwg.mxu0
  %10850 = vmatpush.bf16.msra.mxu0 %v7244
  %10851 = vmatpush.bf16.msra.mxu0 %v7236
  %10852 = vmatpush.bf16.msra.mxu0 %v7228
  %10853 = vmatpush.bf16.msra.mxu0 %v7220
  %10854 = vmatpush.bf16.msra.mxu0 %v7212
  %10855 = vmatpush.bf16.msra.mxu0 %v7204
  %10856 = vmatpush.bf16.msra.mxu0 %v7196
  %10857 = vmatpush.bf16.msra.mxu0 %v7188
  %10858 = vmatmul.bf16.gmra.mxu0 %v1705
  %v10859 = vpop.f32.mrf.mxu0
  %v10860 = vadd.f32 %v10847, %v10859
  %v10861 = vpop.f32.mrf.mxu0
  %10862 = vdwg.mxu0
  %10863 = vmatpush.bf16.msra.mxu0 %v7308
  %10864 = vmatpush.bf16.msra.mxu0 %v7300
  %10865 = vmatpush.bf16.msra.mxu0 %v7292
  %10866 = vmatpush.bf16.msra.mxu0 %v7284
  %10867 = vmatpush.bf16.msra.mxu0 %v7276
  %10868 = vmatpush.bf16.msra.mxu0 %v7268
  %10869 = vmatpush.bf16.msra.mxu0 %v7260
  %10870 = vmatpush.bf16.msra.mxu0 %v7252
  %10871 = vmatmul.bf16.gmra.mxu0 %v1706
  %v10872 = vpop.f32.mrf.mxu0
  %v10873 = vadd.f32 %v10860, %v10872
  %v10874 = vpop.f32.mrf.mxu0
  %10875 = vdwg.mxu0
  %10876 = vmatpush.bf16.msra.mxu0 %v7372
  %10877 = vmatpush.bf16.msra.mxu0 %v7364
  %10878 = vmatpush.bf16.msra.mxu0 %v7356
  %10879 = vmatpush.bf16.msra.mxu0 %v7348
  %10880 = vmatpush.bf16.msra.mxu0 %v7340
  %10881 = vmatpush.bf16.msra.mxu0 %v7332
  %10882 = vmatpush.bf16.msra.mxu0 %v7324
  %10883 = vmatpush.bf16.msra.mxu0 %v7316
  %10884 = vmatmul.bf16.gmra.mxu0 %v1707
  %v10885 = vpop.f32.mrf.mxu0
  %v10886 = vadd.f32 %v10873, %v10885
  %v10887 = vpop.f32.mrf.mxu0
  %10888 = vdwg.mxu0
  %10889 = vmatpush.bf16.msra.mxu0 %v7436
  %10890 = vmatpush.bf16.msra.mxu0 %v7428
  %10891 = vmatpush.bf16.msra.mxu0 %v7420
  %10892 = vmatpush.bf16.msra.mxu0 %v7412
  %10893 = vmatpush.bf16.msra.mxu0 %v7404
  %10894 = vmatpush.bf16.msra.mxu0 %v7396
  %10895 = vmatpush.bf16.msra.mxu0 %v7388
  %10896 = vmatpush.bf16.msra.mxu0 %v7380
  %10897 = vmatmul.bf16.gmra.mxu0 %v1708
  %v10898 = vpop.f32.mrf.mxu0
  %v10899 = vadd.f32 %v10886, %v10898
  %v10900 = vpop.f32.mrf.mxu0
  %10901 = vdwg.mxu0
  %10902 = vmatpush.bf16.msra.mxu0 %v7500
  %10903 = vmatpush.bf16.msra.mxu0 %v7492
  %10904 = vmatpush.bf16.msra.mxu0 %v7484
  %10905 = vmatpush.bf16.msra.mxu0 %v7476
  %10906 = vmatpush.bf16.msra.mxu0 %v7468
  %10907 = vmatpush.bf16.msra.mxu0 %v7460
  %10908 = vmatpush.bf16.msra.mxu0 %v7452
  %10909 = vmatpush.bf16.msra.mxu0 %v7444
  %10910 = vmatmul.bf16.gmra.mxu0 %v1709
  %v10911 = vpop.f32.mrf.mxu0
  %v10912 = vadd.f32 %v10899, %v10911
  %v10913 = vpop.f32.mrf.mxu0
  %10914 = vdwg.mxu0
  %10915 = vmatpush.bf16.msra.mxu0 %v7564
  %10916 = vmatpush.bf16.msra.mxu0 %v7556
  %10917 = vmatpush.bf16.msra.mxu0 %v7548
  %10918 = vmatpush.bf16.msra.mxu0 %v7540
  %10919 = vmatpush.bf16.msra.mxu0 %v7532
  %10920 = vmatpush.bf16.msra.mxu0 %v7524
  %10921 = vmatpush.bf16.msra.mxu0 %v7516
  %10922 = vmatpush.bf16.msra.mxu0 %v7508
  %10923 = vmatmul.bf16.gmra.mxu0 %v1710
  %v10924 = vpop.f32.mrf.mxu0
  %v10925 = vadd.f32 %v10912, %v10924
  %v10926 = vpop.f32.mrf.mxu0
  %10927 = vdwg.mxu0
  %10928 = vmatpush.bf16.msra.mxu0 %v7628
  %10929 = vmatpush.bf16.msra.mxu0 %v7620
  %10930 = vmatpush.bf16.msra.mxu0 %v7612
  %10931 = vmatpush.bf16.msra.mxu0 %v7604
  %10932 = vmatpush.bf16.msra.mxu0 %v7596
  %10933 = vmatpush.bf16.msra.mxu0 %v7588
  %10934 = vmatpush.bf16.msra.mxu0 %v7580
  %10935 = vmatpush.bf16.msra.mxu0 %v7572
  %10936 = vmatmul.bf16.gmra.mxu0 %v1711
  %v10937 = vpop.f32.mrf.mxu0
  %v10938 = vadd.f32 %v10925, %v10937
  %v10939 = vpop.f32.mrf.mxu0
  %10940 = vdwg.mxu0
  %10941 = vmatpush.bf16.msra.mxu0 %v7692
  %10942 = vmatpush.bf16.msra.mxu0 %v7684
  %10943 = vmatpush.bf16.msra.mxu0 %v7676
  %10944 = vmatpush.bf16.msra.mxu0 %v7668
  %10945 = vmatpush.bf16.msra.mxu0 %v7660
  %10946 = vmatpush.bf16.msra.mxu0 %v7652
  %10947 = vmatpush.bf16.msra.mxu0 %v7644
  %10948 = vmatpush.bf16.msra.mxu0 %v7636
  %10949 = vmatmul.bf16.gmra.mxu0 %v1712
  %v10950 = vpop.f32.mrf.mxu0
  %v10951 = vadd.f32 %v10938, %v10950
  %v10952 = vpop.f32.mrf.mxu0
  %10953 = vdwg.mxu0
  %10954 = vmatpush.bf16.msra.mxu0 %v7756
  %10955 = vmatpush.bf16.msra.mxu0 %v7748
  %10956 = vmatpush.bf16.msra.mxu0 %v7740
  %10957 = vmatpush.bf16.msra.mxu0 %v7732
  %10958 = vmatpush.bf16.msra.mxu0 %v7724
  %10959 = vmatpush.bf16.msra.mxu0 %v7716
  %10960 = vmatpush.bf16.msra.mxu0 %v7708
  %10961 = vmatpush.bf16.msra.mxu0 %v7700
  %10962 = vmatmul.bf16.gmra.mxu0 %v1713
  %v10963 = vpop.f32.mrf.mxu0
  %v10964 = vadd.f32 %v10951, %v10963
  %v10965 = vpop.f32.mrf.mxu0
  %10966 = vdwg.mxu0
  %10967 = vmatpush.bf16.msra.mxu0 %v7820
  %10968 = vmatpush.bf16.msra.mxu0 %v7812
  %10969 = vmatpush.bf16.msra.mxu0 %v7804
  %10970 = vmatpush.bf16.msra.mxu0 %v7796
  %10971 = vmatpush.bf16.msra.mxu0 %v7788
  %10972 = vmatpush.bf16.msra.mxu0 %v7780
  %10973 = vmatpush.bf16.msra.mxu0 %v7772
  %10974 = vmatpush.bf16.msra.mxu0 %v7764
  %10975 = vmatmul.bf16.gmra.mxu0 %v1714
  %v10976 = vpop.f32.mrf.mxu0
  %v10977 = vadd.f32 %v10964, %v10976
  %v10978 = vpop.f32.mrf.mxu0
  %10979 = vdwg.mxu0
  %10980 = vmatpush.bf16.msra.mxu0 %v7884
  %10981 = vmatpush.bf16.msra.mxu0 %v7876
  %10982 = vmatpush.bf16.msra.mxu0 %v7868
  %10983 = vmatpush.bf16.msra.mxu0 %v7860
  %10984 = vmatpush.bf16.msra.mxu0 %v7852
  %10985 = vmatpush.bf16.msra.mxu0 %v7844
  %10986 = vmatpush.bf16.msra.mxu0 %v7836
  %10987 = vmatpush.bf16.msra.mxu0 %v7828
  %10988 = vmatmul.bf16.gmra.mxu0 %v1715
  %v10989 = vpop.f32.mrf.mxu0
  %v10990 = vadd.f32 %v10977, %v10989
  %v10991 = vpop.f32.mrf.mxu0
  %10992 = vdwg.mxu0
  %10993 = vmatpush.bf16.msra.mxu0 %v7948
  %10994 = vmatpush.bf16.msra.mxu0 %v7940
  %10995 = vmatpush.bf16.msra.mxu0 %v7932
  %10996 = vmatpush.bf16.msra.mxu0 %v7924
  %10997 = vmatpush.bf16.msra.mxu0 %v7916
  %10998 = vmatpush.bf16.msra.mxu0 %v7908
  %10999 = vmatpush.bf16.msra.mxu0 %v7900
  %11000 = vmatpush.bf16.msra.mxu0 %v7892
  %11001 = vmatmul.bf16.gmra.mxu0 %v1716
  %v11002 = vpop.f32.mrf.mxu0
  %v11003 = vadd.f32 %v10990, %v11002
  %v11004 = vpop.f32.mrf.mxu0
  %11005 = vdwg.mxu0
  %11006 = vmatpush.bf16.msra.mxu0 %v8012
  %11007 = vmatpush.bf16.msra.mxu0 %v8004
  %11008 = vmatpush.bf16.msra.mxu0 %v7996
  %11009 = vmatpush.bf16.msra.mxu0 %v7988
  %11010 = vmatpush.bf16.msra.mxu0 %v7980
  %11011 = vmatpush.bf16.msra.mxu0 %v7972
  %11012 = vmatpush.bf16.msra.mxu0 %v7964
  %11013 = vmatpush.bf16.msra.mxu0 %v7956
  %11014 = vmatmul.bf16.gmra.mxu0 %v1717
  %v11015 = vpop.f32.mrf.mxu0
  %v11016 = vadd.f32 %v11003, %v11015
  %v11017 = vpop.f32.mrf.mxu0
  %11018 = vdwg.mxu0
  %11019 = vmatpush.bf16.msra.mxu0 %v8076
  %11020 = vmatpush.bf16.msra.mxu0 %v8068
  %11021 = vmatpush.bf16.msra.mxu0 %v8060
  %11022 = vmatpush.bf16.msra.mxu0 %v8052
  %11023 = vmatpush.bf16.msra.mxu0 %v8044
  %11024 = vmatpush.bf16.msra.mxu0 %v8036
  %11025 = vmatpush.bf16.msra.mxu0 %v8028
  %11026 = vmatpush.bf16.msra.mxu0 %v8020
  %11027 = vmatmul.bf16.gmra.mxu0 %v1718
  %v11028 = vpop.f32.mrf.mxu0
  %v11029 = vadd.f32 %v11016, %v11028
  %v11030 = vpop.f32.mrf.mxu0
  %11031 = vdwg.mxu0
  %11032 = vmatpush.bf16.msra.mxu0 %v8140
  %11033 = vmatpush.bf16.msra.mxu0 %v8132
  %11034 = vmatpush.bf16.msra.mxu0 %v8124
  %11035 = vmatpush.bf16.msra.mxu0 %v8116
  %11036 = vmatpush.bf16.msra.mxu0 %v8108
  %11037 = vmatpush.bf16.msra.mxu0 %v8100
  %11038 = vmatpush.bf16.msra.mxu0 %v8092
  %11039 = vmatpush.bf16.msra.mxu0 %v8084
  %11040 = vmatmul.bf16.gmra.mxu0 %v1719
  %v11041 = vpop.f32.mrf.mxu0
  %v11042 = vadd.f32 %v11029, %v11041
  %v11043 = vpop.f32.mrf.mxu0
  %11044 = vdwg.mxu0
  %11045 = vmatpush.bf16.msra.mxu0 %v6605
  %11046 = vmatpush.bf16.msra.mxu0 %v6597
  %11047 = vmatpush.bf16.msra.mxu0 %v6589
  %11048 = vmatpush.bf16.msra.mxu0 %v6581
  %11049 = vmatpush.bf16.msra.mxu0 %v6573
  %11050 = vmatpush.bf16.msra.mxu0 %v6565
  %11051 = vmatpush.bf16.msra.mxu0 %v6557
  %11052 = vmatpush.bf16.msra.mxu0 %v6549
  %11053 = vmatmul.bf16.gmra.mxu0 %v1695
  %v11054 = vpop.f32.mrf.mxu0
  %v11055 = vadd.f32 %v1645, %v11054
  %v11056 = vpop.f32.mrf.mxu0
  %11057 = vdwg.mxu0
  %11058 = vmatpush.bf16.msra.mxu0 %v6669
  %11059 = vmatpush.bf16.msra.mxu0 %v6661
  %11060 = vmatpush.bf16.msra.mxu0 %v6653
  %11061 = vmatpush.bf16.msra.mxu0 %v6645
  %11062 = vmatpush.bf16.msra.mxu0 %v6637
  %11063 = vmatpush.bf16.msra.mxu0 %v6629
  %11064 = vmatpush.bf16.msra.mxu0 %v6621
  %11065 = vmatpush.bf16.msra.mxu0 %v6613
  %11066 = vmatmul.bf16.gmra.mxu0 %v1696
  %v11067 = vpop.f32.mrf.mxu0
  %v11068 = vadd.f32 %v11055, %v11067
  %v11069 = vpop.f32.mrf.mxu0
  %11070 = vdwg.mxu0
  %11071 = vmatpush.bf16.msra.mxu0 %v6733
  %11072 = vmatpush.bf16.msra.mxu0 %v6725
  %11073 = vmatpush.bf16.msra.mxu0 %v6717
  %11074 = vmatpush.bf16.msra.mxu0 %v6709
  %11075 = vmatpush.bf16.msra.mxu0 %v6701
  %11076 = vmatpush.bf16.msra.mxu0 %v6693
  %11077 = vmatpush.bf16.msra.mxu0 %v6685
  %11078 = vmatpush.bf16.msra.mxu0 %v6677
  %11079 = vmatmul.bf16.gmra.mxu0 %v1697
  %v11080 = vpop.f32.mrf.mxu0
  %v11081 = vadd.f32 %v11068, %v11080
  %v11082 = vpop.f32.mrf.mxu0
  %11083 = vdwg.mxu0
  %11084 = vmatpush.bf16.msra.mxu0 %v6797
  %11085 = vmatpush.bf16.msra.mxu0 %v6789
  %11086 = vmatpush.bf16.msra.mxu0 %v6781
  %11087 = vmatpush.bf16.msra.mxu0 %v6773
  %11088 = vmatpush.bf16.msra.mxu0 %v6765
  %11089 = vmatpush.bf16.msra.mxu0 %v6757
  %11090 = vmatpush.bf16.msra.mxu0 %v6749
  %11091 = vmatpush.bf16.msra.mxu0 %v6741
  %11092 = vmatmul.bf16.gmra.mxu0 %v1698
  %v11093 = vpop.f32.mrf.mxu0
  %v11094 = vadd.f32 %v11081, %v11093
  %v11095 = vpop.f32.mrf.mxu0
  %11096 = vdwg.mxu0
  %11097 = vmatpush.bf16.msra.mxu0 %v6861
  %11098 = vmatpush.bf16.msra.mxu0 %v6853
  %11099 = vmatpush.bf16.msra.mxu0 %v6845
  %11100 = vmatpush.bf16.msra.mxu0 %v6837
  %11101 = vmatpush.bf16.msra.mxu0 %v6829
  %11102 = vmatpush.bf16.msra.mxu0 %v6821
  %11103 = vmatpush.bf16.msra.mxu0 %v6813
  %11104 = vmatpush.bf16.msra.mxu0 %v6805
  %11105 = vmatmul.bf16.gmra.mxu0 %v1699
  %v11106 = vpop.f32.mrf.mxu0
  %v11107 = vadd.f32 %v11094, %v11106
  %v11108 = vpop.f32.mrf.mxu0
  %11109 = vdwg.mxu0
  %11110 = vmatpush.bf16.msra.mxu0 %v6925
  %11111 = vmatpush.bf16.msra.mxu0 %v6917
  %11112 = vmatpush.bf16.msra.mxu0 %v6909
  %11113 = vmatpush.bf16.msra.mxu0 %v6901
  %11114 = vmatpush.bf16.msra.mxu0 %v6893
  %11115 = vmatpush.bf16.msra.mxu0 %v6885
  %11116 = vmatpush.bf16.msra.mxu0 %v6877
  %11117 = vmatpush.bf16.msra.mxu0 %v6869
  %11118 = vmatmul.bf16.gmra.mxu0 %v1700
  %v11119 = vpop.f32.mrf.mxu0
  %v11120 = vadd.f32 %v11107, %v11119
  %v11121 = vpop.f32.mrf.mxu0
  %11122 = vdwg.mxu0
  %11123 = vmatpush.bf16.msra.mxu0 %v6989
  %11124 = vmatpush.bf16.msra.mxu0 %v6981
  %11125 = vmatpush.bf16.msra.mxu0 %v6973
  %11126 = vmatpush.bf16.msra.mxu0 %v6965
  %11127 = vmatpush.bf16.msra.mxu0 %v6957
  %11128 = vmatpush.bf16.msra.mxu0 %v6949
  %11129 = vmatpush.bf16.msra.mxu0 %v6941
  %11130 = vmatpush.bf16.msra.mxu0 %v6933
  %11131 = vmatmul.bf16.gmra.mxu0 %v1701
  %v11132 = vpop.f32.mrf.mxu0
  %v11133 = vadd.f32 %v11120, %v11132
  %v11134 = vpop.f32.mrf.mxu0
  %11135 = vdwg.mxu0
  %11136 = vmatpush.bf16.msra.mxu0 %v7053
  %11137 = vmatpush.bf16.msra.mxu0 %v7045
  %11138 = vmatpush.bf16.msra.mxu0 %v7037
  %11139 = vmatpush.bf16.msra.mxu0 %v7029
  %11140 = vmatpush.bf16.msra.mxu0 %v7021
  %11141 = vmatpush.bf16.msra.mxu0 %v7013
  %11142 = vmatpush.bf16.msra.mxu0 %v7005
  %11143 = vmatpush.bf16.msra.mxu0 %v6997
  %11144 = vmatmul.bf16.gmra.mxu0 %v1702
  %v11145 = vpop.f32.mrf.mxu0
  %v11146 = vadd.f32 %v11133, %v11145
  %v11147 = vpop.f32.mrf.mxu0
  %11148 = vdwg.mxu0
  %11149 = vmatpush.bf16.msra.mxu0 %v7117
  %11150 = vmatpush.bf16.msra.mxu0 %v7109
  %11151 = vmatpush.bf16.msra.mxu0 %v7101
  %11152 = vmatpush.bf16.msra.mxu0 %v7093
  %11153 = vmatpush.bf16.msra.mxu0 %v7085
  %11154 = vmatpush.bf16.msra.mxu0 %v7077
  %11155 = vmatpush.bf16.msra.mxu0 %v7069
  %11156 = vmatpush.bf16.msra.mxu0 %v7061
  %11157 = vmatmul.bf16.gmra.mxu0 %v1703
  %v11158 = vpop.f32.mrf.mxu0
  %v11159 = vadd.f32 %v11146, %v11158
  %v11160 = vpop.f32.mrf.mxu0
  %11161 = vdwg.mxu0
  %11162 = vmatpush.bf16.msra.mxu0 %v7181
  %11163 = vmatpush.bf16.msra.mxu0 %v7173
  %11164 = vmatpush.bf16.msra.mxu0 %v7165
  %11165 = vmatpush.bf16.msra.mxu0 %v7157
  %11166 = vmatpush.bf16.msra.mxu0 %v7149
  %11167 = vmatpush.bf16.msra.mxu0 %v7141
  %11168 = vmatpush.bf16.msra.mxu0 %v7133
  %11169 = vmatpush.bf16.msra.mxu0 %v7125
  %11170 = vmatmul.bf16.gmra.mxu0 %v1704
  %v11171 = vpop.f32.mrf.mxu0
  %v11172 = vadd.f32 %v11159, %v11171
  %v11173 = vpop.f32.mrf.mxu0
  %11174 = vdwg.mxu0
  %11175 = vmatpush.bf16.msra.mxu0 %v7245
  %11176 = vmatpush.bf16.msra.mxu0 %v7237
  %11177 = vmatpush.bf16.msra.mxu0 %v7229
  %11178 = vmatpush.bf16.msra.mxu0 %v7221
  %11179 = vmatpush.bf16.msra.mxu0 %v7213
  %11180 = vmatpush.bf16.msra.mxu0 %v7205
  %11181 = vmatpush.bf16.msra.mxu0 %v7197
  %11182 = vmatpush.bf16.msra.mxu0 %v7189
  %11183 = vmatmul.bf16.gmra.mxu0 %v1705
  %v11184 = vpop.f32.mrf.mxu0
  %v11185 = vadd.f32 %v11172, %v11184
  %v11186 = vpop.f32.mrf.mxu0
  %11187 = vdwg.mxu0
  %11188 = vmatpush.bf16.msra.mxu0 %v7309
  %11189 = vmatpush.bf16.msra.mxu0 %v7301
  %11190 = vmatpush.bf16.msra.mxu0 %v7293
  %11191 = vmatpush.bf16.msra.mxu0 %v7285
  %11192 = vmatpush.bf16.msra.mxu0 %v7277
  %11193 = vmatpush.bf16.msra.mxu0 %v7269
  %11194 = vmatpush.bf16.msra.mxu0 %v7261
  %11195 = vmatpush.bf16.msra.mxu0 %v7253
  %11196 = vmatmul.bf16.gmra.mxu0 %v1706
  %v11197 = vpop.f32.mrf.mxu0
  %v11198 = vadd.f32 %v11185, %v11197
  %v11199 = vpop.f32.mrf.mxu0
  %11200 = vdwg.mxu0
  %11201 = vmatpush.bf16.msra.mxu0 %v7373
  %11202 = vmatpush.bf16.msra.mxu0 %v7365
  %11203 = vmatpush.bf16.msra.mxu0 %v7357
  %11204 = vmatpush.bf16.msra.mxu0 %v7349
  %11205 = vmatpush.bf16.msra.mxu0 %v7341
  %11206 = vmatpush.bf16.msra.mxu0 %v7333
  %11207 = vmatpush.bf16.msra.mxu0 %v7325
  %11208 = vmatpush.bf16.msra.mxu0 %v7317
  %11209 = vmatmul.bf16.gmra.mxu0 %v1707
  %v11210 = vpop.f32.mrf.mxu0
  %v11211 = vadd.f32 %v11198, %v11210
  %v11212 = vpop.f32.mrf.mxu0
  %11213 = vdwg.mxu0
  %11214 = vmatpush.bf16.msra.mxu0 %v7437
  %11215 = vmatpush.bf16.msra.mxu0 %v7429
  %11216 = vmatpush.bf16.msra.mxu0 %v7421
  %11217 = vmatpush.bf16.msra.mxu0 %v7413
  %11218 = vmatpush.bf16.msra.mxu0 %v7405
  %11219 = vmatpush.bf16.msra.mxu0 %v7397
  %11220 = vmatpush.bf16.msra.mxu0 %v7389
  %11221 = vmatpush.bf16.msra.mxu0 %v7381
  %11222 = vmatmul.bf16.gmra.mxu0 %v1708
  %v11223 = vpop.f32.mrf.mxu0
  %v11224 = vadd.f32 %v11211, %v11223
  %v11225 = vpop.f32.mrf.mxu0
  %11226 = vdwg.mxu0
  %11227 = vmatpush.bf16.msra.mxu0 %v7501
  %11228 = vmatpush.bf16.msra.mxu0 %v7493
  %11229 = vmatpush.bf16.msra.mxu0 %v7485
  %11230 = vmatpush.bf16.msra.mxu0 %v7477
  %11231 = vmatpush.bf16.msra.mxu0 %v7469
  %11232 = vmatpush.bf16.msra.mxu0 %v7461
  %11233 = vmatpush.bf16.msra.mxu0 %v7453
  %11234 = vmatpush.bf16.msra.mxu0 %v7445
  %11235 = vmatmul.bf16.gmra.mxu0 %v1709
  %v11236 = vpop.f32.mrf.mxu0
  %v11237 = vadd.f32 %v11224, %v11236
  %v11238 = vpop.f32.mrf.mxu0
  %11239 = vdwg.mxu0
  %11240 = vmatpush.bf16.msra.mxu0 %v7565
  %11241 = vmatpush.bf16.msra.mxu0 %v7557
  %11242 = vmatpush.bf16.msra.mxu0 %v7549
  %11243 = vmatpush.bf16.msra.mxu0 %v7541
  %11244 = vmatpush.bf16.msra.mxu0 %v7533
  %11245 = vmatpush.bf16.msra.mxu0 %v7525
  %11246 = vmatpush.bf16.msra.mxu0 %v7517
  %11247 = vmatpush.bf16.msra.mxu0 %v7509
  %11248 = vmatmul.bf16.gmra.mxu0 %v1710
  %v11249 = vpop.f32.mrf.mxu0
  %v11250 = vadd.f32 %v11237, %v11249
  %v11251 = vpop.f32.mrf.mxu0
  %11252 = vdwg.mxu0
  %11253 = vmatpush.bf16.msra.mxu0 %v7629
  %11254 = vmatpush.bf16.msra.mxu0 %v7621
  %11255 = vmatpush.bf16.msra.mxu0 %v7613
  %11256 = vmatpush.bf16.msra.mxu0 %v7605
  %11257 = vmatpush.bf16.msra.mxu0 %v7597
  %11258 = vmatpush.bf16.msra.mxu0 %v7589
  %11259 = vmatpush.bf16.msra.mxu0 %v7581
  %11260 = vmatpush.bf16.msra.mxu0 %v7573
  %11261 = vmatmul.bf16.gmra.mxu0 %v1711
  %v11262 = vpop.f32.mrf.mxu0
  %v11263 = vadd.f32 %v11250, %v11262
  %v11264 = vpop.f32.mrf.mxu0
  %11265 = vdwg.mxu0
  %11266 = vmatpush.bf16.msra.mxu0 %v7693
  %11267 = vmatpush.bf16.msra.mxu0 %v7685
  %11268 = vmatpush.bf16.msra.mxu0 %v7677
  %11269 = vmatpush.bf16.msra.mxu0 %v7669
  %11270 = vmatpush.bf16.msra.mxu0 %v7661
  %11271 = vmatpush.bf16.msra.mxu0 %v7653
  %11272 = vmatpush.bf16.msra.mxu0 %v7645
  %11273 = vmatpush.bf16.msra.mxu0 %v7637
  %11274 = vmatmul.bf16.gmra.mxu0 %v1712
  %v11275 = vpop.f32.mrf.mxu0
  %v11276 = vadd.f32 %v11263, %v11275
  %v11277 = vpop.f32.mrf.mxu0
  %11278 = vdwg.mxu0
  %11279 = vmatpush.bf16.msra.mxu0 %v7757
  %11280 = vmatpush.bf16.msra.mxu0 %v7749
  %11281 = vmatpush.bf16.msra.mxu0 %v7741
  %11282 = vmatpush.bf16.msra.mxu0 %v7733
  %11283 = vmatpush.bf16.msra.mxu0 %v7725
  %11284 = vmatpush.bf16.msra.mxu0 %v7717
  %11285 = vmatpush.bf16.msra.mxu0 %v7709
  %11286 = vmatpush.bf16.msra.mxu0 %v7701
  %11287 = vmatmul.bf16.gmra.mxu0 %v1713
  %v11288 = vpop.f32.mrf.mxu0
  %v11289 = vadd.f32 %v11276, %v11288
  %v11290 = vpop.f32.mrf.mxu0
  %11291 = vdwg.mxu0
  %11292 = vmatpush.bf16.msra.mxu0 %v7821
  %11293 = vmatpush.bf16.msra.mxu0 %v7813
  %11294 = vmatpush.bf16.msra.mxu0 %v7805
  %11295 = vmatpush.bf16.msra.mxu0 %v7797
  %11296 = vmatpush.bf16.msra.mxu0 %v7789
  %11297 = vmatpush.bf16.msra.mxu0 %v7781
  %11298 = vmatpush.bf16.msra.mxu0 %v7773
  %11299 = vmatpush.bf16.msra.mxu0 %v7765
  %11300 = vmatmul.bf16.gmra.mxu0 %v1714
  %v11301 = vpop.f32.mrf.mxu0
  %v11302 = vadd.f32 %v11289, %v11301
  %v11303 = vpop.f32.mrf.mxu0
  %11304 = vdwg.mxu0
  %11305 = vmatpush.bf16.msra.mxu0 %v7885
  %11306 = vmatpush.bf16.msra.mxu0 %v7877
  %11307 = vmatpush.bf16.msra.mxu0 %v7869
  %11308 = vmatpush.bf16.msra.mxu0 %v7861
  %11309 = vmatpush.bf16.msra.mxu0 %v7853
  %11310 = vmatpush.bf16.msra.mxu0 %v7845
  %11311 = vmatpush.bf16.msra.mxu0 %v7837
  %11312 = vmatpush.bf16.msra.mxu0 %v7829
  %11313 = vmatmul.bf16.gmra.mxu0 %v1715
  %v11314 = vpop.f32.mrf.mxu0
  %v11315 = vadd.f32 %v11302, %v11314
  %v11316 = vpop.f32.mrf.mxu0
  %11317 = vdwg.mxu0
  %11318 = vmatpush.bf16.msra.mxu0 %v7949
  %11319 = vmatpush.bf16.msra.mxu0 %v7941
  %11320 = vmatpush.bf16.msra.mxu0 %v7933
  %11321 = vmatpush.bf16.msra.mxu0 %v7925
  %11322 = vmatpush.bf16.msra.mxu0 %v7917
  %11323 = vmatpush.bf16.msra.mxu0 %v7909
  %11324 = vmatpush.bf16.msra.mxu0 %v7901
  %11325 = vmatpush.bf16.msra.mxu0 %v7893
  %11326 = vmatmul.bf16.gmra.mxu0 %v1716
  %v11327 = vpop.f32.mrf.mxu0
  %v11328 = vadd.f32 %v11315, %v11327
  %v11329 = vpop.f32.mrf.mxu0
  %11330 = vdwg.mxu0
  %11331 = vmatpush.bf16.msra.mxu0 %v8013
  %11332 = vmatpush.bf16.msra.mxu0 %v8005
  %11333 = vmatpush.bf16.msra.mxu0 %v7997
  %11334 = vmatpush.bf16.msra.mxu0 %v7989
  %11335 = vmatpush.bf16.msra.mxu0 %v7981
  %11336 = vmatpush.bf16.msra.mxu0 %v7973
  %11337 = vmatpush.bf16.msra.mxu0 %v7965
  %11338 = vmatpush.bf16.msra.mxu0 %v7957
  %11339 = vmatmul.bf16.gmra.mxu0 %v1717
  %v11340 = vpop.f32.mrf.mxu0
  %v11341 = vadd.f32 %v11328, %v11340
  %v11342 = vpop.f32.mrf.mxu0
  %11343 = vdwg.mxu0
  %11344 = vmatpush.bf16.msra.mxu0 %v8077
  %11345 = vmatpush.bf16.msra.mxu0 %v8069
  %11346 = vmatpush.bf16.msra.mxu0 %v8061
  %11347 = vmatpush.bf16.msra.mxu0 %v8053
  %11348 = vmatpush.bf16.msra.mxu0 %v8045
  %11349 = vmatpush.bf16.msra.mxu0 %v8037
  %11350 = vmatpush.bf16.msra.mxu0 %v8029
  %11351 = vmatpush.bf16.msra.mxu0 %v8021
  %11352 = vmatmul.bf16.gmra.mxu0 %v1718
  %v11353 = vpop.f32.mrf.mxu0
  %v11354 = vadd.f32 %v11341, %v11353
  %v11355 = vpop.f32.mrf.mxu0
  %11356 = vdwg.mxu0
  %11357 = vmatpush.bf16.msra.mxu0 %v8141
  %11358 = vmatpush.bf16.msra.mxu0 %v8133
  %11359 = vmatpush.bf16.msra.mxu0 %v8125
  %11360 = vmatpush.bf16.msra.mxu0 %v8117
  %11361 = vmatpush.bf16.msra.mxu0 %v8109
  %11362 = vmatpush.bf16.msra.mxu0 %v8101
  %11363 = vmatpush.bf16.msra.mxu0 %v8093
  %11364 = vmatpush.bf16.msra.mxu0 %v8085
  %11365 = vmatmul.bf16.gmra.mxu0 %v1719
  %v11366 = vpop.f32.mrf.mxu0
  %v11367 = vadd.f32 %v11354, %v11366
  %v11368 = vpop.f32.mrf.mxu0
  %11369 = vdwg.mxu0
  %11370 = vmatpush.bf16.msra.mxu0 %v6606
  %11371 = vmatpush.bf16.msra.mxu0 %v6598
  %11372 = vmatpush.bf16.msra.mxu0 %v6590
  %11373 = vmatpush.bf16.msra.mxu0 %v6582
  %11374 = vmatpush.bf16.msra.mxu0 %v6574
  %11375 = vmatpush.bf16.msra.mxu0 %v6566
  %11376 = vmatpush.bf16.msra.mxu0 %v6558
  %11377 = vmatpush.bf16.msra.mxu0 %v6550
  %11378 = vmatmul.bf16.gmra.mxu0 %v1695
  %v11379 = vpop.f32.mrf.mxu0
  %v11380 = vadd.f32 %v1646, %v11379
  %v11381 = vpop.f32.mrf.mxu0
  %11382 = vdwg.mxu0
  %11383 = vmatpush.bf16.msra.mxu0 %v6670
  %11384 = vmatpush.bf16.msra.mxu0 %v6662
  %11385 = vmatpush.bf16.msra.mxu0 %v6654
  %11386 = vmatpush.bf16.msra.mxu0 %v6646
  %11387 = vmatpush.bf16.msra.mxu0 %v6638
  %11388 = vmatpush.bf16.msra.mxu0 %v6630
  %11389 = vmatpush.bf16.msra.mxu0 %v6622
  %11390 = vmatpush.bf16.msra.mxu0 %v6614
  %11391 = vmatmul.bf16.gmra.mxu0 %v1696
  %v11392 = vpop.f32.mrf.mxu0
  %v11393 = vadd.f32 %v11380, %v11392
  %v11394 = vpop.f32.mrf.mxu0
  %11395 = vdwg.mxu0
  %11396 = vmatpush.bf16.msra.mxu0 %v6734
  %11397 = vmatpush.bf16.msra.mxu0 %v6726
  %11398 = vmatpush.bf16.msra.mxu0 %v6718
  %11399 = vmatpush.bf16.msra.mxu0 %v6710
  %11400 = vmatpush.bf16.msra.mxu0 %v6702
  %11401 = vmatpush.bf16.msra.mxu0 %v6694
  %11402 = vmatpush.bf16.msra.mxu0 %v6686
  %11403 = vmatpush.bf16.msra.mxu0 %v6678
  %11404 = vmatmul.bf16.gmra.mxu0 %v1697
  %v11405 = vpop.f32.mrf.mxu0
  %v11406 = vadd.f32 %v11393, %v11405
  %v11407 = vpop.f32.mrf.mxu0
  %11408 = vdwg.mxu0
  %11409 = vmatpush.bf16.msra.mxu0 %v6798
  %11410 = vmatpush.bf16.msra.mxu0 %v6790
  %11411 = vmatpush.bf16.msra.mxu0 %v6782
  %11412 = vmatpush.bf16.msra.mxu0 %v6774
  %11413 = vmatpush.bf16.msra.mxu0 %v6766
  %11414 = vmatpush.bf16.msra.mxu0 %v6758
  %11415 = vmatpush.bf16.msra.mxu0 %v6750
  %11416 = vmatpush.bf16.msra.mxu0 %v6742
  %11417 = vmatmul.bf16.gmra.mxu0 %v1698
  %v11418 = vpop.f32.mrf.mxu0
  %v11419 = vadd.f32 %v11406, %v11418
  %v11420 = vpop.f32.mrf.mxu0
  %11421 = vdwg.mxu0
  %11422 = vmatpush.bf16.msra.mxu0 %v6862
  %11423 = vmatpush.bf16.msra.mxu0 %v6854
  %11424 = vmatpush.bf16.msra.mxu0 %v6846
  %11425 = vmatpush.bf16.msra.mxu0 %v6838
  %11426 = vmatpush.bf16.msra.mxu0 %v6830
  %11427 = vmatpush.bf16.msra.mxu0 %v6822
  %11428 = vmatpush.bf16.msra.mxu0 %v6814
  %11429 = vmatpush.bf16.msra.mxu0 %v6806
  %11430 = vmatmul.bf16.gmra.mxu0 %v1699
  %v11431 = vpop.f32.mrf.mxu0
  %v11432 = vadd.f32 %v11419, %v11431
  %v11433 = vpop.f32.mrf.mxu0
  %11434 = vdwg.mxu0
  %11435 = vmatpush.bf16.msra.mxu0 %v6926
  %11436 = vmatpush.bf16.msra.mxu0 %v6918
  %11437 = vmatpush.bf16.msra.mxu0 %v6910
  %11438 = vmatpush.bf16.msra.mxu0 %v6902
  %11439 = vmatpush.bf16.msra.mxu0 %v6894
  %11440 = vmatpush.bf16.msra.mxu0 %v6886
  %11441 = vmatpush.bf16.msra.mxu0 %v6878
  %11442 = vmatpush.bf16.msra.mxu0 %v6870
  %11443 = vmatmul.bf16.gmra.mxu0 %v1700
  %v11444 = vpop.f32.mrf.mxu0
  %v11445 = vadd.f32 %v11432, %v11444
  %v11446 = vpop.f32.mrf.mxu0
  %11447 = vdwg.mxu0
  %11448 = vmatpush.bf16.msra.mxu0 %v6990
  %11449 = vmatpush.bf16.msra.mxu0 %v6982
  %11450 = vmatpush.bf16.msra.mxu0 %v6974
  %11451 = vmatpush.bf16.msra.mxu0 %v6966
  %11452 = vmatpush.bf16.msra.mxu0 %v6958
  %11453 = vmatpush.bf16.msra.mxu0 %v6950
  %11454 = vmatpush.bf16.msra.mxu0 %v6942
  %11455 = vmatpush.bf16.msra.mxu0 %v6934
  %11456 = vmatmul.bf16.gmra.mxu0 %v1701
  %v11457 = vpop.f32.mrf.mxu0
  %v11458 = vadd.f32 %v11445, %v11457
  %v11459 = vpop.f32.mrf.mxu0
  %11460 = vdwg.mxu0
  %11461 = vmatpush.bf16.msra.mxu0 %v7054
  %11462 = vmatpush.bf16.msra.mxu0 %v7046
  %11463 = vmatpush.bf16.msra.mxu0 %v7038
  %11464 = vmatpush.bf16.msra.mxu0 %v7030
  %11465 = vmatpush.bf16.msra.mxu0 %v7022
  %11466 = vmatpush.bf16.msra.mxu0 %v7014
  %11467 = vmatpush.bf16.msra.mxu0 %v7006
  %11468 = vmatpush.bf16.msra.mxu0 %v6998
  %11469 = vmatmul.bf16.gmra.mxu0 %v1702
  %v11470 = vpop.f32.mrf.mxu0
  %v11471 = vadd.f32 %v11458, %v11470
  %v11472 = vpop.f32.mrf.mxu0
  %11473 = vdwg.mxu0
  %11474 = vmatpush.bf16.msra.mxu0 %v7118
  %11475 = vmatpush.bf16.msra.mxu0 %v7110
  %11476 = vmatpush.bf16.msra.mxu0 %v7102
  %11477 = vmatpush.bf16.msra.mxu0 %v7094
  %11478 = vmatpush.bf16.msra.mxu0 %v7086
  %11479 = vmatpush.bf16.msra.mxu0 %v7078
  %11480 = vmatpush.bf16.msra.mxu0 %v7070
  %11481 = vmatpush.bf16.msra.mxu0 %v7062
  %11482 = vmatmul.bf16.gmra.mxu0 %v1703
  %v11483 = vpop.f32.mrf.mxu0
  %v11484 = vadd.f32 %v11471, %v11483
  %v11485 = vpop.f32.mrf.mxu0
  %11486 = vdwg.mxu0
  %11487 = vmatpush.bf16.msra.mxu0 %v7182
  %11488 = vmatpush.bf16.msra.mxu0 %v7174
  %11489 = vmatpush.bf16.msra.mxu0 %v7166
  %11490 = vmatpush.bf16.msra.mxu0 %v7158
  %11491 = vmatpush.bf16.msra.mxu0 %v7150
  %11492 = vmatpush.bf16.msra.mxu0 %v7142
  %11493 = vmatpush.bf16.msra.mxu0 %v7134
  %11494 = vmatpush.bf16.msra.mxu0 %v7126
  %11495 = vmatmul.bf16.gmra.mxu0 %v1704
  %v11496 = vpop.f32.mrf.mxu0
  %v11497 = vadd.f32 %v11484, %v11496
  %v11498 = vpop.f32.mrf.mxu0
  %11499 = vdwg.mxu0
  %11500 = vmatpush.bf16.msra.mxu0 %v7246
  %11501 = vmatpush.bf16.msra.mxu0 %v7238
  %11502 = vmatpush.bf16.msra.mxu0 %v7230
  %11503 = vmatpush.bf16.msra.mxu0 %v7222
  %11504 = vmatpush.bf16.msra.mxu0 %v7214
  %11505 = vmatpush.bf16.msra.mxu0 %v7206
  %11506 = vmatpush.bf16.msra.mxu0 %v7198
  %11507 = vmatpush.bf16.msra.mxu0 %v7190
  %11508 = vmatmul.bf16.gmra.mxu0 %v1705
  %v11509 = vpop.f32.mrf.mxu0
  %v11510 = vadd.f32 %v11497, %v11509
  %v11511 = vpop.f32.mrf.mxu0
  %11512 = vdwg.mxu0
  %11513 = vmatpush.bf16.msra.mxu0 %v7310
  %11514 = vmatpush.bf16.msra.mxu0 %v7302
  %11515 = vmatpush.bf16.msra.mxu0 %v7294
  %11516 = vmatpush.bf16.msra.mxu0 %v7286
  %11517 = vmatpush.bf16.msra.mxu0 %v7278
  %11518 = vmatpush.bf16.msra.mxu0 %v7270
  %11519 = vmatpush.bf16.msra.mxu0 %v7262
  %11520 = vmatpush.bf16.msra.mxu0 %v7254
  %11521 = vmatmul.bf16.gmra.mxu0 %v1706
  %v11522 = vpop.f32.mrf.mxu0
  %v11523 = vadd.f32 %v11510, %v11522
  %v11524 = vpop.f32.mrf.mxu0
  %11525 = vdwg.mxu0
  %11526 = vmatpush.bf16.msra.mxu0 %v7374
  %11527 = vmatpush.bf16.msra.mxu0 %v7366
  %11528 = vmatpush.bf16.msra.mxu0 %v7358
  %11529 = vmatpush.bf16.msra.mxu0 %v7350
  %11530 = vmatpush.bf16.msra.mxu0 %v7342
  %11531 = vmatpush.bf16.msra.mxu0 %v7334
  %11532 = vmatpush.bf16.msra.mxu0 %v7326
  %11533 = vmatpush.bf16.msra.mxu0 %v7318
  %11534 = vmatmul.bf16.gmra.mxu0 %v1707
  %v11535 = vpop.f32.mrf.mxu0
  %v11536 = vadd.f32 %v11523, %v11535
  %v11537 = vpop.f32.mrf.mxu0
  %11538 = vdwg.mxu0
  %11539 = vmatpush.bf16.msra.mxu0 %v7438
  %11540 = vmatpush.bf16.msra.mxu0 %v7430
  %11541 = vmatpush.bf16.msra.mxu0 %v7422
  %11542 = vmatpush.bf16.msra.mxu0 %v7414
  %11543 = vmatpush.bf16.msra.mxu0 %v7406
  %11544 = vmatpush.bf16.msra.mxu0 %v7398
  %11545 = vmatpush.bf16.msra.mxu0 %v7390
  %11546 = vmatpush.bf16.msra.mxu0 %v7382
  %11547 = vmatmul.bf16.gmra.mxu0 %v1708
  %v11548 = vpop.f32.mrf.mxu0
  %v11549 = vadd.f32 %v11536, %v11548
  %v11550 = vpop.f32.mrf.mxu0
  %11551 = vdwg.mxu0
  %11552 = vmatpush.bf16.msra.mxu0 %v7502
  %11553 = vmatpush.bf16.msra.mxu0 %v7494
  %11554 = vmatpush.bf16.msra.mxu0 %v7486
  %11555 = vmatpush.bf16.msra.mxu0 %v7478
  %11556 = vmatpush.bf16.msra.mxu0 %v7470
  %11557 = vmatpush.bf16.msra.mxu0 %v7462
  %11558 = vmatpush.bf16.msra.mxu0 %v7454
  %11559 = vmatpush.bf16.msra.mxu0 %v7446
  %11560 = vmatmul.bf16.gmra.mxu0 %v1709
  %v11561 = vpop.f32.mrf.mxu0
  %v11562 = vadd.f32 %v11549, %v11561
  %v11563 = vpop.f32.mrf.mxu0
  %11564 = vdwg.mxu0
  %11565 = vmatpush.bf16.msra.mxu0 %v7566
  %11566 = vmatpush.bf16.msra.mxu0 %v7558
  %11567 = vmatpush.bf16.msra.mxu0 %v7550
  %11568 = vmatpush.bf16.msra.mxu0 %v7542
  %11569 = vmatpush.bf16.msra.mxu0 %v7534
  %11570 = vmatpush.bf16.msra.mxu0 %v7526
  %11571 = vmatpush.bf16.msra.mxu0 %v7518
  %11572 = vmatpush.bf16.msra.mxu0 %v7510
  %11573 = vmatmul.bf16.gmra.mxu0 %v1710
  %v11574 = vpop.f32.mrf.mxu0
  %v11575 = vadd.f32 %v11562, %v11574
  %v11576 = vpop.f32.mrf.mxu0
  %11577 = vdwg.mxu0
  %11578 = vmatpush.bf16.msra.mxu0 %v7630
  %11579 = vmatpush.bf16.msra.mxu0 %v7622
  %11580 = vmatpush.bf16.msra.mxu0 %v7614
  %11581 = vmatpush.bf16.msra.mxu0 %v7606
  %11582 = vmatpush.bf16.msra.mxu0 %v7598
  %11583 = vmatpush.bf16.msra.mxu0 %v7590
  %11584 = vmatpush.bf16.msra.mxu0 %v7582
  %11585 = vmatpush.bf16.msra.mxu0 %v7574
  %11586 = vmatmul.bf16.gmra.mxu0 %v1711
  %v11587 = vpop.f32.mrf.mxu0
  %v11588 = vadd.f32 %v11575, %v11587
  %v11589 = vpop.f32.mrf.mxu0
  %11590 = vdwg.mxu0
  %11591 = vmatpush.bf16.msra.mxu0 %v7694
  %11592 = vmatpush.bf16.msra.mxu0 %v7686
  %11593 = vmatpush.bf16.msra.mxu0 %v7678
  %11594 = vmatpush.bf16.msra.mxu0 %v7670
  %11595 = vmatpush.bf16.msra.mxu0 %v7662
  %11596 = vmatpush.bf16.msra.mxu0 %v7654
  %11597 = vmatpush.bf16.msra.mxu0 %v7646
  %11598 = vmatpush.bf16.msra.mxu0 %v7638
  %11599 = vmatmul.bf16.gmra.mxu0 %v1712
  %v11600 = vpop.f32.mrf.mxu0
  %v11601 = vadd.f32 %v11588, %v11600
  %v11602 = vpop.f32.mrf.mxu0
  %11603 = vdwg.mxu0
  %11604 = vmatpush.bf16.msra.mxu0 %v7758
  %11605 = vmatpush.bf16.msra.mxu0 %v7750
  %11606 = vmatpush.bf16.msra.mxu0 %v7742
  %11607 = vmatpush.bf16.msra.mxu0 %v7734
  %11608 = vmatpush.bf16.msra.mxu0 %v7726
  %11609 = vmatpush.bf16.msra.mxu0 %v7718
  %11610 = vmatpush.bf16.msra.mxu0 %v7710
  %11611 = vmatpush.bf16.msra.mxu0 %v7702
  %11612 = vmatmul.bf16.gmra.mxu0 %v1713
  %v11613 = vpop.f32.mrf.mxu0
  %v11614 = vadd.f32 %v11601, %v11613
  %v11615 = vpop.f32.mrf.mxu0
  %11616 = vdwg.mxu0
  %11617 = vmatpush.bf16.msra.mxu0 %v7822
  %11618 = vmatpush.bf16.msra.mxu0 %v7814
  %11619 = vmatpush.bf16.msra.mxu0 %v7806
  %11620 = vmatpush.bf16.msra.mxu0 %v7798
  %11621 = vmatpush.bf16.msra.mxu0 %v7790
  %11622 = vmatpush.bf16.msra.mxu0 %v7782
  %11623 = vmatpush.bf16.msra.mxu0 %v7774
  %11624 = vmatpush.bf16.msra.mxu0 %v7766
  %11625 = vmatmul.bf16.gmra.mxu0 %v1714
  %v11626 = vpop.f32.mrf.mxu0
  %v11627 = vadd.f32 %v11614, %v11626
  %v11628 = vpop.f32.mrf.mxu0
  %11629 = vdwg.mxu0
  %11630 = vmatpush.bf16.msra.mxu0 %v7886
  %11631 = vmatpush.bf16.msra.mxu0 %v7878
  %11632 = vmatpush.bf16.msra.mxu0 %v7870
  %11633 = vmatpush.bf16.msra.mxu0 %v7862
  %11634 = vmatpush.bf16.msra.mxu0 %v7854
  %11635 = vmatpush.bf16.msra.mxu0 %v7846
  %11636 = vmatpush.bf16.msra.mxu0 %v7838
  %11637 = vmatpush.bf16.msra.mxu0 %v7830
  %11638 = vmatmul.bf16.gmra.mxu0 %v1715
  %v11639 = vpop.f32.mrf.mxu0
  %v11640 = vadd.f32 %v11627, %v11639
  %v11641 = vpop.f32.mrf.mxu0
  %11642 = vdwg.mxu0
  %11643 = vmatpush.bf16.msra.mxu0 %v7950
  %11644 = vmatpush.bf16.msra.mxu0 %v7942
  %11645 = vmatpush.bf16.msra.mxu0 %v7934
  %11646 = vmatpush.bf16.msra.mxu0 %v7926
  %11647 = vmatpush.bf16.msra.mxu0 %v7918
  %11648 = vmatpush.bf16.msra.mxu0 %v7910
  %11649 = vmatpush.bf16.msra.mxu0 %v7902
  %11650 = vmatpush.bf16.msra.mxu0 %v7894
  %11651 = vmatmul.bf16.gmra.mxu0 %v1716
  %v11652 = vpop.f32.mrf.mxu0
  %v11653 = vadd.f32 %v11640, %v11652
  %v11654 = vpop.f32.mrf.mxu0
  %11655 = vdwg.mxu0
  %11656 = vmatpush.bf16.msra.mxu0 %v8014
  %11657 = vmatpush.bf16.msra.mxu0 %v8006
  %11658 = vmatpush.bf16.msra.mxu0 %v7998
  %11659 = vmatpush.bf16.msra.mxu0 %v7990
  %11660 = vmatpush.bf16.msra.mxu0 %v7982
  %11661 = vmatpush.bf16.msra.mxu0 %v7974
  %11662 = vmatpush.bf16.msra.mxu0 %v7966
  %11663 = vmatpush.bf16.msra.mxu0 %v7958
  %11664 = vmatmul.bf16.gmra.mxu0 %v1717
  %v11665 = vpop.f32.mrf.mxu0
  %v11666 = vadd.f32 %v11653, %v11665
  %v11667 = vpop.f32.mrf.mxu0
  %11668 = vdwg.mxu0
  %11669 = vmatpush.bf16.msra.mxu0 %v8078
  %11670 = vmatpush.bf16.msra.mxu0 %v8070
  %11671 = vmatpush.bf16.msra.mxu0 %v8062
  %11672 = vmatpush.bf16.msra.mxu0 %v8054
  %11673 = vmatpush.bf16.msra.mxu0 %v8046
  %11674 = vmatpush.bf16.msra.mxu0 %v8038
  %11675 = vmatpush.bf16.msra.mxu0 %v8030
  %11676 = vmatpush.bf16.msra.mxu0 %v8022
  %11677 = vmatmul.bf16.gmra.mxu0 %v1718
  %v11678 = vpop.f32.mrf.mxu0
  %v11679 = vadd.f32 %v11666, %v11678
  %v11680 = vpop.f32.mrf.mxu0
  %11681 = vdwg.mxu0
  %11682 = vmatpush.bf16.msra.mxu0 %v8142
  %11683 = vmatpush.bf16.msra.mxu0 %v8134
  %11684 = vmatpush.bf16.msra.mxu0 %v8126
  %11685 = vmatpush.bf16.msra.mxu0 %v8118
  %11686 = vmatpush.bf16.msra.mxu0 %v8110
  %11687 = vmatpush.bf16.msra.mxu0 %v8102
  %11688 = vmatpush.bf16.msra.mxu0 %v8094
  %11689 = vmatpush.bf16.msra.mxu0 %v8086
  %11690 = vmatmul.bf16.gmra.mxu0 %v1719
  %v11691 = vpop.f32.mrf.mxu0
  %v11692 = vadd.f32 %v11679, %v11691
  %v11693 = vpop.f32.mrf.mxu0
  %11694 = vdwg.mxu0
  %11695 = vmatpush.bf16.msra.mxu0 %v6607
  %11696 = vmatpush.bf16.msra.mxu0 %v6599
  %11697 = vmatpush.bf16.msra.mxu0 %v6591
  %11698 = vmatpush.bf16.msra.mxu0 %v6583
  %11699 = vmatpush.bf16.msra.mxu0 %v6575
  %11700 = vmatpush.bf16.msra.mxu0 %v6567
  %11701 = vmatpush.bf16.msra.mxu0 %v6559
  %11702 = vmatpush.bf16.msra.mxu0 %v6551
  %11703 = vmatmul.bf16.gmra.mxu0 %v1695
  %v11704 = vpop.f32.mrf.mxu0
  %v11705 = vadd.f32 %v1647, %v11704
  %v11706 = vpop.f32.mrf.mxu0
  %11707 = vdwg.mxu0
  %11708 = vmatpush.bf16.msra.mxu0 %v6671
  %11709 = vmatpush.bf16.msra.mxu0 %v6663
  %11710 = vmatpush.bf16.msra.mxu0 %v6655
  %11711 = vmatpush.bf16.msra.mxu0 %v6647
  %11712 = vmatpush.bf16.msra.mxu0 %v6639
  %11713 = vmatpush.bf16.msra.mxu0 %v6631
  %11714 = vmatpush.bf16.msra.mxu0 %v6623
  %11715 = vmatpush.bf16.msra.mxu0 %v6615
  %11716 = vmatmul.bf16.gmra.mxu0 %v1696
  %v11717 = vpop.f32.mrf.mxu0
  %v11718 = vadd.f32 %v11705, %v11717
  %v11719 = vpop.f32.mrf.mxu0
  %11720 = vdwg.mxu0
  %11721 = vmatpush.bf16.msra.mxu0 %v6735
  %11722 = vmatpush.bf16.msra.mxu0 %v6727
  %11723 = vmatpush.bf16.msra.mxu0 %v6719
  %11724 = vmatpush.bf16.msra.mxu0 %v6711
  %11725 = vmatpush.bf16.msra.mxu0 %v6703
  %11726 = vmatpush.bf16.msra.mxu0 %v6695
  %11727 = vmatpush.bf16.msra.mxu0 %v6687
  %11728 = vmatpush.bf16.msra.mxu0 %v6679
  %11729 = vmatmul.bf16.gmra.mxu0 %v1697
  %v11730 = vpop.f32.mrf.mxu0
  %v11731 = vadd.f32 %v11718, %v11730
  %v11732 = vpop.f32.mrf.mxu0
  %11733 = vdwg.mxu0
  %11734 = vmatpush.bf16.msra.mxu0 %v6799
  %11735 = vmatpush.bf16.msra.mxu0 %v6791
  %11736 = vmatpush.bf16.msra.mxu0 %v6783
  %11737 = vmatpush.bf16.msra.mxu0 %v6775
  %11738 = vmatpush.bf16.msra.mxu0 %v6767
  %11739 = vmatpush.bf16.msra.mxu0 %v6759
  %11740 = vmatpush.bf16.msra.mxu0 %v6751
  %11741 = vmatpush.bf16.msra.mxu0 %v6743
  %11742 = vmatmul.bf16.gmra.mxu0 %v1698
  %v11743 = vpop.f32.mrf.mxu0
  %v11744 = vadd.f32 %v11731, %v11743
  %v11745 = vpop.f32.mrf.mxu0
  %11746 = vdwg.mxu0
  %11747 = vmatpush.bf16.msra.mxu0 %v6863
  %11748 = vmatpush.bf16.msra.mxu0 %v6855
  %11749 = vmatpush.bf16.msra.mxu0 %v6847
  %11750 = vmatpush.bf16.msra.mxu0 %v6839
  %11751 = vmatpush.bf16.msra.mxu0 %v6831
  %11752 = vmatpush.bf16.msra.mxu0 %v6823
  %11753 = vmatpush.bf16.msra.mxu0 %v6815
  %11754 = vmatpush.bf16.msra.mxu0 %v6807
  %11755 = vmatmul.bf16.gmra.mxu0 %v1699
  %v11756 = vpop.f32.mrf.mxu0
  %v11757 = vadd.f32 %v11744, %v11756
  %v11758 = vpop.f32.mrf.mxu0
  %11759 = vdwg.mxu0
  %11760 = vmatpush.bf16.msra.mxu0 %v6927
  %11761 = vmatpush.bf16.msra.mxu0 %v6919
  %11762 = vmatpush.bf16.msra.mxu0 %v6911
  %11763 = vmatpush.bf16.msra.mxu0 %v6903
  %11764 = vmatpush.bf16.msra.mxu0 %v6895
  %11765 = vmatpush.bf16.msra.mxu0 %v6887
  %11766 = vmatpush.bf16.msra.mxu0 %v6879
  %11767 = vmatpush.bf16.msra.mxu0 %v6871
  %11768 = vmatmul.bf16.gmra.mxu0 %v1700
  %v11769 = vpop.f32.mrf.mxu0
  %v11770 = vadd.f32 %v11757, %v11769
  %v11771 = vpop.f32.mrf.mxu0
  %11772 = vdwg.mxu0
  %11773 = vmatpush.bf16.msra.mxu0 %v6991
  %11774 = vmatpush.bf16.msra.mxu0 %v6983
  %11775 = vmatpush.bf16.msra.mxu0 %v6975
  %11776 = vmatpush.bf16.msra.mxu0 %v6967
  %11777 = vmatpush.bf16.msra.mxu0 %v6959
  %11778 = vmatpush.bf16.msra.mxu0 %v6951
  %11779 = vmatpush.bf16.msra.mxu0 %v6943
  %11780 = vmatpush.bf16.msra.mxu0 %v6935
  %11781 = vmatmul.bf16.gmra.mxu0 %v1701
  %v11782 = vpop.f32.mrf.mxu0
  %v11783 = vadd.f32 %v11770, %v11782
  %v11784 = vpop.f32.mrf.mxu0
  %11785 = vdwg.mxu0
  %11786 = vmatpush.bf16.msra.mxu0 %v7055
  %11787 = vmatpush.bf16.msra.mxu0 %v7047
  %11788 = vmatpush.bf16.msra.mxu0 %v7039
  %11789 = vmatpush.bf16.msra.mxu0 %v7031
  %11790 = vmatpush.bf16.msra.mxu0 %v7023
  %11791 = vmatpush.bf16.msra.mxu0 %v7015
  %11792 = vmatpush.bf16.msra.mxu0 %v7007
  %11793 = vmatpush.bf16.msra.mxu0 %v6999
  %11794 = vmatmul.bf16.gmra.mxu0 %v1702
  %v11795 = vpop.f32.mrf.mxu0
  %v11796 = vadd.f32 %v11783, %v11795
  %v11797 = vpop.f32.mrf.mxu0
  %11798 = vdwg.mxu0
  %11799 = vmatpush.bf16.msra.mxu0 %v7119
  %11800 = vmatpush.bf16.msra.mxu0 %v7111
  %11801 = vmatpush.bf16.msra.mxu0 %v7103
  %11802 = vmatpush.bf16.msra.mxu0 %v7095
  %11803 = vmatpush.bf16.msra.mxu0 %v7087
  %11804 = vmatpush.bf16.msra.mxu0 %v7079
  %11805 = vmatpush.bf16.msra.mxu0 %v7071
  %11806 = vmatpush.bf16.msra.mxu0 %v7063
  %11807 = vmatmul.bf16.gmra.mxu0 %v1703
  %v11808 = vpop.f32.mrf.mxu0
  %v11809 = vadd.f32 %v11796, %v11808
  %v11810 = vpop.f32.mrf.mxu0
  %11811 = vdwg.mxu0
  %11812 = vmatpush.bf16.msra.mxu0 %v7183
  %11813 = vmatpush.bf16.msra.mxu0 %v7175
  %11814 = vmatpush.bf16.msra.mxu0 %v7167
  %11815 = vmatpush.bf16.msra.mxu0 %v7159
  %11816 = vmatpush.bf16.msra.mxu0 %v7151
  %11817 = vmatpush.bf16.msra.mxu0 %v7143
  %11818 = vmatpush.bf16.msra.mxu0 %v7135
  %11819 = vmatpush.bf16.msra.mxu0 %v7127
  %11820 = vmatmul.bf16.gmra.mxu0 %v1704
  %v11821 = vpop.f32.mrf.mxu0
  %v11822 = vadd.f32 %v11809, %v11821
  %v11823 = vpop.f32.mrf.mxu0
  %11824 = vdwg.mxu0
  %11825 = vmatpush.bf16.msra.mxu0 %v7247
  %11826 = vmatpush.bf16.msra.mxu0 %v7239
  %11827 = vmatpush.bf16.msra.mxu0 %v7231
  %11828 = vmatpush.bf16.msra.mxu0 %v7223
  %11829 = vmatpush.bf16.msra.mxu0 %v7215
  %11830 = vmatpush.bf16.msra.mxu0 %v7207
  %11831 = vmatpush.bf16.msra.mxu0 %v7199
  %11832 = vmatpush.bf16.msra.mxu0 %v7191
  %11833 = vmatmul.bf16.gmra.mxu0 %v1705
  %v11834 = vpop.f32.mrf.mxu0
  %v11835 = vadd.f32 %v11822, %v11834
  %v11836 = vpop.f32.mrf.mxu0
  %11837 = vdwg.mxu0
  %11838 = vmatpush.bf16.msra.mxu0 %v7311
  %11839 = vmatpush.bf16.msra.mxu0 %v7303
  %11840 = vmatpush.bf16.msra.mxu0 %v7295
  %11841 = vmatpush.bf16.msra.mxu0 %v7287
  %11842 = vmatpush.bf16.msra.mxu0 %v7279
  %11843 = vmatpush.bf16.msra.mxu0 %v7271
  %11844 = vmatpush.bf16.msra.mxu0 %v7263
  %11845 = vmatpush.bf16.msra.mxu0 %v7255
  %11846 = vmatmul.bf16.gmra.mxu0 %v1706
  %v11847 = vpop.f32.mrf.mxu0
  %v11848 = vadd.f32 %v11835, %v11847
  %v11849 = vpop.f32.mrf.mxu0
  %11850 = vdwg.mxu0
  %11851 = vmatpush.bf16.msra.mxu0 %v7375
  %11852 = vmatpush.bf16.msra.mxu0 %v7367
  %11853 = vmatpush.bf16.msra.mxu0 %v7359
  %11854 = vmatpush.bf16.msra.mxu0 %v7351
  %11855 = vmatpush.bf16.msra.mxu0 %v7343
  %11856 = vmatpush.bf16.msra.mxu0 %v7335
  %11857 = vmatpush.bf16.msra.mxu0 %v7327
  %11858 = vmatpush.bf16.msra.mxu0 %v7319
  %11859 = vmatmul.bf16.gmra.mxu0 %v1707
  %v11860 = vpop.f32.mrf.mxu0
  %v11861 = vadd.f32 %v11848, %v11860
  %v11862 = vpop.f32.mrf.mxu0
  %11863 = vdwg.mxu0
  %11864 = vmatpush.bf16.msra.mxu0 %v7439
  %11865 = vmatpush.bf16.msra.mxu0 %v7431
  %11866 = vmatpush.bf16.msra.mxu0 %v7423
  %11867 = vmatpush.bf16.msra.mxu0 %v7415
  %11868 = vmatpush.bf16.msra.mxu0 %v7407
  %11869 = vmatpush.bf16.msra.mxu0 %v7399
  %11870 = vmatpush.bf16.msra.mxu0 %v7391
  %11871 = vmatpush.bf16.msra.mxu0 %v7383
  %11872 = vmatmul.bf16.gmra.mxu0 %v1708
  %v11873 = vpop.f32.mrf.mxu0
  %v11874 = vadd.f32 %v11861, %v11873
  %v11875 = vpop.f32.mrf.mxu0
  %11876 = vdwg.mxu0
  %11877 = vmatpush.bf16.msra.mxu0 %v7503
  %11878 = vmatpush.bf16.msra.mxu0 %v7495
  %11879 = vmatpush.bf16.msra.mxu0 %v7487
  %11880 = vmatpush.bf16.msra.mxu0 %v7479
  %11881 = vmatpush.bf16.msra.mxu0 %v7471
  %11882 = vmatpush.bf16.msra.mxu0 %v7463
  %11883 = vmatpush.bf16.msra.mxu0 %v7455
  %11884 = vmatpush.bf16.msra.mxu0 %v7447
  %11885 = vmatmul.bf16.gmra.mxu0 %v1709
  %v11886 = vpop.f32.mrf.mxu0
  %v11887 = vadd.f32 %v11874, %v11886
  %v11888 = vpop.f32.mrf.mxu0
  %11889 = vdwg.mxu0
  %11890 = vmatpush.bf16.msra.mxu0 %v7567
  %11891 = vmatpush.bf16.msra.mxu0 %v7559
  %11892 = vmatpush.bf16.msra.mxu0 %v7551
  %11893 = vmatpush.bf16.msra.mxu0 %v7543
  %11894 = vmatpush.bf16.msra.mxu0 %v7535
  %11895 = vmatpush.bf16.msra.mxu0 %v7527
  %11896 = vmatpush.bf16.msra.mxu0 %v7519
  %11897 = vmatpush.bf16.msra.mxu0 %v7511
  %11898 = vmatmul.bf16.gmra.mxu0 %v1710
  %v11899 = vpop.f32.mrf.mxu0
  %v11900 = vadd.f32 %v11887, %v11899
  %v11901 = vpop.f32.mrf.mxu0
  %11902 = vdwg.mxu0
  %11903 = vmatpush.bf16.msra.mxu0 %v7631
  %11904 = vmatpush.bf16.msra.mxu0 %v7623
  %11905 = vmatpush.bf16.msra.mxu0 %v7615
  %11906 = vmatpush.bf16.msra.mxu0 %v7607
  %11907 = vmatpush.bf16.msra.mxu0 %v7599
  %11908 = vmatpush.bf16.msra.mxu0 %v7591
  %11909 = vmatpush.bf16.msra.mxu0 %v7583
  %11910 = vmatpush.bf16.msra.mxu0 %v7575
  %11911 = vmatmul.bf16.gmra.mxu0 %v1711
  %v11912 = vpop.f32.mrf.mxu0
  %v11913 = vadd.f32 %v11900, %v11912
  %v11914 = vpop.f32.mrf.mxu0
  %11915 = vdwg.mxu0
  %11916 = vmatpush.bf16.msra.mxu0 %v7695
  %11917 = vmatpush.bf16.msra.mxu0 %v7687
  %11918 = vmatpush.bf16.msra.mxu0 %v7679
  %11919 = vmatpush.bf16.msra.mxu0 %v7671
  %11920 = vmatpush.bf16.msra.mxu0 %v7663
  %11921 = vmatpush.bf16.msra.mxu0 %v7655
  %11922 = vmatpush.bf16.msra.mxu0 %v7647
  %11923 = vmatpush.bf16.msra.mxu0 %v7639
  %11924 = vmatmul.bf16.gmra.mxu0 %v1712
  %v11925 = vpop.f32.mrf.mxu0
  %v11926 = vadd.f32 %v11913, %v11925
  %v11927 = vpop.f32.mrf.mxu0
  %11928 = vdwg.mxu0
  %11929 = vmatpush.bf16.msra.mxu0 %v7759
  %11930 = vmatpush.bf16.msra.mxu0 %v7751
  %11931 = vmatpush.bf16.msra.mxu0 %v7743
  %11932 = vmatpush.bf16.msra.mxu0 %v7735
  %11933 = vmatpush.bf16.msra.mxu0 %v7727
  %11934 = vmatpush.bf16.msra.mxu0 %v7719
  %11935 = vmatpush.bf16.msra.mxu0 %v7711
  %11936 = vmatpush.bf16.msra.mxu0 %v7703
  %11937 = vmatmul.bf16.gmra.mxu0 %v1713
  %v11938 = vpop.f32.mrf.mxu0
  %v11939 = vadd.f32 %v11926, %v11938
  %v11940 = vpop.f32.mrf.mxu0
  %11941 = vdwg.mxu0
  %11942 = vmatpush.bf16.msra.mxu0 %v7823
  %11943 = vmatpush.bf16.msra.mxu0 %v7815
  %11944 = vmatpush.bf16.msra.mxu0 %v7807
  %11945 = vmatpush.bf16.msra.mxu0 %v7799
  %11946 = vmatpush.bf16.msra.mxu0 %v7791
  %11947 = vmatpush.bf16.msra.mxu0 %v7783
  %11948 = vmatpush.bf16.msra.mxu0 %v7775
  %11949 = vmatpush.bf16.msra.mxu0 %v7767
  %11950 = vmatmul.bf16.gmra.mxu0 %v1714
  %v11951 = vpop.f32.mrf.mxu0
  %v11952 = vadd.f32 %v11939, %v11951
  %v11953 = vpop.f32.mrf.mxu0
  %11954 = vdwg.mxu0
  %11955 = vmatpush.bf16.msra.mxu0 %v7887
  %11956 = vmatpush.bf16.msra.mxu0 %v7879
  %11957 = vmatpush.bf16.msra.mxu0 %v7871
  %11958 = vmatpush.bf16.msra.mxu0 %v7863
  %11959 = vmatpush.bf16.msra.mxu0 %v7855
  %11960 = vmatpush.bf16.msra.mxu0 %v7847
  %11961 = vmatpush.bf16.msra.mxu0 %v7839
  %11962 = vmatpush.bf16.msra.mxu0 %v7831
  %11963 = vmatmul.bf16.gmra.mxu0 %v1715
  %v11964 = vpop.f32.mrf.mxu0
  %v11965 = vadd.f32 %v11952, %v11964
  %v11966 = vpop.f32.mrf.mxu0
  %11967 = vdwg.mxu0
  %11968 = vmatpush.bf16.msra.mxu0 %v7951
  %11969 = vmatpush.bf16.msra.mxu0 %v7943
  %11970 = vmatpush.bf16.msra.mxu0 %v7935
  %11971 = vmatpush.bf16.msra.mxu0 %v7927
  %11972 = vmatpush.bf16.msra.mxu0 %v7919
  %11973 = vmatpush.bf16.msra.mxu0 %v7911
  %11974 = vmatpush.bf16.msra.mxu0 %v7903
  %11975 = vmatpush.bf16.msra.mxu0 %v7895
  %11976 = vmatmul.bf16.gmra.mxu0 %v1716
  %v11977 = vpop.f32.mrf.mxu0
  %v11978 = vadd.f32 %v11965, %v11977
  %v11979 = vpop.f32.mrf.mxu0
  %11980 = vdwg.mxu0
  %11981 = vmatpush.bf16.msra.mxu0 %v8015
  %11982 = vmatpush.bf16.msra.mxu0 %v8007
  %11983 = vmatpush.bf16.msra.mxu0 %v7999
  %11984 = vmatpush.bf16.msra.mxu0 %v7991
  %11985 = vmatpush.bf16.msra.mxu0 %v7983
  %11986 = vmatpush.bf16.msra.mxu0 %v7975
  %11987 = vmatpush.bf16.msra.mxu0 %v7967
  %11988 = vmatpush.bf16.msra.mxu0 %v7959
  %11989 = vmatmul.bf16.gmra.mxu0 %v1717
  %v11990 = vpop.f32.mrf.mxu0
  %v11991 = vadd.f32 %v11978, %v11990
  %v11992 = vpop.f32.mrf.mxu0
  %11993 = vdwg.mxu0
  %11994 = vmatpush.bf16.msra.mxu0 %v8079
  %11995 = vmatpush.bf16.msra.mxu0 %v8071
  %11996 = vmatpush.bf16.msra.mxu0 %v8063
  %11997 = vmatpush.bf16.msra.mxu0 %v8055
  %11998 = vmatpush.bf16.msra.mxu0 %v8047
  %11999 = vmatpush.bf16.msra.mxu0 %v8039
  %12000 = vmatpush.bf16.msra.mxu0 %v8031
  %12001 = vmatpush.bf16.msra.mxu0 %v8023
  %12002 = vmatmul.bf16.gmra.mxu0 %v1718
  %v12003 = vpop.f32.mrf.mxu0
  %v12004 = vadd.f32 %v11991, %v12003
  %v12005 = vpop.f32.mrf.mxu0
  %12006 = vdwg.mxu0
  %12007 = vmatpush.bf16.msra.mxu0 %v8143
  %12008 = vmatpush.bf16.msra.mxu0 %v8135
  %12009 = vmatpush.bf16.msra.mxu0 %v8127
  %12010 = vmatpush.bf16.msra.mxu0 %v8119
  %12011 = vmatpush.bf16.msra.mxu0 %v8111
  %12012 = vmatpush.bf16.msra.mxu0 %v8103
  %12013 = vmatpush.bf16.msra.mxu0 %v8095
  %12014 = vmatpush.bf16.msra.mxu0 %v8087
  %12015 = vmatmul.bf16.gmra.mxu0 %v1719
  %v12016 = vpop.f32.mrf.mxu0
  %v12017 = vadd.f32 %v12004, %v12016
  %v12018 = vpop.f32.mrf.mxu0
  %12019 = vdwg.mxu0
  %12020 = vmatpush.bf16.msra.mxu0 %v6608
  %12021 = vmatpush.bf16.msra.mxu0 %v6600
  %12022 = vmatpush.bf16.msra.mxu0 %v6592
  %12023 = vmatpush.bf16.msra.mxu0 %v6584
  %12024 = vmatpush.bf16.msra.mxu0 %v6576
  %12025 = vmatpush.bf16.msra.mxu0 %v6568
  %12026 = vmatpush.bf16.msra.mxu0 %v6560
  %12027 = vmatpush.bf16.msra.mxu0 %v6552
  %12028 = vmatmul.bf16.gmra.mxu0 %v1695
  %v12029 = vpop.f32.mrf.mxu0
  %v12030 = vadd.f32 %v1648, %v12029
  %v12031 = vpop.f32.mrf.mxu0
  %12032 = vdwg.mxu0
  %12033 = vmatpush.bf16.msra.mxu0 %v6672
  %12034 = vmatpush.bf16.msra.mxu0 %v6664
  %12035 = vmatpush.bf16.msra.mxu0 %v6656
  %12036 = vmatpush.bf16.msra.mxu0 %v6648
  %12037 = vmatpush.bf16.msra.mxu0 %v6640
  %12038 = vmatpush.bf16.msra.mxu0 %v6632
  %12039 = vmatpush.bf16.msra.mxu0 %v6624
  %12040 = vmatpush.bf16.msra.mxu0 %v6616
  %12041 = vmatmul.bf16.gmra.mxu0 %v1696
  %v12042 = vpop.f32.mrf.mxu0
  %v12043 = vadd.f32 %v12030, %v12042
  %v12044 = vpop.f32.mrf.mxu0
  %12045 = vdwg.mxu0
  %12046 = vmatpush.bf16.msra.mxu0 %v6736
  %12047 = vmatpush.bf16.msra.mxu0 %v6728
  %12048 = vmatpush.bf16.msra.mxu0 %v6720
  %12049 = vmatpush.bf16.msra.mxu0 %v6712
  %12050 = vmatpush.bf16.msra.mxu0 %v6704
  %12051 = vmatpush.bf16.msra.mxu0 %v6696
  %12052 = vmatpush.bf16.msra.mxu0 %v6688
  %12053 = vmatpush.bf16.msra.mxu0 %v6680
  %12054 = vmatmul.bf16.gmra.mxu0 %v1697
  %v12055 = vpop.f32.mrf.mxu0
  %v12056 = vadd.f32 %v12043, %v12055
  %v12057 = vpop.f32.mrf.mxu0
  %12058 = vdwg.mxu0
  %12059 = vmatpush.bf16.msra.mxu0 %v6800
  %12060 = vmatpush.bf16.msra.mxu0 %v6792
  %12061 = vmatpush.bf16.msra.mxu0 %v6784
  %12062 = vmatpush.bf16.msra.mxu0 %v6776
  %12063 = vmatpush.bf16.msra.mxu0 %v6768
  %12064 = vmatpush.bf16.msra.mxu0 %v6760
  %12065 = vmatpush.bf16.msra.mxu0 %v6752
  %12066 = vmatpush.bf16.msra.mxu0 %v6744
  %12067 = vmatmul.bf16.gmra.mxu0 %v1698
  %v12068 = vpop.f32.mrf.mxu0
  %v12069 = vadd.f32 %v12056, %v12068
  %v12070 = vpop.f32.mrf.mxu0
  %12071 = vdwg.mxu0
  %12072 = vmatpush.bf16.msra.mxu0 %v6864
  %12073 = vmatpush.bf16.msra.mxu0 %v6856
  %12074 = vmatpush.bf16.msra.mxu0 %v6848
  %12075 = vmatpush.bf16.msra.mxu0 %v6840
  %12076 = vmatpush.bf16.msra.mxu0 %v6832
  %12077 = vmatpush.bf16.msra.mxu0 %v6824
  %12078 = vmatpush.bf16.msra.mxu0 %v6816
  %12079 = vmatpush.bf16.msra.mxu0 %v6808
  %12080 = vmatmul.bf16.gmra.mxu0 %v1699
  %v12081 = vpop.f32.mrf.mxu0
  %v12082 = vadd.f32 %v12069, %v12081
  %v12083 = vpop.f32.mrf.mxu0
  %12084 = vdwg.mxu0
  %12085 = vmatpush.bf16.msra.mxu0 %v6928
  %12086 = vmatpush.bf16.msra.mxu0 %v6920
  %12087 = vmatpush.bf16.msra.mxu0 %v6912
  %12088 = vmatpush.bf16.msra.mxu0 %v6904
  %12089 = vmatpush.bf16.msra.mxu0 %v6896
  %12090 = vmatpush.bf16.msra.mxu0 %v6888
  %12091 = vmatpush.bf16.msra.mxu0 %v6880
  %12092 = vmatpush.bf16.msra.mxu0 %v6872
  %12093 = vmatmul.bf16.gmra.mxu0 %v1700
  %v12094 = vpop.f32.mrf.mxu0
  %v12095 = vadd.f32 %v12082, %v12094
  %v12096 = vpop.f32.mrf.mxu0
  %12097 = vdwg.mxu0
  %12098 = vmatpush.bf16.msra.mxu0 %v6992
  %12099 = vmatpush.bf16.msra.mxu0 %v6984
  %12100 = vmatpush.bf16.msra.mxu0 %v6976
  %12101 = vmatpush.bf16.msra.mxu0 %v6968
  %12102 = vmatpush.bf16.msra.mxu0 %v6960
  %12103 = vmatpush.bf16.msra.mxu0 %v6952
  %12104 = vmatpush.bf16.msra.mxu0 %v6944
  %12105 = vmatpush.bf16.msra.mxu0 %v6936
  %12106 = vmatmul.bf16.gmra.mxu0 %v1701
  %v12107 = vpop.f32.mrf.mxu0
  %v12108 = vadd.f32 %v12095, %v12107
  %v12109 = vpop.f32.mrf.mxu0
  %12110 = vdwg.mxu0
  %12111 = vmatpush.bf16.msra.mxu0 %v7056
  %12112 = vmatpush.bf16.msra.mxu0 %v7048
  %12113 = vmatpush.bf16.msra.mxu0 %v7040
  %12114 = vmatpush.bf16.msra.mxu0 %v7032
  %12115 = vmatpush.bf16.msra.mxu0 %v7024
  %12116 = vmatpush.bf16.msra.mxu0 %v7016
  %12117 = vmatpush.bf16.msra.mxu0 %v7008
  %12118 = vmatpush.bf16.msra.mxu0 %v7000
  %12119 = vmatmul.bf16.gmra.mxu0 %v1702
  %v12120 = vpop.f32.mrf.mxu0
  %v12121 = vadd.f32 %v12108, %v12120
  %v12122 = vpop.f32.mrf.mxu0
  %12123 = vdwg.mxu0
  %12124 = vmatpush.bf16.msra.mxu0 %v7120
  %12125 = vmatpush.bf16.msra.mxu0 %v7112
  %12126 = vmatpush.bf16.msra.mxu0 %v7104
  %12127 = vmatpush.bf16.msra.mxu0 %v7096
  %12128 = vmatpush.bf16.msra.mxu0 %v7088
  %12129 = vmatpush.bf16.msra.mxu0 %v7080
  %12130 = vmatpush.bf16.msra.mxu0 %v7072
  %12131 = vmatpush.bf16.msra.mxu0 %v7064
  %12132 = vmatmul.bf16.gmra.mxu0 %v1703
  %v12133 = vpop.f32.mrf.mxu0
  %v12134 = vadd.f32 %v12121, %v12133
  %v12135 = vpop.f32.mrf.mxu0
  %12136 = vdwg.mxu0
  %12137 = vmatpush.bf16.msra.mxu0 %v7184
  %12138 = vmatpush.bf16.msra.mxu0 %v7176
  %12139 = vmatpush.bf16.msra.mxu0 %v7168
  %12140 = vmatpush.bf16.msra.mxu0 %v7160
  %12141 = vmatpush.bf16.msra.mxu0 %v7152
  %12142 = vmatpush.bf16.msra.mxu0 %v7144
  %12143 = vmatpush.bf16.msra.mxu0 %v7136
  %12144 = vmatpush.bf16.msra.mxu0 %v7128
  %12145 = vmatmul.bf16.gmra.mxu0 %v1704
  %v12146 = vpop.f32.mrf.mxu0
  %v12147 = vadd.f32 %v12134, %v12146
  %v12148 = vpop.f32.mrf.mxu0
  %12149 = vdwg.mxu0
  %12150 = vmatpush.bf16.msra.mxu0 %v7248
  %12151 = vmatpush.bf16.msra.mxu0 %v7240
  %12152 = vmatpush.bf16.msra.mxu0 %v7232
  %12153 = vmatpush.bf16.msra.mxu0 %v7224
  %12154 = vmatpush.bf16.msra.mxu0 %v7216
  %12155 = vmatpush.bf16.msra.mxu0 %v7208
  %12156 = vmatpush.bf16.msra.mxu0 %v7200
  %12157 = vmatpush.bf16.msra.mxu0 %v7192
  %12158 = vmatmul.bf16.gmra.mxu0 %v1705
  %v12159 = vpop.f32.mrf.mxu0
  %v12160 = vadd.f32 %v12147, %v12159
  %v12161 = vpop.f32.mrf.mxu0
  %12162 = vdwg.mxu0
  %12163 = vmatpush.bf16.msra.mxu0 %v7312
  %12164 = vmatpush.bf16.msra.mxu0 %v7304
  %12165 = vmatpush.bf16.msra.mxu0 %v7296
  %12166 = vmatpush.bf16.msra.mxu0 %v7288
  %12167 = vmatpush.bf16.msra.mxu0 %v7280
  %12168 = vmatpush.bf16.msra.mxu0 %v7272
  %12169 = vmatpush.bf16.msra.mxu0 %v7264
  %12170 = vmatpush.bf16.msra.mxu0 %v7256
  %12171 = vmatmul.bf16.gmra.mxu0 %v1706
  %v12172 = vpop.f32.mrf.mxu0
  %v12173 = vadd.f32 %v12160, %v12172
  %v12174 = vpop.f32.mrf.mxu0
  %12175 = vdwg.mxu0
  %12176 = vmatpush.bf16.msra.mxu0 %v7376
  %12177 = vmatpush.bf16.msra.mxu0 %v7368
  %12178 = vmatpush.bf16.msra.mxu0 %v7360
  %12179 = vmatpush.bf16.msra.mxu0 %v7352
  %12180 = vmatpush.bf16.msra.mxu0 %v7344
  %12181 = vmatpush.bf16.msra.mxu0 %v7336
  %12182 = vmatpush.bf16.msra.mxu0 %v7328
  %12183 = vmatpush.bf16.msra.mxu0 %v7320
  %12184 = vmatmul.bf16.gmra.mxu0 %v1707
  %v12185 = vpop.f32.mrf.mxu0
  %v12186 = vadd.f32 %v12173, %v12185
  %v12187 = vpop.f32.mrf.mxu0
  %12188 = vdwg.mxu0
  %12189 = vmatpush.bf16.msra.mxu0 %v7440
  %12190 = vmatpush.bf16.msra.mxu0 %v7432
  %12191 = vmatpush.bf16.msra.mxu0 %v7424
  %12192 = vmatpush.bf16.msra.mxu0 %v7416
  %12193 = vmatpush.bf16.msra.mxu0 %v7408
  %12194 = vmatpush.bf16.msra.mxu0 %v7400
  %12195 = vmatpush.bf16.msra.mxu0 %v7392
  %12196 = vmatpush.bf16.msra.mxu0 %v7384
  %12197 = vmatmul.bf16.gmra.mxu0 %v1708
  %v12198 = vpop.f32.mrf.mxu0
  %v12199 = vadd.f32 %v12186, %v12198
  %v12200 = vpop.f32.mrf.mxu0
  %12201 = vdwg.mxu0
  %12202 = vmatpush.bf16.msra.mxu0 %v7504
  %12203 = vmatpush.bf16.msra.mxu0 %v7496
  %12204 = vmatpush.bf16.msra.mxu0 %v7488
  %12205 = vmatpush.bf16.msra.mxu0 %v7480
  %12206 = vmatpush.bf16.msra.mxu0 %v7472
  %12207 = vmatpush.bf16.msra.mxu0 %v7464
  %12208 = vmatpush.bf16.msra.mxu0 %v7456
  %12209 = vmatpush.bf16.msra.mxu0 %v7448
  %12210 = vmatmul.bf16.gmra.mxu0 %v1709
  %v12211 = vpop.f32.mrf.mxu0
  %v12212 = vadd.f32 %v12199, %v12211
  %v12213 = vpop.f32.mrf.mxu0
  %12214 = vdwg.mxu0
  %12215 = vmatpush.bf16.msra.mxu0 %v7568
  %12216 = vmatpush.bf16.msra.mxu0 %v7560
  %12217 = vmatpush.bf16.msra.mxu0 %v7552
  %12218 = vmatpush.bf16.msra.mxu0 %v7544
  %12219 = vmatpush.bf16.msra.mxu0 %v7536
  %12220 = vmatpush.bf16.msra.mxu0 %v7528
  %12221 = vmatpush.bf16.msra.mxu0 %v7520
  %12222 = vmatpush.bf16.msra.mxu0 %v7512
  %12223 = vmatmul.bf16.gmra.mxu0 %v1710
  %v12224 = vpop.f32.mrf.mxu0
  %v12225 = vadd.f32 %v12212, %v12224
  %v12226 = vpop.f32.mrf.mxu0
  %12227 = vdwg.mxu0
  %12228 = vmatpush.bf16.msra.mxu0 %v7632
  %12229 = vmatpush.bf16.msra.mxu0 %v7624
  %12230 = vmatpush.bf16.msra.mxu0 %v7616
  %12231 = vmatpush.bf16.msra.mxu0 %v7608
  %12232 = vmatpush.bf16.msra.mxu0 %v7600
  %12233 = vmatpush.bf16.msra.mxu0 %v7592
  %12234 = vmatpush.bf16.msra.mxu0 %v7584
  %12235 = vmatpush.bf16.msra.mxu0 %v7576
  %12236 = vmatmul.bf16.gmra.mxu0 %v1711
  %v12237 = vpop.f32.mrf.mxu0
  %v12238 = vadd.f32 %v12225, %v12237
  %v12239 = vpop.f32.mrf.mxu0
  %12240 = vdwg.mxu0
  %12241 = vmatpush.bf16.msra.mxu0 %v7696
  %12242 = vmatpush.bf16.msra.mxu0 %v7688
  %12243 = vmatpush.bf16.msra.mxu0 %v7680
  %12244 = vmatpush.bf16.msra.mxu0 %v7672
  %12245 = vmatpush.bf16.msra.mxu0 %v7664
  %12246 = vmatpush.bf16.msra.mxu0 %v7656
  %12247 = vmatpush.bf16.msra.mxu0 %v7648
  %12248 = vmatpush.bf16.msra.mxu0 %v7640
  %12249 = vmatmul.bf16.gmra.mxu0 %v1712
  %v12250 = vpop.f32.mrf.mxu0
  %v12251 = vadd.f32 %v12238, %v12250
  %v12252 = vpop.f32.mrf.mxu0
  %12253 = vdwg.mxu0
  %12254 = vmatpush.bf16.msra.mxu0 %v7760
  %12255 = vmatpush.bf16.msra.mxu0 %v7752
  %12256 = vmatpush.bf16.msra.mxu0 %v7744
  %12257 = vmatpush.bf16.msra.mxu0 %v7736
  %12258 = vmatpush.bf16.msra.mxu0 %v7728
  %12259 = vmatpush.bf16.msra.mxu0 %v7720
  %12260 = vmatpush.bf16.msra.mxu0 %v7712
  %12261 = vmatpush.bf16.msra.mxu0 %v7704
  %12262 = vmatmul.bf16.gmra.mxu0 %v1713
  %v12263 = vpop.f32.mrf.mxu0
  %v12264 = vadd.f32 %v12251, %v12263
  %v12265 = vpop.f32.mrf.mxu0
  %12266 = vdwg.mxu0
  %12267 = vmatpush.bf16.msra.mxu0 %v7824
  %12268 = vmatpush.bf16.msra.mxu0 %v7816
  %12269 = vmatpush.bf16.msra.mxu0 %v7808
  %12270 = vmatpush.bf16.msra.mxu0 %v7800
  %12271 = vmatpush.bf16.msra.mxu0 %v7792
  %12272 = vmatpush.bf16.msra.mxu0 %v7784
  %12273 = vmatpush.bf16.msra.mxu0 %v7776
  %12274 = vmatpush.bf16.msra.mxu0 %v7768
  %12275 = vmatmul.bf16.gmra.mxu0 %v1714
  %v12276 = vpop.f32.mrf.mxu0
  %v12277 = vadd.f32 %v12264, %v12276
  %v12278 = vpop.f32.mrf.mxu0
  %12279 = vdwg.mxu0
  %12280 = vmatpush.bf16.msra.mxu0 %v7888
  %12281 = vmatpush.bf16.msra.mxu0 %v7880
  %12282 = vmatpush.bf16.msra.mxu0 %v7872
  %12283 = vmatpush.bf16.msra.mxu0 %v7864
  %12284 = vmatpush.bf16.msra.mxu0 %v7856
  %12285 = vmatpush.bf16.msra.mxu0 %v7848
  %12286 = vmatpush.bf16.msra.mxu0 %v7840
  %12287 = vmatpush.bf16.msra.mxu0 %v7832
  %12288 = vmatmul.bf16.gmra.mxu0 %v1715
  %v12289 = vpop.f32.mrf.mxu0
  %v12290 = vadd.f32 %v12277, %v12289
  %v12291 = vpop.f32.mrf.mxu0
  %12292 = vdwg.mxu0
  %12293 = vmatpush.bf16.msra.mxu0 %v7952
  %12294 = vmatpush.bf16.msra.mxu0 %v7944
  %12295 = vmatpush.bf16.msra.mxu0 %v7936
  %12296 = vmatpush.bf16.msra.mxu0 %v7928
  %12297 = vmatpush.bf16.msra.mxu0 %v7920
  %12298 = vmatpush.bf16.msra.mxu0 %v7912
  %12299 = vmatpush.bf16.msra.mxu0 %v7904
  %12300 = vmatpush.bf16.msra.mxu0 %v7896
  %12301 = vmatmul.bf16.gmra.mxu0 %v1716
  %v12302 = vpop.f32.mrf.mxu0
  %v12303 = vadd.f32 %v12290, %v12302
  %v12304 = vpop.f32.mrf.mxu0
  %12305 = vdwg.mxu0
  %12306 = vmatpush.bf16.msra.mxu0 %v8016
  %12307 = vmatpush.bf16.msra.mxu0 %v8008
  %12308 = vmatpush.bf16.msra.mxu0 %v8000
  %12309 = vmatpush.bf16.msra.mxu0 %v7992
  %12310 = vmatpush.bf16.msra.mxu0 %v7984
  %12311 = vmatpush.bf16.msra.mxu0 %v7976
  %12312 = vmatpush.bf16.msra.mxu0 %v7968
  %12313 = vmatpush.bf16.msra.mxu0 %v7960
  %12314 = vmatmul.bf16.gmra.mxu0 %v1717
  %v12315 = vpop.f32.mrf.mxu0
  %v12316 = vadd.f32 %v12303, %v12315
  %v12317 = vpop.f32.mrf.mxu0
  %12318 = vdwg.mxu0
  %12319 = vmatpush.bf16.msra.mxu0 %v8080
  %12320 = vmatpush.bf16.msra.mxu0 %v8072
  %12321 = vmatpush.bf16.msra.mxu0 %v8064
  %12322 = vmatpush.bf16.msra.mxu0 %v8056
  %12323 = vmatpush.bf16.msra.mxu0 %v8048
  %12324 = vmatpush.bf16.msra.mxu0 %v8040
  %12325 = vmatpush.bf16.msra.mxu0 %v8032
  %12326 = vmatpush.bf16.msra.mxu0 %v8024
  %12327 = vmatmul.bf16.gmra.mxu0 %v1718
  %v12328 = vpop.f32.mrf.mxu0
  %v12329 = vadd.f32 %v12316, %v12328
  %v12330 = vpop.f32.mrf.mxu0
  %12331 = vdwg.mxu0
  %12332 = vmatpush.bf16.msra.mxu0 %v8144
  %12333 = vmatpush.bf16.msra.mxu0 %v8136
  %12334 = vmatpush.bf16.msra.mxu0 %v8128
  %12335 = vmatpush.bf16.msra.mxu0 %v8120
  %12336 = vmatpush.bf16.msra.mxu0 %v8112
  %12337 = vmatpush.bf16.msra.mxu0 %v8104
  %12338 = vmatpush.bf16.msra.mxu0 %v8096
  %12339 = vmatpush.bf16.msra.mxu0 %v8088
  %12340 = vmatmul.bf16.gmra.mxu0 %v1719
  %v12341 = vpop.f32.mrf.mxu0
  %v12342 = vadd.f32 %v12329, %v12341
  %v12343 = vpop.f32.mrf.mxu0
  %12344 = vdwg.mxu0
  %v12345 = vmax.f32 %v10067, 0.0
  %v12346 = vmax.f32 %v10392, 0.0
  %v12347 = vmax.f32 %v10717, 0.0
  %v12348 = vmax.f32 %v11042, 0.0
  %v12349 = vmax.f32 %v11367, 0.0
  %v12350 = vmax.f32 %v11692, 0.0
  %v12351 = vmax.f32 %v12017, 0.0
  %v12352 = vmax.f32 %v12342, 0.0
  %v12353 = vpack.c.bf16 %v12346, %v12345
  %v12354 = vpack.c.bf16 %v12348, %v12347
  %v12355 = vpack.c.bf16 %v12350, %v12349
  %v12356 = vpack.c.bf16 %v12352, %v12351
  %v12357 = vld [vmem:[%s3] sm:$0xf]
  %v12358 = vld [vmem:[%s3 + $0x4] sm:$0xf]
  %v12359 = vld [vmem:[%s3 + $0x8] sm:$0xf]
  %v12360 = vld [vmem:[%s3 + $0xc] sm:$0xf]
  %v12361 = vld [vmem:[%s3 + $0x10] sm:$0xf]
  %v12362 = vld [vmem:[%s3 + $0x14] sm:$0xf]
  %v12363 = vld [vmem:[%s3 + $0x18] sm:$0xf]
  %v12364 = vld [vmem:[%s3 + $0x1c] sm:$0xf]
  %v12365 = vld [vmem:[%s3 + $0x20] sm:$0xf]
  %v12366 = vld [vmem:[%s3 + $0x24] sm:$0xf]
  %v12367 = vld [vmem:[%s3 + $0x28] sm:$0xf]
  %v12368 = vld [vmem:[%s3 + $0x2c] sm:$0xf]
  %v12369 = vld [vmem:[%s3 + $0x30] sm:$0xf]
  %v12370 = vld [vmem:[%s3 + $0x34] sm:$0xf]
  %v12371 = vld [vmem:[%s3 + $0x38] sm:$0xf]
  %v12372 = vld [vmem:[%s3 + $0x3c] sm:$0xf]
  %v12373 = vld [vmem:[%s3 + $0x40] sm:$0xf]
  %v12374 = vld [vmem:[%s3 + $0x44] sm:$0xf]
  %v12375 = vld [vmem:[%s3 + $0x48] sm:$0xf]
  %v12376 = vld [vmem:[%s3 + $0x4c] sm:$0xf]
  %v12377 = vld [vmem:[%s3 + $0x50] sm:$0xf]
  %v12378 = vld [vmem:[%s3 + $0x54] sm:$0xf]
  %v12379 = vld [vmem:[%s3 + $0x58] sm:$0xf]
  %v12380 = vld [vmem:[%s3 + $0x5c] sm:$0xf]
  %v12381 = vld [vmem:[%s3 + $0x60] sm:$0xf]
  %v12382 = vld [vmem:[%s3 + $0x64] sm:$0xf]
  %v12383 = vld [vmem:[%s3 + $0x68] sm:$0xf]
  %v12384 = vld [vmem:[%s3 + $0x6c] sm:$0xf]
  %v12385 = vld [vmem:[%s3 + $0x70] sm:$0xf]
  %v12386 = vld [vmem:[%s3 + $0x74] sm:$0xf]
  %v12387 = vld [vmem:[%s3 + $0x78] sm:$0xf]
  %v12388 = vld [vmem:[%s3 + $0x7c] sm:$0xf]
  %v12389 = vld [vmem:[%s3 + $0x80] sm:$0xf]
  %v12390 = vld [vmem:[%s3 + $0x84] sm:$0xf]
  %v12391 = vld [vmem:[%s3 + $0x88] sm:$0xf]
  %v12392 = vld [vmem:[%s3 + $0x8c] sm:$0xf]
  %v12393 = vld [vmem:[%s3 + $0x90] sm:$0xf]
  %v12394 = vld [vmem:[%s3 + $0x94] sm:$0xf]
  %v12395 = vld [vmem:[%s3 + $0x98] sm:$0xf]
  %v12396 = vld [vmem:[%s3 + $0x9c] sm:$0xf]
  %v12397 = vld [vmem:[%s3 + $0xa0] sm:$0xf]
  %v12398 = vld [vmem:[%s3 + $0xa4] sm:$0xf]
  %v12399 = vld [vmem:[%s3 + $0xa8] sm:$0xf]
  %v12400 = vld [vmem:[%s3 + $0xac] sm:$0xf]
  %v12401 = vld [vmem:[%s3 + $0xb0] sm:$0xf]
  %v12402 = vld [vmem:[%s3 + $0xb4] sm:$0xf]
  %v12403 = vld [vmem:[%s3 + $0xb8] sm:$0xf]
  %v12404 = vld [vmem:[%s3 + $0xbc] sm:$0xf]
  %v12405 = vld [vmem:[%s3 + $0xc0] sm:$0xf]
  %v12406 = vld [vmem:[%s3 + $0xc4] sm:$0xf]
  %v12407 = vld [vmem:[%s3 + $0xc8] sm:$0xf]
  %v12408 = vld [vmem:[%s3 + $0xcc] sm:$0xf]
  %v12409 = vld [vmem:[%s3 + $0xd0] sm:$0xf]
  %v12410 = vld [vmem:[%s3 + $0xd4] sm:$0xf]
  %v12411 = vld [vmem:[%s3 + $0xd8] sm:$0xf]
  %v12412 = vld [vmem:[%s3 + $0xdc] sm:$0xf]
  %v12413 = vld [vmem:[%s3 + $0xe0] sm:$0xf]
  %v12414 = vld [vmem:[%s3 + $0xe4] sm:$0xf]
  %v12415 = vld [vmem:[%s3 + $0xe8] sm:$0xf]
  %v12416 = vld [vmem:[%s3 + $0xec] sm:$0xf]
  %v12417 = vld [vmem:[%s3 + $0xf0] sm:$0xf]
  %v12418 = vld [vmem:[%s3 + $0xf4] sm:$0xf]
  %v12419 = vld [vmem:[%s3 + $0xf8] sm:$0xf]
  %v12420 = vld [vmem:[%s3 + $0xfc] sm:$0xf]
  %v12421 = vld [vmem:[%s4] sm:$0x1]
  %v12423 = vperm.slane %v12421, 0
  %v12427 = vunpack.c.l.b16 %v12353
  %v12428 = vunpack.c.h.b16 %v12353
  %v12429 = vunpack.c.l.b16 %v12354
  %v12430 = vunpack.c.h.b16 %v12354
  %v12431 = vpack.c.b16 %v12427, %v12427
  %v12432 = vpack.c.b16 %v12428, %v12428
  %v12433 = vpack.c.b16 %v12429, %v12429
  %v12434 = vpack.c.b16 %v12430, %v12430
  %v12503 = vunpack.c.l.b16 %v12357
  %v12504 = vunpack.c.l.b16 %v12358
  %v12505 = vunpack.c.l.b16 %v12359
  %v12506 = vunpack.c.l.b16 %v12360
  %v12507 = vunpack.c.l.b16 %v12361
  %v12508 = vunpack.c.l.b16 %v12362
  %v12509 = vunpack.c.l.b16 %v12363
  %v12510 = vunpack.c.l.b16 %v12364
  %v12511 = vunpack.c.l.b16 %v12365
  %v12512 = vunpack.c.l.b16 %v12366
  %v12513 = vunpack.c.l.b16 %v12367
  %v12514 = vunpack.c.l.b16 %v12368
  %v12515 = vunpack.c.l.b16 %v12369
  %v12516 = vunpack.c.l.b16 %v12370
  %v12517 = vunpack.c.l.b16 %v12371
  %v12518 = vunpack.c.l.b16 %v12372
  %v12519 = vunpack.c.l.b16 %v12373
  %v12520 = vunpack.c.l.b16 %v12374
  %v12521 = vunpack.c.l.b16 %v12375
  %v12522 = vunpack.c.l.b16 %v12376
  %v12523 = vunpack.c.l.b16 %v12377
  %v12524 = vunpack.c.l.b16 %v12378
  %v12525 = vunpack.c.l.b16 %v12379
  %v12526 = vunpack.c.l.b16 %v12380
  %v12527 = vunpack.c.l.b16 %v12381
  %v12528 = vunpack.c.l.b16 %v12382
  %v12529 = vunpack.c.l.b16 %v12383
  %v12530 = vunpack.c.l.b16 %v12384
  %v12531 = vunpack.c.l.b16 %v12385
  %v12532 = vunpack.c.l.b16 %v12386
  %v12533 = vunpack.c.l.b16 %v12387
  %v12534 = vunpack.c.l.b16 %v12388
  %v12535 = vunpack.c.l.b16 %v12389
  %v12536 = vunpack.c.l.b16 %v12390
  %v12537 = vunpack.c.l.b16 %v12391
  %v12538 = vunpack.c.l.b16 %v12392
  %v12539 = vunpack.c.l.b16 %v12393
  %v12540 = vunpack.c.l.b16 %v12394
  %v12541 = vunpack.c.l.b16 %v12395
  %v12542 = vunpack.c.l.b16 %v12396
  %v12543 = vunpack.c.l.b16 %v12397
  %v12544 = vunpack.c.l.b16 %v12398
  %v12545 = vunpack.c.l.b16 %v12399
  %v12546 = vunpack.c.l.b16 %v12400
  %v12547 = vunpack.c.l.b16 %v12401
  %v12548 = vunpack.c.l.b16 %v12402
  %v12549 = vunpack.c.l.b16 %v12403
  %v12550 = vunpack.c.l.b16 %v12404
  %v12551 = vunpack.c.l.b16 %v12405
  %v12552 = vunpack.c.l.b16 %v12406
  %v12553 = vunpack.c.l.b16 %v12407
  %v12554 = vunpack.c.l.b16 %v12408
  %v12555 = vunpack.c.l.b16 %v12409
  %v12556 = vunpack.c.l.b16 %v12410
  %v12557 = vunpack.c.l.b16 %v12411
  %v12558 = vunpack.c.l.b16 %v12412
  %v12559 = vunpack.c.l.b16 %v12413
  %v12560 = vunpack.c.l.b16 %v12414
  %v12561 = vunpack.c.l.b16 %v12415
  %v12562 = vunpack.c.l.b16 %v12416
  %v12563 = vunpack.c.l.b16 %v12417
  %v12564 = vunpack.c.l.b16 %v12418
  %v12565 = vunpack.c.l.b16 %v12419
  %v12566 = vunpack.c.l.b16 %v12420
  %v12567 = vpack.c.b16 %v12504, %v12503
  %v12568 = vpack.c.b16 %v12506, %v12505
  %v12569 = vpack.c.b16 %v12508, %v12507
  %v12570 = vpack.c.b16 %v12510, %v12509
  %v12571 = vpack.c.b16 %v12512, %v12511
  %v12572 = vpack.c.b16 %v12514, %v12513
  %v12573 = vpack.c.b16 %v12516, %v12515
  %v12574 = vpack.c.b16 %v12518, %v12517
  %v12575 = vpack.c.b16 %v12520, %v12519
  %v12576 = vpack.c.b16 %v12522, %v12521
  %v12577 = vpack.c.b16 %v12524, %v12523
  %v12578 = vpack.c.b16 %v12526, %v12525
  %v12579 = vpack.c.b16 %v12528, %v12527
  %v12580 = vpack.c.b16 %v12530, %v12529
  %v12581 = vpack.c.b16 %v12532, %v12531
  %v12582 = vpack.c.b16 %v12534, %v12533
  %v12583 = vpack.c.b16 %v12536, %v12535
  %v12584 = vpack.c.b16 %v12538, %v12537
  %v12585 = vpack.c.b16 %v12540, %v12539
  %v12586 = vpack.c.b16 %v12542, %v12541
  %v12587 = vpack.c.b16 %v12544, %v12543
  %v12588 = vpack.c.b16 %v12546, %v12545
  %v12589 = vpack.c.b16 %v12548, %v12547
  %v12590 = vpack.c.b16 %v12550, %v12549
  %v12591 = vpack.c.b16 %v12552, %v12551
  %v12592 = vpack.c.b16 %v12554, %v12553
  %v12593 = vpack.c.b16 %v12556, %v12555
  %v12594 = vpack.c.b16 %v12558, %v12557
  %v12595 = vpack.c.b16 %v12560, %v12559
  %v12596 = vpack.c.b16 %v12562, %v12561
  %v12597 = vpack.c.b16 %v12564, %v12563
  %v12598 = vpack.c.b16 %v12566, %v12565
  %12631 = vmatpush.bf16.msra.mxu0 %v12574
  %12632 = vmatpush.bf16.msra.mxu0 %v12573
  %12633 = vmatpush.bf16.msra.mxu0 %v12572
  %12634 = vmatpush.bf16.msra.mxu0 %v12571
  %12635 = vmatpush.bf16.msra.mxu0 %v12570
  %12636 = vmatpush.bf16.msra.mxu0 %v12569
  %12637 = vmatpush.bf16.msra.mxu0 %v12568
  %12638 = vmatpush.bf16.msra.mxu0 %v12567
  %12639 = vmatmul.bf16.gmra.mxu0 %v12431
  %v12640 = vpop.f32.mrf.mxu0
  %v12641 = vadd.f32 %v12423, %v12640
  %v12642 = vpop.f32.mrf.mxu0
  %12643 = vdwg.mxu0
  %12644 = vmatpush.bf16.msra.mxu0 %v12582
  %12645 = vmatpush.bf16.msra.mxu0 %v12581
  %12646 = vmatpush.bf16.msra.mxu0 %v12580
  %12647 = vmatpush.bf16.msra.mxu0 %v12579
  %12648 = vmatpush.bf16.msra.mxu0 %v12578
  %12649 = vmatpush.bf16.msra.mxu0 %v12577
  %12650 = vmatpush.bf16.msra.mxu0 %v12576
  %12651 = vmatpush.bf16.msra.mxu0 %v12575
  %12652 = vmatmul.bf16.gmra.mxu0 %v12432
  %v12653 = vpop.f32.mrf.mxu0
  %v12654 = vadd.f32 %v12641, %v12653
  %v12655 = vpop.f32.mrf.mxu0
  %12656 = vdwg.mxu0
  %12657 = vmatpush.bf16.msra.mxu0 %v12590
  %12658 = vmatpush.bf16.msra.mxu0 %v12589
  %12659 = vmatpush.bf16.msra.mxu0 %v12588
  %12660 = vmatpush.bf16.msra.mxu0 %v12587
  %12661 = vmatpush.bf16.msra.mxu0 %v12586
  %12662 = vmatpush.bf16.msra.mxu0 %v12585
  %12663 = vmatpush.bf16.msra.mxu0 %v12584
  %12664 = vmatpush.bf16.msra.mxu0 %v12583
  %12665 = vmatmul.bf16.gmra.mxu0 %v12433
  %v12666 = vpop.f32.mrf.mxu0
  %v12667 = vadd.f32 %v12654, %v12666
  %v12668 = vpop.f32.mrf.mxu0
  %12669 = vdwg.mxu0
  %12670 = vmatpush.bf16.msra.mxu0 %v12598
  %12671 = vmatpush.bf16.msra.mxu0 %v12597
  %12672 = vmatpush.bf16.msra.mxu0 %v12596
  %12673 = vmatpush.bf16.msra.mxu0 %v12595
  %12674 = vmatpush.bf16.msra.mxu0 %v12594
  %12675 = vmatpush.bf16.msra.mxu0 %v12593
  %12676 = vmatpush.bf16.msra.mxu0 %v12592
  %12677 = vmatpush.bf16.msra.mxu0 %v12591
  %12678 = vmatmul.bf16.gmra.mxu0 %v12434
  %v12679 = vpop.f32.mrf.mxu0
  %v12680 = vadd.f32 %v12667, %v12679
  %v12681 = vpop.f32.mrf.mxu0
  %12682 = vdwg.mxu0
  %v12683 = vld [vmem:[%s5] sm:$0xf]
  %v12684 = vld [vmem:[%s5 + $0x4] sm:$0xf]
  %v12685 = vld [vmem:[%s5 + $0x8] sm:$0xf]
  %v12686 = vld [vmem:[%s5 + $0xc] sm:$0xf]
  %v12687 = vld [vmem:[%s5 + $0x10] sm:$0xf]
  %v12688 = vld [vmem:[%s5 + $0x14] sm:$0xf]
  %v12689 = vld [vmem:[%s5 + $0x18] sm:$0xf]
  %v12690 = vld [vmem:[%s5 + $0x1c] sm:$0xf]
  %v12691 = vld [vmem:[%s5 + $0x20] sm:$0xf]
  %v12692 = vld [vmem:[%s5 + $0x24] sm:$0xf]
  %v12693 = vld [vmem:[%s5 + $0x28] sm:$0xf]
  %v12694 = vld [vmem:[%s5 + $0x2c] sm:$0xf]
  %v12695 = vld [vmem:[%s5 + $0x30] sm:$0xf]
  %v12696 = vld [vmem:[%s5 + $0x34] sm:$0xf]
  %v12697 = vld [vmem:[%s5 + $0x38] sm:$0xf]
  %v12698 = vld [vmem:[%s5 + $0x3c] sm:$0xf]
  %v12699 = vld [vmem:[%s5 + $0x40] sm:$0xf]
  %v12700 = vld [vmem:[%s5 + $0x44] sm:$0xf]
  %v12701 = vld [vmem:[%s5 + $0x48] sm:$0xf]
  %v12702 = vld [vmem:[%s5 + $0x4c] sm:$0xf]
  %v12703 = vld [vmem:[%s5 + $0x50] sm:$0xf]
  %v12704 = vld [vmem:[%s5 + $0x54] sm:$0xf]
  %v12705 = vld [vmem:[%s5 + $0x58] sm:$0xf]
  %v12706 = vld [vmem:[%s5 + $0x5c] sm:$0xf]
  %v12707 = vld [vmem:[%s5 + $0x60] sm:$0xf]
  %v12708 = vld [vmem:[%s5 + $0x64] sm:$0xf]
  %v12709 = vld [vmem:[%s5 + $0x68] sm:$0xf]
  %v12710 = vld [vmem:[%s5 + $0x6c] sm:$0xf]
  %v12711 = vld [vmem:[%s5 + $0x70] sm:$0xf]
  %v12712 = vld [vmem:[%s5 + $0x74] sm:$0xf]
  %v12713 = vld [vmem:[%s5 + $0x78] sm:$0xf]
  %v12714 = vld [vmem:[%s5 + $0x7c] sm:$0xf]
  %v12715 = vld [vmem:[%s5 + $0x80] sm:$0xf]
  %v12716 = vld [vmem:[%s5 + $0x84] sm:$0xf]
  %v12717 = vld [vmem:[%s5 + $0x88] sm:$0xf]
  %v12718 = vld [vmem:[%s5 + $0x8c] sm:$0xf]
  %v12719 = vld [vmem:[%s5 + $0x90] sm:$0xf]
  %v12720 = vld [vmem:[%s5 + $0x94] sm:$0xf]
  %v12721 = vld [vmem:[%s5 + $0x98] sm:$0xf]
  %v12722 = vld [vmem:[%s5 + $0x9c] sm:$0xf]
  %v12723 = vld [vmem:[%s5 + $0xa0] sm:$0xf]
  %v12724 = vld [vmem:[%s5 + $0xa4] sm:$0xf]
  %v12725 = vld [vmem:[%s5 + $0xa8] sm:$0xf]
  %v12726 = vld [vmem:[%s5 + $0xac] sm:$0xf]
  %v12727 = vld [vmem:[%s5 + $0xb0] sm:$0xf]
  %v12728 = vld [vmem:[%s5 + $0xb4] sm:$0xf]
  %v12729 = vld [vmem:[%s5 + $0xb8] sm:$0xf]
  %v12730 = vld [vmem:[%s5 + $0xbc] sm:$0xf]
  %v12731 = vld [vmem:[%s5 + $0xc0] sm:$0xf]
  %v12732 = vld [vmem:[%s5 + $0xc4] sm:$0xf]
  %v12733 = vld [vmem:[%s5 + $0xc8] sm:$0xf]
  %v12734 = vld [vmem:[%s5 + $0xcc] sm:$0xf]
  %v12735 = vld [vmem:[%s5 + $0xd0] sm:$0xf]
  %v12736 = vld [vmem:[%s5 + $0xd4] sm:$0xf]
  %v12737 = vld [vmem:[%s5 + $0xd8] sm:$0xf]
  %v12738 = vld [vmem:[%s5 + $0xdc] sm:$0xf]
  %v12739 = vld [vmem:[%s5 + $0xe0] sm:$0xf]
  %v12740 = vld [vmem:[%s5 + $0xe4] sm:$0xf]
  %v12741 = vld [vmem:[%s5 + $0xe8] sm:$0xf]
  %v12742 = vld [vmem:[%s5 + $0xec] sm:$0xf]
  %v12743 = vld [vmem:[%s5 + $0xf0] sm:$0xf]
  %v12744 = vld [vmem:[%s5 + $0xf4] sm:$0xf]
  %v12745 = vld [vmem:[%s5 + $0xf8] sm:$0xf]
  %v12746 = vld [vmem:[%s5 + $0xfc] sm:$0xf]
  %v12747 = vld [vmem:[%s6] sm:$0x1]
  %v12749 = vperm.slane %v12747, 0
  %v12753 = vunpack.c.l.b16 %v12355
  %v12754 = vunpack.c.h.b16 %v12355
  %v12755 = vunpack.c.l.b16 %v12356
  %v12756 = vunpack.c.h.b16 %v12356
  %v12757 = vpack.c.b16 %v12753, %v12753
  %v12758 = vpack.c.b16 %v12754, %v12754
  %v12759 = vpack.c.b16 %v12755, %v12755
  %v12760 = vpack.c.b16 %v12756, %v12756
  %v12829 = vunpack.c.l.b16 %v12683
  %v12830 = vunpack.c.l.b16 %v12684
  %v12831 = vunpack.c.l.b16 %v12685
  %v12832 = vunpack.c.l.b16 %v12686
  %v12833 = vunpack.c.l.b16 %v12687
  %v12834 = vunpack.c.l.b16 %v12688
  %v12835 = vunpack.c.l.b16 %v12689
  %v12836 = vunpack.c.l.b16 %v12690
  %v12837 = vunpack.c.l.b16 %v12691
  %v12838 = vunpack.c.l.b16 %v12692
  %v12839 = vunpack.c.l.b16 %v12693
  %v12840 = vunpack.c.l.b16 %v12694
  %v12841 = vunpack.c.l.b16 %v12695
  %v12842 = vunpack.c.l.b16 %v12696
  %v12843 = vunpack.c.l.b16 %v12697
  %v12844 = vunpack.c.l.b16 %v12698
  %v12845 = vunpack.c.l.b16 %v12699
  %v12846 = vunpack.c.l.b16 %v12700
  %v12847 = vunpack.c.l.b16 %v12701
  %v12848 = vunpack.c.l.b16 %v12702
  %v12849 = vunpack.c.l.b16 %v12703
  %v12850 = vunpack.c.l.b16 %v12704
  %v12851 = vunpack.c.l.b16 %v12705
  %v12852 = vunpack.c.l.b16 %v12706
  %v12853 = vunpack.c.l.b16 %v12707
  %v12854 = vunpack.c.l.b16 %v12708
  %v12855 = vunpack.c.l.b16 %v12709
  %v12856 = vunpack.c.l.b16 %v12710
  %v12857 = vunpack.c.l.b16 %v12711
  %v12858 = vunpack.c.l.b16 %v12712
  %v12859 = vunpack.c.l.b16 %v12713
  %v12860 = vunpack.c.l.b16 %v12714
  %v12861 = vunpack.c.l.b16 %v12715
  %v12862 = vunpack.c.l.b16 %v12716
  %v12863 = vunpack.c.l.b16 %v12717
  %v12864 = vunpack.c.l.b16 %v12718
  %v12865 = vunpack.c.l.b16 %v12719
  %v12866 = vunpack.c.l.b16 %v12720
  %v12867 = vunpack.c.l.b16 %v12721
  %v12868 = vunpack.c.l.b16 %v12722
  %v12869 = vunpack.c.l.b16 %v12723
  %v12870 = vunpack.c.l.b16 %v12724
  %v12871 = vunpack.c.l.b16 %v12725
  %v12872 = vunpack.c.l.b16 %v12726
  %v12873 = vunpack.c.l.b16 %v12727
  %v12874 = vunpack.c.l.b16 %v12728
  %v12875 = vunpack.c.l.b16 %v12729
  %v12876 = vunpack.c.l.b16 %v12730
  %v12877 = vunpack.c.l.b16 %v12731
  %v12878 = vunpack.c.l.b16 %v12732
  %v12879 = vunpack.c.l.b16 %v12733
  %v12880 = vunpack.c.l.b16 %v12734
  %v12881 = vunpack.c.l.b16 %v12735
  %v12882 = vunpack.c.l.b16 %v12736
  %v12883 = vunpack.c.l.b16 %v12737
  %v12884 = vunpack.c.l.b16 %v12738
  %v12885 = vunpack.c.l.b16 %v12739
  %v12886 = vunpack.c.l.b16 %v12740
  %v12887 = vunpack.c.l.b16 %v12741
  %v12888 = vunpack.c.l.b16 %v12742
  %v12889 = vunpack.c.l.b16 %v12743
  %v12890 = vunpack.c.l.b16 %v12744
  %v12891 = vunpack.c.l.b16 %v12745
  %v12892 = vunpack.c.l.b16 %v12746
  %v12893 = vpack.c.b16 %v12830, %v12829
  %v12894 = vpack.c.b16 %v12832, %v12831
  %v12895 = vpack.c.b16 %v12834, %v12833
  %v12896 = vpack.c.b16 %v12836, %v12835
  %v12897 = vpack.c.b16 %v12838, %v12837
  %v12898 = vpack.c.b16 %v12840, %v12839
  %v12899 = vpack.c.b16 %v12842, %v12841
  %v12900 = vpack.c.b16 %v12844, %v12843
  %v12901 = vpack.c.b16 %v12846, %v12845
  %v12902 = vpack.c.b16 %v12848, %v12847
  %v12903 = vpack.c.b16 %v12850, %v12849
  %v12904 = vpack.c.b16 %v12852, %v12851
  %v12905 = vpack.c.b16 %v12854, %v12853
  %v12906 = vpack.c.b16 %v12856, %v12855
  %v12907 = vpack.c.b16 %v12858, %v12857
  %v12908 = vpack.c.b16 %v12860, %v12859
  %v12909 = vpack.c.b16 %v12862, %v12861
  %v12910 = vpack.c.b16 %v12864, %v12863
  %v12911 = vpack.c.b16 %v12866, %v12865
  %v12912 = vpack.c.b16 %v12868, %v12867
  %v12913 = vpack.c.b16 %v12870, %v12869
  %v12914 = vpack.c.b16 %v12872, %v12871
  %v12915 = vpack.c.b16 %v12874, %v12873
  %v12916 = vpack.c.b16 %v12876, %v12875
  %v12917 = vpack.c.b16 %v12878, %v12877
  %v12918 = vpack.c.b16 %v12880, %v12879
  %v12919 = vpack.c.b16 %v12882, %v12881
  %v12920 = vpack.c.b16 %v12884, %v12883
  %v12921 = vpack.c.b16 %v12886, %v12885
  %v12922 = vpack.c.b16 %v12888, %v12887
  %v12923 = vpack.c.b16 %v12890, %v12889
  %v12924 = vpack.c.b16 %v12892, %v12891
  %12957 = vmatpush.bf16.msra.mxu0 %v12900
  %12958 = vmatpush.bf16.msra.mxu0 %v12899
  %12959 = vmatpush.bf16.msra.mxu0 %v12898
  %12960 = vmatpush.bf16.msra.mxu0 %v12897
  %12961 = vmatpush.bf16.msra.mxu0 %v12896
  %12962 = vmatpush.bf16.msra.mxu0 %v12895
  %12963 = vmatpush.bf16.msra.mxu0 %v12894
  %12964 = vmatpush.bf16.msra.mxu0 %v12893
  %12965 = vmatmul.bf16.gmra.mxu0 %v12757
  %v12966 = vpop.f32.mrf.mxu0
  %v12967 = vadd.f32 %v12749, %v12966
  %v12968 = vpop.f32.mrf.mxu0
  %12969 = vdwg.mxu0
  %12970 = vmatpush.bf16.msra.mxu0 %v12908
  %12971 = vmatpush.bf16.msra.mxu0 %v12907
  %12972 = vmatpush.bf16.msra.mxu0 %v12906
  %12973 = vmatpush.bf16.msra.mxu0 %v12905
  %12974 = vmatpush.bf16.msra.mxu0 %v12904
  %12975 = vmatpush.bf16.msra.mxu0 %v12903
  %12976 = vmatpush.bf16.msra.mxu0 %v12902
  %12977 = vmatpush.bf16.msra.mxu0 %v12901
  %12978 = vmatmul.bf16.gmra.mxu0 %v12758
  %v12979 = vpop.f32.mrf.mxu0
  %v12980 = vadd.f32 %v12967, %v12979
  %v12981 = vpop.f32.mrf.mxu0
  %12982 = vdwg.mxu0
  %12983 = vmatpush.bf16.msra.mxu0 %v12916
  %12984 = vmatpush.bf16.msra.mxu0 %v12915
  %12985 = vmatpush.bf16.msra.mxu0 %v12914
  %12986 = vmatpush.bf16.msra.mxu0 %v12913
  %12987 = vmatpush.bf16.msra.mxu0 %v12912
  %12988 = vmatpush.bf16.msra.mxu0 %v12911
  %12989 = vmatpush.bf16.msra.mxu0 %v12910
  %12990 = vmatpush.bf16.msra.mxu0 %v12909
  %12991 = vmatmul.bf16.gmra.mxu0 %v12759
  %v12992 = vpop.f32.mrf.mxu0
  %v12993 = vadd.f32 %v12980, %v12992
  %v12994 = vpop.f32.mrf.mxu0
  %12995 = vdwg.mxu0
  %12996 = vmatpush.bf16.msra.mxu0 %v12924
  %12997 = vmatpush.bf16.msra.mxu0 %v12923
  %12998 = vmatpush.bf16.msra.mxu0 %v12922
  %12999 = vmatpush.bf16.msra.mxu0 %v12921
  %13000 = vmatpush.bf16.msra.mxu0 %v12920
  %13001 = vmatpush.bf16.msra.mxu0 %v12919
  %13002 = vmatpush.bf16.msra.mxu0 %v12918
  %13003 = vmatpush.bf16.msra.mxu0 %v12917
  %13004 = vmatmul.bf16.gmra.mxu0 %v12760
  %v13005 = vpop.f32.mrf.mxu0
  %v13006 = vadd.f32 %v12993, %v13005
  %v13007 = vpop.f32.mrf.mxu0
  %13008 = vdwg.mxu0
  %13009 = vadd.xlane.f32.xlu0 %v12680
  %v13010 = vpop.xlane.xlu0 %13009
  %v13011 = vmul.f32 %v13010, 0.16666667
  %13013 = vset.pattern.permute.xlu0 0
  %13014 = vperm.xlu0 %13013, %v13006
  %v13015 = vpop.permute.xlu0 %13014
  %v13017 = vadd.f32 %v13015, %v12680
  %v13018 = vsub.f32 %v13017, %v13011
  %13019 = vst [vmem:[%s7] sm:$0xff] %v13018
  // Predicated region
  $region30: #{vacnn_forward.7} parent=0 // pred_check
    _
  $region31: #{vacnn_forward.7} parent=0 // pred_check_branch
    %13021 = sbr.rel (0) target = $region33
  $region32: #{vacnn_forward.7} parent=0 // pred_region
    _
  $region33: #{vacnn_forward.7} parent=0 // pred_fallthru
    _
  // Predicated region
  $region34: #{vacnn_forward.7} parent=0 // pred_check
    _
  $region35: #{vacnn_forward.7} parent=0 // pred_check_branch
    %13023 = sbr.rel (0) target = $region37
  $region36: #{vacnn_forward.7} parent=0 // pred_region
    _
  $region37: #{vacnn_forward.7} parent=0 // pred_fallthru
    _

</llo_original>
